<compile_context>
chip_gen: v5e
topology: v5e:2x2
jax: 0.10.0
libtpu: 0.0.40
codegen_flags: <defaults>
</compile_context>

<pallas_src>
import functools

import numpy as np
import jax
import jax.numpy as jnp
from jax.experimental import pallas as pl
from jax.experimental.pallas import tpu as pltpu

_C1, _C2, _C3 = 32, 64, 128      # conv channel widths
_FC1, _NCLS = 256, 6             # head sizes
_VMEM_SPEC = pl.BlockSpec(memory_space=pltpu.MemorySpace.VMEM)


def _round_up(x, m):
    return (x + m - 1) // m * m


# ---------------------------------------------------------------------------
# The single fused kernel
# ---------------------------------------------------------------------------
def _audio_cnn_kernel(
        x_ref,
        w1_ref, b1_ref, msk1_ref, s1_ref,
        w2_ref, b2_ref, msk2_ref, s2_ref,
        w3_ref, b3_ref, msk3_ref, a3_ref,
        fc1w_ref, fc1b_ref, fc2w_ref, fc2b_ref,
        o_ref,
        pad1, pool1, pad2, pool2, pad3, pool3,
        *, geom):
    """Whole AudioCNN eval forward on VMEM-resident data (one grid-less call).

    Activations are kept as 2D (N*H*W, C) f32 matrices (pixels on sublanes,
    channels on lanes).  A 3x3 conv with padding=1 is the sum of 9 shifted-tap
    matmuls; shifts are static sublane slices of a zero-padded VMEM scratch and
    per-tap masks zero out row/image wrap-around, which exactly reproduces the
    zero-padding semantics of Conv2d(padding=1).
    """

    def conv_bn_relu_pool(x, pad_ref, pool_ref, w_ref, b_ref, msk_ref,
                          wd, cin, cout, mg):
        p = x.shape[0]                                # flattened N*H*W pixels
        # zero-pad the flattened pixel axis so every tap shift is in-bounds
        pad_ref[...] = jnp.zeros_like(pad_ref)
        pad_ref[mg:mg + p, :] = x
        acc = jnp.zeros((p, cout), jnp.float32)
        for t in range(9):                            # 3x3 taps, unrolled
            dh, dw = t // 3 - 1, t % 3 - 1
            sh = dh * wd + dw
            xs = pad_ref[mg + sh:mg + sh + p, :]      # (p, cin) shifted pixels
            xm = xs * msk_ref[:, t:t + 1]             # kill out-of-image taps (f32)
            wt = w_ref[t * cin:(t + 1) * cin, :]      # (cin, cout), BN-folded
            if cin == 1:
                acc = acc + xm * wt                   # rank-1 tap on the VPU (f32)
            else:
                acc = acc + jnp.dot(xm.astype(jnp.bfloat16), wt,
                                    preferred_element_type=jnp.float32)
        y = jnp.maximum(acc + b_ref[...], 0.0)        # folded-BN bias + ReLU (f32)
        # fused MaxPool2d(2, 2): max over the 4 window corners via sublane shifts
        pool_ref[...] = jnp.zeros_like(pool_ref)
        pool_ref[0:p, :] = y
        return jnp.maximum(
            jnp.maximum(pool_ref[0:p, :], pool_ref[1:p + 1, :]),
            jnp.maximum(pool_ref[wd:p + wd, :], pool_ref[wd + 1:p + wd + 1, :]))

    (w1d, mg1), (w2d, mg2), (w3d, mg3) = geom

    mx1 = conv_bn_relu_pool(x_ref[...], pad1, pool1, w1_ref, b1_ref, msk1_ref,
                            w1d, 1, _C1, mg1)
    # top-left-corner selection -> pooled feature map, rows ordered (n, i, j)
    x2 = jnp.dot(s1_ref[...], mx1, preferred_element_type=jnp.float32)
    mx2 = conv_bn_relu_pool(x2, pad2, pool2, w2_ref, b2_ref, msk2_ref,
                            w2d, _C1, _C2, mg2)
    x3 = jnp.dot(s2_ref[...], mx2, preferred_element_type=jnp.float32)
    mx3 = conv_bn_relu_pool(x3, pad3, pool3, w3_ref, b3_ref, msk3_ref,
                            w3d, _C2, _C3, mg3)

    # a3 = (3rd max-pool selection) fused with AdaptiveAvgPool2d((1,1)) mean
    gap = jnp.dot(a3_ref[...], mx3, preferred_element_type=jnp.float32)  # (N, 128)

    hid = jnp.dot(gap.astype(jnp.bfloat16), fc1w_ref[...],
                  preferred_element_type=jnp.float32) + fc1b_ref[...]
    hid = jnp.maximum(hid, 0.0)
    # TODO(synk): nn.Dropout(0.85) only applies when module.training; this is
    # the eval-mode forward, so dropout is a no-op.
    o_ref[...] = jnp.dot(hid.astype(jnp.bfloat16), fc2w_ref[...],
                         preferred_element_type=jnp.float32) + fc2b_ref[...]


# ---------------------------------------------------------------------------
# One-time (off the hot path) weight / constant preparation
# ---------------------------------------------------------------------------
def _conv_masks(n, h, w):
    """(n*h*w, 9) f32: mask[p, t] = 1 iff tap t of pixel p lands inside the image."""
    ii, jj = np.meshgrid(np.arange(h), np.arange(w), indexing="ij")
    ii = np.tile(ii.reshape(-1), n)
    jj = np.tile(jj.reshape(-1), n)
    cols = []
    for t in range(9):
        dh, dw = t // 3 - 1, t % 3 - 1
        cols.append((ii + dh >= 0) & (ii + dh < h) & (jj + dw >= 0) & (jj + dw < w))
    return jnp.asarray(np.stack(cols, axis=1).astype(np.float32))


def _pool_select(n, h, w):
    """(n*(h//2)*(w//2), n*h*w) 0/1 matrix picking the top-left row of each 2x2 window."""
    ho, wo = h // 2, w // 2
    s = np.zeros((n * ho * wo, n * h * w), np.float32)
    for b in range(n):
        for io in range(ho):
            for jo in range(wo):
                s[(b * ho + io) * wo + jo, b * h * w + 2 * io * w + 2 * jo] = 1.0
    return jnp.asarray(s)


def _pool_gap_matrix(n, h, w):
    """(n, n*h*w): last max-pool's top-left selection fused with the GAP mean."""
    ho, wo = h // 2, w // 2
    a = np.zeros((n, n * h * w), np.float32)
    for b in range(n):
        for io in range(ho):
            for jo in range(wo):
                a[b, b * h * w + 2 * io * w + 2 * jo] = 1.0 / (ho * wo)
    return jnp.asarray(a)


def prepare_params(raw, n, h, w, eps=1e-5):
    """Fold BN into conv weights/biases, transpose to GEMM layout, cast matmul
    weights to bf16, and build the static masks / selection matrices.  Run once."""
    prep = {}
    spatial = [(h, w), (h // 2, w // 2), (h // 4, w // 4)]
    for i, name in enumerate(("block1", "block2", "block3")):
        wgt, b, gamma, beta, mean, var = raw[name]
        cout, cin = wgt.shape[0], wgt.shape[1]
        scale = gamma / jnp.sqrt(var + eps)
        # torch (Cout, Cin, 3, 3) -> (kh, kw, cin, cout) -> (9*cin, cout), BN scale folded
        wmat = jnp.transpose(wgt * scale[:, None, None, None],
                             (2, 3, 1, 0)).reshape(9 * cin, cout)
        prep[f"w{i + 1}"] = wmat.astype(jnp.float32 if cin == 1 else jnp.bfloat16)
        prep[f"b{i + 1}"] = ((b - mean) * scale + beta).reshape(1, cout).astype(jnp.float32)
        prep[f"msk{i + 1}"] = _conv_masks(n, *spatial[i])
    prep["s1"] = _pool_select(n, h, w)
    prep["s2"] = _pool_select(n, h // 2, w // 2)
    prep["a3"] = _pool_gap_matrix(n, h // 4, w // 4)
    prep["fc1_w"] = raw["fc1_w"].T.astype(jnp.bfloat16)
    prep["fc1_b"] = raw["fc1_b"].reshape(1, -1).astype(jnp.float32)
    prep["fc2_w"] = raw["fc2_w"].T.astype(jnp.bfloat16)
    prep["fc2_b"] = raw["fc2_b"].reshape(1, -1).astype(jnp.float32)
    return prep


# ---------------------------------------------------------------------------
# Forward wrapper: one transpose/reshape of x + one pallas_call
# ---------------------------------------------------------------------------
@jax.jit
def audio_cnn_forward(x_nchw, prep):
    n, cin, h, w = x_nchw.shape
    p1, p2, p3 = n * h * w, n * (h // 2) * (w // 2), n * (h // 4) * (w // 4)
    mg1 = _round_up(w + 1, 8)
    mg2 = _round_up(w // 2 + 1, 8)
    mg3 = _round_up(w // 4 + 1, 8)
    x2d = jnp.transpose(x_nchw, (0, 2, 3, 1)).reshape(p1, cin).astype(jnp.float32)
    kernel = functools.partial(
        _audio_cnn_kernel, geom=((w, mg1), (w // 2, mg2), (w // 4, mg3)))
    return pl.pallas_call(
        kernel,
        out_shape=jax.ShapeDtypeStruct((n, _NCLS), jnp.float32),
        in_specs=[_VMEM_SPEC] * 17,
        out_specs=_VMEM_SPEC,
        scratch_shapes=[
            pltpu.VMEM((p1 + 2 * mg1, cin), jnp.float32),   # conv1 shifted-tap pad
            pltpu.VMEM((p1 + mg1, _C1), jnp.float32),       # conv1 pool corners
            pltpu.VMEM((p2 + 2 * mg2, _C1), jnp.float32),   # conv2 shifted-tap pad
            pltpu.VMEM((p2 + mg2, _C2), jnp.float32),       # conv2 pool corners
            pltpu.VMEM((p3 + 2 * mg3, _C2), jnp.float32),   # conv3 shifted-tap pad
            pltpu.VMEM((p3 + mg3, _C3), jnp.float32),       # conv3 pool corners
        ],
    )(x2d,
      prep["w1"], prep["b1"], prep["msk1"], prep["s1"],
      prep["w2"], prep["b2"], prep["msk2"], prep["s2"],
      prep["w3"], prep["b3"], prep["msk3"], prep["a3"],
      prep["fc1_w"], prep["fc1_b"], prep["fc2_w"], prep["fc2_b"])


# ---------------------------------------------------------------------------
# Synthetic (deterministic) parameters in the original torch layout
# ---------------------------------------------------------------------------
def init_params(key):
    ks = iter(jax.random.split(key, 32))

    def conv_block(cout, cin):
        w = jax.random.normal(next(ks), (cout, cin, 3, 3), jnp.float32) * 0.1
        b = jax.random.normal(next(ks), (cout,), jnp.float32) * 0.1
        gamma = 1.0 + 0.1 * jax.random.normal(next(ks), (cout,), jnp.float32)
        beta = 0.1 * jax.random.normal(next(ks), (cout,), jnp.float32)
        mean = 0.05 * jax.random.normal(next(ks), (cout,), jnp.float32)
        var = 0.5 + jnp.abs(jax.random.normal(next(ks), (cout,), jnp.float32)) * 0.2
        return (w, b, gamma, beta, mean, var)

    return {
        "block1": conv_block(_C1, 1),
        "block2": conv_block(_C2, _C1),
        "block3": conv_block(_C3, _C2),
        "fc1_w": jax.random.normal(next(ks), (_FC1, _C3), jnp.float32) * 0.05,
        "fc1_b": jax.random.normal(next(ks), (_FC1,), jnp.float32) * 0.05,
        "fc2_w": jax.random.normal(next(ks), (_NCLS, _FC1), jnp.float32) * 0.05,
        "fc2_b": jax.random.normal(next(ks), (_NCLS,), jnp.float32) * 0.05,
    }


# ---------------------------------------------------------------------------
# Pure-JAX (XLA) eval-mode reference, straight from the PyTorch spec
# ---------------------------------------------------------------------------
def _reference_forward(x_nchw, raw, eps=1e-5):
    def block(x, prm):
        w, b, gamma, beta, mean, var = prm
        y = jax.lax.conv_general_dilated(x, w, (1, 1), ((1, 1), (1, 1)),
                                         dimension_numbers=("NCHW", "OIHW", "NCHW"))
        y = y + b[None, :, None, None]
        y = (y - mean[None, :, None, None]) / jnp.sqrt(var[None, :, None, None] + eps)
        y = gamma[None, :, None, None] * y + beta[None, :, None, None]
        y = jnp.maximum(y, 0.0)
        n, c, hh, ww = y.shape
        return y.reshape(n, c, hh // 2, 2, ww // 2, 2).max(axis=(3, 5))

    x = block(x_nchw, raw["block1"])
    x = block(x, raw["block2"])
    x = block(x, raw["block3"])
    x = x.mean(axis=(2, 3))                                     # GAP -> (N, 128)
    x = jnp.maximum(x @ raw["fc1_w"].T + raw["fc1_b"], 0.0)     # dropout: eval no-op
    return x @ raw["fc2_w"].T + raw["fc2_b"]


if __name__ == "__main__":
    key = jax.random.PRNGKey(0)
    k_x, k_p = jax.random.split(key)
    # NCHW input consistent with Conv2d(1, 32, ...): batch=2, channels=1, 16x16
    x = jax.random.normal(k_x, (2, 1, 16, 16), jnp.float32)
    raw = init_params(k_p)
    prep = prepare_params(raw, n=2, h=16, w=16)   # one-time prep, off the hot path

    out = jax.block_until_ready(audio_cnn_forward(x, prep))
    assert out.shape == (2, _NCLS) and out.dtype == jnp.float32
    assert bool(jnp.all(jnp.isfinite(out)))

    ref = _reference_forward(x, raw)
    err = float(jnp.max(jnp.abs(out - ref)))
    tol = 0.08 + 0.05 * float(jnp.max(jnp.abs(ref)))   # generous: bf16 matmul path
    assert err < tol, f"mismatch vs reference: max|diff|={err} (tol={tol})"
    print("KERNEL_OK")
</pallas_src>

<mosaic_0001>
module attributes {stable_mosaic.version = 11 : i64} {
  func.func @_audio_cnn_kernel(%arg0: memref<512x1xf32, #tpu.memory_space<vmem>>, %arg1: memref<9x32xf32, #tpu.memory_space<vmem>>, %arg2: memref<1x32xf32, #tpu.memory_space<vmem>>, %arg3: memref<512x9xf32, #tpu.memory_space<vmem>>, %arg4: memref<128x512xf32, #tpu.memory_space<vmem>>, %arg5: memref<288x64xbf16, #tpu.memory_space<vmem>>, %arg6: memref<1x64xf32, #tpu.memory_space<vmem>>, %arg7: memref<128x9xf32, #tpu.memory_space<vmem>>, %arg8: memref<32x128xf32, #tpu.memory_space<vmem>>, %arg9: memref<576x128xbf16, #tpu.memory_space<vmem>>, %arg10: memref<1x128xf32, #tpu.memory_space<vmem>>, %arg11: memref<32x9xf32, #tpu.memory_space<vmem>>, %arg12: memref<2x32xf32, #tpu.memory_space<vmem>>, %arg13: memref<128x256xbf16, #tpu.memory_space<vmem>>, %arg14: memref<1x256xf32, #tpu.memory_space<vmem>>, %arg15: memref<256x6xbf16, #tpu.memory_space<vmem>>, %arg16: memref<1x6xf32, #tpu.memory_space<vmem>>, %arg17: memref<2x6xf32, #tpu.memory_space<vmem>>, %arg18: memref<560x1xf32, #tpu.memory_space<vmem>>, %arg19: memref<536x32xf32, #tpu.memory_space<vmem>>, %arg20: memref<160x32xf32, #tpu.memory_space<vmem>>, %arg21: memref<144x64xf32, #tpu.memory_space<vmem>>, %arg22: memref<48x64xf32, #tpu.memory_space<vmem>>, %arg23: memref<40x128xf32, #tpu.memory_space<vmem>>) attributes {dimension_semantics = [], scalar_prefetch = 0 : i64, scratch_operands = 6 : i64, tpu.core_type = #tpu.core_type<tc>} {
    %c0 = arith.constant 0 : index
    %c0_0 = arith.constant 0 : index
    %0 = vector.load %arg0[%c0, %c0_0] : memref<512x1xf32, #tpu.memory_space<vmem>>, vector<512x1xf32>
    %cst = arith.constant 0.000000e+00 : f32
    %1 = vector.broadcast %cst : f32 to vector<560x1xf32>
    %c0_1 = arith.constant 0 : index
    %c0_2 = arith.constant 0 : index
    %2 = vector.load %arg18[%c0_1, %c0_2] : memref<560x1xf32, #tpu.memory_space<vmem>>, vector<560x1xf32>
    tpu.vector_store %arg18[%c0_1, %c0_2], %1 {strides = array<i32>} : memref<560x1xf32, #tpu.memory_space<vmem>>, vector<560x1xf32>,
    %c24 = arith.constant 24 : index
    %c0_3 = arith.constant 0 : index
    %3 = vector.load %arg18[%c24, %c0_3] : memref<560x1xf32, #tpu.memory_space<vmem>>, vector<512x1xf32>
    tpu.vector_store %arg18[%c24, %c0_3], %0 {strides = array<i32>} : memref<560x1xf32, #tpu.memory_space<vmem>>, vector<512x1xf32>,
    %cst_4 = arith.constant 0.000000e+00 : f32
    %4 = vector.broadcast %cst_4 : f32 to vector<512x32xf32>
    %c7 = arith.constant 7 : index
    %c0_5 = arith.constant 0 : index
    %5 = vector.load %arg18[%c7, %c0_5] : memref<560x1xf32, #tpu.memory_space<vmem>>, vector<512x1xf32>
    %c0_6 = arith.constant 0 : index
    %c0_7 = arith.constant 0 : index
    %6 = vector.load %arg3[%c0_6, %c0_7] : memref<512x9xf32, #tpu.memory_space<vmem>>, vector<512x1xf32>
    %7 = arith.mulf %5, %6 : vector<512x1xf32>
    %c0_8 = arith.constant 0 : index
    %c0_9 = arith.constant 0 : index
    %8 = vector.load %arg1[%c0_8, %c0_9] : memref<9x32xf32, #tpu.memory_space<vmem>>, vector<1x32xf32>
    %9 = vector.broadcast %7 : vector<512x1xf32> to vector<512x32xf32>
    %10 = vector.broadcast %8 : vector<1x32xf32> to vector<512x32xf32>
    %11 = arith.mulf %9, %10 : vector<512x32xf32>
    %12 = arith.addf %4, %11 : vector<512x32xf32>
    %c8 = arith.constant 8 : index
    %c0_10 = arith.constant 0 : index
    %13 = vector.load %arg18[%c8, %c0_10] : memref<560x1xf32, #tpu.memory_space<vmem>>, vector<512x1xf32>
    %c0_11 = arith.constant 0 : index
    %c1 = arith.constant 1 : index
    %14 = vector.load %arg3[%c0_11, %c1] : memref<512x9xf32, #tpu.memory_space<vmem>>, vector<512x1xf32>
    %15 = arith.mulf %13, %14 : vector<512x1xf32>
    %c1_12 = arith.constant 1 : index
    %c0_13 = arith.constant 0 : index
    %16 = vector.load %arg1[%c1_12, %c0_13] : memref<9x32xf32, #tpu.memory_space<vmem>>, vector<1x32xf32>
    %17 = vector.broadcast %15 : vector<512x1xf32> to vector<512x32xf32>
    %18 = vector.broadcast %16 : vector<1x32xf32> to vector<512x32xf32>
    %19 = arith.mulf %17, %18 : vector<512x32xf32>
    %20 = arith.addf %12, %19 : vector<512x32xf32>
    %c9 = arith.constant 9 : index
    %c0_14 = arith.constant 0 : index
    %21 = vector.load %arg18[%c9, %c0_14] : memref<560x1xf32, #tpu.memory_space<vmem>>, vector<512x1xf32>
    %c0_15 = arith.constant 0 : index
    %c2 = arith.constant 2 : index
    %22 = vector.load %arg3[%c0_15, %c2] : memref<512x9xf32, #tpu.memory_space<vmem>>, vector<512x1xf32>
    %23 = arith.mulf %21, %22 : vector<512x1xf32>
    %c2_16 = arith.constant 2 : index
    %c0_17 = arith.constant 0 : index
    %24 = vector.load %arg1[%c2_16, %c0_17] : memref<9x32xf32, #tpu.memory_space<vmem>>, vector<1x32xf32>
    %25 = vector.broadcast %23 : vector<512x1xf32> to vector<512x32xf32>
    %26 = vector.broadcast %24 : vector<1x32xf32> to vector<512x32xf32>
    %27 = arith.mulf %25, %26 : vector<512x32xf32>
    %28 = arith.addf %20, %27 : vector<512x32xf32>
    %c23 = arith.constant 23 : index
    %c0_18 = arith.constant 0 : index
    %29 = vector.load %arg18[%c23, %c0_18] : memref<560x1xf32, #tpu.memory_space<vmem>>, vector<512x1xf32>
    %c0_19 = arith.constant 0 : index
    %c3 = arith.constant 3 : index
    %30 = vector.load %arg3[%c0_19, %c3] : memref<512x9xf32, #tpu.memory_space<vmem>>, vector<512x1xf32>
    %31 = arith.mulf %29, %30 : vector<512x1xf32>
    %c3_20 = arith.constant 3 : index
    %c0_21 = arith.constant 0 : index
    %32 = vector.load %arg1[%c3_20, %c0_21] : memref<9x32xf32, #tpu.memory_space<vmem>>, vector<1x32xf32>
    %33 = vector.broadcast %31 : vector<512x1xf32> to vector<512x32xf32>
    %34 = vector.broadcast %32 : vector<1x32xf32> to vector<512x32xf32>
    %35 = arith.mulf %33, %34 : vector<512x32xf32>
    %36 = arith.addf %28, %35 : vector<512x32xf32>
    %c24_22 = arith.constant 24 : index
    %c0_23 = arith.constant 0 : index
    %37 = vector.load %arg18[%c24_22, %c0_23] : memref<560x1xf32, #tpu.memory_space<vmem>>, vector<512x1xf32>
    %c0_24 = arith.constant 0 : index
    %c4 = arith.constant 4 : index
    %38 = vector.load %arg3[%c0_24, %c4] : memref<512x9xf32, #tpu.memory_space<vmem>>, vector<512x1xf32>
    %39 = arith.mulf %37, %38 : vector<512x1xf32>
    %c4_25 = arith.constant 4 : index
    %c0_26 = arith.constant 0 : index
    %40 = vector.load %arg1[%c4_25, %c0_26] : memref<9x32xf32, #tpu.memory_space<vmem>>, vector<1x32xf32>
    %41 = vector.broadcast %39 : vector<512x1xf32> to vector<512x32xf32>
    %42 = vector.broadcast %40 : vector<1x32xf32> to vector<512x32xf32>
    %43 = arith.mulf %41, %42 : vector<512x32xf32>
    %44 = arith.addf %36, %43 : vector<512x32xf32>
    %c25 = arith.constant 25 : index
    %c0_27 = arith.constant 0 : index
    %45 = vector.load %arg18[%c25, %c0_27] : memref<560x1xf32, #tpu.memory_space<vmem>>, vector<512x1xf32>
    %c0_28 = arith.constant 0 : index
    %c5 = arith.constant 5 : index
    %46 = vector.load %arg3[%c0_28, %c5] : memref<512x9xf32, #tpu.memory_space<vmem>>, vector<512x1xf32>
    %47 = arith.mulf %45, %46 : vector<512x1xf32>
    %c5_29 = arith.constant 5 : index
    %c0_30 = arith.constant 0 : index
    %48 = vector.load %arg1[%c5_29, %c0_30] : memref<9x32xf32, #tpu.memory_space<vmem>>, vector<1x32xf32>
    %49 = vector.broadcast %47 : vector<512x1xf32> to vector<512x32xf32>
    %50 = vector.broadcast %48 : vector<1x32xf32> to vector<512x32xf32>
    %51 = arith.mulf %49, %50 : vector<512x32xf32>
    %52 = arith.addf %44, %51 : vector<512x32xf32>
    %c39 = arith.constant 39 : index
    %c0_31 = arith.constant 0 : index
    %53 = vector.load %arg18[%c39, %c0_31] : memref<560x1xf32, #tpu.memory_space<vmem>>, vector<512x1xf32>
    %c0_32 = arith.constant 0 : index
    %c6 = arith.constant 6 : index
    %54 = vector.load %arg3[%c0_32, %c6] : memref<512x9xf32, #tpu.memory_space<vmem>>, vector<512x1xf32>
    %55 = arith.mulf %53, %54 : vector<512x1xf32>
    %c6_33 = arith.constant 6 : index
    %c0_34 = arith.constant 0 : index
    %56 = vector.load %arg1[%c6_33, %c0_34] : memref<9x32xf32, #tpu.memory_space<vmem>>, vector<1x32xf32>
    %57 = vector.broadcast %55 : vector<512x1xf32> to vector<512x32xf32>
    %58 = vector.broadcast %56 : vector<1x32xf32> to vector<512x32xf32>
    %59 = arith.mulf %57, %58 : vector<512x32xf32>
    %60 = arith.addf %52, %59 : vector<512x32xf32>
    %c40 = arith.constant 40 : index
    %c0_35 = arith.constant 0 : index
    %61 = vector.load %arg18[%c40, %c0_35] : memref<560x1xf32, #tpu.memory_space<vmem>>, vector<512x1xf32>
    %c0_36 = arith.constant 0 : index
    %c7_37 = arith.constant 7 : index
    %62 = vector.load %arg3[%c0_36, %c7_37] : memref<512x9xf32, #tpu.memory_space<vmem>>, vector<512x1xf32>
    %63 = arith.mulf %61, %62 : vector<512x1xf32>
    %c7_38 = arith.constant 7 : index
    %c0_39 = arith.constant 0 : index
    %64 = vector.load %arg1[%c7_38, %c0_39] : memref<9x32xf32, #tpu.memory_space<vmem>>, vector<1x32xf32>
    %65 = vector.broadcast %63 : vector<512x1xf32> to vector<512x32xf32>
    %66 = vector.broadcast %64 : vector<1x32xf32> to vector<512x32xf32>
    %67 = arith.mulf %65, %66 : vector<512x32xf32>
    %68 = arith.addf %60, %67 : vector<512x32xf32>
    %c41 = arith.constant 41 : index
    %c0_40 = arith.constant 0 : index
    %69 = vector.load %arg18[%c41, %c0_40] : memref<560x1xf32, #tpu.memory_space<vmem>>, vector<512x1xf32>
    %c0_41 = arith.constant 0 : index
    %c8_42 = arith.constant 8 : index
    %70 = vector.load %arg3[%c0_41, %c8_42] : memref<512x9xf32, #tpu.memory_space<vmem>>, vector<512x1xf32>
    %71 = arith.mulf %69, %70 : vector<512x1xf32>
    %c8_43 = arith.constant 8 : index
    %c0_44 = arith.constant 0 : index
    %72 = vector.load %arg1[%c8_43, %c0_44] : memref<9x32xf32, #tpu.memory_space<vmem>>, vector<1x32xf32>
    %73 = vector.broadcast %71 : vector<512x1xf32> to vector<512x32xf32>
    %74 = vector.broadcast %72 : vector<1x32xf32> to vector<512x32xf32>
    %75 = arith.mulf %73, %74 : vector<512x32xf32>
    %76 = arith.addf %68, %75 : vector<512x32xf32>
    %c0_45 = arith.constant 0 : index
    %c0_46 = arith.constant 0 : index
    %77 = vector.load %arg2[%c0_45, %c0_46] : memref<1x32xf32, #tpu.memory_space<vmem>>, vector<1x32xf32>
    %78 = vector.broadcast %77 : vector<1x32xf32> to vector<512x32xf32>
    %79 = arith.addf %76, %78 : vector<512x32xf32>
    %cst_47 = arith.constant 0.000000e+00 : f32
    %80 = vector.broadcast %cst_47 : f32 to vector<512x32xf32>
    %81 = arith.maximumf %79, %80 : vector<512x32xf32>
    %cst_48 = arith.constant 0.000000e+00 : f32
    %82 = vector.broadcast %cst_48 : f32 to vector<536x32xf32>
    %c0_49 = arith.constant 0 : index
    %c0_50 = arith.constant 0 : index
    %83 = vector.load %arg19[%c0_49, %c0_50] : memref<536x32xf32, #tpu.memory_space<vmem>>, vector<536x32xf32>
    tpu.vector_store %arg19[%c0_49, %c0_50], %82 {strides = array<i32>} : memref<536x32xf32, #tpu.memory_space<vmem>>, vector<536x32xf32>,
    %c0_51 = arith.constant 0 : index
    %c0_52 = arith.constant 0 : index
    %84 = vector.load %arg19[%c0_51, %c0_52] : memref<536x32xf32, #tpu.memory_space<vmem>>, vector<512x32xf32>
    tpu.vector_store %arg19[%c0_51, %c0_52], %81 {strides = array<i32>} : memref<536x32xf32, #tpu.memory_space<vmem>>, vector<512x32xf32>,
    %c0_53 = arith.constant 0 : index
    %c0_54 = arith.constant 0 : index
    %85 = vector.load %arg19[%c0_53, %c0_54] : memref<536x32xf32, #tpu.memory_space<vmem>>, vector<512x32xf32>
    %c1_55 = arith.constant 1 : index
    %c0_56 = arith.constant 0 : index
    %86 = vector.load %arg19[%c1_55, %c0_56] : memref<536x32xf32, #tpu.memory_space<vmem>>, vector<512x32xf32>
    %87 = arith.maximumf %85, %86 : vector<512x32xf32>
    %c16 = arith.constant 16 : index
    %c0_57 = arith.constant 0 : index
    %88 = vector.load %arg19[%c16, %c0_57] : memref<536x32xf32, #tpu.memory_space<vmem>>, vector<512x32xf32>
    %c17 = arith.constant 17 : index
    %c0_58 = arith.constant 0 : index
    %89 = vector.load %arg19[%c17, %c0_58] : memref<536x32xf32, #tpu.memory_space<vmem>>, vector<512x32xf32>
    %90 = arith.maximumf %88, %89 : vector<512x32xf32>
    %91 = arith.maximumf %87, %90 : vector<512x32xf32>
    %c0_59 = arith.constant 0 : index
    %c0_60 = arith.constant 0 : index
    %92 = vector.load %arg4[%c0_59, %c0_60] : memref<128x512xf32, #tpu.memory_space<vmem>>, vector<128x512xf32>
    %cst_61 = arith.constant dense<0.000000e+00> : vector<128x32xf32>
    %93 = tpu.matmul %92, %91, %cst_61 {dimension_numbers = #tpu.dot_dimension_numbers<[1], [0], [0], [1], [0, 0, 1, 1], [], []>} : vector<128x512xf32>, vector<512x32xf32>, vector<128x32xf32> -> vector<128x32xf32>
    %cst_62 = arith.constant 0.000000e+00 : f32
    %94 = vector.broadcast %cst_62 : f32 to vector<160x32xf32>
    %c0_63 = arith.constant 0 : index
    %c0_64 = arith.constant 0 : index
    %95 = vector.load %arg20[%c0_63, %c0_64] : memref<160x32xf32, #tpu.memory_space<vmem>>, vector<160x32xf32>
    tpu.vector_store %arg20[%c0_63, %c0_64], %94 {strides = array<i32>} : memref<160x32xf32, #tpu.memory_space<vmem>>, vector<160x32xf32>,
    %c16_65 = arith.constant 16 : index
    %c0_66 = arith.constant 0 : index
    %96 = vector.load %arg20[%c16_65, %c0_66] : memref<160x32xf32, #tpu.memory_space<vmem>>, vector<128x32xf32>
    tpu.vector_store %arg20[%c16_65, %c0_66], %93 {strides = array<i32>} : memref<160x32xf32, #tpu.memory_space<vmem>>, vector<128x32xf32>,
    %cst_67 = arith.constant 0.000000e+00 : f32
    %97 = vector.broadcast %cst_67 : f32 to vector<128x64xf32>
    %c7_68 = arith.constant 7 : index
    %c0_69 = arith.constant 0 : index
    %98 = vector.load %arg20[%c7_68, %c0_69] : memref<160x32xf32, #tpu.memory_space<vmem>>, vector<128x32xf32>
    %c0_70 = arith.constant 0 : index
    %c0_71 = arith.constant 0 : index
    %99 = vector.load %arg7[%c0_70, %c0_71] : memref<128x9xf32, #tpu.memory_space<vmem>>, vector<128x1xf32>
    %100 = vector.broadcast %99 : vector<128x1xf32> to vector<128x32xf32>
    %101 = arith.mulf %98, %100 : vector<128x32xf32>
    %c0_72 = arith.constant 0 : index
    %c0_73 = arith.constant 0 : index
    %102 = vector.load %arg5[%c0_72, %c0_73] : memref<288x64xbf16, #tpu.memory_space<vmem>>, vector<32x64xbf16>
    %103 = arith.truncf %101 : vector<128x32xf32> to vector<128x32xbf16>
    %cst_74 = arith.constant dense<0.000000e+00> : vector<128x64xf32>
    %104 = tpu.matmul %103, %102, %cst_74 {dimension_numbers = #tpu.dot_dimension_numbers<[1], [0], [0], [1], [0, 0, 1, 1], [], []>} : vector<128x32xbf16>, vector<32x64xbf16>, vector<128x64xf32> -> vector<128x64xf32>
    %105 = arith.addf %97, %104 : vector<128x64xf32>
    %c8_75 = arith.constant 8 : index
    %c0_76 = arith.constant 0 : index
    %106 = vector.load %arg20[%c8_75, %c0_76] : memref<160x32xf32, #tpu.memory_space<vmem>>, vector<128x32xf32>
    %c0_77 = arith.constant 0 : index
    %c1_78 = arith.constant 1 : index
    %107 = vector.load %arg7[%c0_77, %c1_78] : memref<128x9xf32, #tpu.memory_space<vmem>>, vector<128x1xf32>
    %108 = vector.broadcast %107 : vector<128x1xf32> to vector<128x32xf32>
    %109 = arith.mulf %106, %108 : vector<128x32xf32>
    %c32 = arith.constant 32 : index
    %c0_79 = arith.constant 0 : index
    %110 = vector.load %arg5[%c32, %c0_79] : memref<288x64xbf16, #tpu.memory_space<vmem>>, vector<32x64xbf16>
    %111 = arith.truncf %109 : vector<128x32xf32> to vector<128x32xbf16>
    %cst_80 = arith.constant dense<0.000000e+00> : vector<128x64xf32>
    %112 = tpu.matmul %111, %110, %cst_80 {dimension_numbers = #tpu.dot_dimension_numbers<[1], [0], [0], [1], [0, 0, 1, 1], [], []>} : vector<128x32xbf16>, vector<32x64xbf16>, vector<128x64xf32> -> vector<128x64xf32>
    %113 = arith.addf %105, %112 : vector<128x64xf32>
    %c9_81 = arith.constant 9 : index
    %c0_82 = arith.constant 0 : index
    %114 = vector.load %arg20[%c9_81, %c0_82] : memref<160x32xf32, #tpu.memory_space<vmem>>, vector<128x32xf32>
    %c0_83 = arith.constant 0 : index
    %c2_84 = arith.constant 2 : index
    %115 = vector.load %arg7[%c0_83, %c2_84] : memref<128x9xf32, #tpu.memory_space<vmem>>, vector<128x1xf32>
    %116 = vector.broadcast %115 : vector<128x1xf32> to vector<128x32xf32>
    %117 = arith.mulf %114, %116 : vector<128x32xf32>
    %c64 = arith.constant 64 : index
    %c0_85 = arith.constant 0 : index
    %118 = vector.load %arg5[%c64, %c0_85] : memref<288x64xbf16, #tpu.memory_space<vmem>>, vector<32x64xbf16>
    %119 = arith.truncf %117 : vector<128x32xf32> to vector<128x32xbf16>
    %cst_86 = arith.constant dense<0.000000e+00> : vector<128x64xf32>
    %120 = tpu.matmul %119, %118, %cst_86 {dimension_numbers = #tpu.dot_dimension_numbers<[1], [0], [0], [1], [0, 0, 1, 1], [], []>} : vector<128x32xbf16>, vector<32x64xbf16>, vector<128x64xf32> -> vector<128x64xf32>
    %121 = arith.addf %113, %120 : vector<128x64xf32>
    %c15 = arith.constant 15 : index
    %c0_87 = arith.constant 0 : index
    %122 = vector.load %arg20[%c15, %c0_87] : memref<160x32xf32, #tpu.memory_space<vmem>>, vector<128x32xf32>
    %c0_88 = arith.constant 0 : index
    %c3_89 = arith.constant 3 : index
    %123 = vector.load %arg7[%c0_88, %c3_89] : memref<128x9xf32, #tpu.memory_space<vmem>>, vector<128x1xf32>
    %124 = vector.broadcast %123 : vector<128x1xf32> to vector<128x32xf32>
    %125 = arith.mulf %122, %124 : vector<128x32xf32>
    %c96 = arith.constant 96 : index
    %c0_90 = arith.constant 0 : index
    %126 = vector.load %arg5[%c96, %c0_90] : memref<288x64xbf16, #tpu.memory_space<vmem>>, vector<32x64xbf16>
    %127 = arith.truncf %125 : vector<128x32xf32> to vector<128x32xbf16>
    %cst_91 = arith.constant dense<0.000000e+00> : vector<128x64xf32>
    %128 = tpu.matmul %127, %126, %cst_91 {dimension_numbers = #tpu.dot_dimension_numbers<[1], [0], [0], [1], [0, 0, 1, 1], [], []>} : vector<128x32xbf16>, vector<32x64xbf16>, vector<128x64xf32> -> vector<128x64xf32>
    %129 = arith.addf %121, %128 : vector<128x64xf32>
    %c16_92 = arith.constant 16 : index
    %c0_93 = arith.constant 0 : index
    %130 = vector.load %arg20[%c16_92, %c0_93] : memref<160x32xf32, #tpu.memory_space<vmem>>, vector<128x32xf32>
    %c0_94 = arith.constant 0 : index
    %c4_95 = arith.constant 4 : index
    %131 = vector.load %arg7[%c0_94, %c4_95] : memref<128x9xf32, #tpu.memory_space<vmem>>, vector<128x1xf32>
    %132 = vector.broadcast %131 : vector<128x1xf32> to vector<128x32xf32>
    %133 = arith.mulf %130, %132 : vector<128x32xf32>
    %c128 = arith.constant 128 : index
    %c0_96 = arith.constant 0 : index
    %134 = vector.load %arg5[%c128, %c0_96] : memref<288x64xbf16, #tpu.memory_space<vmem>>, vector<32x64xbf16>
    %135 = arith.truncf %133 : vector<128x32xf32> to vector<128x32xbf16>
    %cst_97 = arith.constant dense<0.000000e+00> : vector<128x64xf32>
    %136 = tpu.matmul %135, %134, %cst_97 {dimension_numbers = #tpu.dot_dimension_numbers<[1], [0], [0], [1], [0, 0, 1, 1], [], []>} : vector<128x32xbf16>, vector<32x64xbf16>, vector<128x64xf32> -> vector<128x64xf32>
    %137 = arith.addf %129, %136 : vector<128x64xf32>
    %c17_98 = arith.constant 17 : index
    %c0_99 = arith.constant 0 : index
    %138 = vector.load %arg20[%c17_98, %c0_99] : memref<160x32xf32, #tpu.memory_space<vmem>>, vector<128x32xf32>
    %c0_100 = arith.constant 0 : index
    %c5_101 = arith.constant 5 : index
    %139 = vector.load %arg7[%c0_100, %c5_101] : memref<128x9xf32, #tpu.memory_space<vmem>>, vector<128x1xf32>
    %140 = vector.broadcast %139 : vector<128x1xf32> to vector<128x32xf32>
    %141 = arith.mulf %138, %140 : vector<128x32xf32>
    %c160 = arith.constant 160 : index
    %c0_102 = arith.constant 0 : index
    %142 = vector.load %arg5[%c160, %c0_102] : memref<288x64xbf16, #tpu.memory_space<vmem>>, vector<32x64xbf16>
    %143 = arith.truncf %141 : vector<128x32xf32> to vector<128x32xbf16>
    %cst_103 = arith.constant dense<0.000000e+00> : vector<128x64xf32>
    %144 = tpu.matmul %143, %142, %cst_103 {dimension_numbers = #tpu.dot_dimension_numbers<[1], [0], [0], [1], [0, 0, 1, 1], [], []>} : vector<128x32xbf16>, vector<32x64xbf16>, vector<128x64xf32> -> vector<128x64xf32>
    %145 = arith.addf %137, %144 : vector<128x64xf32>
    %c23_104 = arith.constant 23 : index
    %c0_105 = arith.constant 0 : index
    %146 = vector.load %arg20[%c23_104, %c0_105] : memref<160x32xf32, #tpu.memory_space<vmem>>, vector<128x32xf32>
    %c0_106 = arith.constant 0 : index
    %c6_107 = arith.constant 6 : index
    %147 = vector.load %arg7[%c0_106, %c6_107] : memref<128x9xf32, #tpu.memory_space<vmem>>, vector<128x1xf32>
    %148 = vector.broadcast %147 : vector<128x1xf32> to vector<128x32xf32>
    %149 = arith.mulf %146, %148 : vector<128x32xf32>
    %c192 = arith.constant 192 : index
    %c0_108 = arith.constant 0 : index
    %150 = vector.load %arg5[%c192, %c0_108] : memref<288x64xbf16, #tpu.memory_space<vmem>>, vector<32x64xbf16>
    %151 = arith.truncf %149 : vector<128x32xf32> to vector<128x32xbf16>
    %cst_109 = arith.constant dense<0.000000e+00> : vector<128x64xf32>
    %152 = tpu.matmul %151, %150, %cst_109 {dimension_numbers = #tpu.dot_dimension_numbers<[1], [0], [0], [1], [0, 0, 1, 1], [], []>} : vector<128x32xbf16>, vector<32x64xbf16>, vector<128x64xf32> -> vector<128x64xf32>
    %153 = arith.addf %145, %152 : vector<128x64xf32>
    %c24_110 = arith.constant 24 : index
    %c0_111 = arith.constant 0 : index
    %154 = vector.load %arg20[%c24_110, %c0_111] : memref<160x32xf32, #tpu.memory_space<vmem>>, vector<128x32xf32>
    %c0_112 = arith.constant 0 : index
    %c7_113 = arith.constant 7 : index
    %155 = vector.load %arg7[%c0_112, %c7_113] : memref<128x9xf32, #tpu.memory_space<vmem>>, vector<128x1xf32>
    %156 = vector.broadcast %155 : vector<128x1xf32> to vector<128x32xf32>
    %157 = arith.mulf %154, %156 : vector<128x32xf32>
    %c224 = arith.constant 224 : index
    %c0_114 = arith.constant 0 : index
    %158 = vector.load %arg5[%c224, %c0_114] : memref<288x64xbf16, #tpu.memory_space<vmem>>, vector<32x64xbf16>
    %159 = arith.truncf %157 : vector<128x32xf32> to vector<128x32xbf16>
    %cst_115 = arith.constant dense<0.000000e+00> : vector<128x64xf32>
    %160 = tpu.matmul %159, %158, %cst_115 {dimension_numbers = #tpu.dot_dimension_numbers<[1], [0], [0], [1], [0, 0, 1, 1], [], []>} : vector<128x32xbf16>, vector<32x64xbf16>, vector<128x64xf32> -> vector<128x64xf32>
    %161 = arith.addf %153, %160 : vector<128x64xf32>
    %c25_116 = arith.constant 25 : index
    %c0_117 = arith.constant 0 : index
    %162 = vector.load %arg20[%c25_116, %c0_117] : memref<160x32xf32, #tpu.memory_space<vmem>>, vector<128x32xf32>
    %c0_118 = arith.constant 0 : index
    %c8_119 = arith.constant 8 : index
    %163 = vector.load %arg7[%c0_118, %c8_119] : memref<128x9xf32, #tpu.memory_space<vmem>>, vector<128x1xf32>
    %164 = vector.broadcast %163 : vector<128x1xf32> to vector<128x32xf32>
    %165 = arith.mulf %162, %164 : vector<128x32xf32>
    %c256 = arith.constant 256 : index
    %c0_120 = arith.constant 0 : index
    %166 = vector.load %arg5[%c256, %c0_120] : memref<288x64xbf16, #tpu.memory_space<vmem>>, vector<32x64xbf16>
    %167 = arith.truncf %165 : vector<128x32xf32> to vector<128x32xbf16>
    %cst_121 = arith.constant dense<0.000000e+00> : vector<128x64xf32>
    %168 = tpu.matmul %167, %166, %cst_121 {dimension_numbers = #tpu.dot_dimension_numbers<[1], [0], [0], [1], [0, 0, 1, 1], [], []>} : vector<128x32xbf16>, vector<32x64xbf16>, vector<128x64xf32> -> vector<128x64xf32>
    %169 = arith.addf %161, %168 : vector<128x64xf32>
    %c0_122 = arith.constant 0 : index
    %c0_123 = arith.constant 0 : index
    %170 = vector.load %arg6[%c0_122, %c0_123] : memref<1x64xf32, #tpu.memory_space<vmem>>, vector<1x64xf32>
    %171 = vector.broadcast %170 : vector<1x64xf32> to vector<128x64xf32>
    %172 = arith.addf %169, %171 : vector<128x64xf32>
    %cst_124 = arith.constant 0.000000e+00 : f32
    %173 = vector.broadcast %cst_124 : f32 to vector<128x64xf32>
    %174 = arith.maximumf %172, %173 : vector<128x64xf32>
    %cst_125 = arith.constant 0.000000e+00 : f32
    %175 = vector.broadcast %cst_125 : f32 to vector<144x64xf32>
    %c0_126 = arith.constant 0 : index
    %c0_127 = arith.constant 0 : index
    %176 = vector.load %arg21[%c0_126, %c0_127] : memref<144x64xf32, #tpu.memory_space<vmem>>, vector<144x64xf32>
    tpu.vector_store %arg21[%c0_126, %c0_127], %175 {strides = array<i32>} : memref<144x64xf32, #tpu.memory_space<vmem>>, vector<144x64xf32>,
    %c0_128 = arith.constant 0 : index
    %c0_129 = arith.constant 0 : index
    %177 = vector.load %arg21[%c0_128, %c0_129] : memref<144x64xf32, #tpu.memory_space<vmem>>, vector<128x64xf32>
    tpu.vector_store %arg21[%c0_128, %c0_129], %174 {strides = array<i32>} : memref<144x64xf32, #tpu.memory_space<vmem>>, vector<128x64xf32>,
    %c0_130 = arith.constant 0 : index
    %c0_131 = arith.constant 0 : index
    %178 = vector.load %arg21[%c0_130, %c0_131] : memref<144x64xf32, #tpu.memory_space<vmem>>, vector<128x64xf32>
    %c1_132 = arith.constant 1 : index
    %c0_133 = arith.constant 0 : index
    %179 = vector.load %arg21[%c1_132, %c0_133] : memref<144x64xf32, #tpu.memory_space<vmem>>, vector<128x64xf32>
    %180 = arith.maximumf %178, %179 : vector<128x64xf32>
    %c8_134 = arith.constant 8 : index
    %c0_135 = arith.constant 0 : index
    %181 = vector.load %arg21[%c8_134, %c0_135] : memref<144x64xf32, #tpu.memory_space<vmem>>, vector<128x64xf32>
    %c9_136 = arith.constant 9 : index
    %c0_137 = arith.constant 0 : index
    %182 = vector.load %arg21[%c9_136, %c0_137] : memref<144x64xf32, #tpu.memory_space<vmem>>, vector<128x64xf32>
    %183 = arith.maximumf %181, %182 : vector<128x64xf32>
    %184 = arith.maximumf %180, %183 : vector<128x64xf32>
    %c0_138 = arith.constant 0 : index
    %c0_139 = arith.constant 0 : index
    %185 = vector.load %arg8[%c0_138, %c0_139] : memref<32x128xf32, #tpu.memory_space<vmem>>, vector<32x128xf32>
    %cst_140 = arith.constant dense<0.000000e+00> : vector<32x64xf32>
    %186 = tpu.matmul %185, %184, %cst_140 {dimension_numbers = #tpu.dot_dimension_numbers<[1], [0], [0], [1], [0, 0, 1, 1], [], []>} : vector<32x128xf32>, vector<128x64xf32>, vector<32x64xf32> -> vector<32x64xf32>
    %cst_141 = arith.constant 0.000000e+00 : f32
    %187 = vector.broadcast %cst_141 : f32 to vector<48x64xf32>
    %c0_142 = arith.constant 0 : index
    %c0_143 = arith.constant 0 : index
    %188 = vector.load %arg22[%c0_142, %c0_143] : memref<48x64xf32, #tpu.memory_space<vmem>>, vector<48x64xf32>
    tpu.vector_store %arg22[%c0_142, %c0_143], %187 {strides = array<i32>} : memref<48x64xf32, #tpu.memory_space<vmem>>, vector<48x64xf32>,
    %c8_144 = arith.constant 8 : index
    %c0_145 = arith.constant 0 : index
    %189 = vector.load %arg22[%c8_144, %c0_145] : memref<48x64xf32, #tpu.memory_space<vmem>>, vector<32x64xf32>
    tpu.vector_store %arg22[%c8_144, %c0_145], %186 {strides = array<i32>} : memref<48x64xf32, #tpu.memory_space<vmem>>, vector<32x64xf32>,
    %cst_146 = arith.constant 0.000000e+00 : f32
    %190 = vector.broadcast %cst_146 : f32 to vector<32x128xf32>
    %c3_147 = arith.constant 3 : index
    %c0_148 = arith.constant 0 : index
    %191 = vector.load %arg22[%c3_147, %c0_148] : memref<48x64xf32, #tpu.memory_space<vmem>>, vector<32x64xf32>
    %c0_149 = arith.constant 0 : index
    %c0_150 = arith.constant 0 : index
    %192 = vector.load %arg11[%c0_149, %c0_150] : memref<32x9xf32, #tpu.memory_space<vmem>>, vector<32x1xf32>
    %193 = vector.broadcast %192 : vector<32x1xf32> to vector<32x64xf32>
    %194 = arith.mulf %191, %193 : vector<32x64xf32>
    %c0_151 = arith.constant 0 : index
    %c0_152 = arith.constant 0 : index
    %195 = vector.load %arg9[%c0_151, %c0_152] : memref<576x128xbf16, #tpu.memory_space<vmem>>, vector<64x128xbf16>
    %196 = arith.truncf %194 : vector<32x64xf32> to vector<32x64xbf16>
    %cst_153 = arith.constant dense<0.000000e+00> : vector<32x128xf32>
    %197 = tpu.matmul %196, %195, %cst_153 {dimension_numbers = #tpu.dot_dimension_numbers<[1], [0], [0], [1], [0, 0, 1, 1], [], []>} : vector<32x64xbf16>, vector<64x128xbf16>, vector<32x128xf32> -> vector<32x128xf32>
    %198 = arith.addf %190, %197 : vector<32x128xf32>
    %c4_154 = arith.constant 4 : index
    %c0_155 = arith.constant 0 : index
    %199 = vector.load %arg22[%c4_154, %c0_155] : memref<48x64xf32, #tpu.memory_space<vmem>>, vector<32x64xf32>
    %c0_156 = arith.constant 0 : index
    %c1_157 = arith.constant 1 : index
    %200 = vector.load %arg11[%c0_156, %c1_157] : memref<32x9xf32, #tpu.memory_space<vmem>>, vector<32x1xf32>
    %201 = vector.broadcast %200 : vector<32x1xf32> to vector<32x64xf32>
    %202 = arith.mulf %199, %201 : vector<32x64xf32>
    %c64_158 = arith.constant 64 : index
    %c0_159 = arith.constant 0 : index
    %203 = vector.load %arg9[%c64_158, %c0_159] : memref<576x128xbf16, #tpu.memory_space<vmem>>, vector<64x128xbf16>
    %204 = arith.truncf %202 : vector<32x64xf32> to vector<32x64xbf16>
    %cst_160 = arith.constant dense<0.000000e+00> : vector<32x128xf32>
    %205 = tpu.matmul %204, %203, %cst_160 {dimension_numbers = #tpu.dot_dimension_numbers<[1], [0], [0], [1], [0, 0, 1, 1], [], []>} : vector<32x64xbf16>, vector<64x128xbf16>, vector<32x128xf32> -> vector<32x128xf32>
    %206 = arith.addf %198, %205 : vector<32x128xf32>
    %c5_161 = arith.constant 5 : index
    %c0_162 = arith.constant 0 : index
    %207 = vector.load %arg22[%c5_161, %c0_162] : memref<48x64xf32, #tpu.memory_space<vmem>>, vector<32x64xf32>
    %c0_163 = arith.constant 0 : index
    %c2_164 = arith.constant 2 : index
    %208 = vector.load %arg11[%c0_163, %c2_164] : memref<32x9xf32, #tpu.memory_space<vmem>>, vector<32x1xf32>
    %209 = vector.broadcast %208 : vector<32x1xf32> to vector<32x64xf32>
    %210 = arith.mulf %207, %209 : vector<32x64xf32>
    %c128_165 = arith.constant 128 : index
    %c0_166 = arith.constant 0 : index
    %211 = vector.load %arg9[%c128_165, %c0_166] : memref<576x128xbf16, #tpu.memory_space<vmem>>, vector<64x128xbf16>
    %212 = arith.truncf %210 : vector<32x64xf32> to vector<32x64xbf16>
    %cst_167 = arith.constant dense<0.000000e+00> : vector<32x128xf32>
    %213 = tpu.matmul %212, %211, %cst_167 {dimension_numbers = #tpu.dot_dimension_numbers<[1], [0], [0], [1], [0, 0, 1, 1], [], []>} : vector<32x64xbf16>, vector<64x128xbf16>, vector<32x128xf32> -> vector<32x128xf32>
    %214 = arith.addf %206, %213 : vector<32x128xf32>
    %c7_168 = arith.constant 7 : index
    %c0_169 = arith.constant 0 : index
    %215 = vector.load %arg22[%c7_168, %c0_169] : memref<48x64xf32, #tpu.memory_space<vmem>>, vector<32x64xf32>
    %c0_170 = arith.constant 0 : index
    %c3_171 = arith.constant 3 : index
    %216 = vector.load %arg11[%c0_170, %c3_171] : memref<32x9xf32, #tpu.memory_space<vmem>>, vector<32x1xf32>
    %217 = vector.broadcast %216 : vector<32x1xf32> to vector<32x64xf32>
    %218 = arith.mulf %215, %217 : vector<32x64xf32>
    %c192_172 = arith.constant 192 : index
    %c0_173 = arith.constant 0 : index
    %219 = vector.load %arg9[%c192_172, %c0_173] : memref<576x128xbf16, #tpu.memory_space<vmem>>, vector<64x128xbf16>
    %220 = arith.truncf %218 : vector<32x64xf32> to vector<32x64xbf16>
    %cst_174 = arith.constant dense<0.000000e+00> : vector<32x128xf32>
    %221 = tpu.matmul %220, %219, %cst_174 {dimension_numbers = #tpu.dot_dimension_numbers<[1], [0], [0], [1], [0, 0, 1, 1], [], []>} : vector<32x64xbf16>, vector<64x128xbf16>, vector<32x128xf32> -> vector<32x128xf32>
    %222 = arith.addf %214, %221 : vector<32x128xf32>
    %c8_175 = arith.constant 8 : index
    %c0_176 = arith.constant 0 : index
    %223 = vector.load %arg22[%c8_175, %c0_176] : memref<48x64xf32, #tpu.memory_space<vmem>>, vector<32x64xf32>
    %c0_177 = arith.constant 0 : index
    %c4_178 = arith.constant 4 : index
    %224 = vector.load %arg11[%c0_177, %c4_178] : memref<32x9xf32, #tpu.memory_space<vmem>>, vector<32x1xf32>
    %225 = vector.broadcast %224 : vector<32x1xf32> to vector<32x64xf32>
    %226 = arith.mulf %223, %225 : vector<32x64xf32>
    %c256_179 = arith.constant 256 : index
    %c0_180 = arith.constant 0 : index
    %227 = vector.load %arg9[%c256_179, %c0_180] : memref<576x128xbf16, #tpu.memory_space<vmem>>, vector<64x128xbf16>
    %228 = arith.truncf %226 : vector<32x64xf32> to vector<32x64xbf16>
    %cst_181 = arith.constant dense<0.000000e+00> : vector<32x128xf32>
    %229 = tpu.matmul %228, %227, %cst_181 {dimension_numbers = #tpu.dot_dimension_numbers<[1], [0], [0], [1], [0, 0, 1, 1], [], []>} : vector<32x64xbf16>, vector<64x128xbf16>, vector<32x128xf32> -> vector<32x128xf32>
    %230 = arith.addf %222, %229 : vector<32x128xf32>
    %c9_182 = arith.constant 9 : index
    %c0_183 = arith.constant 0 : index
    %231 = vector.load %arg22[%c9_182, %c0_183] : memref<48x64xf32, #tpu.memory_space<vmem>>, vector<32x64xf32>
    %c0_184 = arith.constant 0 : index
    %c5_185 = arith.constant 5 : index
    %232 = vector.load %arg11[%c0_184, %c5_185] : memref<32x9xf32, #tpu.memory_space<vmem>>, vector<32x1xf32>
    %233 = vector.broadcast %232 : vector<32x1xf32> to vector<32x64xf32>
    %234 = arith.mulf %231, %233 : vector<32x64xf32>
    %c320 = arith.constant 320 : index
    %c0_186 = arith.constant 0 : index
    %235 = vector.load %arg9[%c320, %c0_186] : memref<576x128xbf16, #tpu.memory_space<vmem>>, vector<64x128xbf16>
    %236 = arith.truncf %234 : vector<32x64xf32> to vector<32x64xbf16>
    %cst_187 = arith.constant dense<0.000000e+00> : vector<32x128xf32>
    %237 = tpu.matmul %236, %235, %cst_187 {dimension_numbers = #tpu.dot_dimension_numbers<[1], [0], [0], [1], [0, 0, 1, 1], [], []>} : vector<32x64xbf16>, vector<64x128xbf16>, vector<32x128xf32> -> vector<32x128xf32>
    %238 = arith.addf %230, %237 : vector<32x128xf32>
    %c11 = arith.constant 11 : index
    %c0_188 = arith.constant 0 : index
    %239 = vector.load %arg22[%c11, %c0_188] : memref<48x64xf32, #tpu.memory_space<vmem>>, vector<32x64xf32>
    %c0_189 = arith.constant 0 : index
    %c6_190 = arith.constant 6 : index
    %240 = vector.load %arg11[%c0_189, %c6_190] : memref<32x9xf32, #tpu.memory_space<vmem>>, vector<32x1xf32>
    %241 = vector.broadcast %240 : vector<32x1xf32> to vector<32x64xf32>
    %242 = arith.mulf %239, %241 : vector<32x64xf32>
    %c384 = arith.constant 384 : index
    %c0_191 = arith.constant 0 : index
    %243 = vector.load %arg9[%c384, %c0_191] : memref<576x128xbf16, #tpu.memory_space<vmem>>, vector<64x128xbf16>
    %244 = arith.truncf %242 : vector<32x64xf32> to vector<32x64xbf16>
    %cst_192 = arith.constant dense<0.000000e+00> : vector<32x128xf32>
    %245 = tpu.matmul %244, %243, %cst_192 {dimension_numbers = #tpu.dot_dimension_numbers<[1], [0], [0], [1], [0, 0, 1, 1], [], []>} : vector<32x64xbf16>, vector<64x128xbf16>, vector<32x128xf32> -> vector<32x128xf32>
    %246 = arith.addf %238, %245 : vector<32x128xf32>
    %c12 = arith.constant 12 : index
    %c0_193 = arith.constant 0 : index
    %247 = vector.load %arg22[%c12, %c0_193] : memref<48x64xf32, #tpu.memory_space<vmem>>, vector<32x64xf32>
    %c0_194 = arith.constant 0 : index
    %c7_195 = arith.constant 7 : index
    %248 = vector.load %arg11[%c0_194, %c7_195] : memref<32x9xf32, #tpu.memory_space<vmem>>, vector<32x1xf32>
    %249 = vector.broadcast %248 : vector<32x1xf32> to vector<32x64xf32>
    %250 = arith.mulf %247, %249 : vector<32x64xf32>
    %c448 = arith.constant 448 : index
    %c0_196 = arith.constant 0 : index
    %251 = vector.load %arg9[%c448, %c0_196] : memref<576x128xbf16, #tpu.memory_space<vmem>>, vector<64x128xbf16>
    %252 = arith.truncf %250 : vector<32x64xf32> to vector<32x64xbf16>
    %cst_197 = arith.constant dense<0.000000e+00> : vector<32x128xf32>
    %253 = tpu.matmul %252, %251, %cst_197 {dimension_numbers = #tpu.dot_dimension_numbers<[1], [0], [0], [1], [0, 0, 1, 1], [], []>} : vector<32x64xbf16>, vector<64x128xbf16>, vector<32x128xf32> -> vector<32x128xf32>
    %254 = arith.addf %246, %253 : vector<32x128xf32>
    %c13 = arith.constant 13 : index
    %c0_198 = arith.constant 0 : index
    %255 = vector.load %arg22[%c13, %c0_198] : memref<48x64xf32, #tpu.memory_space<vmem>>, vector<32x64xf32>
    %c0_199 = arith.constant 0 : index
    %c8_200 = arith.constant 8 : index
    %256 = vector.load %arg11[%c0_199, %c8_200] : memref<32x9xf32, #tpu.memory_space<vmem>>, vector<32x1xf32>
    %257 = vector.broadcast %256 : vector<32x1xf32> to vector<32x64xf32>
    %258 = arith.mulf %255, %257 : vector<32x64xf32>
    %c512 = arith.constant 512 : index
    %c0_201 = arith.constant 0 : index
    %259 = vector.load %arg9[%c512, %c0_201] : memref<576x128xbf16, #tpu.memory_space<vmem>>, vector<64x128xbf16>
    %260 = arith.truncf %258 : vector<32x64xf32> to vector<32x64xbf16>
    %cst_202 = arith.constant dense<0.000000e+00> : vector<32x128xf32>
    %261 = tpu.matmul %260, %259, %cst_202 {dimension_numbers = #tpu.dot_dimension_numbers<[1], [0], [0], [1], [0, 0, 1, 1], [], []>} : vector<32x64xbf16>, vector<64x128xbf16>, vector<32x128xf32> -> vector<32x128xf32>
    %262 = arith.addf %254, %261 : vector<32x128xf32>
    %c0_203 = arith.constant 0 : index
    %c0_204 = arith.constant 0 : index
    %263 = vector.load %arg10[%c0_203, %c0_204] : memref<1x128xf32, #tpu.memory_space<vmem>>, vector<1x128xf32>
    %264 = vector.broadcast %263 : vector<1x128xf32> to vector<32x128xf32>
    %265 = arith.addf %262, %264 : vector<32x128xf32>
    %cst_205 = arith.constant 0.000000e+00 : f32
    %266 = vector.broadcast %cst_205 : f32 to vector<32x128xf32>
    %267 = arith.maximumf %265, %266 : vector<32x128xf32>
    %cst_206 = arith.constant 0.000000e+00 : f32
    %268 = vector.broadcast %cst_206 : f32 to vector<40x128xf32>
    %c0_207 = arith.constant 0 : index
    %c0_208 = arith.constant 0 : index
    %269 = vector.load %arg23[%c0_207, %c0_208] : memref<40x128xf32, #tpu.memory_space<vmem>>, vector<40x128xf32>
    tpu.vector_store %arg23[%c0_207, %c0_208], %268 {strides = array<i32>} : memref<40x128xf32, #tpu.memory_space<vmem>>, vector<40x128xf32>,
    %c0_209 = arith.constant 0 : index
    %c0_210 = arith.constant 0 : index
    %270 = vector.load %arg23[%c0_209, %c0_210] : memref<40x128xf32, #tpu.memory_space<vmem>>, vector<32x128xf32>
    tpu.vector_store %arg23[%c0_209, %c0_210], %267 {strides = array<i32>} : memref<40x128xf32, #tpu.memory_space<vmem>>, vector<32x128xf32>,
    %c0_211 = arith.constant 0 : index
    %c0_212 = arith.constant 0 : index
    %271 = vector.load %arg23[%c0_211, %c0_212] : memref<40x128xf32, #tpu.memory_space<vmem>>, vector<32x128xf32>
    %c1_213 = arith.constant 1 : index
    %c0_214 = arith.constant 0 : index
    %272 = vector.load %arg23[%c1_213, %c0_214] : memref<40x128xf32, #tpu.memory_space<vmem>>, vector<32x128xf32>
    %273 = arith.maximumf %271, %272 : vector<32x128xf32>
    %c4_215 = arith.constant 4 : index
    %c0_216 = arith.constant 0 : index
    %274 = vector.load %arg23[%c4_215, %c0_216] : memref<40x128xf32, #tpu.memory_space<vmem>>, vector<32x128xf32>
    %c5_217 = arith.constant 5 : index
    %c0_218 = arith.constant 0 : index
    %275 = vector.load %arg23[%c5_217, %c0_218] : memref<40x128xf32, #tpu.memory_space<vmem>>, vector<32x128xf32>
    %276 = arith.maximumf %274, %275 : vector<32x128xf32>
    %277 = arith.maximumf %273, %276 : vector<32x128xf32>
    %c0_219 = arith.constant 0 : index
    %c0_220 = arith.constant 0 : index
    %278 = vector.load %arg12[%c0_219, %c0_220] : memref<2x32xf32, #tpu.memory_space<vmem>>, vector<2x32xf32>
    %cst_221 = arith.constant dense<0.000000e+00> : vector<2x128xf32>
    %279 = tpu.matmul %278, %277, %cst_221 {dimension_numbers = #tpu.dot_dimension_numbers<[1], [0], [0], [1], [0, 0, 1, 1], [], []>} : vector<2x32xf32>, vector<32x128xf32>, vector<2x128xf32> -> vector<2x128xf32>
    %280 = arith.truncf %279 : vector<2x128xf32> to vector<2x128xbf16>
    %c0_222 = arith.constant 0 : index
    %c0_223 = arith.constant 0 : index
    %281 = vector.load %arg13[%c0_222, %c0_223] : memref<128x256xbf16, #tpu.memory_space<vmem>>, vector<128x256xbf16>
    %cst_224 = arith.constant dense<0.000000e+00> : vector<2x256xf32>
    %282 = tpu.matmul %280, %281, %cst_224 {dimension_numbers = #tpu.dot_dimension_numbers<[1], [0], [0], [1], [0, 0, 1, 1], [], []>} : vector<2x128xbf16>, vector<128x256xbf16>, vector<2x256xf32> -> vector<2x256xf32>
    %c0_225 = arith.constant 0 : index
    %c0_226 = arith.constant 0 : index
    %283 = vector.load %arg14[%c0_225, %c0_226] : memref<1x256xf32, #tpu.memory_space<vmem>>, vector<1x256xf32>
    %284 = vector.broadcast %283 : vector<1x256xf32> to vector<2x256xf32>
    %285 = arith.addf %282, %284 : vector<2x256xf32>
    %cst_227 = arith.constant 0.000000e+00 : f32
    %286 = vector.broadcast %cst_227 : f32 to vector<2x256xf32>
    %287 = arith.maximumf %285, %286 : vector<2x256xf32>
    %288 = arith.truncf %287 : vector<2x256xf32> to vector<2x256xbf16>
    %c0_228 = arith.constant 0 : index
    %c0_229 = arith.constant 0 : index
    %289 = vector.load %arg15[%c0_228, %c0_229] : memref<256x6xbf16, #tpu.memory_space<vmem>>, vector<256x6xbf16>
    %cst_230 = arith.constant dense<0.000000e+00> : vector<2x6xf32>
    %290 = tpu.matmul %288, %289, %cst_230 {dimension_numbers = #tpu.dot_dimension_numbers<[1], [0], [0], [1], [0, 0, 1, 1], [], []>} : vector<2x256xbf16>, vector<256x6xbf16>, vector<2x6xf32> -> vector<2x6xf32>
    %c0_231 = arith.constant 0 : index
    %c0_232 = arith.constant 0 : index
    %291 = vector.load %arg16[%c0_231, %c0_232] : memref<1x6xf32, #tpu.memory_space<vmem>>, vector<1x6xf32>
    %292 = vector.broadcast %291 : vector<1x6xf32> to vector<2x6xf32>
    %293 = arith.addf %290, %292 : vector<2x6xf32>
    %c0_233 = arith.constant 0 : index
    %c0_234 = arith.constant 0 : index
    %294 = vector.load %arg17[%c0_233, %c0_234] : memref<2x6xf32, #tpu.memory_space<vmem>>, vector<2x6xf32>
    tpu.vector_store %arg17[%c0_233, %c0_234], %293 {strides = array<i32>} : memref<2x6xf32, #tpu.memory_space<vmem>>, vector<2x6xf32>,
    return
  }
}

</mosaic_0001>

<llo_original>
// kernel: audio_cnn_forward.1
$region0: #{audio_cnn_forward.1}
  #allocation0 [shape = 'u32[]', space=smem, size = 0x4, offset = 0x4, fixed_abs, tag = 'smem constant byte address 0x4 - core index']
  #allocation1 [shape = 'u32[72,128]{1,0:T(1,128)}', space=vmem, size = 0x9000, scoped, tag = 'internal scratch']
  #allocation2 [shape = 'f32[560,1]{1,0:T(8,128)}', space=vmem, size = 0x46000, scoped, tag = 'scratch operand']
  #allocation3 [shape = 'f32[536,32]{1,0:T(8,128)}', space=vmem, size = 0x43000, scoped, tag = 'scratch operand']
  #allocation4 [shape = 'f32[160,32]{1,0:T(8,128)}', space=vmem, size = 0x14000, scoped, tag = 'scratch operand']
  #allocation5 [shape = 'f32[144,64]{1,0:T(8,128)}', space=vmem, size = 0x12000, scoped, tag = 'scratch operand']
  #allocation6 [shape = 'f32[48,64]{1,0:T(8,128)}', space=vmem, size = 0x6000, scoped, tag = 'scratch operand']
  #allocation7 [shape = 'f32[40,128]{1,0:T(8,128)}', space=vmem, size = 0x5000, scoped, tag = 'scratch operand']
  %s0 = inlined_call_operand.vmem [shape: f32[512,1], index: 0, kind: input, shape index: {}]
  %s1 = inlined_call_operand.vmem [shape: f32[9,32], index: 1, kind: input, shape index: {}]
  %s2 = inlined_call_operand.vmem [shape: f32[1,32], index: 2, kind: input, shape index: {}]
  %s3 = inlined_call_operand.vmem [shape: f32[512,9], index: 3, kind: input, shape index: {}]
  %s4 = inlined_call_operand.vmem [shape: f32[128,512], index: 4, kind: input, shape index: {}]
  %s5 = inlined_call_operand.vmem [shape: bf16[288,64], index: 5, kind: input, shape index: {}]
  %s6 = inlined_call_operand.vmem [shape: f32[1,64], index: 6, kind: input, shape index: {}]
  %s7 = inlined_call_operand.vmem [shape: f32[128,9], index: 7, kind: input, shape index: {}]
  %s8 = inlined_call_operand.vmem [shape: f32[32,128], index: 8, kind: input, shape index: {}]
  %s9 = inlined_call_operand.vmem [shape: bf16[576,128], index: 9, kind: input, shape index: {}]
  %s10 = inlined_call_operand.vmem [shape: f32[1,128], index: 10, kind: input, shape index: {}]
  %s11 = inlined_call_operand.vmem [shape: f32[32,9], index: 11, kind: input, shape index: {}]
  %s12 = inlined_call_operand.vmem [shape: f32[2,32], index: 12, kind: input, shape index: {}]
  %s13 = inlined_call_operand.vmem [shape: bf16[128,256], index: 13, kind: input, shape index: {}]
  %s14 = inlined_call_operand.vmem [shape: f32[1,256], index: 14, kind: input, shape index: {}]
  %s15 = inlined_call_operand.vmem [shape: bf16[256,6], index: 15, kind: input, shape index: {}]
  %s16 = inlined_call_operand.vmem [shape: f32[1,6], index: 16, kind: input, shape index: {}]
  %s17 = inlined_call_operand.hbm [shape: f32[2,6], index: 17, kind: output, shape index: {}]
  %s18 = sld [smem:[#allocation0]]
  $region78: #{audio_cnn_forward.1} parent=0
    _
  %s20 = ssub.s32 1, %s18
  %s21 = scalar_select 0, %s20, %s18
  $region1: #{audio_cnn_forward.1} parent=0
    #allocation8 [shape = 'u8[1024]{0}', space=vmem, size = 0x400, scoped, tag = 'output window, operand 0, single buffered']
    #allocation9 [shape = 's32[1]{0}', space=sflag, size = 0x4, scoped, tag = 'scoped memory for audio_cnn_forward.1']
    %22 = vsyncpa [#allocation9], 0
    // Predicated region
    $region2: #{audio_cnn_forward.1} parent=1 // pred_check
      _
    $region3: #{audio_cnn_forward.1} parent=1 // pred_check_branch
      %24 = sbr.rel (0) target = $region5
    $region4: #{audio_cnn_forward.1} parent=1 // pred_region
      _
    $region5: #{audio_cnn_forward.1} parent=1 // pred_fallthru
      _
    // Predicated region
    $region6: #{audio_cnn_forward.1} parent=1 // pred_check
      _
    $region7: #{audio_cnn_forward.1} parent=1 // pred_check_branch
      %26 = sbr.rel (0) target = $region9
    $region8: #{audio_cnn_forward.1} parent=1 // pred_region
      _
    $region9: #{audio_cnn_forward.1} parent=1 // pred_fallthru
      _
    // Predicated region
    $region10: #{audio_cnn_forward.1} parent=1 // pred_check
      _
    $region11: #{audio_cnn_forward.1} parent=1 // pred_check_branch
      %28 = sbr.rel (0) target = $region13
    $region12: #{audio_cnn_forward.1} parent=1 // pred_region
      _
    $region13: #{audio_cnn_forward.1} parent=1 // pred_fallthru
      _
    // Predicated region
    $region14: #{audio_cnn_forward.1} parent=1 // pred_check
      _
    $region15: #{audio_cnn_forward.1} parent=1 // pred_check_branch
      %30 = sbr.rel (0) target = $region17
    $region16: #{audio_cnn_forward.1} parent=1 // pred_region
      _
    $region17: #{audio_cnn_forward.1} parent=1 // pred_fallthru
      _
    // Predicated region
    $region18: #{audio_cnn_forward.1} parent=1 // pred_check
      _
    $region19: #{audio_cnn_forward.1} parent=1 // pred_check_branch
      %32 = sbr.rel (0) target = $region21
    $region20: #{audio_cnn_forward.1} parent=1 // pred_region
      _
    $region21: #{audio_cnn_forward.1} parent=1 // pred_fallthru
      _
    // Predicated region
    $region22: #{audio_cnn_forward.1} parent=1 // pred_check
      _
    $region23: #{audio_cnn_forward.1} parent=1 // pred_check_branch
      %34 = sbr.rel (0) target = $region25
    $region24: #{audio_cnn_forward.1} parent=1 // pred_region
      _
    $region25: #{audio_cnn_forward.1} parent=1 // pred_fallthru
      _
    // Predicated region
    $region26: #{audio_cnn_forward.1} parent=1 // pred_check
      _
    $region27: #{audio_cnn_forward.1} parent=1 // pred_check_branch
      %36 = sbr.rel (0) target = $region29
    $region28: #{audio_cnn_forward.1} parent=1 // pred_region
      _
    $region29: #{audio_cnn_forward.1} parent=1 // pred_fallthru
      _
    // Predicated region
    $region30: #{audio_cnn_forward.1} parent=1 // pred_check
      _
    $region31: #{audio_cnn_forward.1} parent=1 // pred_check_branch
      %38 = sbr.rel (0) target = $region33
    $region32: #{audio_cnn_forward.1} parent=1 // pred_region
      _
    $region33: #{audio_cnn_forward.1} parent=1 // pred_fallthru
      _
    // Predicated region
    $region34: #{audio_cnn_forward.1} parent=1 // pred_check
      _
    $region35: #{audio_cnn_forward.1} parent=1 // pred_check_branch
      %40 = sbr.rel (0) target = $region37
    $region36: #{audio_cnn_forward.1} parent=1 // pred_region
      _
    $region37: #{audio_cnn_forward.1} parent=1 // pred_fallthru
      _
    // Predicated region
    $region38: #{audio_cnn_forward.1} parent=1 // pred_check
      _
    $region39: #{audio_cnn_forward.1} parent=1 // pred_check_branch
      %42 = sbr.rel (0) target = $region41
    $region40: #{audio_cnn_forward.1} parent=1 // pred_region
      _
    $region41: #{audio_cnn_forward.1} parent=1 // pred_fallthru
      _
    // Predicated region
    $region42: #{audio_cnn_forward.1} parent=1 // pred_check
      _
    $region43: #{audio_cnn_forward.1} parent=1 // pred_check_branch
      %44 = sbr.rel (0) target = $region45
    $region44: #{audio_cnn_forward.1} parent=1 // pred_region
      _
    $region45: #{audio_cnn_forward.1} parent=1 // pred_fallthru
      _
    // Predicated region
    $region46: #{audio_cnn_forward.1} parent=1 // pred_check
      _
    $region47: #{audio_cnn_forward.1} parent=1 // pred_check_branch
      %46 = sbr.rel (0) target = $region49
    $region48: #{audio_cnn_forward.1} parent=1 // pred_region
      _
    $region49: #{audio_cnn_forward.1} parent=1 // pred_fallthru
      _
    // Predicated region
    $region50: #{audio_cnn_forward.1} parent=1 // pred_check
      _
    $region51: #{audio_cnn_forward.1} parent=1 // pred_check_branch
      %48 = sbr.rel (0) target = $region53
    $region52: #{audio_cnn_forward.1} parent=1 // pred_region
      _
    $region53: #{audio_cnn_forward.1} parent=1 // pred_fallthru
      _
    // Predicated region
    $region54: #{audio_cnn_forward.1} parent=1 // pred_check
      _
    $region55: #{audio_cnn_forward.1} parent=1 // pred_check_branch
      %50 = sbr.rel (0) target = $region57
    $region56: #{audio_cnn_forward.1} parent=1 // pred_region
      _
    $region57: #{audio_cnn_forward.1} parent=1 // pred_fallthru
      _
    // Predicated region
    $region58: #{audio_cnn_forward.1} parent=1 // pred_check
      _
    $region59: #{audio_cnn_forward.1} parent=1 // pred_check_branch
      %52 = sbr.rel (0) target = $region61
    $region60: #{audio_cnn_forward.1} parent=1 // pred_region
      _
    $region61: #{audio_cnn_forward.1} parent=1 // pred_fallthru
      _
    // Predicated region
    $region62: #{audio_cnn_forward.1} parent=1 // pred_check
      _
    $region63: #{audio_cnn_forward.1} parent=1 // pred_check_branch
      %54 = sbr.rel (0) target = $region65
    $region64: #{audio_cnn_forward.1} parent=1 // pred_region
      _
    $region65: #{audio_cnn_forward.1} parent=1 // pred_fallthru
      _
    // Predicated region
    $region66: #{audio_cnn_forward.1} parent=1 // pred_check
      _
    $region67: #{audio_cnn_forward.1} parent=1 // pred_check_branch
      %56 = sbr.rel (0) target = $region69
    $region68: #{audio_cnn_forward.1} parent=1 // pred_region
      _
    $region69: #{audio_cnn_forward.1} parent=1 // pred_fallthru
      _
    %v58 = vld [vmem:[%s0] sm:$0xff]
    %v59 = vld [vmem:[%s0 + $0x8] sm:$0xff]
    %v60 = vld [vmem:[%s0 + $0x10] sm:$0xff]
    %v61 = vld [vmem:[%s0 + $0x18] sm:$0xff]
    %v62 = vld [vmem:[%s0 + $0x20] sm:$0xff]
    %v63 = vld [vmem:[%s0 + $0x28] sm:$0xff]
    %v64 = vld [vmem:[%s0 + $0x30] sm:$0xff]
    %v65 = vld [vmem:[%s0 + $0x38] sm:$0xff]
    %v66 = vld [vmem:[%s0 + $0x40] sm:$0xff]
    %v67 = vld [vmem:[%s0 + $0x48] sm:$0xff]
    %v68 = vld [vmem:[%s0 + $0x50] sm:$0xff]
    %v69 = vld [vmem:[%s0 + $0x58] sm:$0xff]
    %v70 = vld [vmem:[%s0 + $0x60] sm:$0xff]
    %v71 = vld [vmem:[%s0 + $0x68] sm:$0xff]
    %v72 = vld [vmem:[%s0 + $0x70] sm:$0xff]
    %v73 = vld [vmem:[%s0 + $0x78] sm:$0xff]
    %v74 = vld [vmem:[%s0 + $0x80] sm:$0xff]
    %v75 = vld [vmem:[%s0 + $0x88] sm:$0xff]
    %v76 = vld [vmem:[%s0 + $0x90] sm:$0xff]
    %v77 = vld [vmem:[%s0 + $0x98] sm:$0xff]
    %v78 = vld [vmem:[%s0 + $0xa0] sm:$0xff]
    %v79 = vld [vmem:[%s0 + $0xa8] sm:$0xff]
    %v80 = vld [vmem:[%s0 + $0xb0] sm:$0xff]
    %v81 = vld [vmem:[%s0 + $0xb8] sm:$0xff]
    %v82 = vld [vmem:[%s0 + $0xc0] sm:$0xff]
    %v83 = vld [vmem:[%s0 + $0xc8] sm:$0xff]
    %v84 = vld [vmem:[%s0 + $0xd0] sm:$0xff]
    %v85 = vld [vmem:[%s0 + $0xd8] sm:$0xff]
    %v86 = vld [vmem:[%s0 + $0xe0] sm:$0xff]
    %v87 = vld [vmem:[%s0 + $0xe8] sm:$0xff]
    %v88 = vld [vmem:[%s0 + $0xf0] sm:$0xff]
    %v89 = vld [vmem:[%s0 + $0xf8] sm:$0xff]
    %v90 = vld [vmem:[%s0 + $0x100] sm:$0xff]
    %v91 = vld [vmem:[%s0 + $0x108] sm:$0xff]
    %v92 = vld [vmem:[%s0 + $0x110] sm:$0xff]
    %v93 = vld [vmem:[%s0 + $0x118] sm:$0xff]
    %v94 = vld [vmem:[%s0 + $0x120] sm:$0xff]
    %v95 = vld [vmem:[%s0 + $0x128] sm:$0xff]
    %v96 = vld [vmem:[%s0 + $0x130] sm:$0xff]
    %v97 = vld [vmem:[%s0 + $0x138] sm:$0xff]
    %v98 = vld [vmem:[%s0 + $0x140] sm:$0xff]
    %v99 = vld [vmem:[%s0 + $0x148] sm:$0xff]
    %v100 = vld [vmem:[%s0 + $0x150] sm:$0xff]
    %v101 = vld [vmem:[%s0 + $0x158] sm:$0xff]
    %v102 = vld [vmem:[%s0 + $0x160] sm:$0xff]
    %v103 = vld [vmem:[%s0 + $0x168] sm:$0xff]
    %v104 = vld [vmem:[%s0 + $0x170] sm:$0xff]
    %v105 = vld [vmem:[%s0 + $0x178] sm:$0xff]
    %v106 = vld [vmem:[%s0 + $0x180] sm:$0xff]
    %v107 = vld [vmem:[%s0 + $0x188] sm:$0xff]
    %v108 = vld [vmem:[%s0 + $0x190] sm:$0xff]
    %v109 = vld [vmem:[%s0 + $0x198] sm:$0xff]
    %v110 = vld [vmem:[%s0 + $0x1a0] sm:$0xff]
    %v111 = vld [vmem:[%s0 + $0x1a8] sm:$0xff]
    %v112 = vld [vmem:[%s0 + $0x1b0] sm:$0xff]
    %v113 = vld [vmem:[%s0 + $0x1b8] sm:$0xff]
    %v114 = vld [vmem:[%s0 + $0x1c0] sm:$0xff]
    %v115 = vld [vmem:[%s0 + $0x1c8] sm:$0xff]
    %v116 = vld [vmem:[%s0 + $0x1d0] sm:$0xff]
    %v117 = vld [vmem:[%s0 + $0x1d8] sm:$0xff]
    %v118 = vld [vmem:[%s0 + $0x1e0] sm:$0xff]
    %v119 = vld [vmem:[%s0 + $0x1e8] sm:$0xff]
    %v120 = vld [vmem:[%s0 + $0x1f0] sm:$0xff]
    %v121 = vld [vmem:[%s0 + $0x1f8] sm:$0xff]
    %vm122 = vcmask 7168
    %123 = vst.msk [vmem:[#allocation2] sm:$0xff] %vm122, 0.0
    %124 = vst.msk [vmem:[#allocation2 + $0x8] sm:$0xff] %vm122, 0.0
    %125 = vst.msk [vmem:[#allocation2 + $0x10] sm:$0xff] %vm122, 0.0
    %126 = vst.msk [vmem:[#allocation2 + $0x18] sm:$0xff] %vm122, 0.0
    %127 = vst.msk [vmem:[#allocation2 + $0x20] sm:$0xff] %vm122, 0.0
    %128 = vst.msk [vmem:[#allocation2 + $0x28] sm:$0xff] %vm122, 0.0
    %129 = vst.msk [vmem:[#allocation2 + $0x30] sm:$0xff] %vm122, 0.0
    %130 = vst.msk [vmem:[#allocation2 + $0x38] sm:$0xff] %vm122, 0.0
    %131 = vst.msk [vmem:[#allocation2 + $0x40] sm:$0xff] %vm122, 0.0
    %132 = vst.msk [vmem:[#allocation2 + $0x48] sm:$0xff] %vm122, 0.0
    %133 = vst.msk [vmem:[#allocation2 + $0x50] sm:$0xff] %vm122, 0.0
    %134 = vst.msk [vmem:[#allocation2 + $0x58] sm:$0xff] %vm122, 0.0
    %135 = vst.msk [vmem:[#allocation2 + $0x60] sm:$0xff] %vm122, 0.0
    %136 = vst.msk [vmem:[#allocation2 + $0x68] sm:$0xff] %vm122, 0.0
    %137 = vst.msk [vmem:[#allocation2 + $0x70] sm:$0xff] %vm122, 0.0
    %138 = vst.msk [vmem:[#allocation2 + $0x78] sm:$0xff] %vm122, 0.0
    %139 = vst.msk [vmem:[#allocation2 + $0x80] sm:$0xff] %vm122, 0.0
    %140 = vst.msk [vmem:[#allocation2 + $0x88] sm:$0xff] %vm122, 0.0
    %141 = vst.msk [vmem:[#allocation2 + $0x90] sm:$0xff] %vm122, 0.0
    %142 = vst.msk [vmem:[#allocation2 + $0x98] sm:$0xff] %vm122, 0.0
    %143 = vst.msk [vmem:[#allocation2 + $0xa0] sm:$0xff] %vm122, 0.0
    %144 = vst.msk [vmem:[#allocation2 + $0xa8] sm:$0xff] %vm122, 0.0
    %145 = vst.msk [vmem:[#allocation2 + $0xb0] sm:$0xff] %vm122, 0.0
    %146 = vst.msk [vmem:[#allocation2 + $0xb8] sm:$0xff] %vm122, 0.0
    %147 = vst.msk [vmem:[#allocation2 + $0xc0] sm:$0xff] %vm122, 0.0
    %148 = vst.msk [vmem:[#allocation2 + $0xc8] sm:$0xff] %vm122, 0.0
    %149 = vst.msk [vmem:[#allocation2 + $0xd0] sm:$0xff] %vm122, 0.0
    %150 = vst.msk [vmem:[#allocation2 + $0xd8] sm:$0xff] %vm122, 0.0
    %151 = vst.msk [vmem:[#allocation2 + $0xe0] sm:$0xff] %vm122, 0.0
    %152 = vst.msk [vmem:[#allocation2 + $0xe8] sm:$0xff] %vm122, 0.0
    %153 = vst.msk [vmem:[#allocation2 + $0xf0] sm:$0xff] %vm122, 0.0
    %154 = vst.msk [vmem:[#allocation2 + $0xf8] sm:$0xff] %vm122, 0.0
    %155 = vst.msk [vmem:[#allocation2 + $0x100] sm:$0xff] %vm122, 0.0
    %156 = vst.msk [vmem:[#allocation2 + $0x108] sm:$0xff] %vm122, 0.0
    %157 = vst.msk [vmem:[#allocation2 + $0x110] sm:$0xff] %vm122, 0.0
    %158 = vst.msk [vmem:[#allocation2 + $0x118] sm:$0xff] %vm122, 0.0
    %159 = vst.msk [vmem:[#allocation2 + $0x120] sm:$0xff] %vm122, 0.0
    %160 = vst.msk [vmem:[#allocation2 + $0x128] sm:$0xff] %vm122, 0.0
    %161 = vst.msk [vmem:[#allocation2 + $0x130] sm:$0xff] %vm122, 0.0
    %162 = vst.msk [vmem:[#allocation2 + $0x138] sm:$0xff] %vm122, 0.0
    %163 = vst.msk [vmem:[#allocation2 + $0x140] sm:$0xff] %vm122, 0.0
    %164 = vst.msk [vmem:[#allocation2 + $0x148] sm:$0xff] %vm122, 0.0
    %165 = vst.msk [vmem:[#allocation2 + $0x150] sm:$0xff] %vm122, 0.0
    %166 = vst.msk [vmem:[#allocation2 + $0x158] sm:$0xff] %vm122, 0.0
    %167 = vst.msk [vmem:[#allocation2 + $0x160] sm:$0xff] %vm122, 0.0
    %168 = vst.msk [vmem:[#allocation2 + $0x168] sm:$0xff] %vm122, 0.0
    %169 = vst.msk [vmem:[#allocation2 + $0x170] sm:$0xff] %vm122, 0.0
    %170 = vst.msk [vmem:[#allocation2 + $0x178] sm:$0xff] %vm122, 0.0
    %171 = vst.msk [vmem:[#allocation2 + $0x180] sm:$0xff] %vm122, 0.0
    %172 = vst.msk [vmem:[#allocation2 + $0x188] sm:$0xff] %vm122, 0.0
    %173 = vst.msk [vmem:[#allocation2 + $0x190] sm:$0xff] %vm122, 0.0
    %174 = vst.msk [vmem:[#allocation2 + $0x198] sm:$0xff] %vm122, 0.0
    %175 = vst.msk [vmem:[#allocation2 + $0x1a0] sm:$0xff] %vm122, 0.0
    %176 = vst.msk [vmem:[#allocation2 + $0x1a8] sm:$0xff] %vm122, 0.0
    %177 = vst.msk [vmem:[#allocation2 + $0x1b0] sm:$0xff] %vm122, 0.0
    %178 = vst.msk [vmem:[#allocation2 + $0x1b8] sm:$0xff] %vm122, 0.0
    %179 = vst.msk [vmem:[#allocation2 + $0x1c0] sm:$0xff] %vm122, 0.0
    %180 = vst.msk [vmem:[#allocation2 + $0x1c8] sm:$0xff] %vm122, 0.0
    %181 = vst.msk [vmem:[#allocation2 + $0x1d0] sm:$0xff] %vm122, 0.0
    %182 = vst.msk [vmem:[#allocation2 + $0x1d8] sm:$0xff] %vm122, 0.0
    %183 = vst.msk [vmem:[#allocation2 + $0x1e0] sm:$0xff] %vm122, 0.0
    %184 = vst.msk [vmem:[#allocation2 + $0x1e8] sm:$0xff] %vm122, 0.0
    %185 = vst.msk [vmem:[#allocation2 + $0x1f0] sm:$0xff] %vm122, 0.0
    %186 = vst.msk [vmem:[#allocation2 + $0x1f8] sm:$0xff] %vm122, 0.0
    %187 = vst.msk [vmem:[#allocation2 + $0x200] sm:$0xff] %vm122, 0.0
    %188 = vst.msk [vmem:[#allocation2 + $0x208] sm:$0xff] %vm122, 0.0
    %189 = vst.msk [vmem:[#allocation2 + $0x210] sm:$0xff] %vm122, 0.0
    %190 = vst.msk [vmem:[#allocation2 + $0x218] sm:$0xff] %vm122, 0.0
    %191 = vst.msk [vmem:[#allocation2 + $0x220] sm:$0xff] %vm122, 0.0
    %192 = vst.msk [vmem:[#allocation2 + $0x228] sm:$0xff] %vm122, 0.0
    %193 = vst.msk [vmem:[#allocation2 + $0x18] sm:$0xff] %vm122, %v58
    %194 = vst.msk [vmem:[#allocation2 + $0x20] sm:$0xff] %vm122, %v59
    %195 = vst.msk [vmem:[#allocation2 + $0x28] sm:$0xff] %vm122, %v60
    %196 = vst.msk [vmem:[#allocation2 + $0x30] sm:$0xff] %vm122, %v61
    %197 = vst.msk [vmem:[#allocation2 + $0x38] sm:$0xff] %vm122, %v62
    %198 = vst.msk [vmem:[#allocation2 + $0x40] sm:$0xff] %vm122, %v63
    %199 = vst.msk [vmem:[#allocation2 + $0x48] sm:$0xff] %vm122, %v64
    %200 = vst.msk [vmem:[#allocation2 + $0x50] sm:$0xff] %vm122, %v65
    %201 = vst.msk [vmem:[#allocation2 + $0x58] sm:$0xff] %vm122, %v66
    %202 = vst.msk [vmem:[#allocation2 + $0x60] sm:$0xff] %vm122, %v67
    %203 = vst.msk [vmem:[#allocation2 + $0x68] sm:$0xff] %vm122, %v68
    %204 = vst.msk [vmem:[#allocation2 + $0x70] sm:$0xff] %vm122, %v69
    %205 = vst.msk [vmem:[#allocation2 + $0x78] sm:$0xff] %vm122, %v70
    %206 = vst.msk [vmem:[#allocation2 + $0x80] sm:$0xff] %vm122, %v71
    %207 = vst.msk [vmem:[#allocation2 + $0x88] sm:$0xff] %vm122, %v72
    %208 = vst.msk [vmem:[#allocation2 + $0x90] sm:$0xff] %vm122, %v73
    %209 = vst.msk [vmem:[#allocation2 + $0x98] sm:$0xff] %vm122, %v74
    %210 = vst.msk [vmem:[#allocation2 + $0xa0] sm:$0xff] %vm122, %v75
    %211 = vst.msk [vmem:[#allocation2 + $0xa8] sm:$0xff] %vm122, %v76
    %212 = vst.msk [vmem:[#allocation2 + $0xb0] sm:$0xff] %vm122, %v77
    %213 = vst.msk [vmem:[#allocation2 + $0xb8] sm:$0xff] %vm122, %v78
    %214 = vst.msk [vmem:[#allocation2 + $0xc0] sm:$0xff] %vm122, %v79
    %215 = vst.msk [vmem:[#allocation2 + $0xc8] sm:$0xff] %vm122, %v80
    %216 = vst.msk [vmem:[#allocation2 + $0xd0] sm:$0xff] %vm122, %v81
    %217 = vst.msk [vmem:[#allocation2 + $0xd8] sm:$0xff] %vm122, %v82
    %218 = vst.msk [vmem:[#allocation2 + $0xe0] sm:$0xff] %vm122, %v83
    %219 = vst.msk [vmem:[#allocation2 + $0xe8] sm:$0xff] %vm122, %v84
    %220 = vst.msk [vmem:[#allocation2 + $0xf0] sm:$0xff] %vm122, %v85
    %221 = vst.msk [vmem:[#allocation2 + $0xf8] sm:$0xff] %vm122, %v86
    %222 = vst.msk [vmem:[#allocation2 + $0x100] sm:$0xff] %vm122, %v87
    %223 = vst.msk [vmem:[#allocation2 + $0x108] sm:$0xff] %vm122, %v88
    %224 = vst.msk [vmem:[#allocation2 + $0x110] sm:$0xff] %vm122, %v89
    %225 = vst.msk [vmem:[#allocation2 + $0x118] sm:$0xff] %vm122, %v90
    %226 = vst.msk [vmem:[#allocation2 + $0x120] sm:$0xff] %vm122, %v91
    %227 = vst.msk [vmem:[#allocation2 + $0x128] sm:$0xff] %vm122, %v92
    %228 = vst.msk [vmem:[#allocation2 + $0x130] sm:$0xff] %vm122, %v93
    %229 = vst.msk [vmem:[#allocation2 + $0x138] sm:$0xff] %vm122, %v94
    %230 = vst.msk [vmem:[#allocation2 + $0x140] sm:$0xff] %vm122, %v95
    %231 = vst.msk [vmem:[#allocation2 + $0x148] sm:$0xff] %vm122, %v96
    %232 = vst.msk [vmem:[#allocation2 + $0x150] sm:$0xff] %vm122, %v97
    %233 = vst.msk [vmem:[#allocation2 + $0x158] sm:$0xff] %vm122, %v98
    %234 = vst.msk [vmem:[#allocation2 + $0x160] sm:$0xff] %vm122, %v99
    %235 = vst.msk [vmem:[#allocation2 + $0x168] sm:$0xff] %vm122, %v100
    %236 = vst.msk [vmem:[#allocation2 + $0x170] sm:$0xff] %vm122, %v101
    %237 = vst.msk [vmem:[#allocation2 + $0x178] sm:$0xff] %vm122, %v102
    %238 = vst.msk [vmem:[#allocation2 + $0x180] sm:$0xff] %vm122, %v103
    %239 = vst.msk [vmem:[#allocation2 + $0x188] sm:$0xff] %vm122, %v104
    %240 = vst.msk [vmem:[#allocation2 + $0x190] sm:$0xff] %vm122, %v105
    %241 = vst.msk [vmem:[#allocation2 + $0x198] sm:$0xff] %vm122, %v106
    %242 = vst.msk [vmem:[#allocation2 + $0x1a0] sm:$0xff] %vm122, %v107
    %243 = vst.msk [vmem:[#allocation2 + $0x1a8] sm:$0xff] %vm122, %v108
    %244 = vst.msk [vmem:[#allocation2 + $0x1b0] sm:$0xff] %vm122, %v109
    %245 = vst.msk [vmem:[#allocation2 + $0x1b8] sm:$0xff] %vm122, %v110
    %246 = vst.msk [vmem:[#allocation2 + $0x1c0] sm:$0xff] %vm122, %v111
    %247 = vst.msk [vmem:[#allocation2 + $0x1c8] sm:$0xff] %vm122, %v112
    %248 = vst.msk [vmem:[#allocation2 + $0x1d0] sm:$0xff] %vm122, %v113
    %249 = vst.msk [vmem:[#allocation2 + $0x1d8] sm:$0xff] %vm122, %v114
    %250 = vst.msk [vmem:[#allocation2 + $0x1e0] sm:$0xff] %vm122, %v115
    %251 = vst.msk [vmem:[#allocation2 + $0x1e8] sm:$0xff] %vm122, %v116
    %252 = vst.msk [vmem:[#allocation2 + $0x1f0] sm:$0xff] %vm122, %v117
    %253 = vst.msk [vmem:[#allocation2 + $0x1f8] sm:$0xff] %vm122, %v118
    %254 = vst.msk [vmem:[#allocation2 + $0x200] sm:$0xff] %vm122, %v119
    %255 = vst.msk [vmem:[#allocation2 + $0x208] sm:$0xff] %vm122, %v120
    %256 = vst.msk [vmem:[#allocation2 + $0x210] sm:$0xff] %vm122, %v121
    %v257 = vld [vmem:[#allocation2 + $0x7] sm:$0xff]
    %v258 = vld [vmem:[#allocation2 + $0xf] sm:$0xff]
    %v259 = vld [vmem:[#allocation2 + $0x17] sm:$0xff]
    %v260 = vld [vmem:[#allocation2 + $0x1f] sm:$0xff]
    %v261 = vld [vmem:[#allocation2 + $0x27] sm:$0xff]
    %v262 = vld [vmem:[#allocation2 + $0x2f] sm:$0xff]
    %v263 = vld [vmem:[#allocation2 + $0x37] sm:$0xff]
    %v264 = vld [vmem:[#allocation2 + $0x3f] sm:$0xff]
    %v265 = vld [vmem:[#allocation2 + $0x47] sm:$0xff]
    %v266 = vld [vmem:[#allocation2 + $0x4f] sm:$0xff]
    %v267 = vld [vmem:[#allocation2 + $0x57] sm:$0xff]
    %v268 = vld [vmem:[#allocation2 + $0x5f] sm:$0xff]
    %v269 = vld [vmem:[#allocation2 + $0x67] sm:$0xff]
    %v270 = vld [vmem:[#allocation2 + $0x6f] sm:$0xff]
    %v271 = vld [vmem:[#allocation2 + $0x77] sm:$0xff]
    %v272 = vld [vmem:[#allocation2 + $0x7f] sm:$0xff]
    %v273 = vld [vmem:[#allocation2 + $0x87] sm:$0xff]
    %v274 = vld [vmem:[#allocation2 + $0x8f] sm:$0xff]
    %v275 = vld [vmem:[#allocation2 + $0x97] sm:$0xff]
    %v276 = vld [vmem:[#allocation2 + $0x9f] sm:$0xff]
    %v277 = vld [vmem:[#allocation2 + $0xa7] sm:$0xff]
    %v278 = vld [vmem:[#allocation2 + $0xaf] sm:$0xff]
    %v279 = vld [vmem:[#allocation2 + $0xb7] sm:$0xff]
    %v280 = vld [vmem:[#allocation2 + $0xbf] sm:$0xff]
    %v281 = vld [vmem:[#allocation2 + $0xc7] sm:$0xff]
    %v282 = vld [vmem:[#allocation2 + $0xcf] sm:$0xff]
    %v283 = vld [vmem:[#allocation2 + $0xd7] sm:$0xff]
    %v284 = vld [vmem:[#allocation2 + $0xdf] sm:$0xff]
    %v285 = vld [vmem:[#allocation2 + $0xe7] sm:$0xff]
    %v286 = vld [vmem:[#allocation2 + $0xef] sm:$0xff]
    %v287 = vld [vmem:[#allocation2 + $0xf7] sm:$0xff]
    %v288 = vld [vmem:[#allocation2 + $0xff] sm:$0xff]
    %v289 = vld [vmem:[#allocation2 + $0x107] sm:$0xff]
    %v290 = vld [vmem:[#allocation2 + $0x10f] sm:$0xff]
    %v291 = vld [vmem:[#allocation2 + $0x117] sm:$0xff]
    %v292 = vld [vmem:[#allocation2 + $0x11f] sm:$0xff]
    %v293 = vld [vmem:[#allocation2 + $0x127] sm:$0xff]
    %v294 = vld [vmem:[#allocation2 + $0x12f] sm:$0xff]
    %v295 = vld [vmem:[#allocation2 + $0x137] sm:$0xff]
    %v296 = vld [vmem:[#allocation2 + $0x13f] sm:$0xff]
    %v297 = vld [vmem:[#allocation2 + $0x147] sm:$0xff]
    %v298 = vld [vmem:[#allocation2 + $0x14f] sm:$0xff]
    %v299 = vld [vmem:[#allocation2 + $0x157] sm:$0xff]
    %v300 = vld [vmem:[#allocation2 + $0x15f] sm:$0xff]
    %v301 = vld [vmem:[#allocation2 + $0x167] sm:$0xff]
    %v302 = vld [vmem:[#allocation2 + $0x16f] sm:$0xff]
    %v303 = vld [vmem:[#allocation2 + $0x177] sm:$0xff]
    %v304 = vld [vmem:[#allocation2 + $0x17f] sm:$0xff]
    %v305 = vld [vmem:[#allocation2 + $0x187] sm:$0xff]
    %v306 = vld [vmem:[#allocation2 + $0x18f] sm:$0xff]
    %v307 = vld [vmem:[#allocation2 + $0x197] sm:$0xff]
    %v308 = vld [vmem:[#allocation2 + $0x19f] sm:$0xff]
    %v309 = vld [vmem:[#allocation2 + $0x1a7] sm:$0xff]
    %v310 = vld [vmem:[#allocation2 + $0x1af] sm:$0xff]
    %v311 = vld [vmem:[#allocation2 + $0x1b7] sm:$0xff]
    %v312 = vld [vmem:[#allocation2 + $0x1bf] sm:$0xff]
    %v313 = vld [vmem:[#allocation2 + $0x1c7] sm:$0xff]
    %v314 = vld [vmem:[#allocation2 + $0x1cf] sm:$0xff]
    %v315 = vld [vmem:[#allocation2 + $0x1d7] sm:$0xff]
    %v316 = vld [vmem:[#allocation2 + $0x1df] sm:$0xff]
    %v317 = vld [vmem:[#allocation2 + $0x1e7] sm:$0xff]
    %v318 = vld [vmem:[#allocation2 + $0x1ef] sm:$0xff]
    %v319 = vld [vmem:[#allocation2 + $0x1f7] sm:$0xff]
    %v320 = vld [vmem:[#allocation2 + $0x1ff] sm:$0xff]
    %v321 = vld [vmem:[%s3] sm:$0xff]
    %v322 = vld [vmem:[%s3 + $0x8] sm:$0xff]
    %v323 = vld [vmem:[%s3 + $0x10] sm:$0xff]
    %v324 = vld [vmem:[%s3 + $0x18] sm:$0xff]
    %v325 = vld [vmem:[%s3 + $0x20] sm:$0xff]
    %v326 = vld [vmem:[%s3 + $0x28] sm:$0xff]
    %v327 = vld [vmem:[%s3 + $0x30] sm:$0xff]
    %v328 = vld [vmem:[%s3 + $0x38] sm:$0xff]
    %v329 = vld [vmem:[%s3 + $0x40] sm:$0xff]
    %v330 = vld [vmem:[%s3 + $0x48] sm:$0xff]
    %v331 = vld [vmem:[%s3 + $0x50] sm:$0xff]
    %v332 = vld [vmem:[%s3 + $0x58] sm:$0xff]
    %v333 = vld [vmem:[%s3 + $0x60] sm:$0xff]
    %v334 = vld [vmem:[%s3 + $0x68] sm:$0xff]
    %v335 = vld [vmem:[%s3 + $0x70] sm:$0xff]
    %v336 = vld [vmem:[%s3 + $0x78] sm:$0xff]
    %v337 = vld [vmem:[%s3 + $0x80] sm:$0xff]
    %v338 = vld [vmem:[%s3 + $0x88] sm:$0xff]
    %v339 = vld [vmem:[%s3 + $0x90] sm:$0xff]
    %v340 = vld [vmem:[%s3 + $0x98] sm:$0xff]
    %v341 = vld [vmem:[%s3 + $0xa0] sm:$0xff]
    %v342 = vld [vmem:[%s3 + $0xa8] sm:$0xff]
    %v343 = vld [vmem:[%s3 + $0xb0] sm:$0xff]
    %v344 = vld [vmem:[%s3 + $0xb8] sm:$0xff]
    %v345 = vld [vmem:[%s3 + $0xc0] sm:$0xff]
    %v346 = vld [vmem:[%s3 + $0xc8] sm:$0xff]
    %v347 = vld [vmem:[%s3 + $0xd0] sm:$0xff]
    %v348 = vld [vmem:[%s3 + $0xd8] sm:$0xff]
    %v349 = vld [vmem:[%s3 + $0xe0] sm:$0xff]
    %v350 = vld [vmem:[%s3 + $0xe8] sm:$0xff]
    %v351 = vld [vmem:[%s3 + $0xf0] sm:$0xff]
    %v352 = vld [vmem:[%s3 + $0xf8] sm:$0xff]
    %v353 = vld [vmem:[%s3 + $0x100] sm:$0xff]
    %v354 = vld [vmem:[%s3 + $0x108] sm:$0xff]
    %v355 = vld [vmem:[%s3 + $0x110] sm:$0xff]
    %v356 = vld [vmem:[%s3 + $0x118] sm:$0xff]
    %v357 = vld [vmem:[%s3 + $0x120] sm:$0xff]
    %v358 = vld [vmem:[%s3 + $0x128] sm:$0xff]
    %v359 = vld [vmem:[%s3 + $0x130] sm:$0xff]
    %v360 = vld [vmem:[%s3 + $0x138] sm:$0xff]
    %v361 = vld [vmem:[%s3 + $0x140] sm:$0xff]
    %v362 = vld [vmem:[%s3 + $0x148] sm:$0xff]
    %v363 = vld [vmem:[%s3 + $0x150] sm:$0xff]
    %v364 = vld [vmem:[%s3 + $0x158] sm:$0xff]
    %v365 = vld [vmem:[%s3 + $0x160] sm:$0xff]
    %v366 = vld [vmem:[%s3 + $0x168] sm:$0xff]
    %v367 = vld [vmem:[%s3 + $0x170] sm:$0xff]
    %v368 = vld [vmem:[%s3 + $0x178] sm:$0xff]
    %v369 = vld [vmem:[%s3 + $0x180] sm:$0xff]
    %v370 = vld [vmem:[%s3 + $0x188] sm:$0xff]
    %v371 = vld [vmem:[%s3 + $0x190] sm:$0xff]
    %v372 = vld [vmem:[%s3 + $0x198] sm:$0xff]
    %v373 = vld [vmem:[%s3 + $0x1a0] sm:$0xff]
    %v374 = vld [vmem:[%s3 + $0x1a8] sm:$0xff]
    %v375 = vld [vmem:[%s3 + $0x1b0] sm:$0xff]
    %v376 = vld [vmem:[%s3 + $0x1b8] sm:$0xff]
    %v377 = vld [vmem:[%s3 + $0x1c0] sm:$0xff]
    %v378 = vld [vmem:[%s3 + $0x1c8] sm:$0xff]
    %v379 = vld [vmem:[%s3 + $0x1d0] sm:$0xff]
    %v380 = vld [vmem:[%s3 + $0x1d8] sm:$0xff]
    %v381 = vld [vmem:[%s3 + $0x1e0] sm:$0xff]
    %v382 = vld [vmem:[%s3 + $0x1e8] sm:$0xff]
    %v383 = vld [vmem:[%s3 + $0x1f0] sm:$0xff]
    %v384 = vld [vmem:[%s3 + $0x1f8] sm:$0xff]
    %v385 = vmul.f32 %v257, %v321
    %v386 = vmul.f32 %v258, %v322
    %v387 = vmul.f32 %v259, %v323
    %v388 = vmul.f32 %v260, %v324
    %v389 = vmul.f32 %v261, %v325
    %v390 = vmul.f32 %v262, %v326
    %v391 = vmul.f32 %v263, %v327
    %v392 = vmul.f32 %v264, %v328
    %v393 = vmul.f32 %v265, %v329
    %v394 = vmul.f32 %v266, %v330
    %v395 = vmul.f32 %v267, %v331
    %v396 = vmul.f32 %v268, %v332
    %v397 = vmul.f32 %v269, %v333
    %v398 = vmul.f32 %v270, %v334
    %v399 = vmul.f32 %v271, %v335
    %v400 = vmul.f32 %v272, %v336
    %v401 = vmul.f32 %v273, %v337
    %v402 = vmul.f32 %v274, %v338
    %v403 = vmul.f32 %v275, %v339
    %v404 = vmul.f32 %v276, %v340
    %v405 = vmul.f32 %v277, %v341
    %v406 = vmul.f32 %v278, %v342
    %v407 = vmul.f32 %v279, %v343
    %v408 = vmul.f32 %v280, %v344
    %v409 = vmul.f32 %v281, %v345
    %v410 = vmul.f32 %v282, %v346
    %v411 = vmul.f32 %v283, %v347
    %v412 = vmul.f32 %v284, %v348
    %v413 = vmul.f32 %v285, %v349
    %v414 = vmul.f32 %v286, %v350
    %v415 = vmul.f32 %v287, %v351
    %v416 = vmul.f32 %v288, %v352
    %v417 = vmul.f32 %v289, %v353
    %v418 = vmul.f32 %v290, %v354
    %v419 = vmul.f32 %v291, %v355
    %v420 = vmul.f32 %v292, %v356
    %v421 = vmul.f32 %v293, %v357
    %v422 = vmul.f32 %v294, %v358
    %v423 = vmul.f32 %v295, %v359
    %v424 = vmul.f32 %v296, %v360
    %v425 = vmul.f32 %v297, %v361
    %v426 = vmul.f32 %v298, %v362
    %v427 = vmul.f32 %v299, %v363
    %v428 = vmul.f32 %v300, %v364
    %v429 = vmul.f32 %v301, %v365
    %v430 = vmul.f32 %v302, %v366
    %v431 = vmul.f32 %v303, %v367
    %v432 = vmul.f32 %v304, %v368
    %v433 = vmul.f32 %v305, %v369
    %v434 = vmul.f32 %v306, %v370
    %v435 = vmul.f32 %v307, %v371
    %v436 = vmul.f32 %v308, %v372
    %v437 = vmul.f32 %v309, %v373
    %v438 = vmul.f32 %v310, %v374
    %v439 = vmul.f32 %v311, %v375
    %v440 = vmul.f32 %v312, %v376
    %v441 = vmul.f32 %v313, %v377
    %v442 = vmul.f32 %v314, %v378
    %v443 = vmul.f32 %v315, %v379
    %v444 = vmul.f32 %v316, %v380
    %v445 = vmul.f32 %v317, %v381
    %v446 = vmul.f32 %v318, %v382
    %v447 = vmul.f32 %v319, %v383
    %v448 = vmul.f32 %v320, %v384
    %v449 = vld [vmem:[%s1] sm:$0x1]
    %451 = vset.pattern.permute.xlu0 0
    %452 = vperm.xlu0 %451, %v385
    %v453 = vpop.permute.xlu0 %452
    %456 = vset.pattern.permute.xlu0 0
    %457 = vperm.xlu0 %456, %v386
    %v458 = vpop.permute.xlu0 %457
    %461 = vset.pattern.permute.xlu0 0
    %462 = vperm.xlu0 %461, %v387
    %v463 = vpop.permute.xlu0 %462
    %466 = vset.pattern.permute.xlu0 0
    %467 = vperm.xlu0 %466, %v388
    %v468 = vpop.permute.xlu0 %467
    %471 = vset.pattern.permute.xlu0 0
    %472 = vperm.xlu0 %471, %v389
    %v473 = vpop.permute.xlu0 %472
    %476 = vset.pattern.permute.xlu0 0
    %477 = vperm.xlu0 %476, %v390
    %v478 = vpop.permute.xlu0 %477
    %481 = vset.pattern.permute.xlu0 0
    %482 = vperm.xlu0 %481, %v391
    %v483 = vpop.permute.xlu0 %482
    %486 = vset.pattern.permute.xlu0 0
    %487 = vperm.xlu0 %486, %v392
    %v488 = vpop.permute.xlu0 %487
    %491 = vset.pattern.permute.xlu0 0
    %492 = vperm.xlu0 %491, %v393
    %v493 = vpop.permute.xlu0 %492
    %496 = vset.pattern.permute.xlu0 0
    %497 = vperm.xlu0 %496, %v394
    %v498 = vpop.permute.xlu0 %497
    %501 = vset.pattern.permute.xlu0 0
    %502 = vperm.xlu0 %501, %v395
    %v503 = vpop.permute.xlu0 %502
    %506 = vset.pattern.permute.xlu0 0
    %507 = vperm.xlu0 %506, %v396
    %v508 = vpop.permute.xlu0 %507
    %511 = vset.pattern.permute.xlu0 0
    %512 = vperm.xlu0 %511, %v397
    %v513 = vpop.permute.xlu0 %512
    %516 = vset.pattern.permute.xlu0 0
    %517 = vperm.xlu0 %516, %v398
    %v518 = vpop.permute.xlu0 %517
    %521 = vset.pattern.permute.xlu0 0
    %522 = vperm.xlu0 %521, %v399
    %v523 = vpop.permute.xlu0 %522
    %526 = vset.pattern.permute.xlu0 0
    %527 = vperm.xlu0 %526, %v400
    %v528 = vpop.permute.xlu0 %527
    %531 = vset.pattern.permute.xlu0 0
    %532 = vperm.xlu0 %531, %v401
    %v533 = vpop.permute.xlu0 %532
    %536 = vset.pattern.permute.xlu0 0
    %537 = vperm.xlu0 %536, %v402
    %v538 = vpop.permute.xlu0 %537
    %541 = vset.pattern.permute.xlu0 0
    %542 = vperm.xlu0 %541, %v403
    %v543 = vpop.permute.xlu0 %542
    %546 = vset.pattern.permute.xlu0 0
    %547 = vperm.xlu0 %546, %v404
    %v548 = vpop.permute.xlu0 %547
    %551 = vset.pattern.permute.xlu0 0
    %552 = vperm.xlu0 %551, %v405
    %v553 = vpop.permute.xlu0 %552
    %556 = vset.pattern.permute.xlu0 0
    %557 = vperm.xlu0 %556, %v406
    %v558 = vpop.permute.xlu0 %557
    %561 = vset.pattern.permute.xlu0 0
    %562 = vperm.xlu0 %561, %v407
    %v563 = vpop.permute.xlu0 %562
    %566 = vset.pattern.permute.xlu0 0
    %567 = vperm.xlu0 %566, %v408
    %v568 = vpop.permute.xlu0 %567
    %571 = vset.pattern.permute.xlu0 0
    %572 = vperm.xlu0 %571, %v409
    %v573 = vpop.permute.xlu0 %572
    %576 = vset.pattern.permute.xlu0 0
    %577 = vperm.xlu0 %576, %v410
    %v578 = vpop.permute.xlu0 %577
    %581 = vset.pattern.permute.xlu0 0
    %582 = vperm.xlu0 %581, %v411
    %v583 = vpop.permute.xlu0 %582
    %586 = vset.pattern.permute.xlu0 0
    %587 = vperm.xlu0 %586, %v412
    %v588 = vpop.permute.xlu0 %587
    %591 = vset.pattern.permute.xlu0 0
    %592 = vperm.xlu0 %591, %v413
    %v593 = vpop.permute.xlu0 %592
    %596 = vset.pattern.permute.xlu0 0
    %597 = vperm.xlu0 %596, %v414
    %v598 = vpop.permute.xlu0 %597
    %601 = vset.pattern.permute.xlu0 0
    %602 = vperm.xlu0 %601, %v415
    %v603 = vpop.permute.xlu0 %602
    %606 = vset.pattern.permute.xlu0 0
    %607 = vperm.xlu0 %606, %v416
    %v608 = vpop.permute.xlu0 %607
    %611 = vset.pattern.permute.xlu0 0
    %612 = vperm.xlu0 %611, %v417
    %v613 = vpop.permute.xlu0 %612
    %616 = vset.pattern.permute.xlu0 0
    %617 = vperm.xlu0 %616, %v418
    %v618 = vpop.permute.xlu0 %617
    %621 = vset.pattern.permute.xlu0 0
    %622 = vperm.xlu0 %621, %v419
    %v623 = vpop.permute.xlu0 %622
    %626 = vset.pattern.permute.xlu0 0
    %627 = vperm.xlu0 %626, %v420
    %v628 = vpop.permute.xlu0 %627
    %631 = vset.pattern.permute.xlu0 0
    %632 = vperm.xlu0 %631, %v421
    %v633 = vpop.permute.xlu0 %632
    %636 = vset.pattern.permute.xlu0 0
    %637 = vperm.xlu0 %636, %v422
    %v638 = vpop.permute.xlu0 %637
    %641 = vset.pattern.permute.xlu0 0
    %642 = vperm.xlu0 %641, %v423
    %v643 = vpop.permute.xlu0 %642
    %646 = vset.pattern.permute.xlu0 0
    %647 = vperm.xlu0 %646, %v424
    %v648 = vpop.permute.xlu0 %647
    %651 = vset.pattern.permute.xlu0 0
    %652 = vperm.xlu0 %651, %v425
    %v653 = vpop.permute.xlu0 %652
    %656 = vset.pattern.permute.xlu0 0
    %657 = vperm.xlu0 %656, %v426
    %v658 = vpop.permute.xlu0 %657
    %661 = vset.pattern.permute.xlu0 0
    %662 = vperm.xlu0 %661, %v427
    %v663 = vpop.permute.xlu0 %662
    %666 = vset.pattern.permute.xlu0 0
    %667 = vperm.xlu0 %666, %v428
    %v668 = vpop.permute.xlu0 %667
    %671 = vset.pattern.permute.xlu0 0
    %672 = vperm.xlu0 %671, %v429
    %v673 = vpop.permute.xlu0 %672
    %676 = vset.pattern.permute.xlu0 0
    %677 = vperm.xlu0 %676, %v430
    %v678 = vpop.permute.xlu0 %677
    %681 = vset.pattern.permute.xlu0 0
    %682 = vperm.xlu0 %681, %v431
    %v683 = vpop.permute.xlu0 %682
    %686 = vset.pattern.permute.xlu0 0
    %687 = vperm.xlu0 %686, %v432
    %v688 = vpop.permute.xlu0 %687
    %691 = vset.pattern.permute.xlu0 0
    %692 = vperm.xlu0 %691, %v433
    %v693 = vpop.permute.xlu0 %692
    %696 = vset.pattern.permute.xlu0 0
    %697 = vperm.xlu0 %696, %v434
    %v698 = vpop.permute.xlu0 %697
    %701 = vset.pattern.permute.xlu0 0
    %702 = vperm.xlu0 %701, %v435
    %v703 = vpop.permute.xlu0 %702
    %706 = vset.pattern.permute.xlu0 0
    %707 = vperm.xlu0 %706, %v436
    %v708 = vpop.permute.xlu0 %707
    %711 = vset.pattern.permute.xlu0 0
    %712 = vperm.xlu0 %711, %v437
    %v713 = vpop.permute.xlu0 %712
    %716 = vset.pattern.permute.xlu0 0
    %717 = vperm.xlu0 %716, %v438
    %v718 = vpop.permute.xlu0 %717
    %721 = vset.pattern.permute.xlu0 0
    %722 = vperm.xlu0 %721, %v439
    %v723 = vpop.permute.xlu0 %722
    %726 = vset.pattern.permute.xlu0 0
    %727 = vperm.xlu0 %726, %v440
    %v728 = vpop.permute.xlu0 %727
    %731 = vset.pattern.permute.xlu0 0
    %732 = vperm.xlu0 %731, %v441
    %v733 = vpop.permute.xlu0 %732
    %736 = vset.pattern.permute.xlu0 0
    %737 = vperm.xlu0 %736, %v442
    %v738 = vpop.permute.xlu0 %737
    %741 = vset.pattern.permute.xlu0 0
    %742 = vperm.xlu0 %741, %v443
    %v743 = vpop.permute.xlu0 %742
    %746 = vset.pattern.permute.xlu0 0
    %747 = vperm.xlu0 %746, %v444
    %v748 = vpop.permute.xlu0 %747
    %751 = vset.pattern.permute.xlu0 0
    %752 = vperm.xlu0 %751, %v445
    %v753 = vpop.permute.xlu0 %752
    %756 = vset.pattern.permute.xlu0 0
    %757 = vperm.xlu0 %756, %v446
    %v758 = vpop.permute.xlu0 %757
    %761 = vset.pattern.permute.xlu0 0
    %762 = vperm.xlu0 %761, %v447
    %v763 = vpop.permute.xlu0 %762
    %766 = vset.pattern.permute.xlu0 0
    %767 = vperm.xlu0 %766, %v448
    %v768 = vpop.permute.xlu0 %767
    %v770 = vperm.slane %v449, 0
    %v771 = vmul.f32 %v453, %v770
    %v772 = vmul.f32 %v458, %v770
    %v773 = vmul.f32 %v463, %v770
    %v774 = vmul.f32 %v468, %v770
    %v775 = vmul.f32 %v473, %v770
    %v776 = vmul.f32 %v478, %v770
    %v777 = vmul.f32 %v483, %v770
    %v778 = vmul.f32 %v488, %v770
    %v779 = vmul.f32 %v493, %v770
    %v780 = vmul.f32 %v498, %v770
    %v781 = vmul.f32 %v503, %v770
    %v782 = vmul.f32 %v508, %v770
    %v783 = vmul.f32 %v513, %v770
    %v784 = vmul.f32 %v518, %v770
    %v785 = vmul.f32 %v523, %v770
    %v786 = vmul.f32 %v528, %v770
    %v787 = vmul.f32 %v533, %v770
    %v788 = vmul.f32 %v538, %v770
    %v789 = vmul.f32 %v543, %v770
    %v790 = vmul.f32 %v548, %v770
    %v791 = vmul.f32 %v553, %v770
    %v792 = vmul.f32 %v558, %v770
    %v793 = vmul.f32 %v563, %v770
    %v794 = vmul.f32 %v568, %v770
    %v795 = vmul.f32 %v573, %v770
    %v796 = vmul.f32 %v578, %v770
    %v797 = vmul.f32 %v583, %v770
    %v798 = vmul.f32 %v588, %v770
    %v799 = vmul.f32 %v593, %v770
    %v800 = vmul.f32 %v598, %v770
    %v801 = vmul.f32 %v603, %v770
    %v802 = vmul.f32 %v608, %v770
    %v803 = vmul.f32 %v613, %v770
    %v804 = vmul.f32 %v618, %v770
    %v805 = vmul.f32 %v623, %v770
    %v806 = vmul.f32 %v628, %v770
    %v807 = vmul.f32 %v633, %v770
    %v808 = vmul.f32 %v638, %v770
    %v809 = vmul.f32 %v643, %v770
    %v810 = vmul.f32 %v648, %v770
    %v811 = vmul.f32 %v653, %v770
    %v812 = vmul.f32 %v658, %v770
    %v813 = vmul.f32 %v663, %v770
    %v814 = vmul.f32 %v668, %v770
    %v815 = vmul.f32 %v673, %v770
    %v816 = vmul.f32 %v678, %v770
    %v817 = vmul.f32 %v683, %v770
    %v818 = vmul.f32 %v688, %v770
    %v819 = vmul.f32 %v693, %v770
    %v820 = vmul.f32 %v698, %v770
    %v821 = vmul.f32 %v703, %v770
    %v822 = vmul.f32 %v708, %v770
    %v823 = vmul.f32 %v713, %v770
    %v824 = vmul.f32 %v718, %v770
    %v825 = vmul.f32 %v723, %v770
    %v826 = vmul.f32 %v728, %v770
    %v827 = vmul.f32 %v733, %v770
    %v828 = vmul.f32 %v738, %v770
    %v829 = vmul.f32 %v743, %v770
    %v830 = vmul.f32 %v748, %v770
    %v831 = vmul.f32 %v753, %v770
    %v832 = vmul.f32 %v758, %v770
    %v833 = vmul.f32 %v763, %v770
    %v834 = vmul.f32 %v768, %v770
    %v835 = vadd.f32 %v771, 0.0
    %v836 = vadd.f32 %v772, 0.0
    %v837 = vadd.f32 %v773, 0.0
    %v838 = vadd.f32 %v774, 0.0
    %v839 = vadd.f32 %v775, 0.0
    %v840 = vadd.f32 %v776, 0.0
    %v841 = vadd.f32 %v777, 0.0
    %v842 = vadd.f32 %v778, 0.0
    %v843 = vadd.f32 %v779, 0.0
    %v844 = vadd.f32 %v780, 0.0
    %v845 = vadd.f32 %v781, 0.0
    %v846 = vadd.f32 %v782, 0.0
    %v847 = vadd.f32 %v783, 0.0
    %v848 = vadd.f32 %v784, 0.0
    %v849 = vadd.f32 %v785, 0.0
    %v850 = vadd.f32 %v786, 0.0
    %v851 = vadd.f32 %v787, 0.0
    %v852 = vadd.f32 %v788, 0.0
    %v853 = vadd.f32 %v789, 0.0
    %v854 = vadd.f32 %v790, 0.0
    %v855 = vadd.f32 %v791, 0.0
    %v856 = vadd.f32 %v792, 0.0
    %v857 = vadd.f32 %v793, 0.0
    %v858 = vadd.f32 %v794, 0.0
    %v859 = vadd.f32 %v795, 0.0
    %v860 = vadd.f32 %v796, 0.0
    %v861 = vadd.f32 %v797, 0.0
    %v862 = vadd.f32 %v798, 0.0
    %v863 = vadd.f32 %v799, 0.0
    %v864 = vadd.f32 %v800, 0.0
    %v865 = vadd.f32 %v801, 0.0
    %v866 = vadd.f32 %v802, 0.0
    %v867 = vadd.f32 %v803, 0.0
    %v868 = vadd.f32 %v804, 0.0
    %v869 = vadd.f32 %v805, 0.0
    %v870 = vadd.f32 %v806, 0.0
    %v871 = vadd.f32 %v807, 0.0
    %v872 = vadd.f32 %v808, 0.0
    %v873 = vadd.f32 %v809, 0.0
    %v874 = vadd.f32 %v810, 0.0
    %v875 = vadd.f32 %v811, 0.0
    %v876 = vadd.f32 %v812, 0.0
    %v877 = vadd.f32 %v813, 0.0
    %v878 = vadd.f32 %v814, 0.0
    %v879 = vadd.f32 %v815, 0.0
    %v880 = vadd.f32 %v816, 0.0
    %v881 = vadd.f32 %v817, 0.0
    %v882 = vadd.f32 %v818, 0.0
    %v883 = vadd.f32 %v819, 0.0
    %v884 = vadd.f32 %v820, 0.0
    %v885 = vadd.f32 %v821, 0.0
    %v886 = vadd.f32 %v822, 0.0
    %v887 = vadd.f32 %v823, 0.0
    %v888 = vadd.f32 %v824, 0.0
    %v889 = vadd.f32 %v825, 0.0
    %v890 = vadd.f32 %v826, 0.0
    %v891 = vadd.f32 %v827, 0.0
    %v892 = vadd.f32 %v828, 0.0
    %v893 = vadd.f32 %v829, 0.0
    %v894 = vadd.f32 %v830, 0.0
    %v895 = vadd.f32 %v831, 0.0
    %v896 = vadd.f32 %v832, 0.0
    %v897 = vadd.f32 %v833, 0.0
    %v898 = vadd.f32 %v834, 0.0
    %v899 = vld [vmem:[#allocation2 + $0x8] sm:$0xff]
    %v900 = vld [vmem:[#allocation2 + $0x10] sm:$0xff]
    %v901 = vld [vmem:[#allocation2 + $0x18] sm:$0xff]
    %v902 = vld [vmem:[#allocation2 + $0x20] sm:$0xff]
    %v903 = vld [vmem:[#allocation2 + $0x28] sm:$0xff]
    %v904 = vld [vmem:[#allocation2 + $0x30] sm:$0xff]
    %v905 = vld [vmem:[#allocation2 + $0x38] sm:$0xff]
    %v906 = vld [vmem:[#allocation2 + $0x40] sm:$0xff]
    %v907 = vld [vmem:[#allocation2 + $0x48] sm:$0xff]
    %v908 = vld [vmem:[#allocation2 + $0x50] sm:$0xff]
    %v909 = vld [vmem:[#allocation2 + $0x58] sm:$0xff]
    %v910 = vld [vmem:[#allocation2 + $0x60] sm:$0xff]
    %v911 = vld [vmem:[#allocation2 + $0x68] sm:$0xff]
    %v912 = vld [vmem:[#allocation2 + $0x70] sm:$0xff]
    %v913 = vld [vmem:[#allocation2 + $0x78] sm:$0xff]
    %v914 = vld [vmem:[#allocation2 + $0x80] sm:$0xff]
    %v915 = vld [vmem:[#allocation2 + $0x88] sm:$0xff]
    %v916 = vld [vmem:[#allocation2 + $0x90] sm:$0xff]
    %v917 = vld [vmem:[#allocation2 + $0x98] sm:$0xff]
    %v918 = vld [vmem:[#allocation2 + $0xa0] sm:$0xff]
    %v919 = vld [vmem:[#allocation2 + $0xa8] sm:$0xff]
    %v920 = vld [vmem:[#allocation2 + $0xb0] sm:$0xff]
    %v921 = vld [vmem:[#allocation2 + $0xb8] sm:$0xff]
    %v922 = vld [vmem:[#allocation2 + $0xc0] sm:$0xff]
    %v923 = vld [vmem:[#allocation2 + $0xc8] sm:$0xff]
    %v924 = vld [vmem:[#allocation2 + $0xd0] sm:$0xff]
    %v925 = vld [vmem:[#allocation2 + $0xd8] sm:$0xff]
    %v926 = vld [vmem:[#allocation2 + $0xe0] sm:$0xff]
    %v927 = vld [vmem:[#allocation2 + $0xe8] sm:$0xff]
    %v928 = vld [vmem:[#allocation2 + $0xf0] sm:$0xff]
    %v929 = vld [vmem:[#allocation2 + $0xf8] sm:$0xff]
    %v930 = vld [vmem:[#allocation2 + $0x100] sm:$0xff]
    %v931 = vld [vmem:[#allocation2 + $0x108] sm:$0xff]
    %v932 = vld [vmem:[#allocation2 + $0x110] sm:$0xff]
    %v933 = vld [vmem:[#allocation2 + $0x118] sm:$0xff]
    %v934 = vld [vmem:[#allocation2 + $0x120] sm:$0xff]
    %v935 = vld [vmem:[#allocation2 + $0x128] sm:$0xff]
    %v936 = vld [vmem:[#allocation2 + $0x130] sm:$0xff]
    %v937 = vld [vmem:[#allocation2 + $0x138] sm:$0xff]
    %v938 = vld [vmem:[#allocation2 + $0x140] sm:$0xff]
    %v939 = vld [vmem:[#allocation2 + $0x148] sm:$0xff]
    %v940 = vld [vmem:[#allocation2 + $0x150] sm:$0xff]
    %v941 = vld [vmem:[#allocation2 + $0x158] sm:$0xff]
    %v942 = vld [vmem:[#allocation2 + $0x160] sm:$0xff]
    %v943 = vld [vmem:[#allocation2 + $0x168] sm:$0xff]
    %v944 = vld [vmem:[#allocation2 + $0x170] sm:$0xff]
    %v945 = vld [vmem:[#allocation2 + $0x178] sm:$0xff]
    %v946 = vld [vmem:[#allocation2 + $0x180] sm:$0xff]
    %v947 = vld [vmem:[#allocation2 + $0x188] sm:$0xff]
    %v948 = vld [vmem:[#allocation2 + $0x190] sm:$0xff]
    %v949 = vld [vmem:[#allocation2 + $0x198] sm:$0xff]
    %v950 = vld [vmem:[#allocation2 + $0x1a0] sm:$0xff]
    %v951 = vld [vmem:[#allocation2 + $0x1a8] sm:$0xff]
    %v952 = vld [vmem:[#allocation2 + $0x1b0] sm:$0xff]
    %v953 = vld [vmem:[#allocation2 + $0x1b8] sm:$0xff]
    %v954 = vld [vmem:[#allocation2 + $0x1c0] sm:$0xff]
    %v955 = vld [vmem:[#allocation2 + $0x1c8] sm:$0xff]
    %v956 = vld [vmem:[#allocation2 + $0x1d0] sm:$0xff]
    %v957 = vld [vmem:[#allocation2 + $0x1d8] sm:$0xff]
    %v958 = vld [vmem:[#allocation2 + $0x1e0] sm:$0xff]
    %v959 = vld [vmem:[#allocation2 + $0x1e8] sm:$0xff]
    %v960 = vld [vmem:[#allocation2 + $0x1f0] sm:$0xff]
    %v961 = vld [vmem:[#allocation2 + $0x1f8] sm:$0xff]
    %v962 = vld [vmem:[#allocation2 + $0x200] sm:$0xff]
    %1027 = vrot.lane.b32.xlu0 %v321, 127
    %v1028 = vpop.permute.xlu0 %1027
    %1029 = vrot.lane.b32.xlu0 %v322, 127
    %v1030 = vpop.permute.xlu0 %1029
    %1031 = vrot.lane.b32.xlu0 %v323, 127
    %v1032 = vpop.permute.xlu0 %1031
    %1033 = vrot.lane.b32.xlu0 %v324, 127
    %v1034 = vpop.permute.xlu0 %1033
    %1035 = vrot.lane.b32.xlu0 %v325, 127
    %v1036 = vpop.permute.xlu0 %1035
    %1037 = vrot.lane.b32.xlu0 %v326, 127
    %v1038 = vpop.permute.xlu0 %1037
    %1039 = vrot.lane.b32.xlu0 %v327, 127
    %v1040 = vpop.permute.xlu0 %1039
    %1041 = vrot.lane.b32.xlu0 %v328, 127
    %v1042 = vpop.permute.xlu0 %1041
    %1043 = vrot.lane.b32.xlu0 %v329, 127
    %v1044 = vpop.permute.xlu0 %1043
    %1045 = vrot.lane.b32.xlu0 %v330, 127
    %v1046 = vpop.permute.xlu0 %1045
    %1047 = vrot.lane.b32.xlu0 %v331, 127
    %v1048 = vpop.permute.xlu0 %1047
    %1049 = vrot.lane.b32.xlu0 %v332, 127
    %v1050 = vpop.permute.xlu0 %1049
    %1051 = vrot.lane.b32.xlu0 %v333, 127
    %v1052 = vpop.permute.xlu0 %1051
    %1053 = vrot.lane.b32.xlu0 %v334, 127
    %v1054 = vpop.permute.xlu0 %1053
    %1055 = vrot.lane.b32.xlu0 %v335, 127
    %v1056 = vpop.permute.xlu0 %1055
    %1057 = vrot.lane.b32.xlu0 %v336, 127
    %v1058 = vpop.permute.xlu0 %1057
    %1059 = vrot.lane.b32.xlu0 %v337, 127
    %v1060 = vpop.permute.xlu0 %1059
    %1061 = vrot.lane.b32.xlu0 %v338, 127
    %v1062 = vpop.permute.xlu0 %1061
    %1063 = vrot.lane.b32.xlu0 %v339, 127
    %v1064 = vpop.permute.xlu0 %1063
    %1065 = vrot.lane.b32.xlu0 %v340, 127
    %v1066 = vpop.permute.xlu0 %1065
    %1067 = vrot.lane.b32.xlu0 %v341, 127
    %v1068 = vpop.permute.xlu0 %1067
    %1069 = vrot.lane.b32.xlu0 %v342, 127
    %v1070 = vpop.permute.xlu0 %1069
    %1071 = vrot.lane.b32.xlu0 %v343, 127
    %v1072 = vpop.permute.xlu0 %1071
    %1073 = vrot.lane.b32.xlu0 %v344, 127
    %v1074 = vpop.permute.xlu0 %1073
    %1075 = vrot.lane.b32.xlu0 %v345, 127
    %v1076 = vpop.permute.xlu0 %1075
    %1077 = vrot.lane.b32.xlu0 %v346, 127
    %v1078 = vpop.permute.xlu0 %1077
    %1079 = vrot.lane.b32.xlu0 %v347, 127
    %v1080 = vpop.permute.xlu0 %1079
    %1081 = vrot.lane.b32.xlu0 %v348, 127
    %v1082 = vpop.permute.xlu0 %1081
    %1083 = vrot.lane.b32.xlu0 %v349, 127
    %v1084 = vpop.permute.xlu0 %1083
    %1085 = vrot.lane.b32.xlu0 %v350, 127
    %v1086 = vpop.permute.xlu0 %1085
    %1087 = vrot.lane.b32.xlu0 %v351, 127
    %v1088 = vpop.permute.xlu0 %1087
    %1089 = vrot.lane.b32.xlu0 %v352, 127
    %v1090 = vpop.permute.xlu0 %1089
    %1091 = vrot.lane.b32.xlu0 %v353, 127
    %v1092 = vpop.permute.xlu0 %1091
    %1093 = vrot.lane.b32.xlu0 %v354, 127
    %v1094 = vpop.permute.xlu0 %1093
    %1095 = vrot.lane.b32.xlu0 %v355, 127
    %v1096 = vpop.permute.xlu0 %1095
    %1097 = vrot.lane.b32.xlu0 %v356, 127
    %v1098 = vpop.permute.xlu0 %1097
    %1099 = vrot.lane.b32.xlu0 %v357, 127
    %v1100 = vpop.permute.xlu0 %1099
    %1101 = vrot.lane.b32.xlu0 %v358, 127
    %v1102 = vpop.permute.xlu0 %1101
    %1103 = vrot.lane.b32.xlu0 %v359, 127
    %v1104 = vpop.permute.xlu0 %1103
    %1105 = vrot.lane.b32.xlu0 %v360, 127
    %v1106 = vpop.permute.xlu0 %1105
    %1107 = vrot.lane.b32.xlu0 %v361, 127
    %v1108 = vpop.permute.xlu0 %1107
    %1109 = vrot.lane.b32.xlu0 %v362, 127
    %v1110 = vpop.permute.xlu0 %1109
    %1111 = vrot.lane.b32.xlu0 %v363, 127
    %v1112 = vpop.permute.xlu0 %1111
    %1113 = vrot.lane.b32.xlu0 %v364, 127
    %v1114 = vpop.permute.xlu0 %1113
    %1115 = vrot.lane.b32.xlu0 %v365, 127
    %v1116 = vpop.permute.xlu0 %1115
    %1117 = vrot.lane.b32.xlu0 %v366, 127
    %v1118 = vpop.permute.xlu0 %1117
    %1119 = vrot.lane.b32.xlu0 %v367, 127
    %v1120 = vpop.permute.xlu0 %1119
    %1121 = vrot.lane.b32.xlu0 %v368, 127
    %v1122 = vpop.permute.xlu0 %1121
    %1123 = vrot.lane.b32.xlu0 %v369, 127
    %v1124 = vpop.permute.xlu0 %1123
    %1125 = vrot.lane.b32.xlu0 %v370, 127
    %v1126 = vpop.permute.xlu0 %1125
    %1127 = vrot.lane.b32.xlu0 %v371, 127
    %v1128 = vpop.permute.xlu0 %1127
    %1129 = vrot.lane.b32.xlu0 %v372, 127
    %v1130 = vpop.permute.xlu0 %1129
    %1131 = vrot.lane.b32.xlu0 %v373, 127
    %v1132 = vpop.permute.xlu0 %1131
    %1133 = vrot.lane.b32.xlu0 %v374, 127
    %v1134 = vpop.permute.xlu0 %1133
    %1135 = vrot.lane.b32.xlu0 %v375, 127
    %v1136 = vpop.permute.xlu0 %1135
    %1137 = vrot.lane.b32.xlu0 %v376, 127
    %v1138 = vpop.permute.xlu0 %1137
    %1139 = vrot.lane.b32.xlu0 %v377, 127
    %v1140 = vpop.permute.xlu0 %1139
    %1141 = vrot.lane.b32.xlu0 %v378, 127
    %v1142 = vpop.permute.xlu0 %1141
    %1143 = vrot.lane.b32.xlu0 %v379, 127
    %v1144 = vpop.permute.xlu0 %1143
    %1145 = vrot.lane.b32.xlu0 %v380, 127
    %v1146 = vpop.permute.xlu0 %1145
    %1147 = vrot.lane.b32.xlu0 %v381, 127
    %v1148 = vpop.permute.xlu0 %1147
    %1149 = vrot.lane.b32.xlu0 %v382, 127
    %v1150 = vpop.permute.xlu0 %1149
    %1151 = vrot.lane.b32.xlu0 %v383, 127
    %v1152 = vpop.permute.xlu0 %1151
    %1153 = vrot.lane.b32.xlu0 %v384, 127
    %v1154 = vpop.permute.xlu0 %1153
    %v1219 = vmul.f32 %v899, %v1028
    %v1220 = vmul.f32 %v900, %v1030
    %v1221 = vmul.f32 %v901, %v1032
    %v1222 = vmul.f32 %v902, %v1034
    %v1223 = vmul.f32 %v903, %v1036
    %v1224 = vmul.f32 %v904, %v1038
    %v1225 = vmul.f32 %v905, %v1040
    %v1226 = vmul.f32 %v906, %v1042
    %v1227 = vmul.f32 %v907, %v1044
    %v1228 = vmul.f32 %v908, %v1046
    %v1229 = vmul.f32 %v909, %v1048
    %v1230 = vmul.f32 %v910, %v1050
    %v1231 = vmul.f32 %v911, %v1052
    %v1232 = vmul.f32 %v912, %v1054
    %v1233 = vmul.f32 %v913, %v1056
    %v1234 = vmul.f32 %v914, %v1058
    %v1235 = vmul.f32 %v915, %v1060
    %v1236 = vmul.f32 %v916, %v1062
    %v1237 = vmul.f32 %v917, %v1064
    %v1238 = vmul.f32 %v918, %v1066
    %v1239 = vmul.f32 %v919, %v1068
    %v1240 = vmul.f32 %v920, %v1070
    %v1241 = vmul.f32 %v921, %v1072
    %v1242 = vmul.f32 %v922, %v1074
    %v1243 = vmul.f32 %v923, %v1076
    %v1244 = vmul.f32 %v924, %v1078
    %v1245 = vmul.f32 %v925, %v1080
    %v1246 = vmul.f32 %v926, %v1082
    %v1247 = vmul.f32 %v927, %v1084
    %v1248 = vmul.f32 %v928, %v1086
    %v1249 = vmul.f32 %v929, %v1088
    %v1250 = vmul.f32 %v930, %v1090
    %v1251 = vmul.f32 %v931, %v1092
    %v1252 = vmul.f32 %v932, %v1094
    %v1253 = vmul.f32 %v933, %v1096
    %v1254 = vmul.f32 %v934, %v1098
    %v1255 = vmul.f32 %v935, %v1100
    %v1256 = vmul.f32 %v936, %v1102
    %v1257 = vmul.f32 %v937, %v1104
    %v1258 = vmul.f32 %v938, %v1106
    %v1259 = vmul.f32 %v939, %v1108
    %v1260 = vmul.f32 %v940, %v1110
    %v1261 = vmul.f32 %v941, %v1112
    %v1262 = vmul.f32 %v942, %v1114
    %v1263 = vmul.f32 %v943, %v1116
    %v1264 = vmul.f32 %v944, %v1118
    %v1265 = vmul.f32 %v945, %v1120
    %v1266 = vmul.f32 %v946, %v1122
    %v1267 = vmul.f32 %v947, %v1124
    %v1268 = vmul.f32 %v948, %v1126
    %v1269 = vmul.f32 %v949, %v1128
    %v1270 = vmul.f32 %v950, %v1130
    %v1271 = vmul.f32 %v951, %v1132
    %v1272 = vmul.f32 %v952, %v1134
    %v1273 = vmul.f32 %v953, %v1136
    %v1274 = vmul.f32 %v954, %v1138
    %v1275 = vmul.f32 %v955, %v1140
    %v1276 = vmul.f32 %v956, %v1142
    %v1277 = vmul.f32 %v957, %v1144
    %v1278 = vmul.f32 %v958, %v1146
    %v1279 = vmul.f32 %v959, %v1148
    %v1280 = vmul.f32 %v960, %v1150
    %v1281 = vmul.f32 %v961, %v1152
    %v1282 = vmul.f32 %v962, %v1154
    %v1283 = vld [vmem:[%s1 + $0x1] sm:$0x1]
    %1285 = vset.pattern.permute.xlu0 0
    %1286 = vperm.xlu0 %1285, %v1219
    %v1287 = vpop.permute.xlu0 %1286
    %1290 = vset.pattern.permute.xlu0 0
    %1291 = vperm.xlu0 %1290, %v1220
    %v1292 = vpop.permute.xlu0 %1291
    %1295 = vset.pattern.permute.xlu0 0
    %1296 = vperm.xlu0 %1295, %v1221
    %v1297 = vpop.permute.xlu0 %1296
    %1300 = vset.pattern.permute.xlu0 0
    %1301 = vperm.xlu0 %1300, %v1222
    %v1302 = vpop.permute.xlu0 %1301
    %1305 = vset.pattern.permute.xlu0 0
    %1306 = vperm.xlu0 %1305, %v1223
    %v1307 = vpop.permute.xlu0 %1306
    %1310 = vset.pattern.permute.xlu0 0
    %1311 = vperm.xlu0 %1310, %v1224
    %v1312 = vpop.permute.xlu0 %1311
    %1315 = vset.pattern.permute.xlu0 0
    %1316 = vperm.xlu0 %1315, %v1225
    %v1317 = vpop.permute.xlu0 %1316
    %1320 = vset.pattern.permute.xlu0 0
    %1321 = vperm.xlu0 %1320, %v1226
    %v1322 = vpop.permute.xlu0 %1321
    %1325 = vset.pattern.permute.xlu0 0
    %1326 = vperm.xlu0 %1325, %v1227
    %v1327 = vpop.permute.xlu0 %1326
    %1330 = vset.pattern.permute.xlu0 0
    %1331 = vperm.xlu0 %1330, %v1228
    %v1332 = vpop.permute.xlu0 %1331
    %1335 = vset.pattern.permute.xlu0 0
    %1336 = vperm.xlu0 %1335, %v1229
    %v1337 = vpop.permute.xlu0 %1336
    %1340 = vset.pattern.permute.xlu0 0
    %1341 = vperm.xlu0 %1340, %v1230
    %v1342 = vpop.permute.xlu0 %1341
    %1345 = vset.pattern.permute.xlu0 0
    %1346 = vperm.xlu0 %1345, %v1231
    %v1347 = vpop.permute.xlu0 %1346
    %1350 = vset.pattern.permute.xlu0 0
    %1351 = vperm.xlu0 %1350, %v1232
    %v1352 = vpop.permute.xlu0 %1351
    %1355 = vset.pattern.permute.xlu0 0
    %1356 = vperm.xlu0 %1355, %v1233
    %v1357 = vpop.permute.xlu0 %1356
    %1360 = vset.pattern.permute.xlu0 0
    %1361 = vperm.xlu0 %1360, %v1234
    %v1362 = vpop.permute.xlu0 %1361
    %1365 = vset.pattern.permute.xlu0 0
    %1366 = vperm.xlu0 %1365, %v1235
    %v1367 = vpop.permute.xlu0 %1366
    %1370 = vset.pattern.permute.xlu0 0
    %1371 = vperm.xlu0 %1370, %v1236
    %v1372 = vpop.permute.xlu0 %1371
    %1375 = vset.pattern.permute.xlu0 0
    %1376 = vperm.xlu0 %1375, %v1237
    %v1377 = vpop.permute.xlu0 %1376
    %1380 = vset.pattern.permute.xlu0 0
    %1381 = vperm.xlu0 %1380, %v1238
    %v1382 = vpop.permute.xlu0 %1381
    %1385 = vset.pattern.permute.xlu0 0
    %1386 = vperm.xlu0 %1385, %v1239
    %v1387 = vpop.permute.xlu0 %1386
    %1390 = vset.pattern.permute.xlu0 0
    %1391 = vperm.xlu0 %1390, %v1240
    %v1392 = vpop.permute.xlu0 %1391
    %1395 = vset.pattern.permute.xlu0 0
    %1396 = vperm.xlu0 %1395, %v1241
    %v1397 = vpop.permute.xlu0 %1396
    %1400 = vset.pattern.permute.xlu0 0
    %1401 = vperm.xlu0 %1400, %v1242
    %v1402 = vpop.permute.xlu0 %1401
    %1405 = vset.pattern.permute.xlu0 0
    %1406 = vperm.xlu0 %1405, %v1243
    %v1407 = vpop.permute.xlu0 %1406
    %1410 = vset.pattern.permute.xlu0 0
    %1411 = vperm.xlu0 %1410, %v1244
    %v1412 = vpop.permute.xlu0 %1411
    %1415 = vset.pattern.permute.xlu0 0
    %1416 = vperm.xlu0 %1415, %v1245
    %v1417 = vpop.permute.xlu0 %1416
    %1420 = vset.pattern.permute.xlu0 0
    %1421 = vperm.xlu0 %1420, %v1246
    %v1422 = vpop.permute.xlu0 %1421
    %1425 = vset.pattern.permute.xlu0 0
    %1426 = vperm.xlu0 %1425, %v1247
    %v1427 = vpop.permute.xlu0 %1426
    %1430 = vset.pattern.permute.xlu0 0
    %1431 = vperm.xlu0 %1430, %v1248
    %v1432 = vpop.permute.xlu0 %1431
    %1435 = vset.pattern.permute.xlu0 0
    %1436 = vperm.xlu0 %1435, %v1249
    %v1437 = vpop.permute.xlu0 %1436
    %1440 = vset.pattern.permute.xlu0 0
    %1441 = vperm.xlu0 %1440, %v1250
    %v1442 = vpop.permute.xlu0 %1441
    %1445 = vset.pattern.permute.xlu0 0
    %1446 = vperm.xlu0 %1445, %v1251
    %v1447 = vpop.permute.xlu0 %1446
    %1450 = vset.pattern.permute.xlu0 0
    %1451 = vperm.xlu0 %1450, %v1252
    %v1452 = vpop.permute.xlu0 %1451
    %1455 = vset.pattern.permute.xlu0 0
    %1456 = vperm.xlu0 %1455, %v1253
    %v1457 = vpop.permute.xlu0 %1456
    %1460 = vset.pattern.permute.xlu0 0
    %1461 = vperm.xlu0 %1460, %v1254
    %v1462 = vpop.permute.xlu0 %1461
    %1465 = vset.pattern.permute.xlu0 0
    %1466 = vperm.xlu0 %1465, %v1255
    %v1467 = vpop.permute.xlu0 %1466
    %1470 = vset.pattern.permute.xlu0 0
    %1471 = vperm.xlu0 %1470, %v1256
    %v1472 = vpop.permute.xlu0 %1471
    %1475 = vset.pattern.permute.xlu0 0
    %1476 = vperm.xlu0 %1475, %v1257
    %v1477 = vpop.permute.xlu0 %1476
    %1480 = vset.pattern.permute.xlu0 0
    %1481 = vperm.xlu0 %1480, %v1258
    %v1482 = vpop.permute.xlu0 %1481
    %1485 = vset.pattern.permute.xlu0 0
    %1486 = vperm.xlu0 %1485, %v1259
    %v1487 = vpop.permute.xlu0 %1486
    %1490 = vset.pattern.permute.xlu0 0
    %1491 = vperm.xlu0 %1490, %v1260
    %v1492 = vpop.permute.xlu0 %1491
    %1495 = vset.pattern.permute.xlu0 0
    %1496 = vperm.xlu0 %1495, %v1261
    %v1497 = vpop.permute.xlu0 %1496
    %1500 = vset.pattern.permute.xlu0 0
    %1501 = vperm.xlu0 %1500, %v1262
    %v1502 = vpop.permute.xlu0 %1501
    %1505 = vset.pattern.permute.xlu0 0
    %1506 = vperm.xlu0 %1505, %v1263
    %v1507 = vpop.permute.xlu0 %1506
    %1510 = vset.pattern.permute.xlu0 0
    %1511 = vperm.xlu0 %1510, %v1264
    %v1512 = vpop.permute.xlu0 %1511
    %1515 = vset.pattern.permute.xlu0 0
    %1516 = vperm.xlu0 %1515, %v1265
    %v1517 = vpop.permute.xlu0 %1516
    %1520 = vset.pattern.permute.xlu0 0
    %1521 = vperm.xlu0 %1520, %v1266
    %v1522 = vpop.permute.xlu0 %1521
    %1525 = vset.pattern.permute.xlu0 0
    %1526 = vperm.xlu0 %1525, %v1267
    %v1527 = vpop.permute.xlu0 %1526
    %1530 = vset.pattern.permute.xlu0 0
    %1531 = vperm.xlu0 %1530, %v1268
    %v1532 = vpop.permute.xlu0 %1531
    %1535 = vset.pattern.permute.xlu0 0
    %1536 = vperm.xlu0 %1535, %v1269
    %v1537 = vpop.permute.xlu0 %1536
    %1540 = vset.pattern.permute.xlu0 0
    %1541 = vperm.xlu0 %1540, %v1270
    %v1542 = vpop.permute.xlu0 %1541
    %1545 = vset.pattern.permute.xlu0 0
    %1546 = vperm.xlu0 %1545, %v1271
    %v1547 = vpop.permute.xlu0 %1546
    %1550 = vset.pattern.permute.xlu0 0
    %1551 = vperm.xlu0 %1550, %v1272
    %v1552 = vpop.permute.xlu0 %1551
    %1555 = vset.pattern.permute.xlu0 0
    %1556 = vperm.xlu0 %1555, %v1273
    %v1557 = vpop.permute.xlu0 %1556
    %1560 = vset.pattern.permute.xlu0 0
    %1561 = vperm.xlu0 %1560, %v1274
    %v1562 = vpop.permute.xlu0 %1561
    %1565 = vset.pattern.permute.xlu0 0
    %1566 = vperm.xlu0 %1565, %v1275
    %v1567 = vpop.permute.xlu0 %1566
    %1570 = vset.pattern.permute.xlu0 0
    %1571 = vperm.xlu0 %1570, %v1276
    %v1572 = vpop.permute.xlu0 %1571
    %1575 = vset.pattern.permute.xlu0 0
    %1576 = vperm.xlu0 %1575, %v1277
    %v1577 = vpop.permute.xlu0 %1576
    %1580 = vset.pattern.permute.xlu0 0
    %1581 = vperm.xlu0 %1580, %v1278
    %v1582 = vpop.permute.xlu0 %1581
    %1585 = vset.pattern.permute.xlu0 0
    %1586 = vperm.xlu0 %1585, %v1279
    %v1587 = vpop.permute.xlu0 %1586
    %1590 = vset.pattern.permute.xlu0 0
    %1591 = vperm.xlu0 %1590, %v1280
    %v1592 = vpop.permute.xlu0 %1591
    %1595 = vset.pattern.permute.xlu0 0
    %1596 = vperm.xlu0 %1595, %v1281
    %v1597 = vpop.permute.xlu0 %1596
    %1600 = vset.pattern.permute.xlu0 0
    %1601 = vperm.xlu0 %1600, %v1282
    %v1602 = vpop.permute.xlu0 %1601
    %v1604 = vperm.slane %v1283, 0
    %v1605 = vmul.f32 %v1287, %v1604
    %v1606 = vmul.f32 %v1292, %v1604
    %v1607 = vmul.f32 %v1297, %v1604
    %v1608 = vmul.f32 %v1302, %v1604
    %v1609 = vmul.f32 %v1307, %v1604
    %v1610 = vmul.f32 %v1312, %v1604
    %v1611 = vmul.f32 %v1317, %v1604
    %v1612 = vmul.f32 %v1322, %v1604
    %v1613 = vmul.f32 %v1327, %v1604
    %v1614 = vmul.f32 %v1332, %v1604
    %v1615 = vmul.f32 %v1337, %v1604
    %v1616 = vmul.f32 %v1342, %v1604
    %v1617 = vmul.f32 %v1347, %v1604
    %v1618 = vmul.f32 %v1352, %v1604
    %v1619 = vmul.f32 %v1357, %v1604
    %v1620 = vmul.f32 %v1362, %v1604
    %v1621 = vmul.f32 %v1367, %v1604
    %v1622 = vmul.f32 %v1372, %v1604
    %v1623 = vmul.f32 %v1377, %v1604
    %v1624 = vmul.f32 %v1382, %v1604
    %v1625 = vmul.f32 %v1387, %v1604
    %v1626 = vmul.f32 %v1392, %v1604
    %v1627 = vmul.f32 %v1397, %v1604
    %v1628 = vmul.f32 %v1402, %v1604
    %v1629 = vmul.f32 %v1407, %v1604
    %v1630 = vmul.f32 %v1412, %v1604
    %v1631 = vmul.f32 %v1417, %v1604
    %v1632 = vmul.f32 %v1422, %v1604
    %v1633 = vmul.f32 %v1427, %v1604
    %v1634 = vmul.f32 %v1432, %v1604
    %v1635 = vmul.f32 %v1437, %v1604
    %v1636 = vmul.f32 %v1442, %v1604
    %v1637 = vmul.f32 %v1447, %v1604
    %v1638 = vmul.f32 %v1452, %v1604
    %v1639 = vmul.f32 %v1457, %v1604
    %v1640 = vmul.f32 %v1462, %v1604
    %v1641 = vmul.f32 %v1467, %v1604
    %v1642 = vmul.f32 %v1472, %v1604
    %v1643 = vmul.f32 %v1477, %v1604
    %v1644 = vmul.f32 %v1482, %v1604
    %v1645 = vmul.f32 %v1487, %v1604
    %v1646 = vmul.f32 %v1492, %v1604
    %v1647 = vmul.f32 %v1497, %v1604
    %v1648 = vmul.f32 %v1502, %v1604
    %v1649 = vmul.f32 %v1507, %v1604
    %v1650 = vmul.f32 %v1512, %v1604
    %v1651 = vmul.f32 %v1517, %v1604
    %v1652 = vmul.f32 %v1522, %v1604
    %v1653 = vmul.f32 %v1527, %v1604
    %v1654 = vmul.f32 %v1532, %v1604
    %v1655 = vmul.f32 %v1537, %v1604
    %v1656 = vmul.f32 %v1542, %v1604
    %v1657 = vmul.f32 %v1547, %v1604
    %v1658 = vmul.f32 %v1552, %v1604
    %v1659 = vmul.f32 %v1557, %v1604
    %v1660 = vmul.f32 %v1562, %v1604
    %v1661 = vmul.f32 %v1567, %v1604
    %v1662 = vmul.f32 %v1572, %v1604
    %v1663 = vmul.f32 %v1577, %v1604
    %v1664 = vmul.f32 %v1582, %v1604
    %v1665 = vmul.f32 %v1587, %v1604
    %v1666 = vmul.f32 %v1592, %v1604
    %v1667 = vmul.f32 %v1597, %v1604
    %v1668 = vmul.f32 %v1602, %v1604
    %v1669 = vadd.f32 %v835, %v1605
    %v1670 = vadd.f32 %v836, %v1606
    %v1671 = vadd.f32 %v837, %v1607
    %v1672 = vadd.f32 %v838, %v1608
    %v1673 = vadd.f32 %v839, %v1609
    %v1674 = vadd.f32 %v840, %v1610
    %v1675 = vadd.f32 %v841, %v1611
    %v1676 = vadd.f32 %v842, %v1612
    %v1677 = vadd.f32 %v843, %v1613
    %v1678 = vadd.f32 %v844, %v1614
    %v1679 = vadd.f32 %v845, %v1615
    %v1680 = vadd.f32 %v846, %v1616
    %v1681 = vadd.f32 %v847, %v1617
    %v1682 = vadd.f32 %v848, %v1618
    %v1683 = vadd.f32 %v849, %v1619
    %v1684 = vadd.f32 %v850, %v1620
    %v1685 = vadd.f32 %v851, %v1621
    %v1686 = vadd.f32 %v852, %v1622
    %v1687 = vadd.f32 %v853, %v1623
    %v1688 = vadd.f32 %v854, %v1624
    %v1689 = vadd.f32 %v855, %v1625
    %v1690 = vadd.f32 %v856, %v1626
    %v1691 = vadd.f32 %v857, %v1627
    %v1692 = vadd.f32 %v858, %v1628
    %v1693 = vadd.f32 %v859, %v1629
    %v1694 = vadd.f32 %v860, %v1630
    %v1695 = vadd.f32 %v861, %v1631
    %v1696 = vadd.f32 %v862, %v1632
    %v1697 = vadd.f32 %v863, %v1633
    %v1698 = vadd.f32 %v864, %v1634
    %v1699 = vadd.f32 %v865, %v1635
    %v1700 = vadd.f32 %v866, %v1636
    %v1701 = vadd.f32 %v867, %v1637
    %v1702 = vadd.f32 %v868, %v1638
    %v1703 = vadd.f32 %v869, %v1639
    %v1704 = vadd.f32 %v870, %v1640
    %v1705 = vadd.f32 %v871, %v1641
    %v1706 = vadd.f32 %v872, %v1642
    %v1707 = vadd.f32 %v873, %v1643
    %v1708 = vadd.f32 %v874, %v1644
    %v1709 = vadd.f32 %v875, %v1645
    %v1710 = vadd.f32 %v876, %v1646
    %v1711 = vadd.f32 %v877, %v1647
    %v1712 = vadd.f32 %v878, %v1648
    %v1713 = vadd.f32 %v879, %v1649
    %v1714 = vadd.f32 %v880, %v1650
    %v1715 = vadd.f32 %v881, %v1651
    %v1716 = vadd.f32 %v882, %v1652
    %v1717 = vadd.f32 %v883, %v1653
    %v1718 = vadd.f32 %v884, %v1654
    %v1719 = vadd.f32 %v885, %v1655
    %v1720 = vadd.f32 %v886, %v1656
    %v1721 = vadd.f32 %v887, %v1657
    %v1722 = vadd.f32 %v888, %v1658
    %v1723 = vadd.f32 %v889, %v1659
    %v1724 = vadd.f32 %v890, %v1660
    %v1725 = vadd.f32 %v891, %v1661
    %v1726 = vadd.f32 %v892, %v1662
    %v1727 = vadd.f32 %v893, %v1663
    %v1728 = vadd.f32 %v894, %v1664
    %v1729 = vadd.f32 %v895, %v1665
    %v1730 = vadd.f32 %v896, %v1666
    %v1731 = vadd.f32 %v897, %v1667
    %v1732 = vadd.f32 %v898, %v1668
    %v1733 = vld [vmem:[#allocation2 + $0x9] sm:$0xff]
    %v1734 = vld [vmem:[#allocation2 + $0x11] sm:$0xff]
    %v1735 = vld [vmem:[#allocation2 + $0x19] sm:$0xff]
    %v1736 = vld [vmem:[#allocation2 + $0x21] sm:$0xff]
    %v1737 = vld [vmem:[#allocation2 + $0x29] sm:$0xff]
    %v1738 = vld [vmem:[#allocation2 + $0x31] sm:$0xff]
    %v1739 = vld [vmem:[#allocation2 + $0x39] sm:$0xff]
    %v1740 = vld [vmem:[#allocation2 + $0x41] sm:$0xff]
    %v1741 = vld [vmem:[#allocation2 + $0x49] sm:$0xff]
    %v1742 = vld [vmem:[#allocation2 + $0x51] sm:$0xff]
    %v1743 = vld [vmem:[#allocation2 + $0x59] sm:$0xff]
    %v1744 = vld [vmem:[#allocation2 + $0x61] sm:$0xff]
    %v1745 = vld [vmem:[#allocation2 + $0x69] sm:$0xff]
    %v1746 = vld [vmem:[#allocation2 + $0x71] sm:$0xff]
    %v1747 = vld [vmem:[#allocation2 + $0x79] sm:$0xff]
    %v1748 = vld [vmem:[#allocation2 + $0x81] sm:$0xff]
    %v1749 = vld [vmem:[#allocation2 + $0x89] sm:$0xff]
    %v1750 = vld [vmem:[#allocation2 + $0x91] sm:$0xff]
    %v1751 = vld [vmem:[#allocation2 + $0x99] sm:$0xff]
    %v1752 = vld [vmem:[#allocation2 + $0xa1] sm:$0xff]
    %v1753 = vld [vmem:[#allocation2 + $0xa9] sm:$0xff]
    %v1754 = vld [vmem:[#allocation2 + $0xb1] sm:$0xff]
    %v1755 = vld [vmem:[#allocation2 + $0xb9] sm:$0xff]
    %v1756 = vld [vmem:[#allocation2 + $0xc1] sm:$0xff]
    %v1757 = vld [vmem:[#allocation2 + $0xc9] sm:$0xff]
    %v1758 = vld [vmem:[#allocation2 + $0xd1] sm:$0xff]
    %v1759 = vld [vmem:[#allocation2 + $0xd9] sm:$0xff]
    %v1760 = vld [vmem:[#allocation2 + $0xe1] sm:$0xff]
    %v1761 = vld [vmem:[#allocation2 + $0xe9] sm:$0xff]
    %v1762 = vld [vmem:[#allocation2 + $0xf1] sm:$0xff]
    %v1763 = vld [vmem:[#allocation2 + $0xf9] sm:$0xff]
    %v1764 = vld [vmem:[#allocation2 + $0x101] sm:$0xff]
    %v1765 = vld [vmem:[#allocation2 + $0x109] sm:$0xff]
    %v1766 = vld [vmem:[#allocation2 + $0x111] sm:$0xff]
    %v1767 = vld [vmem:[#allocation2 + $0x119] sm:$0xff]
    %v1768 = vld [vmem:[#allocation2 + $0x121] sm:$0xff]
    %v1769 = vld [vmem:[#allocation2 + $0x129] sm:$0xff]
    %v1770 = vld [vmem:[#allocation2 + $0x131] sm:$0xff]
    %v1771 = vld [vmem:[#allocation2 + $0x139] sm:$0xff]
    %v1772 = vld [vmem:[#allocation2 + $0x141] sm:$0xff]
    %v1773 = vld [vmem:[#allocation2 + $0x149] sm:$0xff]
    %v1774 = vld [vmem:[#allocation2 + $0x151] sm:$0xff]
    %v1775 = vld [vmem:[#allocation2 + $0x159] sm:$0xff]
    %v1776 = vld [vmem:[#allocation2 + $0x161] sm:$0xff]
    %v1777 = vld [vmem:[#allocation2 + $0x169] sm:$0xff]
    %v1778 = vld [vmem:[#allocation2 + $0x171] sm:$0xff]
    %v1779 = vld [vmem:[#allocation2 + $0x179] sm:$0xff]
    %v1780 = vld [vmem:[#allocation2 + $0x181] sm:$0xff]
    %v1781 = vld [vmem:[#allocation2 + $0x189] sm:$0xff]
    %v1782 = vld [vmem:[#allocation2 + $0x191] sm:$0xff]
    %v1783 = vld [vmem:[#allocation2 + $0x199] sm:$0xff]
    %v1784 = vld [vmem:[#allocation2 + $0x1a1] sm:$0xff]
    %v1785 = vld [vmem:[#allocation2 + $0x1a9] sm:$0xff]
    %v1786 = vld [vmem:[#allocation2 + $0x1b1] sm:$0xff]
    %v1787 = vld [vmem:[#allocation2 + $0x1b9] sm:$0xff]
    %v1788 = vld [vmem:[#allocation2 + $0x1c1] sm:$0xff]
    %v1789 = vld [vmem:[#allocation2 + $0x1c9] sm:$0xff]
    %v1790 = vld [vmem:[#allocation2 + $0x1d1] sm:$0xff]
    %v1791 = vld [vmem:[#allocation2 + $0x1d9] sm:$0xff]
    %v1792 = vld [vmem:[#allocation2 + $0x1e1] sm:$0xff]
    %v1793 = vld [vmem:[#allocation2 + $0x1e9] sm:$0xff]
    %v1794 = vld [vmem:[#allocation2 + $0x1f1] sm:$0xff]
    %v1795 = vld [vmem:[#allocation2 + $0x1f9] sm:$0xff]
    %v1796 = vld [vmem:[#allocation2 + $0x201] sm:$0xff]
    %1797 = vrot.lane.b32.xlu0 %v321, 126
    %v1798 = vpop.permute.xlu0 %1797
    %1799 = vrot.lane.b32.xlu0 %v322, 126
    %v1800 = vpop.permute.xlu0 %1799
    %1801 = vrot.lane.b32.xlu0 %v323, 126
    %v1802 = vpop.permute.xlu0 %1801
    %1803 = vrot.lane.b32.xlu0 %v324, 126
    %v1804 = vpop.permute.xlu0 %1803
    %1805 = vrot.lane.b32.xlu0 %v325, 126
    %v1806 = vpop.permute.xlu0 %1805
    %1807 = vrot.lane.b32.xlu0 %v326, 126
    %v1808 = vpop.permute.xlu0 %1807
    %1809 = vrot.lane.b32.xlu0 %v327, 126
    %v1810 = vpop.permute.xlu0 %1809
    %1811 = vrot.lane.b32.xlu0 %v328, 126
    %v1812 = vpop.permute.xlu0 %1811
    %1813 = vrot.lane.b32.xlu0 %v329, 126
    %v1814 = vpop.permute.xlu0 %1813
    %1815 = vrot.lane.b32.xlu0 %v330, 126
    %v1816 = vpop.permute.xlu0 %1815
    %1817 = vrot.lane.b32.xlu0 %v331, 126
    %v1818 = vpop.permute.xlu0 %1817
    %1819 = vrot.lane.b32.xlu0 %v332, 126
    %v1820 = vpop.permute.xlu0 %1819
    %1821 = vrot.lane.b32.xlu0 %v333, 126
    %v1822 = vpop.permute.xlu0 %1821
    %1823 = vrot.lane.b32.xlu0 %v334, 126
    %v1824 = vpop.permute.xlu0 %1823
    %1825 = vrot.lane.b32.xlu0 %v335, 126
    %v1826 = vpop.permute.xlu0 %1825
    %1827 = vrot.lane.b32.xlu0 %v336, 126
    %v1828 = vpop.permute.xlu0 %1827
    %1829 = vrot.lane.b32.xlu0 %v337, 126
    %v1830 = vpop.permute.xlu0 %1829
    %1831 = vrot.lane.b32.xlu0 %v338, 126
    %v1832 = vpop.permute.xlu0 %1831
    %1833 = vrot.lane.b32.xlu0 %v339, 126
    %v1834 = vpop.permute.xlu0 %1833
    %1835 = vrot.lane.b32.xlu0 %v340, 126
    %v1836 = vpop.permute.xlu0 %1835
    %1837 = vrot.lane.b32.xlu0 %v341, 126
    %v1838 = vpop.permute.xlu0 %1837
    %1839 = vrot.lane.b32.xlu0 %v342, 126
    %v1840 = vpop.permute.xlu0 %1839
    %1841 = vrot.lane.b32.xlu0 %v343, 126
    %v1842 = vpop.permute.xlu0 %1841
    %1843 = vrot.lane.b32.xlu0 %v344, 126
    %v1844 = vpop.permute.xlu0 %1843
    %1845 = vrot.lane.b32.xlu0 %v345, 126
    %v1846 = vpop.permute.xlu0 %1845
    %1847 = vrot.lane.b32.xlu0 %v346, 126
    %v1848 = vpop.permute.xlu0 %1847
    %1849 = vrot.lane.b32.xlu0 %v347, 126
    %v1850 = vpop.permute.xlu0 %1849
    %1851 = vrot.lane.b32.xlu0 %v348, 126
    %v1852 = vpop.permute.xlu0 %1851
    %1853 = vrot.lane.b32.xlu0 %v349, 126
    %v1854 = vpop.permute.xlu0 %1853
    %1855 = vrot.lane.b32.xlu0 %v350, 126
    %v1856 = vpop.permute.xlu0 %1855
    %1857 = vrot.lane.b32.xlu0 %v351, 126
    %v1858 = vpop.permute.xlu0 %1857
    %1859 = vrot.lane.b32.xlu0 %v352, 126
    %v1860 = vpop.permute.xlu0 %1859
    %1861 = vrot.lane.b32.xlu0 %v353, 126
    %v1862 = vpop.permute.xlu0 %1861
    %1863 = vrot.lane.b32.xlu0 %v354, 126
    %v1864 = vpop.permute.xlu0 %1863
    %1865 = vrot.lane.b32.xlu0 %v355, 126
    %v1866 = vpop.permute.xlu0 %1865
    %1867 = vrot.lane.b32.xlu0 %v356, 126
    %v1868 = vpop.permute.xlu0 %1867
    %1869 = vrot.lane.b32.xlu0 %v357, 126
    %v1870 = vpop.permute.xlu0 %1869
    %1871 = vrot.lane.b32.xlu0 %v358, 126
    %v1872 = vpop.permute.xlu0 %1871
    %1873 = vrot.lane.b32.xlu0 %v359, 126
    %v1874 = vpop.permute.xlu0 %1873
    %1875 = vrot.lane.b32.xlu0 %v360, 126
    %v1876 = vpop.permute.xlu0 %1875
    %1877 = vrot.lane.b32.xlu0 %v361, 126
    %v1878 = vpop.permute.xlu0 %1877
    %1879 = vrot.lane.b32.xlu0 %v362, 126
    %v1880 = vpop.permute.xlu0 %1879
    %1881 = vrot.lane.b32.xlu0 %v363, 126
    %v1882 = vpop.permute.xlu0 %1881
    %1883 = vrot.lane.b32.xlu0 %v364, 126
    %v1884 = vpop.permute.xlu0 %1883
    %1885 = vrot.lane.b32.xlu0 %v365, 126
    %v1886 = vpop.permute.xlu0 %1885
    %1887 = vrot.lane.b32.xlu0 %v366, 126
    %v1888 = vpop.permute.xlu0 %1887
    %1889 = vrot.lane.b32.xlu0 %v367, 126
    %v1890 = vpop.permute.xlu0 %1889
    %1891 = vrot.lane.b32.xlu0 %v368, 126
    %v1892 = vpop.permute.xlu0 %1891
    %1893 = vrot.lane.b32.xlu0 %v369, 126
    %v1894 = vpop.permute.xlu0 %1893
    %1895 = vrot.lane.b32.xlu0 %v370, 126
    %v1896 = vpop.permute.xlu0 %1895
    %1897 = vrot.lane.b32.xlu0 %v371, 126
    %v1898 = vpop.permute.xlu0 %1897
    %1899 = vrot.lane.b32.xlu0 %v372, 126
    %v1900 = vpop.permute.xlu0 %1899
    %1901 = vrot.lane.b32.xlu0 %v373, 126
    %v1902 = vpop.permute.xlu0 %1901
    %1903 = vrot.lane.b32.xlu0 %v374, 126
    %v1904 = vpop.permute.xlu0 %1903
    %1905 = vrot.lane.b32.xlu0 %v375, 126
    %v1906 = vpop.permute.xlu0 %1905
    %1907 = vrot.lane.b32.xlu0 %v376, 126
    %v1908 = vpop.permute.xlu0 %1907
    %1909 = vrot.lane.b32.xlu0 %v377, 126
    %v1910 = vpop.permute.xlu0 %1909
    %1911 = vrot.lane.b32.xlu0 %v378, 126
    %v1912 = vpop.permute.xlu0 %1911
    %1913 = vrot.lane.b32.xlu0 %v379, 126
    %v1914 = vpop.permute.xlu0 %1913
    %1915 = vrot.lane.b32.xlu0 %v380, 126
    %v1916 = vpop.permute.xlu0 %1915
    %1917 = vrot.lane.b32.xlu0 %v381, 126
    %v1918 = vpop.permute.xlu0 %1917
    %1919 = vrot.lane.b32.xlu0 %v382, 126
    %v1920 = vpop.permute.xlu0 %1919
    %1921 = vrot.lane.b32.xlu0 %v383, 126
    %v1922 = vpop.permute.xlu0 %1921
    %1923 = vrot.lane.b32.xlu0 %v384, 126
    %v1924 = vpop.permute.xlu0 %1923
    %v1989 = vmul.f32 %v1733, %v1798
    %v1990 = vmul.f32 %v1734, %v1800
    %v1991 = vmul.f32 %v1735, %v1802
    %v1992 = vmul.f32 %v1736, %v1804
    %v1993 = vmul.f32 %v1737, %v1806
    %v1994 = vmul.f32 %v1738, %v1808
    %v1995 = vmul.f32 %v1739, %v1810
    %v1996 = vmul.f32 %v1740, %v1812
    %v1997 = vmul.f32 %v1741, %v1814
    %v1998 = vmul.f32 %v1742, %v1816
    %v1999 = vmul.f32 %v1743, %v1818
    %v2000 = vmul.f32 %v1744, %v1820
    %v2001 = vmul.f32 %v1745, %v1822
    %v2002 = vmul.f32 %v1746, %v1824
    %v2003 = vmul.f32 %v1747, %v1826
    %v2004 = vmul.f32 %v1748, %v1828
    %v2005 = vmul.f32 %v1749, %v1830
    %v2006 = vmul.f32 %v1750, %v1832
    %v2007 = vmul.f32 %v1751, %v1834
    %v2008 = vmul.f32 %v1752, %v1836
    %v2009 = vmul.f32 %v1753, %v1838
    %v2010 = vmul.f32 %v1754, %v1840
    %v2011 = vmul.f32 %v1755, %v1842
    %v2012 = vmul.f32 %v1756, %v1844
    %v2013 = vmul.f32 %v1757, %v1846
    %v2014 = vmul.f32 %v1758, %v1848
    %v2015 = vmul.f32 %v1759, %v1850
    %v2016 = vmul.f32 %v1760, %v1852
    %v2017 = vmul.f32 %v1761, %v1854
    %v2018 = vmul.f32 %v1762, %v1856
    %v2019 = vmul.f32 %v1763, %v1858
    %v2020 = vmul.f32 %v1764, %v1860
    %v2021 = vmul.f32 %v1765, %v1862
    %v2022 = vmul.f32 %v1766, %v1864
    %v2023 = vmul.f32 %v1767, %v1866
    %v2024 = vmul.f32 %v1768, %v1868
    %v2025 = vmul.f32 %v1769, %v1870
    %v2026 = vmul.f32 %v1770, %v1872
    %v2027 = vmul.f32 %v1771, %v1874
    %v2028 = vmul.f32 %v1772, %v1876
    %v2029 = vmul.f32 %v1773, %v1878
    %v2030 = vmul.f32 %v1774, %v1880
    %v2031 = vmul.f32 %v1775, %v1882
    %v2032 = vmul.f32 %v1776, %v1884
    %v2033 = vmul.f32 %v1777, %v1886
    %v2034 = vmul.f32 %v1778, %v1888
    %v2035 = vmul.f32 %v1779, %v1890
    %v2036 = vmul.f32 %v1780, %v1892
    %v2037 = vmul.f32 %v1781, %v1894
    %v2038 = vmul.f32 %v1782, %v1896
    %v2039 = vmul.f32 %v1783, %v1898
    %v2040 = vmul.f32 %v1784, %v1900
    %v2041 = vmul.f32 %v1785, %v1902
    %v2042 = vmul.f32 %v1786, %v1904
    %v2043 = vmul.f32 %v1787, %v1906
    %v2044 = vmul.f32 %v1788, %v1908
    %v2045 = vmul.f32 %v1789, %v1910
    %v2046 = vmul.f32 %v1790, %v1912
    %v2047 = vmul.f32 %v1791, %v1914
    %v2048 = vmul.f32 %v1792, %v1916
    %v2049 = vmul.f32 %v1793, %v1918
    %v2050 = vmul.f32 %v1794, %v1920
    %v2051 = vmul.f32 %v1795, %v1922
    %v2052 = vmul.f32 %v1796, %v1924
    %v2053 = vld [vmem:[%s1 + $0x2] sm:$0x1]
    %2055 = vset.pattern.permute.xlu0 0
    %2056 = vperm.xlu0 %2055, %v1989
    %v2057 = vpop.permute.xlu0 %2056
    %2060 = vset.pattern.permute.xlu0 0
    %2061 = vperm.xlu0 %2060, %v1990
    %v2062 = vpop.permute.xlu0 %2061
    %2065 = vset.pattern.permute.xlu0 0
    %2066 = vperm.xlu0 %2065, %v1991
    %v2067 = vpop.permute.xlu0 %2066
    %2070 = vset.pattern.permute.xlu0 0
    %2071 = vperm.xlu0 %2070, %v1992
    %v2072 = vpop.permute.xlu0 %2071
    %2075 = vset.pattern.permute.xlu0 0
    %2076 = vperm.xlu0 %2075, %v1993
    %v2077 = vpop.permute.xlu0 %2076
    %2080 = vset.pattern.permute.xlu0 0
    %2081 = vperm.xlu0 %2080, %v1994
    %v2082 = vpop.permute.xlu0 %2081
    %2085 = vset.pattern.permute.xlu0 0
    %2086 = vperm.xlu0 %2085, %v1995
    %v2087 = vpop.permute.xlu0 %2086
    %2090 = vset.pattern.permute.xlu0 0
    %2091 = vperm.xlu0 %2090, %v1996
    %v2092 = vpop.permute.xlu0 %2091
    %2095 = vset.pattern.permute.xlu0 0
    %2096 = vperm.xlu0 %2095, %v1997
    %v2097 = vpop.permute.xlu0 %2096
    %2100 = vset.pattern.permute.xlu0 0
    %2101 = vperm.xlu0 %2100, %v1998
    %v2102 = vpop.permute.xlu0 %2101
    %2105 = vset.pattern.permute.xlu0 0
    %2106 = vperm.xlu0 %2105, %v1999
    %v2107 = vpop.permute.xlu0 %2106
    %2110 = vset.pattern.permute.xlu0 0
    %2111 = vperm.xlu0 %2110, %v2000
    %v2112 = vpop.permute.xlu0 %2111
    %2115 = vset.pattern.permute.xlu0 0
    %2116 = vperm.xlu0 %2115, %v2001
    %v2117 = vpop.permute.xlu0 %2116
    %2120 = vset.pattern.permute.xlu0 0
    %2121 = vperm.xlu0 %2120, %v2002
    %v2122 = vpop.permute.xlu0 %2121
    %2125 = vset.pattern.permute.xlu0 0
    %2126 = vperm.xlu0 %2125, %v2003
    %v2127 = vpop.permute.xlu0 %2126
    %2130 = vset.pattern.permute.xlu0 0
    %2131 = vperm.xlu0 %2130, %v2004
    %v2132 = vpop.permute.xlu0 %2131
    %2135 = vset.pattern.permute.xlu0 0
    %2136 = vperm.xlu0 %2135, %v2005
    %v2137 = vpop.permute.xlu0 %2136
    %2140 = vset.pattern.permute.xlu0 0
    %2141 = vperm.xlu0 %2140, %v2006
    %v2142 = vpop.permute.xlu0 %2141
    %2145 = vset.pattern.permute.xlu0 0
    %2146 = vperm.xlu0 %2145, %v2007
    %v2147 = vpop.permute.xlu0 %2146
    %2150 = vset.pattern.permute.xlu0 0
    %2151 = vperm.xlu0 %2150, %v2008
    %v2152 = vpop.permute.xlu0 %2151
    %2155 = vset.pattern.permute.xlu0 0
    %2156 = vperm.xlu0 %2155, %v2009
    %v2157 = vpop.permute.xlu0 %2156
    %2160 = vset.pattern.permute.xlu0 0
    %2161 = vperm.xlu0 %2160, %v2010
    %v2162 = vpop.permute.xlu0 %2161
    %2165 = vset.pattern.permute.xlu0 0
    %2166 = vperm.xlu0 %2165, %v2011
    %v2167 = vpop.permute.xlu0 %2166
    %2170 = vset.pattern.permute.xlu0 0
    %2171 = vperm.xlu0 %2170, %v2012
    %v2172 = vpop.permute.xlu0 %2171
    %2175 = vset.pattern.permute.xlu0 0
    %2176 = vperm.xlu0 %2175, %v2013
    %v2177 = vpop.permute.xlu0 %2176
    %2180 = vset.pattern.permute.xlu0 0
    %2181 = vperm.xlu0 %2180, %v2014
    %v2182 = vpop.permute.xlu0 %2181
    %2185 = vset.pattern.permute.xlu0 0
    %2186 = vperm.xlu0 %2185, %v2015
    %v2187 = vpop.permute.xlu0 %2186
    %2190 = vset.pattern.permute.xlu0 0
    %2191 = vperm.xlu0 %2190, %v2016
    %v2192 = vpop.permute.xlu0 %2191
    %2195 = vset.pattern.permute.xlu0 0
    %2196 = vperm.xlu0 %2195, %v2017
    %v2197 = vpop.permute.xlu0 %2196
    %2200 = vset.pattern.permute.xlu0 0
    %2201 = vperm.xlu0 %2200, %v2018
    %v2202 = vpop.permute.xlu0 %2201
    %2205 = vset.pattern.permute.xlu0 0
    %2206 = vperm.xlu0 %2205, %v2019
    %v2207 = vpop.permute.xlu0 %2206
    %2210 = vset.pattern.permute.xlu0 0
    %2211 = vperm.xlu0 %2210, %v2020
    %v2212 = vpop.permute.xlu0 %2211
    %2215 = vset.pattern.permute.xlu0 0
    %2216 = vperm.xlu0 %2215, %v2021
    %v2217 = vpop.permute.xlu0 %2216
    %2220 = vset.pattern.permute.xlu0 0
    %2221 = vperm.xlu0 %2220, %v2022
    %v2222 = vpop.permute.xlu0 %2221
    %2225 = vset.pattern.permute.xlu0 0
    %2226 = vperm.xlu0 %2225, %v2023
    %v2227 = vpop.permute.xlu0 %2226
    %2230 = vset.pattern.permute.xlu0 0
    %2231 = vperm.xlu0 %2230, %v2024
    %v2232 = vpop.permute.xlu0 %2231
    %2235 = vset.pattern.permute.xlu0 0
    %2236 = vperm.xlu0 %2235, %v2025
    %v2237 = vpop.permute.xlu0 %2236
    %2240 = vset.pattern.permute.xlu0 0
    %2241 = vperm.xlu0 %2240, %v2026
    %v2242 = vpop.permute.xlu0 %2241
    %2245 = vset.pattern.permute.xlu0 0
    %2246 = vperm.xlu0 %2245, %v2027
    %v2247 = vpop.permute.xlu0 %2246
    %2250 = vset.pattern.permute.xlu0 0
    %2251 = vperm.xlu0 %2250, %v2028
    %v2252 = vpop.permute.xlu0 %2251
    %2255 = vset.pattern.permute.xlu0 0
    %2256 = vperm.xlu0 %2255, %v2029
    %v2257 = vpop.permute.xlu0 %2256
    %2260 = vset.pattern.permute.xlu0 0
    %2261 = vperm.xlu0 %2260, %v2030
    %v2262 = vpop.permute.xlu0 %2261
    %2265 = vset.pattern.permute.xlu0 0
    %2266 = vperm.xlu0 %2265, %v2031
    %v2267 = vpop.permute.xlu0 %2266
    %2270 = vset.pattern.permute.xlu0 0
    %2271 = vperm.xlu0 %2270, %v2032
    %v2272 = vpop.permute.xlu0 %2271
    %2275 = vset.pattern.permute.xlu0 0
    %2276 = vperm.xlu0 %2275, %v2033
    %v2277 = vpop.permute.xlu0 %2276
    %2280 = vset.pattern.permute.xlu0 0
    %2281 = vperm.xlu0 %2280, %v2034
    %v2282 = vpop.permute.xlu0 %2281
    %2285 = vset.pattern.permute.xlu0 0
    %2286 = vperm.xlu0 %2285, %v2035
    %v2287 = vpop.permute.xlu0 %2286
    %2290 = vset.pattern.permute.xlu0 0
    %2291 = vperm.xlu0 %2290, %v2036
    %v2292 = vpop.permute.xlu0 %2291
    %2295 = vset.pattern.permute.xlu0 0
    %2296 = vperm.xlu0 %2295, %v2037
    %v2297 = vpop.permute.xlu0 %2296
    %2300 = vset.pattern.permute.xlu0 0
    %2301 = vperm.xlu0 %2300, %v2038
    %v2302 = vpop.permute.xlu0 %2301
    %2305 = vset.pattern.permute.xlu0 0
    %2306 = vperm.xlu0 %2305, %v2039
    %v2307 = vpop.permute.xlu0 %2306
    %2310 = vset.pattern.permute.xlu0 0
    %2311 = vperm.xlu0 %2310, %v2040
    %v2312 = vpop.permute.xlu0 %2311
    %2315 = vset.pattern.permute.xlu0 0
    %2316 = vperm.xlu0 %2315, %v2041
    %v2317 = vpop.permute.xlu0 %2316
    %2320 = vset.pattern.permute.xlu0 0
    %2321 = vperm.xlu0 %2320, %v2042
    %v2322 = vpop.permute.xlu0 %2321
    %2325 = vset.pattern.permute.xlu0 0
    %2326 = vperm.xlu0 %2325, %v2043
    %v2327 = vpop.permute.xlu0 %2326
    %2330 = vset.pattern.permute.xlu0 0
    %2331 = vperm.xlu0 %2330, %v2044
    %v2332 = vpop.permute.xlu0 %2331
    %2335 = vset.pattern.permute.xlu0 0
    %2336 = vperm.xlu0 %2335, %v2045
    %v2337 = vpop.permute.xlu0 %2336
    %2340 = vset.pattern.permute.xlu0 0
    %2341 = vperm.xlu0 %2340, %v2046
    %v2342 = vpop.permute.xlu0 %2341
    %2345 = vset.pattern.permute.xlu0 0
    %2346 = vperm.xlu0 %2345, %v2047
    %v2347 = vpop.permute.xlu0 %2346
    %2350 = vset.pattern.permute.xlu0 0
    %2351 = vperm.xlu0 %2350, %v2048
    %v2352 = vpop.permute.xlu0 %2351
    %2355 = vset.pattern.permute.xlu0 0
    %2356 = vperm.xlu0 %2355, %v2049
    %v2357 = vpop.permute.xlu0 %2356
    %2360 = vset.pattern.permute.xlu0 0
    %2361 = vperm.xlu0 %2360, %v2050
    %v2362 = vpop.permute.xlu0 %2361
    %2365 = vset.pattern.permute.xlu0 0
    %2366 = vperm.xlu0 %2365, %v2051
    %v2367 = vpop.permute.xlu0 %2366
    %2370 = vset.pattern.permute.xlu0 0
    %2371 = vperm.xlu0 %2370, %v2052
    %v2372 = vpop.permute.xlu0 %2371
    %v2374 = vperm.slane %v2053, 0
    %v2375 = vmul.f32 %v2057, %v2374
    %v2376 = vmul.f32 %v2062, %v2374
    %v2377 = vmul.f32 %v2067, %v2374
    %v2378 = vmul.f32 %v2072, %v2374
    %v2379 = vmul.f32 %v2077, %v2374
    %v2380 = vmul.f32 %v2082, %v2374
    %v2381 = vmul.f32 %v2087, %v2374
    %v2382 = vmul.f32 %v2092, %v2374
    %v2383 = vmul.f32 %v2097, %v2374
    %v2384 = vmul.f32 %v2102, %v2374
    %v2385 = vmul.f32 %v2107, %v2374
    %v2386 = vmul.f32 %v2112, %v2374
    %v2387 = vmul.f32 %v2117, %v2374
    %v2388 = vmul.f32 %v2122, %v2374
    %v2389 = vmul.f32 %v2127, %v2374
    %v2390 = vmul.f32 %v2132, %v2374
    %v2391 = vmul.f32 %v2137, %v2374
    %v2392 = vmul.f32 %v2142, %v2374
    %v2393 = vmul.f32 %v2147, %v2374
    %v2394 = vmul.f32 %v2152, %v2374
    %v2395 = vmul.f32 %v2157, %v2374
    %v2396 = vmul.f32 %v2162, %v2374
    %v2397 = vmul.f32 %v2167, %v2374
    %v2398 = vmul.f32 %v2172, %v2374
    %v2399 = vmul.f32 %v2177, %v2374
    %v2400 = vmul.f32 %v2182, %v2374
    %v2401 = vmul.f32 %v2187, %v2374
    %v2402 = vmul.f32 %v2192, %v2374
    %v2403 = vmul.f32 %v2197, %v2374
    %v2404 = vmul.f32 %v2202, %v2374
    %v2405 = vmul.f32 %v2207, %v2374
    %v2406 = vmul.f32 %v2212, %v2374
    %v2407 = vmul.f32 %v2217, %v2374
    %v2408 = vmul.f32 %v2222, %v2374
    %v2409 = vmul.f32 %v2227, %v2374
    %v2410 = vmul.f32 %v2232, %v2374
    %v2411 = vmul.f32 %v2237, %v2374
    %v2412 = vmul.f32 %v2242, %v2374
    %v2413 = vmul.f32 %v2247, %v2374
    %v2414 = vmul.f32 %v2252, %v2374
    %v2415 = vmul.f32 %v2257, %v2374
    %v2416 = vmul.f32 %v2262, %v2374
    %v2417 = vmul.f32 %v2267, %v2374
    %v2418 = vmul.f32 %v2272, %v2374
    %v2419 = vmul.f32 %v2277, %v2374
    %v2420 = vmul.f32 %v2282, %v2374
    %v2421 = vmul.f32 %v2287, %v2374
    %v2422 = vmul.f32 %v2292, %v2374
    %v2423 = vmul.f32 %v2297, %v2374
    %v2424 = vmul.f32 %v2302, %v2374
    %v2425 = vmul.f32 %v2307, %v2374
    %v2426 = vmul.f32 %v2312, %v2374
    %v2427 = vmul.f32 %v2317, %v2374
    %v2428 = vmul.f32 %v2322, %v2374
    %v2429 = vmul.f32 %v2327, %v2374
    %v2430 = vmul.f32 %v2332, %v2374
    %v2431 = vmul.f32 %v2337, %v2374
    %v2432 = vmul.f32 %v2342, %v2374
    %v2433 = vmul.f32 %v2347, %v2374
    %v2434 = vmul.f32 %v2352, %v2374
    %v2435 = vmul.f32 %v2357, %v2374
    %v2436 = vmul.f32 %v2362, %v2374
    %v2437 = vmul.f32 %v2367, %v2374
    %v2438 = vmul.f32 %v2372, %v2374
    %v2439 = vadd.f32 %v1669, %v2375
    %v2440 = vadd.f32 %v1670, %v2376
    %v2441 = vadd.f32 %v1671, %v2377
    %v2442 = vadd.f32 %v1672, %v2378
    %v2443 = vadd.f32 %v1673, %v2379
    %v2444 = vadd.f32 %v1674, %v2380
    %v2445 = vadd.f32 %v1675, %v2381
    %v2446 = vadd.f32 %v1676, %v2382
    %v2447 = vadd.f32 %v1677, %v2383
    %v2448 = vadd.f32 %v1678, %v2384
    %v2449 = vadd.f32 %v1679, %v2385
    %v2450 = vadd.f32 %v1680, %v2386
    %v2451 = vadd.f32 %v1681, %v2387
    %v2452 = vadd.f32 %v1682, %v2388
    %v2453 = vadd.f32 %v1683, %v2389
    %v2454 = vadd.f32 %v1684, %v2390
    %v2455 = vadd.f32 %v1685, %v2391
    %v2456 = vadd.f32 %v1686, %v2392
    %v2457 = vadd.f32 %v1687, %v2393
    %v2458 = vadd.f32 %v1688, %v2394
    %v2459 = vadd.f32 %v1689, %v2395
    %v2460 = vadd.f32 %v1690, %v2396
    %v2461 = vadd.f32 %v1691, %v2397
    %v2462 = vadd.f32 %v1692, %v2398
    %v2463 = vadd.f32 %v1693, %v2399
    %v2464 = vadd.f32 %v1694, %v2400
    %v2465 = vadd.f32 %v1695, %v2401
    %v2466 = vadd.f32 %v1696, %v2402
    %v2467 = vadd.f32 %v1697, %v2403
    %v2468 = vadd.f32 %v1698, %v2404
    %v2469 = vadd.f32 %v1699, %v2405
    %v2470 = vadd.f32 %v1700, %v2406
    %v2471 = vadd.f32 %v1701, %v2407
    %v2472 = vadd.f32 %v1702, %v2408
    %v2473 = vadd.f32 %v1703, %v2409
    %v2474 = vadd.f32 %v1704, %v2410
    %v2475 = vadd.f32 %v1705, %v2411
    %v2476 = vadd.f32 %v1706, %v2412
    %v2477 = vadd.f32 %v1707, %v2413
    %v2478 = vadd.f32 %v1708, %v2414
    %v2479 = vadd.f32 %v1709, %v2415
    %v2480 = vadd.f32 %v1710, %v2416
    %v2481 = vadd.f32 %v1711, %v2417
    %v2482 = vadd.f32 %v1712, %v2418
    %v2483 = vadd.f32 %v1713, %v2419
    %v2484 = vadd.f32 %v1714, %v2420
    %v2485 = vadd.f32 %v1715, %v2421
    %v2486 = vadd.f32 %v1716, %v2422
    %v2487 = vadd.f32 %v1717, %v2423
    %v2488 = vadd.f32 %v1718, %v2424
    %v2489 = vadd.f32 %v1719, %v2425
    %v2490 = vadd.f32 %v1720, %v2426
    %v2491 = vadd.f32 %v1721, %v2427
    %v2492 = vadd.f32 %v1722, %v2428
    %v2493 = vadd.f32 %v1723, %v2429
    %v2494 = vadd.f32 %v1724, %v2430
    %v2495 = vadd.f32 %v1725, %v2431
    %v2496 = vadd.f32 %v1726, %v2432
    %v2497 = vadd.f32 %v1727, %v2433
    %v2498 = vadd.f32 %v1728, %v2434
    %v2499 = vadd.f32 %v1729, %v2435
    %v2500 = vadd.f32 %v1730, %v2436
    %v2501 = vadd.f32 %v1731, %v2437
    %v2502 = vadd.f32 %v1732, %v2438
    %v2503 = vld [vmem:[#allocation2 + $0x17] sm:$0xff]
    %v2504 = vld [vmem:[#allocation2 + $0x1f] sm:$0xff]
    %v2505 = vld [vmem:[#allocation2 + $0x27] sm:$0xff]
    %v2506 = vld [vmem:[#allocation2 + $0x2f] sm:$0xff]
    %v2507 = vld [vmem:[#allocation2 + $0x37] sm:$0xff]
    %v2508 = vld [vmem:[#allocation2 + $0x3f] sm:$0xff]
    %v2509 = vld [vmem:[#allocation2 + $0x47] sm:$0xff]
    %v2510 = vld [vmem:[#allocation2 + $0x4f] sm:$0xff]
    %v2511 = vld [vmem:[#allocation2 + $0x57] sm:$0xff]
    %v2512 = vld [vmem:[#allocation2 + $0x5f] sm:$0xff]
    %v2513 = vld [vmem:[#allocation2 + $0x67] sm:$0xff]
    %v2514 = vld [vmem:[#allocation2 + $0x6f] sm:$0xff]
    %v2515 = vld [vmem:[#allocation2 + $0x77] sm:$0xff]
    %v2516 = vld [vmem:[#allocation2 + $0x7f] sm:$0xff]
    %v2517 = vld [vmem:[#allocation2 + $0x87] sm:$0xff]
    %v2518 = vld [vmem:[#allocation2 + $0x8f] sm:$0xff]
    %v2519 = vld [vmem:[#allocation2 + $0x97] sm:$0xff]
    %v2520 = vld [vmem:[#allocation2 + $0x9f] sm:$0xff]
    %v2521 = vld [vmem:[#allocation2 + $0xa7] sm:$0xff]
    %v2522 = vld [vmem:[#allocation2 + $0xaf] sm:$0xff]
    %v2523 = vld [vmem:[#allocation2 + $0xb7] sm:$0xff]
    %v2524 = vld [vmem:[#allocation2 + $0xbf] sm:$0xff]
    %v2525 = vld [vmem:[#allocation2 + $0xc7] sm:$0xff]
    %v2526 = vld [vmem:[#allocation2 + $0xcf] sm:$0xff]
    %v2527 = vld [vmem:[#allocation2 + $0xd7] sm:$0xff]
    %v2528 = vld [vmem:[#allocation2 + $0xdf] sm:$0xff]
    %v2529 = vld [vmem:[#allocation2 + $0xe7] sm:$0xff]
    %v2530 = vld [vmem:[#allocation2 + $0xef] sm:$0xff]
    %v2531 = vld [vmem:[#allocation2 + $0xf7] sm:$0xff]
    %v2532 = vld [vmem:[#allocation2 + $0xff] sm:$0xff]
    %v2533 = vld [vmem:[#allocation2 + $0x107] sm:$0xff]
    %v2534 = vld [vmem:[#allocation2 + $0x10f] sm:$0xff]
    %v2535 = vld [vmem:[#allocation2 + $0x117] sm:$0xff]
    %v2536 = vld [vmem:[#allocation2 + $0x11f] sm:$0xff]
    %v2537 = vld [vmem:[#allocation2 + $0x127] sm:$0xff]
    %v2538 = vld [vmem:[#allocation2 + $0x12f] sm:$0xff]
    %v2539 = vld [vmem:[#allocation2 + $0x137] sm:$0xff]
    %v2540 = vld [vmem:[#allocation2 + $0x13f] sm:$0xff]
    %v2541 = vld [vmem:[#allocation2 + $0x147] sm:$0xff]
    %v2542 = vld [vmem:[#allocation2 + $0x14f] sm:$0xff]
    %v2543 = vld [vmem:[#allocation2 + $0x157] sm:$0xff]
    %v2544 = vld [vmem:[#allocation2 + $0x15f] sm:$0xff]
    %v2545 = vld [vmem:[#allocation2 + $0x167] sm:$0xff]
    %v2546 = vld [vmem:[#allocation2 + $0x16f] sm:$0xff]
    %v2547 = vld [vmem:[#allocation2 + $0x177] sm:$0xff]
    %v2548 = vld [vmem:[#allocation2 + $0x17f] sm:$0xff]
    %v2549 = vld [vmem:[#allocation2 + $0x187] sm:$0xff]
    %v2550 = vld [vmem:[#allocation2 + $0x18f] sm:$0xff]
    %v2551 = vld [vmem:[#allocation2 + $0x197] sm:$0xff]
    %v2552 = vld [vmem:[#allocation2 + $0x19f] sm:$0xff]
    %v2553 = vld [vmem:[#allocation2 + $0x1a7] sm:$0xff]
    %v2554 = vld [vmem:[#allocation2 + $0x1af] sm:$0xff]
    %v2555 = vld [vmem:[#allocation2 + $0x1b7] sm:$0xff]
    %v2556 = vld [vmem:[#allocation2 + $0x1bf] sm:$0xff]
    %v2557 = vld [vmem:[#allocation2 + $0x1c7] sm:$0xff]
    %v2558 = vld [vmem:[#allocation2 + $0x1cf] sm:$0xff]
    %v2559 = vld [vmem:[#allocation2 + $0x1d7] sm:$0xff]
    %v2560 = vld [vmem:[#allocation2 + $0x1df] sm:$0xff]
    %v2561 = vld [vmem:[#allocation2 + $0x1e7] sm:$0xff]
    %v2562 = vld [vmem:[#allocation2 + $0x1ef] sm:$0xff]
    %v2563 = vld [vmem:[#allocation2 + $0x1f7] sm:$0xff]
    %v2564 = vld [vmem:[#allocation2 + $0x1ff] sm:$0xff]
    %v2565 = vld [vmem:[#allocation2 + $0x207] sm:$0xff]
    %v2566 = vld [vmem:[#allocation2 + $0x20f] sm:$0xff]
    %2567 = vrot.lane.b32.xlu0 %v321, 125
    %v2568 = vpop.permute.xlu0 %2567
    %2569 = vrot.lane.b32.xlu0 %v322, 125
    %v2570 = vpop.permute.xlu0 %2569
    %2571 = vrot.lane.b32.xlu0 %v323, 125
    %v2572 = vpop.permute.xlu0 %2571
    %2573 = vrot.lane.b32.xlu0 %v324, 125
    %v2574 = vpop.permute.xlu0 %2573
    %2575 = vrot.lane.b32.xlu0 %v325, 125
    %v2576 = vpop.permute.xlu0 %2575
    %2577 = vrot.lane.b32.xlu0 %v326, 125
    %v2578 = vpop.permute.xlu0 %2577
    %2579 = vrot.lane.b32.xlu0 %v327, 125
    %v2580 = vpop.permute.xlu0 %2579
    %2581 = vrot.lane.b32.xlu0 %v328, 125
    %v2582 = vpop.permute.xlu0 %2581
    %2583 = vrot.lane.b32.xlu0 %v329, 125
    %v2584 = vpop.permute.xlu0 %2583
    %2585 = vrot.lane.b32.xlu0 %v330, 125
    %v2586 = vpop.permute.xlu0 %2585
    %2587 = vrot.lane.b32.xlu0 %v331, 125
    %v2588 = vpop.permute.xlu0 %2587
    %2589 = vrot.lane.b32.xlu0 %v332, 125
    %v2590 = vpop.permute.xlu0 %2589
    %2591 = vrot.lane.b32.xlu0 %v333, 125
    %v2592 = vpop.permute.xlu0 %2591
    %2593 = vrot.lane.b32.xlu0 %v334, 125
    %v2594 = vpop.permute.xlu0 %2593
    %2595 = vrot.lane.b32.xlu0 %v335, 125
    %v2596 = vpop.permute.xlu0 %2595
    %2597 = vrot.lane.b32.xlu0 %v336, 125
    %v2598 = vpop.permute.xlu0 %2597
    %2599 = vrot.lane.b32.xlu0 %v337, 125
    %v2600 = vpop.permute.xlu0 %2599
    %2601 = vrot.lane.b32.xlu0 %v338, 125
    %v2602 = vpop.permute.xlu0 %2601
    %2603 = vrot.lane.b32.xlu0 %v339, 125
    %v2604 = vpop.permute.xlu0 %2603
    %2605 = vrot.lane.b32.xlu0 %v340, 125
    %v2606 = vpop.permute.xlu0 %2605
    %2607 = vrot.lane.b32.xlu0 %v341, 125
    %v2608 = vpop.permute.xlu0 %2607
    %2609 = vrot.lane.b32.xlu0 %v342, 125
    %v2610 = vpop.permute.xlu0 %2609
    %2611 = vrot.lane.b32.xlu0 %v343, 125
    %v2612 = vpop.permute.xlu0 %2611
    %2613 = vrot.lane.b32.xlu0 %v344, 125
    %v2614 = vpop.permute.xlu0 %2613
    %2615 = vrot.lane.b32.xlu0 %v345, 125
    %v2616 = vpop.permute.xlu0 %2615
    %2617 = vrot.lane.b32.xlu0 %v346, 125
    %v2618 = vpop.permute.xlu0 %2617
    %2619 = vrot.lane.b32.xlu0 %v347, 125
    %v2620 = vpop.permute.xlu0 %2619
    %2621 = vrot.lane.b32.xlu0 %v348, 125
    %v2622 = vpop.permute.xlu0 %2621
    %2623 = vrot.lane.b32.xlu0 %v349, 125
    %v2624 = vpop.permute.xlu0 %2623
    %2625 = vrot.lane.b32.xlu0 %v350, 125
    %v2626 = vpop.permute.xlu0 %2625
    %2627 = vrot.lane.b32.xlu0 %v351, 125
    %v2628 = vpop.permute.xlu0 %2627
    %2629 = vrot.lane.b32.xlu0 %v352, 125
    %v2630 = vpop.permute.xlu0 %2629
    %2631 = vrot.lane.b32.xlu0 %v353, 125
    %v2632 = vpop.permute.xlu0 %2631
    %2633 = vrot.lane.b32.xlu0 %v354, 125
    %v2634 = vpop.permute.xlu0 %2633
    %2635 = vrot.lane.b32.xlu0 %v355, 125
    %v2636 = vpop.permute.xlu0 %2635
    %2637 = vrot.lane.b32.xlu0 %v356, 125
    %v2638 = vpop.permute.xlu0 %2637
    %2639 = vrot.lane.b32.xlu0 %v357, 125
    %v2640 = vpop.permute.xlu0 %2639
    %2641 = vrot.lane.b32.xlu0 %v358, 125
    %v2642 = vpop.permute.xlu0 %2641
    %2643 = vrot.lane.b32.xlu0 %v359, 125
    %v2644 = vpop.permute.xlu0 %2643
    %2645 = vrot.lane.b32.xlu0 %v360, 125
    %v2646 = vpop.permute.xlu0 %2645
    %2647 = vrot.lane.b32.xlu0 %v361, 125
    %v2648 = vpop.permute.xlu0 %2647
    %2649 = vrot.lane.b32.xlu0 %v362, 125
    %v2650 = vpop.permute.xlu0 %2649
    %2651 = vrot.lane.b32.xlu0 %v363, 125
    %v2652 = vpop.permute.xlu0 %2651
    %2653 = vrot.lane.b32.xlu0 %v364, 125
    %v2654 = vpop.permute.xlu0 %2653
    %2655 = vrot.lane.b32.xlu0 %v365, 125
    %v2656 = vpop.permute.xlu0 %2655
    %2657 = vrot.lane.b32.xlu0 %v366, 125
    %v2658 = vpop.permute.xlu0 %2657
    %2659 = vrot.lane.b32.xlu0 %v367, 125
    %v2660 = vpop.permute.xlu0 %2659
    %2661 = vrot.lane.b32.xlu0 %v368, 125
    %v2662 = vpop.permute.xlu0 %2661
    %2663 = vrot.lane.b32.xlu0 %v369, 125
    %v2664 = vpop.permute.xlu0 %2663
    %2665 = vrot.lane.b32.xlu0 %v370, 125
    %v2666 = vpop.permute.xlu0 %2665
    %2667 = vrot.lane.b32.xlu0 %v371, 125
    %v2668 = vpop.permute.xlu0 %2667
    %2669 = vrot.lane.b32.xlu0 %v372, 125
    %v2670 = vpop.permute.xlu0 %2669
    %2671 = vrot.lane.b32.xlu0 %v373, 125
    %v2672 = vpop.permute.xlu0 %2671
    %2673 = vrot.lane.b32.xlu0 %v374, 125
    %v2674 = vpop.permute.xlu0 %2673
    %2675 = vrot.lane.b32.xlu0 %v375, 125
    %v2676 = vpop.permute.xlu0 %2675
    %2677 = vrot.lane.b32.xlu0 %v376, 125
    %v2678 = vpop.permute.xlu0 %2677
    %2679 = vrot.lane.b32.xlu0 %v377, 125
    %v2680 = vpop.permute.xlu0 %2679
    %2681 = vrot.lane.b32.xlu0 %v378, 125
    %v2682 = vpop.permute.xlu0 %2681
    %2683 = vrot.lane.b32.xlu0 %v379, 125
    %v2684 = vpop.permute.xlu0 %2683
    %2685 = vrot.lane.b32.xlu0 %v380, 125
    %v2686 = vpop.permute.xlu0 %2685
    %2687 = vrot.lane.b32.xlu0 %v381, 125
    %v2688 = vpop.permute.xlu0 %2687
    %2689 = vrot.lane.b32.xlu0 %v382, 125
    %v2690 = vpop.permute.xlu0 %2689
    %2691 = vrot.lane.b32.xlu0 %v383, 125
    %v2692 = vpop.permute.xlu0 %2691
    %2693 = vrot.lane.b32.xlu0 %v384, 125
    %v2694 = vpop.permute.xlu0 %2693
    %v2759 = vmul.f32 %v2503, %v2568
    %v2760 = vmul.f32 %v2504, %v2570
    %v2761 = vmul.f32 %v2505, %v2572
    %v2762 = vmul.f32 %v2506, %v2574
    %v2763 = vmul.f32 %v2507, %v2576
    %v2764 = vmul.f32 %v2508, %v2578
    %v2765 = vmul.f32 %v2509, %v2580
    %v2766 = vmul.f32 %v2510, %v2582
    %v2767 = vmul.f32 %v2511, %v2584
    %v2768 = vmul.f32 %v2512, %v2586
    %v2769 = vmul.f32 %v2513, %v2588
    %v2770 = vmul.f32 %v2514, %v2590
    %v2771 = vmul.f32 %v2515, %v2592
    %v2772 = vmul.f32 %v2516, %v2594
    %v2773 = vmul.f32 %v2517, %v2596
    %v2774 = vmul.f32 %v2518, %v2598
    %v2775 = vmul.f32 %v2519, %v2600
    %v2776 = vmul.f32 %v2520, %v2602
    %v2777 = vmul.f32 %v2521, %v2604
    %v2778 = vmul.f32 %v2522, %v2606
    %v2779 = vmul.f32 %v2523, %v2608
    %v2780 = vmul.f32 %v2524, %v2610
    %v2781 = vmul.f32 %v2525, %v2612
    %v2782 = vmul.f32 %v2526, %v2614
    %v2783 = vmul.f32 %v2527, %v2616
    %v2784 = vmul.f32 %v2528, %v2618
    %v2785 = vmul.f32 %v2529, %v2620
    %v2786 = vmul.f32 %v2530, %v2622
    %v2787 = vmul.f32 %v2531, %v2624
    %v2788 = vmul.f32 %v2532, %v2626
    %v2789 = vmul.f32 %v2533, %v2628
    %v2790 = vmul.f32 %v2534, %v2630
    %v2791 = vmul.f32 %v2535, %v2632
    %v2792 = vmul.f32 %v2536, %v2634
    %v2793 = vmul.f32 %v2537, %v2636
    %v2794 = vmul.f32 %v2538, %v2638
    %v2795 = vmul.f32 %v2539, %v2640
    %v2796 = vmul.f32 %v2540, %v2642
    %v2797 = vmul.f32 %v2541, %v2644
    %v2798 = vmul.f32 %v2542, %v2646
    %v2799 = vmul.f32 %v2543, %v2648
    %v2800 = vmul.f32 %v2544, %v2650
    %v2801 = vmul.f32 %v2545, %v2652
    %v2802 = vmul.f32 %v2546, %v2654
    %v2803 = vmul.f32 %v2547, %v2656
    %v2804 = vmul.f32 %v2548, %v2658
    %v2805 = vmul.f32 %v2549, %v2660
    %v2806 = vmul.f32 %v2550, %v2662
    %v2807 = vmul.f32 %v2551, %v2664
    %v2808 = vmul.f32 %v2552, %v2666
    %v2809 = vmul.f32 %v2553, %v2668
    %v2810 = vmul.f32 %v2554, %v2670
    %v2811 = vmul.f32 %v2555, %v2672
    %v2812 = vmul.f32 %v2556, %v2674
    %v2813 = vmul.f32 %v2557, %v2676
    %v2814 = vmul.f32 %v2558, %v2678
    %v2815 = vmul.f32 %v2559, %v2680
    %v2816 = vmul.f32 %v2560, %v2682
    %v2817 = vmul.f32 %v2561, %v2684
    %v2818 = vmul.f32 %v2562, %v2686
    %v2819 = vmul.f32 %v2563, %v2688
    %v2820 = vmul.f32 %v2564, %v2690
    %v2821 = vmul.f32 %v2565, %v2692
    %v2822 = vmul.f32 %v2566, %v2694
    %v2823 = vld [vmem:[%s1 + $0x3] sm:$0x1]
    %2825 = vset.pattern.permute.xlu0 0
    %2826 = vperm.xlu0 %2825, %v2759
    %v2827 = vpop.permute.xlu0 %2826
    %2830 = vset.pattern.permute.xlu0 0
    %2831 = vperm.xlu0 %2830, %v2760
    %v2832 = vpop.permute.xlu0 %2831
    %2835 = vset.pattern.permute.xlu0 0
    %2836 = vperm.xlu0 %2835, %v2761
    %v2837 = vpop.permute.xlu0 %2836
    %2840 = vset.pattern.permute.xlu0 0
    %2841 = vperm.xlu0 %2840, %v2762
    %v2842 = vpop.permute.xlu0 %2841
    %2845 = vset.pattern.permute.xlu0 0
    %2846 = vperm.xlu0 %2845, %v2763
    %v2847 = vpop.permute.xlu0 %2846
    %2850 = vset.pattern.permute.xlu0 0
    %2851 = vperm.xlu0 %2850, %v2764
    %v2852 = vpop.permute.xlu0 %2851
    %2855 = vset.pattern.permute.xlu0 0
    %2856 = vperm.xlu0 %2855, %v2765
    %v2857 = vpop.permute.xlu0 %2856
    %2860 = vset.pattern.permute.xlu0 0
    %2861 = vperm.xlu0 %2860, %v2766
    %v2862 = vpop.permute.xlu0 %2861
    %2865 = vset.pattern.permute.xlu0 0
    %2866 = vperm.xlu0 %2865, %v2767
    %v2867 = vpop.permute.xlu0 %2866
    %2870 = vset.pattern.permute.xlu0 0
    %2871 = vperm.xlu0 %2870, %v2768
    %v2872 = vpop.permute.xlu0 %2871
    %2875 = vset.pattern.permute.xlu0 0
    %2876 = vperm.xlu0 %2875, %v2769
    %v2877 = vpop.permute.xlu0 %2876
    %2880 = vset.pattern.permute.xlu0 0
    %2881 = vperm.xlu0 %2880, %v2770
    %v2882 = vpop.permute.xlu0 %2881
    %2885 = vset.pattern.permute.xlu0 0
    %2886 = vperm.xlu0 %2885, %v2771
    %v2887 = vpop.permute.xlu0 %2886
    %2890 = vset.pattern.permute.xlu0 0
    %2891 = vperm.xlu0 %2890, %v2772
    %v2892 = vpop.permute.xlu0 %2891
    %2895 = vset.pattern.permute.xlu0 0
    %2896 = vperm.xlu0 %2895, %v2773
    %v2897 = vpop.permute.xlu0 %2896
    %2900 = vset.pattern.permute.xlu0 0
    %2901 = vperm.xlu0 %2900, %v2774
    %v2902 = vpop.permute.xlu0 %2901
    %2905 = vset.pattern.permute.xlu0 0
    %2906 = vperm.xlu0 %2905, %v2775
    %v2907 = vpop.permute.xlu0 %2906
    %2910 = vset.pattern.permute.xlu0 0
    %2911 = vperm.xlu0 %2910, %v2776
    %v2912 = vpop.permute.xlu0 %2911
    %2915 = vset.pattern.permute.xlu0 0
    %2916 = vperm.xlu0 %2915, %v2777
    %v2917 = vpop.permute.xlu0 %2916
    %2920 = vset.pattern.permute.xlu0 0
    %2921 = vperm.xlu0 %2920, %v2778
    %v2922 = vpop.permute.xlu0 %2921
    %2925 = vset.pattern.permute.xlu0 0
    %2926 = vperm.xlu0 %2925, %v2779
    %v2927 = vpop.permute.xlu0 %2926
    %2930 = vset.pattern.permute.xlu0 0
    %2931 = vperm.xlu0 %2930, %v2780
    %v2932 = vpop.permute.xlu0 %2931
    %2935 = vset.pattern.permute.xlu0 0
    %2936 = vperm.xlu0 %2935, %v2781
    %v2937 = vpop.permute.xlu0 %2936
    %2940 = vset.pattern.permute.xlu0 0
    %2941 = vperm.xlu0 %2940, %v2782
    %v2942 = vpop.permute.xlu0 %2941
    %2945 = vset.pattern.permute.xlu0 0
    %2946 = vperm.xlu0 %2945, %v2783
    %v2947 = vpop.permute.xlu0 %2946
    %2950 = vset.pattern.permute.xlu0 0
    %2951 = vperm.xlu0 %2950, %v2784
    %v2952 = vpop.permute.xlu0 %2951
    %2955 = vset.pattern.permute.xlu0 0
    %2956 = vperm.xlu0 %2955, %v2785
    %v2957 = vpop.permute.xlu0 %2956
    %2960 = vset.pattern.permute.xlu0 0
    %2961 = vperm.xlu0 %2960, %v2786
    %v2962 = vpop.permute.xlu0 %2961
    %2965 = vset.pattern.permute.xlu0 0
    %2966 = vperm.xlu0 %2965, %v2787
    %v2967 = vpop.permute.xlu0 %2966
    %2970 = vset.pattern.permute.xlu0 0
    %2971 = vperm.xlu0 %2970, %v2788
    %v2972 = vpop.permute.xlu0 %2971
    %2975 = vset.pattern.permute.xlu0 0
    %2976 = vperm.xlu0 %2975, %v2789
    %v2977 = vpop.permute.xlu0 %2976
    %2980 = vset.pattern.permute.xlu0 0
    %2981 = vperm.xlu0 %2980, %v2790
    %v2982 = vpop.permute.xlu0 %2981
    %2985 = vset.pattern.permute.xlu0 0
    %2986 = vperm.xlu0 %2985, %v2791
    %v2987 = vpop.permute.xlu0 %2986
    %2990 = vset.pattern.permute.xlu0 0
    %2991 = vperm.xlu0 %2990, %v2792
    %v2992 = vpop.permute.xlu0 %2991
    %2995 = vset.pattern.permute.xlu0 0
    %2996 = vperm.xlu0 %2995, %v2793
    %v2997 = vpop.permute.xlu0 %2996
    %3000 = vset.pattern.permute.xlu0 0
    %3001 = vperm.xlu0 %3000, %v2794
    %v3002 = vpop.permute.xlu0 %3001
    %3005 = vset.pattern.permute.xlu0 0
    %3006 = vperm.xlu0 %3005, %v2795
    %v3007 = vpop.permute.xlu0 %3006
    %3010 = vset.pattern.permute.xlu0 0
    %3011 = vperm.xlu0 %3010, %v2796
    %v3012 = vpop.permute.xlu0 %3011
    %3015 = vset.pattern.permute.xlu0 0
    %3016 = vperm.xlu0 %3015, %v2797
    %v3017 = vpop.permute.xlu0 %3016
    %3020 = vset.pattern.permute.xlu0 0
    %3021 = vperm.xlu0 %3020, %v2798
    %v3022 = vpop.permute.xlu0 %3021
    %3025 = vset.pattern.permute.xlu0 0
    %3026 = vperm.xlu0 %3025, %v2799
    %v3027 = vpop.permute.xlu0 %3026
    %3030 = vset.pattern.permute.xlu0 0
    %3031 = vperm.xlu0 %3030, %v2800
    %v3032 = vpop.permute.xlu0 %3031
    %3035 = vset.pattern.permute.xlu0 0
    %3036 = vperm.xlu0 %3035, %v2801
    %v3037 = vpop.permute.xlu0 %3036
    %3040 = vset.pattern.permute.xlu0 0
    %3041 = vperm.xlu0 %3040, %v2802
    %v3042 = vpop.permute.xlu0 %3041
    %3045 = vset.pattern.permute.xlu0 0
    %3046 = vperm.xlu0 %3045, %v2803
    %v3047 = vpop.permute.xlu0 %3046
    %3050 = vset.pattern.permute.xlu0 0
    %3051 = vperm.xlu0 %3050, %v2804
    %v3052 = vpop.permute.xlu0 %3051
    %3055 = vset.pattern.permute.xlu0 0
    %3056 = vperm.xlu0 %3055, %v2805
    %v3057 = vpop.permute.xlu0 %3056
    %3060 = vset.pattern.permute.xlu0 0
    %3061 = vperm.xlu0 %3060, %v2806
    %v3062 = vpop.permute.xlu0 %3061
    %3065 = vset.pattern.permute.xlu0 0
    %3066 = vperm.xlu0 %3065, %v2807
    %v3067 = vpop.permute.xlu0 %3066
    %3070 = vset.pattern.permute.xlu0 0
    %3071 = vperm.xlu0 %3070, %v2808
    %v3072 = vpop.permute.xlu0 %3071
    %3075 = vset.pattern.permute.xlu0 0
    %3076 = vperm.xlu0 %3075, %v2809
    %v3077 = vpop.permute.xlu0 %3076
    %3080 = vset.pattern.permute.xlu0 0
    %3081 = vperm.xlu0 %3080, %v2810
    %v3082 = vpop.permute.xlu0 %3081
    %3085 = vset.pattern.permute.xlu0 0
    %3086 = vperm.xlu0 %3085, %v2811
    %v3087 = vpop.permute.xlu0 %3086
    %3090 = vset.pattern.permute.xlu0 0
    %3091 = vperm.xlu0 %3090, %v2812
    %v3092 = vpop.permute.xlu0 %3091
    %3095 = vset.pattern.permute.xlu0 0
    %3096 = vperm.xlu0 %3095, %v2813
    %v3097 = vpop.permute.xlu0 %3096
    %3100 = vset.pattern.permute.xlu0 0
    %3101 = vperm.xlu0 %3100, %v2814
    %v3102 = vpop.permute.xlu0 %3101
    %3105 = vset.pattern.permute.xlu0 0
    %3106 = vperm.xlu0 %3105, %v2815
    %v3107 = vpop.permute.xlu0 %3106
    %3110 = vset.pattern.permute.xlu0 0
    %3111 = vperm.xlu0 %3110, %v2816
    %v3112 = vpop.permute.xlu0 %3111
    %3115 = vset.pattern.permute.xlu0 0
    %3116 = vperm.xlu0 %3115, %v2817
    %v3117 = vpop.permute.xlu0 %3116
    %3120 = vset.pattern.permute.xlu0 0
    %3121 = vperm.xlu0 %3120, %v2818
    %v3122 = vpop.permute.xlu0 %3121
    %3125 = vset.pattern.permute.xlu0 0
    %3126 = vperm.xlu0 %3125, %v2819
    %v3127 = vpop.permute.xlu0 %3126
    %3130 = vset.pattern.permute.xlu0 0
    %3131 = vperm.xlu0 %3130, %v2820
    %v3132 = vpop.permute.xlu0 %3131
    %3135 = vset.pattern.permute.xlu0 0
    %3136 = vperm.xlu0 %3135, %v2821
    %v3137 = vpop.permute.xlu0 %3136
    %3140 = vset.pattern.permute.xlu0 0
    %3141 = vperm.xlu0 %3140, %v2822
    %v3142 = vpop.permute.xlu0 %3141
    %v3144 = vperm.slane %v2823, 0
    %v3145 = vmul.f32 %v2827, %v3144
    %v3146 = vmul.f32 %v2832, %v3144
    %v3147 = vmul.f32 %v2837, %v3144
    %v3148 = vmul.f32 %v2842, %v3144
    %v3149 = vmul.f32 %v2847, %v3144
    %v3150 = vmul.f32 %v2852, %v3144
    %v3151 = vmul.f32 %v2857, %v3144
    %v3152 = vmul.f32 %v2862, %v3144
    %v3153 = vmul.f32 %v2867, %v3144
    %v3154 = vmul.f32 %v2872, %v3144
    %v3155 = vmul.f32 %v2877, %v3144
    %v3156 = vmul.f32 %v2882, %v3144
    %v3157 = vmul.f32 %v2887, %v3144
    %v3158 = vmul.f32 %v2892, %v3144
    %v3159 = vmul.f32 %v2897, %v3144
    %v3160 = vmul.f32 %v2902, %v3144
    %v3161 = vmul.f32 %v2907, %v3144
    %v3162 = vmul.f32 %v2912, %v3144
    %v3163 = vmul.f32 %v2917, %v3144
    %v3164 = vmul.f32 %v2922, %v3144
    %v3165 = vmul.f32 %v2927, %v3144
    %v3166 = vmul.f32 %v2932, %v3144
    %v3167 = vmul.f32 %v2937, %v3144
    %v3168 = vmul.f32 %v2942, %v3144
    %v3169 = vmul.f32 %v2947, %v3144
    %v3170 = vmul.f32 %v2952, %v3144
    %v3171 = vmul.f32 %v2957, %v3144
    %v3172 = vmul.f32 %v2962, %v3144
    %v3173 = vmul.f32 %v2967, %v3144
    %v3174 = vmul.f32 %v2972, %v3144
    %v3175 = vmul.f32 %v2977, %v3144
    %v3176 = vmul.f32 %v2982, %v3144
    %v3177 = vmul.f32 %v2987, %v3144
    %v3178 = vmul.f32 %v2992, %v3144
    %v3179 = vmul.f32 %v2997, %v3144
    %v3180 = vmul.f32 %v3002, %v3144
    %v3181 = vmul.f32 %v3007, %v3144
    %v3182 = vmul.f32 %v3012, %v3144
    %v3183 = vmul.f32 %v3017, %v3144
    %v3184 = vmul.f32 %v3022, %v3144
    %v3185 = vmul.f32 %v3027, %v3144
    %v3186 = vmul.f32 %v3032, %v3144
    %v3187 = vmul.f32 %v3037, %v3144
    %v3188 = vmul.f32 %v3042, %v3144
    %v3189 = vmul.f32 %v3047, %v3144
    %v3190 = vmul.f32 %v3052, %v3144
    %v3191 = vmul.f32 %v3057, %v3144
    %v3192 = vmul.f32 %v3062, %v3144
    %v3193 = vmul.f32 %v3067, %v3144
    %v3194 = vmul.f32 %v3072, %v3144
    %v3195 = vmul.f32 %v3077, %v3144
    %v3196 = vmul.f32 %v3082, %v3144
    %v3197 = vmul.f32 %v3087, %v3144
    %v3198 = vmul.f32 %v3092, %v3144
    %v3199 = vmul.f32 %v3097, %v3144
    %v3200 = vmul.f32 %v3102, %v3144
    %v3201 = vmul.f32 %v3107, %v3144
    %v3202 = vmul.f32 %v3112, %v3144
    %v3203 = vmul.f32 %v3117, %v3144
    %v3204 = vmul.f32 %v3122, %v3144
    %v3205 = vmul.f32 %v3127, %v3144
    %v3206 = vmul.f32 %v3132, %v3144
    %v3207 = vmul.f32 %v3137, %v3144
    %v3208 = vmul.f32 %v3142, %v3144
    %v3209 = vadd.f32 %v2439, %v3145
    %v3210 = vadd.f32 %v2440, %v3146
    %v3211 = vadd.f32 %v2441, %v3147
    %v3212 = vadd.f32 %v2442, %v3148
    %v3213 = vadd.f32 %v2443, %v3149
    %v3214 = vadd.f32 %v2444, %v3150
    %v3215 = vadd.f32 %v2445, %v3151
    %v3216 = vadd.f32 %v2446, %v3152
    %v3217 = vadd.f32 %v2447, %v3153
    %v3218 = vadd.f32 %v2448, %v3154
    %v3219 = vadd.f32 %v2449, %v3155
    %v3220 = vadd.f32 %v2450, %v3156
    %v3221 = vadd.f32 %v2451, %v3157
    %v3222 = vadd.f32 %v2452, %v3158
    %v3223 = vadd.f32 %v2453, %v3159
    %v3224 = vadd.f32 %v2454, %v3160
    %v3225 = vadd.f32 %v2455, %v3161
    %v3226 = vadd.f32 %v2456, %v3162
    %v3227 = vadd.f32 %v2457, %v3163
    %v3228 = vadd.f32 %v2458, %v3164
    %v3229 = vadd.f32 %v2459, %v3165
    %v3230 = vadd.f32 %v2460, %v3166
    %v3231 = vadd.f32 %v2461, %v3167
    %v3232 = vadd.f32 %v2462, %v3168
    %v3233 = vadd.f32 %v2463, %v3169
    %v3234 = vadd.f32 %v2464, %v3170
    %v3235 = vadd.f32 %v2465, %v3171
    %v3236 = vadd.f32 %v2466, %v3172
    %v3237 = vadd.f32 %v2467, %v3173
    %v3238 = vadd.f32 %v2468, %v3174
    %v3239 = vadd.f32 %v2469, %v3175
    %v3240 = vadd.f32 %v2470, %v3176
    %v3241 = vadd.f32 %v2471, %v3177
    %v3242 = vadd.f32 %v2472, %v3178
    %v3243 = vadd.f32 %v2473, %v3179
    %v3244 = vadd.f32 %v2474, %v3180
    %v3245 = vadd.f32 %v2475, %v3181
    %v3246 = vadd.f32 %v2476, %v3182
    %v3247 = vadd.f32 %v2477, %v3183
    %v3248 = vadd.f32 %v2478, %v3184
    %v3249 = vadd.f32 %v2479, %v3185
    %v3250 = vadd.f32 %v2480, %v3186
    %v3251 = vadd.f32 %v2481, %v3187
    %v3252 = vadd.f32 %v2482, %v3188
    %v3253 = vadd.f32 %v2483, %v3189
    %v3254 = vadd.f32 %v2484, %v3190
    %v3255 = vadd.f32 %v2485, %v3191
    %v3256 = vadd.f32 %v2486, %v3192
    %v3257 = vadd.f32 %v2487, %v3193
    %v3258 = vadd.f32 %v2488, %v3194
    %v3259 = vadd.f32 %v2489, %v3195
    %v3260 = vadd.f32 %v2490, %v3196
    %v3261 = vadd.f32 %v2491, %v3197
    %v3262 = vadd.f32 %v2492, %v3198
    %v3263 = vadd.f32 %v2493, %v3199
    %v3264 = vadd.f32 %v2494, %v3200
    %v3265 = vadd.f32 %v2495, %v3201
    %v3266 = vadd.f32 %v2496, %v3202
    %v3267 = vadd.f32 %v2497, %v3203
    %v3268 = vadd.f32 %v2498, %v3204
    %v3269 = vadd.f32 %v2499, %v3205
    %v3270 = vadd.f32 %v2500, %v3206
    %v3271 = vadd.f32 %v2501, %v3207
    %v3272 = vadd.f32 %v2502, %v3208
    %v3273 = vld [vmem:[#allocation2 + $0x18] sm:$0xff]
    %v3274 = vld [vmem:[#allocation2 + $0x20] sm:$0xff]
    %v3275 = vld [vmem:[#allocation2 + $0x28] sm:$0xff]
    %v3276 = vld [vmem:[#allocation2 + $0x30] sm:$0xff]
    %v3277 = vld [vmem:[#allocation2 + $0x38] sm:$0xff]
    %v3278 = vld [vmem:[#allocation2 + $0x40] sm:$0xff]
    %v3279 = vld [vmem:[#allocation2 + $0x48] sm:$0xff]
    %v3280 = vld [vmem:[#allocation2 + $0x50] sm:$0xff]
    %v3281 = vld [vmem:[#allocation2 + $0x58] sm:$0xff]
    %v3282 = vld [vmem:[#allocation2 + $0x60] sm:$0xff]
    %v3283 = vld [vmem:[#allocation2 + $0x68] sm:$0xff]
    %v3284 = vld [vmem:[#allocation2 + $0x70] sm:$0xff]
    %v3285 = vld [vmem:[#allocation2 + $0x78] sm:$0xff]
    %v3286 = vld [vmem:[#allocation2 + $0x80] sm:$0xff]
    %v3287 = vld [vmem:[#allocation2 + $0x88] sm:$0xff]
    %v3288 = vld [vmem:[#allocation2 + $0x90] sm:$0xff]
    %v3289 = vld [vmem:[#allocation2 + $0x98] sm:$0xff]
    %v3290 = vld [vmem:[#allocation2 + $0xa0] sm:$0xff]
    %v3291 = vld [vmem:[#allocation2 + $0xa8] sm:$0xff]
    %v3292 = vld [vmem:[#allocation2 + $0xb0] sm:$0xff]
    %v3293 = vld [vmem:[#allocation2 + $0xb8] sm:$0xff]
    %v3294 = vld [vmem:[#allocation2 + $0xc0] sm:$0xff]
    %v3295 = vld [vmem:[#allocation2 + $0xc8] sm:$0xff]
    %v3296 = vld [vmem:[#allocation2 + $0xd0] sm:$0xff]
    %v3297 = vld [vmem:[#allocation2 + $0xd8] sm:$0xff]
    %v3298 = vld [vmem:[#allocation2 + $0xe0] sm:$0xff]
    %v3299 = vld [vmem:[#allocation2 + $0xe8] sm:$0xff]
    %v3300 = vld [vmem:[#allocation2 + $0xf0] sm:$0xff]
    %v3301 = vld [vmem:[#allocation2 + $0xf8] sm:$0xff]
    %v3302 = vld [vmem:[#allocation2 + $0x100] sm:$0xff]
    %v3303 = vld [vmem:[#allocation2 + $0x108] sm:$0xff]
    %v3304 = vld [vmem:[#allocation2 + $0x110] sm:$0xff]
    %v3305 = vld [vmem:[#allocation2 + $0x118] sm:$0xff]
    %v3306 = vld [vmem:[#allocation2 + $0x120] sm:$0xff]
    %v3307 = vld [vmem:[#allocation2 + $0x128] sm:$0xff]
    %v3308 = vld [vmem:[#allocation2 + $0x130] sm:$0xff]
    %v3309 = vld [vmem:[#allocation2 + $0x138] sm:$0xff]
    %v3310 = vld [vmem:[#allocation2 + $0x140] sm:$0xff]
    %v3311 = vld [vmem:[#allocation2 + $0x148] sm:$0xff]
    %v3312 = vld [vmem:[#allocation2 + $0x150] sm:$0xff]
    %v3313 = vld [vmem:[#allocation2 + $0x158] sm:$0xff]
    %v3314 = vld [vmem:[#allocation2 + $0x160] sm:$0xff]
    %v3315 = vld [vmem:[#allocation2 + $0x168] sm:$0xff]
    %v3316 = vld [vmem:[#allocation2 + $0x170] sm:$0xff]
    %v3317 = vld [vmem:[#allocation2 + $0x178] sm:$0xff]
    %v3318 = vld [vmem:[#allocation2 + $0x180] sm:$0xff]
    %v3319 = vld [vmem:[#allocation2 + $0x188] sm:$0xff]
    %v3320 = vld [vmem:[#allocation2 + $0x190] sm:$0xff]
    %v3321 = vld [vmem:[#allocation2 + $0x198] sm:$0xff]
    %v3322 = vld [vmem:[#allocation2 + $0x1a0] sm:$0xff]
    %v3323 = vld [vmem:[#allocation2 + $0x1a8] sm:$0xff]
    %v3324 = vld [vmem:[#allocation2 + $0x1b0] sm:$0xff]
    %v3325 = vld [vmem:[#allocation2 + $0x1b8] sm:$0xff]
    %v3326 = vld [vmem:[#allocation2 + $0x1c0] sm:$0xff]
    %v3327 = vld [vmem:[#allocation2 + $0x1c8] sm:$0xff]
    %v3328 = vld [vmem:[#allocation2 + $0x1d0] sm:$0xff]
    %v3329 = vld [vmem:[#allocation2 + $0x1d8] sm:$0xff]
    %v3330 = vld [vmem:[#allocation2 + $0x1e0] sm:$0xff]
    %v3331 = vld [vmem:[#allocation2 + $0x1e8] sm:$0xff]
    %v3332 = vld [vmem:[#allocation2 + $0x1f0] sm:$0xff]
    %v3333 = vld [vmem:[#allocation2 + $0x1f8] sm:$0xff]
    %v3334 = vld [vmem:[#allocation2 + $0x200] sm:$0xff]
    %v3335 = vld [vmem:[#allocation2 + $0x208] sm:$0xff]
    %v3336 = vld [vmem:[#allocation2 + $0x210] sm:$0xff]
    %3337 = vrot.lane.b32.xlu0 %v321, 124
    %v3338 = vpop.permute.xlu0 %3337
    %3339 = vrot.lane.b32.xlu0 %v322, 124
    %v3340 = vpop.permute.xlu0 %3339
    %3341 = vrot.lane.b32.xlu0 %v323, 124
    %v3342 = vpop.permute.xlu0 %3341
    %3343 = vrot.lane.b32.xlu0 %v324, 124
    %v3344 = vpop.permute.xlu0 %3343
    %3345 = vrot.lane.b32.xlu0 %v325, 124
    %v3346 = vpop.permute.xlu0 %3345
    %3347 = vrot.lane.b32.xlu0 %v326, 124
    %v3348 = vpop.permute.xlu0 %3347
    %3349 = vrot.lane.b32.xlu0 %v327, 124
    %v3350 = vpop.permute.xlu0 %3349
    %3351 = vrot.lane.b32.xlu0 %v328, 124
    %v3352 = vpop.permute.xlu0 %3351
    %3353 = vrot.lane.b32.xlu0 %v329, 124
    %v3354 = vpop.permute.xlu0 %3353
    %3355 = vrot.lane.b32.xlu0 %v330, 124
    %v3356 = vpop.permute.xlu0 %3355
    %3357 = vrot.lane.b32.xlu0 %v331, 124
    %v3358 = vpop.permute.xlu0 %3357
    %3359 = vrot.lane.b32.xlu0 %v332, 124
    %v3360 = vpop.permute.xlu0 %3359
    %3361 = vrot.lane.b32.xlu0 %v333, 124
    %v3362 = vpop.permute.xlu0 %3361
    %3363 = vrot.lane.b32.xlu0 %v334, 124
    %v3364 = vpop.permute.xlu0 %3363
    %3365 = vrot.lane.b32.xlu0 %v335, 124
    %v3366 = vpop.permute.xlu0 %3365
    %3367 = vrot.lane.b32.xlu0 %v336, 124
    %v3368 = vpop.permute.xlu0 %3367
    %3369 = vrot.lane.b32.xlu0 %v337, 124
    %v3370 = vpop.permute.xlu0 %3369
    %3371 = vrot.lane.b32.xlu0 %v338, 124
    %v3372 = vpop.permute.xlu0 %3371
    %3373 = vrot.lane.b32.xlu0 %v339, 124
    %v3374 = vpop.permute.xlu0 %3373
    %3375 = vrot.lane.b32.xlu0 %v340, 124
    %v3376 = vpop.permute.xlu0 %3375
    %3377 = vrot.lane.b32.xlu0 %v341, 124
    %v3378 = vpop.permute.xlu0 %3377
    %3379 = vrot.lane.b32.xlu0 %v342, 124
    %v3380 = vpop.permute.xlu0 %3379
    %3381 = vrot.lane.b32.xlu0 %v343, 124
    %v3382 = vpop.permute.xlu0 %3381
    %3383 = vrot.lane.b32.xlu0 %v344, 124
    %v3384 = vpop.permute.xlu0 %3383
    %3385 = vrot.lane.b32.xlu0 %v345, 124
    %v3386 = vpop.permute.xlu0 %3385
    %3387 = vrot.lane.b32.xlu0 %v346, 124
    %v3388 = vpop.permute.xlu0 %3387
    %3389 = vrot.lane.b32.xlu0 %v347, 124
    %v3390 = vpop.permute.xlu0 %3389
    %3391 = vrot.lane.b32.xlu0 %v348, 124
    %v3392 = vpop.permute.xlu0 %3391
    %3393 = vrot.lane.b32.xlu0 %v349, 124
    %v3394 = vpop.permute.xlu0 %3393
    %3395 = vrot.lane.b32.xlu0 %v350, 124
    %v3396 = vpop.permute.xlu0 %3395
    %3397 = vrot.lane.b32.xlu0 %v351, 124
    %v3398 = vpop.permute.xlu0 %3397
    %3399 = vrot.lane.b32.xlu0 %v352, 124
    %v3400 = vpop.permute.xlu0 %3399
    %3401 = vrot.lane.b32.xlu0 %v353, 124
    %v3402 = vpop.permute.xlu0 %3401
    %3403 = vrot.lane.b32.xlu0 %v354, 124
    %v3404 = vpop.permute.xlu0 %3403
    %3405 = vrot.lane.b32.xlu0 %v355, 124
    %v3406 = vpop.permute.xlu0 %3405
    %3407 = vrot.lane.b32.xlu0 %v356, 124
    %v3408 = vpop.permute.xlu0 %3407
    %3409 = vrot.lane.b32.xlu0 %v357, 124
    %v3410 = vpop.permute.xlu0 %3409
    %3411 = vrot.lane.b32.xlu0 %v358, 124
    %v3412 = vpop.permute.xlu0 %3411
    %3413 = vrot.lane.b32.xlu0 %v359, 124
    %v3414 = vpop.permute.xlu0 %3413
    %3415 = vrot.lane.b32.xlu0 %v360, 124
    %v3416 = vpop.permute.xlu0 %3415
    %3417 = vrot.lane.b32.xlu0 %v361, 124
    %v3418 = vpop.permute.xlu0 %3417
    %3419 = vrot.lane.b32.xlu0 %v362, 124
    %v3420 = vpop.permute.xlu0 %3419
    %3421 = vrot.lane.b32.xlu0 %v363, 124
    %v3422 = vpop.permute.xlu0 %3421
    %3423 = vrot.lane.b32.xlu0 %v364, 124
    %v3424 = vpop.permute.xlu0 %3423
    %3425 = vrot.lane.b32.xlu0 %v365, 124
    %v3426 = vpop.permute.xlu0 %3425
    %3427 = vrot.lane.b32.xlu0 %v366, 124
    %v3428 = vpop.permute.xlu0 %3427
    %3429 = vrot.lane.b32.xlu0 %v367, 124
    %v3430 = vpop.permute.xlu0 %3429
    %3431 = vrot.lane.b32.xlu0 %v368, 124
    %v3432 = vpop.permute.xlu0 %3431
    %3433 = vrot.lane.b32.xlu0 %v369, 124
    %v3434 = vpop.permute.xlu0 %3433
    %3435 = vrot.lane.b32.xlu0 %v370, 124
    %v3436 = vpop.permute.xlu0 %3435
    %3437 = vrot.lane.b32.xlu0 %v371, 124
    %v3438 = vpop.permute.xlu0 %3437
    %3439 = vrot.lane.b32.xlu0 %v372, 124
    %v3440 = vpop.permute.xlu0 %3439
    %3441 = vrot.lane.b32.xlu0 %v373, 124
    %v3442 = vpop.permute.xlu0 %3441
    %3443 = vrot.lane.b32.xlu0 %v374, 124
    %v3444 = vpop.permute.xlu0 %3443
    %3445 = vrot.lane.b32.xlu0 %v375, 124
    %v3446 = vpop.permute.xlu0 %3445
    %3447 = vrot.lane.b32.xlu0 %v376, 124
    %v3448 = vpop.permute.xlu0 %3447
    %3449 = vrot.lane.b32.xlu0 %v377, 124
    %v3450 = vpop.permute.xlu0 %3449
    %3451 = vrot.lane.b32.xlu0 %v378, 124
    %v3452 = vpop.permute.xlu0 %3451
    %3453 = vrot.lane.b32.xlu0 %v379, 124
    %v3454 = vpop.permute.xlu0 %3453
    %3455 = vrot.lane.b32.xlu0 %v380, 124
    %v3456 = vpop.permute.xlu0 %3455
    %3457 = vrot.lane.b32.xlu0 %v381, 124
    %v3458 = vpop.permute.xlu0 %3457
    %3459 = vrot.lane.b32.xlu0 %v382, 124
    %v3460 = vpop.permute.xlu0 %3459
    %3461 = vrot.lane.b32.xlu0 %v383, 124
    %v3462 = vpop.permute.xlu0 %3461
    %3463 = vrot.lane.b32.xlu0 %v384, 124
    %v3464 = vpop.permute.xlu0 %3463
    %v3529 = vmul.f32 %v3273, %v3338
    %v3530 = vmul.f32 %v3274, %v3340
    %v3531 = vmul.f32 %v3275, %v3342
    %v3532 = vmul.f32 %v3276, %v3344
    %v3533 = vmul.f32 %v3277, %v3346
    %v3534 = vmul.f32 %v3278, %v3348
    %v3535 = vmul.f32 %v3279, %v3350
    %v3536 = vmul.f32 %v3280, %v3352
    %v3537 = vmul.f32 %v3281, %v3354
    %v3538 = vmul.f32 %v3282, %v3356
    %v3539 = vmul.f32 %v3283, %v3358
    %v3540 = vmul.f32 %v3284, %v3360
    %v3541 = vmul.f32 %v3285, %v3362
    %v3542 = vmul.f32 %v3286, %v3364
    %v3543 = vmul.f32 %v3287, %v3366
    %v3544 = vmul.f32 %v3288, %v3368
    %v3545 = vmul.f32 %v3289, %v3370
    %v3546 = vmul.f32 %v3290, %v3372
    %v3547 = vmul.f32 %v3291, %v3374
    %v3548 = vmul.f32 %v3292, %v3376
    %v3549 = vmul.f32 %v3293, %v3378
    %v3550 = vmul.f32 %v3294, %v3380
    %v3551 = vmul.f32 %v3295, %v3382
    %v3552 = vmul.f32 %v3296, %v3384
    %v3553 = vmul.f32 %v3297, %v3386
    %v3554 = vmul.f32 %v3298, %v3388
    %v3555 = vmul.f32 %v3299, %v3390
    %v3556 = vmul.f32 %v3300, %v3392
    %v3557 = vmul.f32 %v3301, %v3394
    %v3558 = vmul.f32 %v3302, %v3396
    %v3559 = vmul.f32 %v3303, %v3398
    %v3560 = vmul.f32 %v3304, %v3400
    %v3561 = vmul.f32 %v3305, %v3402
    %v3562 = vmul.f32 %v3306, %v3404
    %v3563 = vmul.f32 %v3307, %v3406
    %v3564 = vmul.f32 %v3308, %v3408
    %v3565 = vmul.f32 %v3309, %v3410
    %v3566 = vmul.f32 %v3310, %v3412
    %v3567 = vmul.f32 %v3311, %v3414
    %v3568 = vmul.f32 %v3312, %v3416
    %v3569 = vmul.f32 %v3313, %v3418
    %v3570 = vmul.f32 %v3314, %v3420
    %v3571 = vmul.f32 %v3315, %v3422
    %v3572 = vmul.f32 %v3316, %v3424
    %v3573 = vmul.f32 %v3317, %v3426
    %v3574 = vmul.f32 %v3318, %v3428
    %v3575 = vmul.f32 %v3319, %v3430
    %v3576 = vmul.f32 %v3320, %v3432
    %v3577 = vmul.f32 %v3321, %v3434
    %v3578 = vmul.f32 %v3322, %v3436
    %v3579 = vmul.f32 %v3323, %v3438
    %v3580 = vmul.f32 %v3324, %v3440
    %v3581 = vmul.f32 %v3325, %v3442
    %v3582 = vmul.f32 %v3326, %v3444
    %v3583 = vmul.f32 %v3327, %v3446
    %v3584 = vmul.f32 %v3328, %v3448
    %v3585 = vmul.f32 %v3329, %v3450
    %v3586 = vmul.f32 %v3330, %v3452
    %v3587 = vmul.f32 %v3331, %v3454
    %v3588 = vmul.f32 %v3332, %v3456
    %v3589 = vmul.f32 %v3333, %v3458
    %v3590 = vmul.f32 %v3334, %v3460
    %v3591 = vmul.f32 %v3335, %v3462
    %v3592 = vmul.f32 %v3336, %v3464
    %v3593 = vld [vmem:[%s1 + $0x4] sm:$0x1]
    %3595 = vset.pattern.permute.xlu0 0
    %3596 = vperm.xlu0 %3595, %v3529
    %v3597 = vpop.permute.xlu0 %3596
    %3600 = vset.pattern.permute.xlu0 0
    %3601 = vperm.xlu0 %3600, %v3530
    %v3602 = vpop.permute.xlu0 %3601
    %3605 = vset.pattern.permute.xlu0 0
    %3606 = vperm.xlu0 %3605, %v3531
    %v3607 = vpop.permute.xlu0 %3606
    %3610 = vset.pattern.permute.xlu0 0
    %3611 = vperm.xlu0 %3610, %v3532
    %v3612 = vpop.permute.xlu0 %3611
    %3615 = vset.pattern.permute.xlu0 0
    %3616 = vperm.xlu0 %3615, %v3533
    %v3617 = vpop.permute.xlu0 %3616
    %3620 = vset.pattern.permute.xlu0 0
    %3621 = vperm.xlu0 %3620, %v3534
    %v3622 = vpop.permute.xlu0 %3621
    %3625 = vset.pattern.permute.xlu0 0
    %3626 = vperm.xlu0 %3625, %v3535
    %v3627 = vpop.permute.xlu0 %3626
    %3630 = vset.pattern.permute.xlu0 0
    %3631 = vperm.xlu0 %3630, %v3536
    %v3632 = vpop.permute.xlu0 %3631
    %3635 = vset.pattern.permute.xlu0 0
    %3636 = vperm.xlu0 %3635, %v3537
    %v3637 = vpop.permute.xlu0 %3636
    %3640 = vset.pattern.permute.xlu0 0
    %3641 = vperm.xlu0 %3640, %v3538
    %v3642 = vpop.permute.xlu0 %3641
    %3645 = vset.pattern.permute.xlu0 0
    %3646 = vperm.xlu0 %3645, %v3539
    %v3647 = vpop.permute.xlu0 %3646
    %3650 = vset.pattern.permute.xlu0 0
    %3651 = vperm.xlu0 %3650, %v3540
    %v3652 = vpop.permute.xlu0 %3651
    %3655 = vset.pattern.permute.xlu0 0
    %3656 = vperm.xlu0 %3655, %v3541
    %v3657 = vpop.permute.xlu0 %3656
    %3660 = vset.pattern.permute.xlu0 0
    %3661 = vperm.xlu0 %3660, %v3542
    %v3662 = vpop.permute.xlu0 %3661
    %3665 = vset.pattern.permute.xlu0 0
    %3666 = vperm.xlu0 %3665, %v3543
    %v3667 = vpop.permute.xlu0 %3666
    %3670 = vset.pattern.permute.xlu0 0
    %3671 = vperm.xlu0 %3670, %v3544
    %v3672 = vpop.permute.xlu0 %3671
    %3675 = vset.pattern.permute.xlu0 0
    %3676 = vperm.xlu0 %3675, %v3545
    %v3677 = vpop.permute.xlu0 %3676
    %3680 = vset.pattern.permute.xlu0 0
    %3681 = vperm.xlu0 %3680, %v3546
    %v3682 = vpop.permute.xlu0 %3681
    %3685 = vset.pattern.permute.xlu0 0
    %3686 = vperm.xlu0 %3685, %v3547
    %v3687 = vpop.permute.xlu0 %3686
    %3690 = vset.pattern.permute.xlu0 0
    %3691 = vperm.xlu0 %3690, %v3548
    %v3692 = vpop.permute.xlu0 %3691
    %3695 = vset.pattern.permute.xlu0 0
    %3696 = vperm.xlu0 %3695, %v3549
    %v3697 = vpop.permute.xlu0 %3696
    %3700 = vset.pattern.permute.xlu0 0
    %3701 = vperm.xlu0 %3700, %v3550
    %v3702 = vpop.permute.xlu0 %3701
    %3705 = vset.pattern.permute.xlu0 0
    %3706 = vperm.xlu0 %3705, %v3551
    %v3707 = vpop.permute.xlu0 %3706
    %3710 = vset.pattern.permute.xlu0 0
    %3711 = vperm.xlu0 %3710, %v3552
    %v3712 = vpop.permute.xlu0 %3711
    %3715 = vset.pattern.permute.xlu0 0
    %3716 = vperm.xlu0 %3715, %v3553
    %v3717 = vpop.permute.xlu0 %3716
    %3720 = vset.pattern.permute.xlu0 0
    %3721 = vperm.xlu0 %3720, %v3554
    %v3722 = vpop.permute.xlu0 %3721
    %3725 = vset.pattern.permute.xlu0 0
    %3726 = vperm.xlu0 %3725, %v3555
    %v3727 = vpop.permute.xlu0 %3726
    %3730 = vset.pattern.permute.xlu0 0
    %3731 = vperm.xlu0 %3730, %v3556
    %v3732 = vpop.permute.xlu0 %3731
    %3735 = vset.pattern.permute.xlu0 0
    %3736 = vperm.xlu0 %3735, %v3557
    %v3737 = vpop.permute.xlu0 %3736
    %3740 = vset.pattern.permute.xlu0 0
    %3741 = vperm.xlu0 %3740, %v3558
    %v3742 = vpop.permute.xlu0 %3741
    %3745 = vset.pattern.permute.xlu0 0
    %3746 = vperm.xlu0 %3745, %v3559
    %v3747 = vpop.permute.xlu0 %3746
    %3750 = vset.pattern.permute.xlu0 0
    %3751 = vperm.xlu0 %3750, %v3560
    %v3752 = vpop.permute.xlu0 %3751
    %3755 = vset.pattern.permute.xlu0 0
    %3756 = vperm.xlu0 %3755, %v3561
    %v3757 = vpop.permute.xlu0 %3756
    %3760 = vset.pattern.permute.xlu0 0
    %3761 = vperm.xlu0 %3760, %v3562
    %v3762 = vpop.permute.xlu0 %3761
    %3765 = vset.pattern.permute.xlu0 0
    %3766 = vperm.xlu0 %3765, %v3563
    %v3767 = vpop.permute.xlu0 %3766
    %3770 = vset.pattern.permute.xlu0 0
    %3771 = vperm.xlu0 %3770, %v3564
    %v3772 = vpop.permute.xlu0 %3771
    %3775 = vset.pattern.permute.xlu0 0
    %3776 = vperm.xlu0 %3775, %v3565
    %v3777 = vpop.permute.xlu0 %3776
    %3780 = vset.pattern.permute.xlu0 0
    %3781 = vperm.xlu0 %3780, %v3566
    %v3782 = vpop.permute.xlu0 %3781
    %3785 = vset.pattern.permute.xlu0 0
    %3786 = vperm.xlu0 %3785, %v3567
    %v3787 = vpop.permute.xlu0 %3786
    %3790 = vset.pattern.permute.xlu0 0
    %3791 = vperm.xlu0 %3790, %v3568
    %v3792 = vpop.permute.xlu0 %3791
    %3795 = vset.pattern.permute.xlu0 0
    %3796 = vperm.xlu0 %3795, %v3569
    %v3797 = vpop.permute.xlu0 %3796
    %3800 = vset.pattern.permute.xlu0 0
    %3801 = vperm.xlu0 %3800, %v3570
    %v3802 = vpop.permute.xlu0 %3801
    %3805 = vset.pattern.permute.xlu0 0
    %3806 = vperm.xlu0 %3805, %v3571
    %v3807 = vpop.permute.xlu0 %3806
    %3810 = vset.pattern.permute.xlu0 0
    %3811 = vperm.xlu0 %3810, %v3572
    %v3812 = vpop.permute.xlu0 %3811
    %3815 = vset.pattern.permute.xlu0 0
    %3816 = vperm.xlu0 %3815, %v3573
    %v3817 = vpop.permute.xlu0 %3816
    %3820 = vset.pattern.permute.xlu0 0
    %3821 = vperm.xlu0 %3820, %v3574
    %v3822 = vpop.permute.xlu0 %3821
    %3825 = vset.pattern.permute.xlu0 0
    %3826 = vperm.xlu0 %3825, %v3575
    %v3827 = vpop.permute.xlu0 %3826
    %3830 = vset.pattern.permute.xlu0 0
    %3831 = vperm.xlu0 %3830, %v3576
    %v3832 = vpop.permute.xlu0 %3831
    %3835 = vset.pattern.permute.xlu0 0
    %3836 = vperm.xlu0 %3835, %v3577
    %v3837 = vpop.permute.xlu0 %3836
    %3840 = vset.pattern.permute.xlu0 0
    %3841 = vperm.xlu0 %3840, %v3578
    %v3842 = vpop.permute.xlu0 %3841
    %3845 = vset.pattern.permute.xlu0 0
    %3846 = vperm.xlu0 %3845, %v3579
    %v3847 = vpop.permute.xlu0 %3846
    %3850 = vset.pattern.permute.xlu0 0
    %3851 = vperm.xlu0 %3850, %v3580
    %v3852 = vpop.permute.xlu0 %3851
    %3855 = vset.pattern.permute.xlu0 0
    %3856 = vperm.xlu0 %3855, %v3581
    %v3857 = vpop.permute.xlu0 %3856
    %3860 = vset.pattern.permute.xlu0 0
    %3861 = vperm.xlu0 %3860, %v3582
    %v3862 = vpop.permute.xlu0 %3861
    %3865 = vset.pattern.permute.xlu0 0
    %3866 = vperm.xlu0 %3865, %v3583
    %v3867 = vpop.permute.xlu0 %3866
    %3870 = vset.pattern.permute.xlu0 0
    %3871 = vperm.xlu0 %3870, %v3584
    %v3872 = vpop.permute.xlu0 %3871
    %3875 = vset.pattern.permute.xlu0 0
    %3876 = vperm.xlu0 %3875, %v3585
    %v3877 = vpop.permute.xlu0 %3876
    %3880 = vset.pattern.permute.xlu0 0
    %3881 = vperm.xlu0 %3880, %v3586
    %v3882 = vpop.permute.xlu0 %3881
    %3885 = vset.pattern.permute.xlu0 0
    %3886 = vperm.xlu0 %3885, %v3587
    %v3887 = vpop.permute.xlu0 %3886
    %3890 = vset.pattern.permute.xlu0 0
    %3891 = vperm.xlu0 %3890, %v3588
    %v3892 = vpop.permute.xlu0 %3891
    %3895 = vset.pattern.permute.xlu0 0
    %3896 = vperm.xlu0 %3895, %v3589
    %v3897 = vpop.permute.xlu0 %3896
    %3900 = vset.pattern.permute.xlu0 0
    %3901 = vperm.xlu0 %3900, %v3590
    %v3902 = vpop.permute.xlu0 %3901
    %3905 = vset.pattern.permute.xlu0 0
    %3906 = vperm.xlu0 %3905, %v3591
    %v3907 = vpop.permute.xlu0 %3906
    %3910 = vset.pattern.permute.xlu0 0
    %3911 = vperm.xlu0 %3910, %v3592
    %v3912 = vpop.permute.xlu0 %3911
    %v3914 = vperm.slane %v3593, 0
    %v3915 = vmul.f32 %v3597, %v3914
    %v3916 = vmul.f32 %v3602, %v3914
    %v3917 = vmul.f32 %v3607, %v3914
    %v3918 = vmul.f32 %v3612, %v3914
    %v3919 = vmul.f32 %v3617, %v3914
    %v3920 = vmul.f32 %v3622, %v3914
    %v3921 = vmul.f32 %v3627, %v3914
    %v3922 = vmul.f32 %v3632, %v3914
    %v3923 = vmul.f32 %v3637, %v3914
    %v3924 = vmul.f32 %v3642, %v3914
    %v3925 = vmul.f32 %v3647, %v3914
    %v3926 = vmul.f32 %v3652, %v3914
    %v3927 = vmul.f32 %v3657, %v3914
    %v3928 = vmul.f32 %v3662, %v3914
    %v3929 = vmul.f32 %v3667, %v3914
    %v3930 = vmul.f32 %v3672, %v3914
    %v3931 = vmul.f32 %v3677, %v3914
    %v3932 = vmul.f32 %v3682, %v3914
    %v3933 = vmul.f32 %v3687, %v3914
    %v3934 = vmul.f32 %v3692, %v3914
    %v3935 = vmul.f32 %v3697, %v3914
    %v3936 = vmul.f32 %v3702, %v3914
    %v3937 = vmul.f32 %v3707, %v3914
    %v3938 = vmul.f32 %v3712, %v3914
    %v3939 = vmul.f32 %v3717, %v3914
    %v3940 = vmul.f32 %v3722, %v3914
    %v3941 = vmul.f32 %v3727, %v3914
    %v3942 = vmul.f32 %v3732, %v3914
    %v3943 = vmul.f32 %v3737, %v3914
    %v3944 = vmul.f32 %v3742, %v3914
    %v3945 = vmul.f32 %v3747, %v3914
    %v3946 = vmul.f32 %v3752, %v3914
    %v3947 = vmul.f32 %v3757, %v3914
    %v3948 = vmul.f32 %v3762, %v3914
    %v3949 = vmul.f32 %v3767, %v3914
    %v3950 = vmul.f32 %v3772, %v3914
    %v3951 = vmul.f32 %v3777, %v3914
    %v3952 = vmul.f32 %v3782, %v3914
    %v3953 = vmul.f32 %v3787, %v3914
    %v3954 = vmul.f32 %v3792, %v3914
    %v3955 = vmul.f32 %v3797, %v3914
    %v3956 = vmul.f32 %v3802, %v3914
    %v3957 = vmul.f32 %v3807, %v3914
    %v3958 = vmul.f32 %v3812, %v3914
    %v3959 = vmul.f32 %v3817, %v3914
    %v3960 = vmul.f32 %v3822, %v3914
    %v3961 = vmul.f32 %v3827, %v3914
    %v3962 = vmul.f32 %v3832, %v3914
    %v3963 = vmul.f32 %v3837, %v3914
    %v3964 = vmul.f32 %v3842, %v3914
    %v3965 = vmul.f32 %v3847, %v3914
    %v3966 = vmul.f32 %v3852, %v3914
    %v3967 = vmul.f32 %v3857, %v3914
    %v3968 = vmul.f32 %v3862, %v3914
    %v3969 = vmul.f32 %v3867, %v3914
    %v3970 = vmul.f32 %v3872, %v3914
    %v3971 = vmul.f32 %v3877, %v3914
    %v3972 = vmul.f32 %v3882, %v3914
    %v3973 = vmul.f32 %v3887, %v3914
    %v3974 = vmul.f32 %v3892, %v3914
    %v3975 = vmul.f32 %v3897, %v3914
    %v3976 = vmul.f32 %v3902, %v3914
    %v3977 = vmul.f32 %v3907, %v3914
    %v3978 = vmul.f32 %v3912, %v3914
    %v3979 = vadd.f32 %v3209, %v3915
    %v3980 = vadd.f32 %v3210, %v3916
    %v3981 = vadd.f32 %v3211, %v3917
    %v3982 = vadd.f32 %v3212, %v3918
    %v3983 = vadd.f32 %v3213, %v3919
    %v3984 = vadd.f32 %v3214, %v3920
    %v3985 = vadd.f32 %v3215, %v3921
    %v3986 = vadd.f32 %v3216, %v3922
    %v3987 = vadd.f32 %v3217, %v3923
    %v3988 = vadd.f32 %v3218, %v3924
    %v3989 = vadd.f32 %v3219, %v3925
    %v3990 = vadd.f32 %v3220, %v3926
    %v3991 = vadd.f32 %v3221, %v3927
    %v3992 = vadd.f32 %v3222, %v3928
    %v3993 = vadd.f32 %v3223, %v3929
    %v3994 = vadd.f32 %v3224, %v3930
    %v3995 = vadd.f32 %v3225, %v3931
    %v3996 = vadd.f32 %v3226, %v3932
    %v3997 = vadd.f32 %v3227, %v3933
    %v3998 = vadd.f32 %v3228, %v3934
    %v3999 = vadd.f32 %v3229, %v3935
    %v4000 = vadd.f32 %v3230, %v3936
    %v4001 = vadd.f32 %v3231, %v3937
    %v4002 = vadd.f32 %v3232, %v3938
    %v4003 = vadd.f32 %v3233, %v3939
    %v4004 = vadd.f32 %v3234, %v3940
    %v4005 = vadd.f32 %v3235, %v3941
    %v4006 = vadd.f32 %v3236, %v3942
    %v4007 = vadd.f32 %v3237, %v3943
    %v4008 = vadd.f32 %v3238, %v3944
    %v4009 = vadd.f32 %v3239, %v3945
    %v4010 = vadd.f32 %v3240, %v3946
    %v4011 = vadd.f32 %v3241, %v3947
    %v4012 = vadd.f32 %v3242, %v3948
    %v4013 = vadd.f32 %v3243, %v3949
    %v4014 = vadd.f32 %v3244, %v3950
    %v4015 = vadd.f32 %v3245, %v3951
    %v4016 = vadd.f32 %v3246, %v3952
    %v4017 = vadd.f32 %v3247, %v3953
    %v4018 = vadd.f32 %v3248, %v3954
    %v4019 = vadd.f32 %v3249, %v3955
    %v4020 = vadd.f32 %v3250, %v3956
    %v4021 = vadd.f32 %v3251, %v3957
    %v4022 = vadd.f32 %v3252, %v3958
    %v4023 = vadd.f32 %v3253, %v3959
    %v4024 = vadd.f32 %v3254, %v3960
    %v4025 = vadd.f32 %v3255, %v3961
    %v4026 = vadd.f32 %v3256, %v3962
    %v4027 = vadd.f32 %v3257, %v3963
    %v4028 = vadd.f32 %v3258, %v3964
    %v4029 = vadd.f32 %v3259, %v3965
    %v4030 = vadd.f32 %v3260, %v3966
    %v4031 = vadd.f32 %v3261, %v3967
    %v4032 = vadd.f32 %v3262, %v3968
    %v4033 = vadd.f32 %v3263, %v3969
    %v4034 = vadd.f32 %v3264, %v3970
    %v4035 = vadd.f32 %v3265, %v3971
    %v4036 = vadd.f32 %v3266, %v3972
    %v4037 = vadd.f32 %v3267, %v3973
    %v4038 = vadd.f32 %v3268, %v3974
    %v4039 = vadd.f32 %v3269, %v3975
    %v4040 = vadd.f32 %v3270, %v3976
    %v4041 = vadd.f32 %v3271, %v3977
    %v4042 = vadd.f32 %v3272, %v3978
    %v4043 = vld [vmem:[#allocation2 + $0x19] sm:$0xff]
    %v4044 = vld [vmem:[#allocation2 + $0x21] sm:$0xff]
    %v4045 = vld [vmem:[#allocation2 + $0x29] sm:$0xff]
    %v4046 = vld [vmem:[#allocation2 + $0x31] sm:$0xff]
    %v4047 = vld [vmem:[#allocation2 + $0x39] sm:$0xff]
    %v4048 = vld [vmem:[#allocation2 + $0x41] sm:$0xff]
    %v4049 = vld [vmem:[#allocation2 + $0x49] sm:$0xff]
    %v4050 = vld [vmem:[#allocation2 + $0x51] sm:$0xff]
    %v4051 = vld [vmem:[#allocation2 + $0x59] sm:$0xff]
    %v4052 = vld [vmem:[#allocation2 + $0x61] sm:$0xff]
    %v4053 = vld [vmem:[#allocation2 + $0x69] sm:$0xff]
    %v4054 = vld [vmem:[#allocation2 + $0x71] sm:$0xff]
    %v4055 = vld [vmem:[#allocation2 + $0x79] sm:$0xff]
    %v4056 = vld [vmem:[#allocation2 + $0x81] sm:$0xff]
    %v4057 = vld [vmem:[#allocation2 + $0x89] sm:$0xff]
    %v4058 = vld [vmem:[#allocation2 + $0x91] sm:$0xff]
    %v4059 = vld [vmem:[#allocation2 + $0x99] sm:$0xff]
    %v4060 = vld [vmem:[#allocation2 + $0xa1] sm:$0xff]
    %v4061 = vld [vmem:[#allocation2 + $0xa9] sm:$0xff]
    %v4062 = vld [vmem:[#allocation2 + $0xb1] sm:$0xff]
    %v4063 = vld [vmem:[#allocation2 + $0xb9] sm:$0xff]
    %v4064 = vld [vmem:[#allocation2 + $0xc1] sm:$0xff]
    %v4065 = vld [vmem:[#allocation2 + $0xc9] sm:$0xff]
    %v4066 = vld [vmem:[#allocation2 + $0xd1] sm:$0xff]
    %v4067 = vld [vmem:[#allocation2 + $0xd9] sm:$0xff]
    %v4068 = vld [vmem:[#allocation2 + $0xe1] sm:$0xff]
    %v4069 = vld [vmem:[#allocation2 + $0xe9] sm:$0xff]
    %v4070 = vld [vmem:[#allocation2 + $0xf1] sm:$0xff]
    %v4071 = vld [vmem:[#allocation2 + $0xf9] sm:$0xff]
    %v4072 = vld [vmem:[#allocation2 + $0x101] sm:$0xff]
    %v4073 = vld [vmem:[#allocation2 + $0x109] sm:$0xff]
    %v4074 = vld [vmem:[#allocation2 + $0x111] sm:$0xff]
    %v4075 = vld [vmem:[#allocation2 + $0x119] sm:$0xff]
    %v4076 = vld [vmem:[#allocation2 + $0x121] sm:$0xff]
    %v4077 = vld [vmem:[#allocation2 + $0x129] sm:$0xff]
    %v4078 = vld [vmem:[#allocation2 + $0x131] sm:$0xff]
    %v4079 = vld [vmem:[#allocation2 + $0x139] sm:$0xff]
    %v4080 = vld [vmem:[#allocation2 + $0x141] sm:$0xff]
    %v4081 = vld [vmem:[#allocation2 + $0x149] sm:$0xff]
    %v4082 = vld [vmem:[#allocation2 + $0x151] sm:$0xff]
    %v4083 = vld [vmem:[#allocation2 + $0x159] sm:$0xff]
    %v4084 = vld [vmem:[#allocation2 + $0x161] sm:$0xff]
    %v4085 = vld [vmem:[#allocation2 + $0x169] sm:$0xff]
    %v4086 = vld [vmem:[#allocation2 + $0x171] sm:$0xff]
    %v4087 = vld [vmem:[#allocation2 + $0x179] sm:$0xff]
    %v4088 = vld [vmem:[#allocation2 + $0x181] sm:$0xff]
    %v4089 = vld [vmem:[#allocation2 + $0x189] sm:$0xff]
    %v4090 = vld [vmem:[#allocation2 + $0x191] sm:$0xff]
    %v4091 = vld [vmem:[#allocation2 + $0x199] sm:$0xff]
    %v4092 = vld [vmem:[#allocation2 + $0x1a1] sm:$0xff]
    %v4093 = vld [vmem:[#allocation2 + $0x1a9] sm:$0xff]
    %v4094 = vld [vmem:[#allocation2 + $0x1b1] sm:$0xff]
    %v4095 = vld [vmem:[#allocation2 + $0x1b9] sm:$0xff]
    %v4096 = vld [vmem:[#allocation2 + $0x1c1] sm:$0xff]
    %v4097 = vld [vmem:[#allocation2 + $0x1c9] sm:$0xff]
    %v4098 = vld [vmem:[#allocation2 + $0x1d1] sm:$0xff]
    %v4099 = vld [vmem:[#allocation2 + $0x1d9] sm:$0xff]
    %v4100 = vld [vmem:[#allocation2 + $0x1e1] sm:$0xff]
    %v4101 = vld [vmem:[#allocation2 + $0x1e9] sm:$0xff]
    %v4102 = vld [vmem:[#allocation2 + $0x1f1] sm:$0xff]
    %v4103 = vld [vmem:[#allocation2 + $0x1f9] sm:$0xff]
    %v4104 = vld [vmem:[#allocation2 + $0x201] sm:$0xff]
    %v4105 = vld [vmem:[#allocation2 + $0x209] sm:$0xff]
    %v4106 = vld [vmem:[#allocation2 + $0x211] sm:$0xff]
    %4107 = vrot.lane.b32.xlu0 %v321, 123
    %v4108 = vpop.permute.xlu0 %4107
    %4109 = vrot.lane.b32.xlu0 %v322, 123
    %v4110 = vpop.permute.xlu0 %4109
    %4111 = vrot.lane.b32.xlu0 %v323, 123
    %v4112 = vpop.permute.xlu0 %4111
    %4113 = vrot.lane.b32.xlu0 %v324, 123
    %v4114 = vpop.permute.xlu0 %4113
    %4115 = vrot.lane.b32.xlu0 %v325, 123
    %v4116 = vpop.permute.xlu0 %4115
    %4117 = vrot.lane.b32.xlu0 %v326, 123
    %v4118 = vpop.permute.xlu0 %4117
    %4119 = vrot.lane.b32.xlu0 %v327, 123
    %v4120 = vpop.permute.xlu0 %4119
    %4121 = vrot.lane.b32.xlu0 %v328, 123
    %v4122 = vpop.permute.xlu0 %4121
    %4123 = vrot.lane.b32.xlu0 %v329, 123
    %v4124 = vpop.permute.xlu0 %4123
    %4125 = vrot.lane.b32.xlu0 %v330, 123
    %v4126 = vpop.permute.xlu0 %4125
    %4127 = vrot.lane.b32.xlu0 %v331, 123
    %v4128 = vpop.permute.xlu0 %4127
    %4129 = vrot.lane.b32.xlu0 %v332, 123
    %v4130 = vpop.permute.xlu0 %4129
    %4131 = vrot.lane.b32.xlu0 %v333, 123
    %v4132 = vpop.permute.xlu0 %4131
    %4133 = vrot.lane.b32.xlu0 %v334, 123
    %v4134 = vpop.permute.xlu0 %4133
    %4135 = vrot.lane.b32.xlu0 %v335, 123
    %v4136 = vpop.permute.xlu0 %4135
    %4137 = vrot.lane.b32.xlu0 %v336, 123
    %v4138 = vpop.permute.xlu0 %4137
    %4139 = vrot.lane.b32.xlu0 %v337, 123
    %v4140 = vpop.permute.xlu0 %4139
    %4141 = vrot.lane.b32.xlu0 %v338, 123
    %v4142 = vpop.permute.xlu0 %4141
    %4143 = vrot.lane.b32.xlu0 %v339, 123
    %v4144 = vpop.permute.xlu0 %4143
    %4145 = vrot.lane.b32.xlu0 %v340, 123
    %v4146 = vpop.permute.xlu0 %4145
    %4147 = vrot.lane.b32.xlu0 %v341, 123
    %v4148 = vpop.permute.xlu0 %4147
    %4149 = vrot.lane.b32.xlu0 %v342, 123
    %v4150 = vpop.permute.xlu0 %4149
    %4151 = vrot.lane.b32.xlu0 %v343, 123
    %v4152 = vpop.permute.xlu0 %4151
    %4153 = vrot.lane.b32.xlu0 %v344, 123
    %v4154 = vpop.permute.xlu0 %4153
    %4155 = vrot.lane.b32.xlu0 %v345, 123
    %v4156 = vpop.permute.xlu0 %4155
    %4157 = vrot.lane.b32.xlu0 %v346, 123
    %v4158 = vpop.permute.xlu0 %4157
    %4159 = vrot.lane.b32.xlu0 %v347, 123
    %v4160 = vpop.permute.xlu0 %4159
    %4161 = vrot.lane.b32.xlu0 %v348, 123
    %v4162 = vpop.permute.xlu0 %4161
    %4163 = vrot.lane.b32.xlu0 %v349, 123
    %v4164 = vpop.permute.xlu0 %4163
    %4165 = vrot.lane.b32.xlu0 %v350, 123
    %v4166 = vpop.permute.xlu0 %4165
    %4167 = vrot.lane.b32.xlu0 %v351, 123
    %v4168 = vpop.permute.xlu0 %4167
    %4169 = vrot.lane.b32.xlu0 %v352, 123
    %v4170 = vpop.permute.xlu0 %4169
    %4171 = vrot.lane.b32.xlu0 %v353, 123
    %v4172 = vpop.permute.xlu0 %4171
    %4173 = vrot.lane.b32.xlu0 %v354, 123
    %v4174 = vpop.permute.xlu0 %4173
    %4175 = vrot.lane.b32.xlu0 %v355, 123
    %v4176 = vpop.permute.xlu0 %4175
    %4177 = vrot.lane.b32.xlu0 %v356, 123
    %v4178 = vpop.permute.xlu0 %4177
    %4179 = vrot.lane.b32.xlu0 %v357, 123
    %v4180 = vpop.permute.xlu0 %4179
    %4181 = vrot.lane.b32.xlu0 %v358, 123
    %v4182 = vpop.permute.xlu0 %4181
    %4183 = vrot.lane.b32.xlu0 %v359, 123
    %v4184 = vpop.permute.xlu0 %4183
    %4185 = vrot.lane.b32.xlu0 %v360, 123
    %v4186 = vpop.permute.xlu0 %4185
    %4187 = vrot.lane.b32.xlu0 %v361, 123
    %v4188 = vpop.permute.xlu0 %4187
    %4189 = vrot.lane.b32.xlu0 %v362, 123
    %v4190 = vpop.permute.xlu0 %4189
    %4191 = vrot.lane.b32.xlu0 %v363, 123
    %v4192 = vpop.permute.xlu0 %4191
    %4193 = vrot.lane.b32.xlu0 %v364, 123
    %v4194 = vpop.permute.xlu0 %4193
    %4195 = vrot.lane.b32.xlu0 %v365, 123
    %v4196 = vpop.permute.xlu0 %4195
    %4197 = vrot.lane.b32.xlu0 %v366, 123
    %v4198 = vpop.permute.xlu0 %4197
    %4199 = vrot.lane.b32.xlu0 %v367, 123
    %v4200 = vpop.permute.xlu0 %4199
    %4201 = vrot.lane.b32.xlu0 %v368, 123
    %v4202 = vpop.permute.xlu0 %4201
    %4203 = vrot.lane.b32.xlu0 %v369, 123
    %v4204 = vpop.permute.xlu0 %4203
    %4205 = vrot.lane.b32.xlu0 %v370, 123
    %v4206 = vpop.permute.xlu0 %4205
    %4207 = vrot.lane.b32.xlu0 %v371, 123
    %v4208 = vpop.permute.xlu0 %4207
    %4209 = vrot.lane.b32.xlu0 %v372, 123
    %v4210 = vpop.permute.xlu0 %4209
    %4211 = vrot.lane.b32.xlu0 %v373, 123
    %v4212 = vpop.permute.xlu0 %4211
    %4213 = vrot.lane.b32.xlu0 %v374, 123
    %v4214 = vpop.permute.xlu0 %4213
    %4215 = vrot.lane.b32.xlu0 %v375, 123
    %v4216 = vpop.permute.xlu0 %4215
    %4217 = vrot.lane.b32.xlu0 %v376, 123
    %v4218 = vpop.permute.xlu0 %4217
    %4219 = vrot.lane.b32.xlu0 %v377, 123
    %v4220 = vpop.permute.xlu0 %4219
    %4221 = vrot.lane.b32.xlu0 %v378, 123
    %v4222 = vpop.permute.xlu0 %4221
    %4223 = vrot.lane.b32.xlu0 %v379, 123
    %v4224 = vpop.permute.xlu0 %4223
    %4225 = vrot.lane.b32.xlu0 %v380, 123
    %v4226 = vpop.permute.xlu0 %4225
    %4227 = vrot.lane.b32.xlu0 %v381, 123
    %v4228 = vpop.permute.xlu0 %4227
    %4229 = vrot.lane.b32.xlu0 %v382, 123
    %v4230 = vpop.permute.xlu0 %4229
    %4231 = vrot.lane.b32.xlu0 %v383, 123
    %v4232 = vpop.permute.xlu0 %4231
    %4233 = vrot.lane.b32.xlu0 %v384, 123
    %v4234 = vpop.permute.xlu0 %4233
    %v4299 = vmul.f32 %v4043, %v4108
    %v4300 = vmul.f32 %v4044, %v4110
    %v4301 = vmul.f32 %v4045, %v4112
    %v4302 = vmul.f32 %v4046, %v4114
    %v4303 = vmul.f32 %v4047, %v4116
    %v4304 = vmul.f32 %v4048, %v4118
    %v4305 = vmul.f32 %v4049, %v4120
    %v4306 = vmul.f32 %v4050, %v4122
    %v4307 = vmul.f32 %v4051, %v4124
    %v4308 = vmul.f32 %v4052, %v4126
    %v4309 = vmul.f32 %v4053, %v4128
    %v4310 = vmul.f32 %v4054, %v4130
    %v4311 = vmul.f32 %v4055, %v4132
    %v4312 = vmul.f32 %v4056, %v4134
    %v4313 = vmul.f32 %v4057, %v4136
    %v4314 = vmul.f32 %v4058, %v4138
    %v4315 = vmul.f32 %v4059, %v4140
    %v4316 = vmul.f32 %v4060, %v4142
    %v4317 = vmul.f32 %v4061, %v4144
    %v4318 = vmul.f32 %v4062, %v4146
    %v4319 = vmul.f32 %v4063, %v4148
    %v4320 = vmul.f32 %v4064, %v4150
    %v4321 = vmul.f32 %v4065, %v4152
    %v4322 = vmul.f32 %v4066, %v4154
    %v4323 = vmul.f32 %v4067, %v4156
    %v4324 = vmul.f32 %v4068, %v4158
    %v4325 = vmul.f32 %v4069, %v4160
    %v4326 = vmul.f32 %v4070, %v4162
    %v4327 = vmul.f32 %v4071, %v4164
    %v4328 = vmul.f32 %v4072, %v4166
    %v4329 = vmul.f32 %v4073, %v4168
    %v4330 = vmul.f32 %v4074, %v4170
    %v4331 = vmul.f32 %v4075, %v4172
    %v4332 = vmul.f32 %v4076, %v4174
    %v4333 = vmul.f32 %v4077, %v4176
    %v4334 = vmul.f32 %v4078, %v4178
    %v4335 = vmul.f32 %v4079, %v4180
    %v4336 = vmul.f32 %v4080, %v4182
    %v4337 = vmul.f32 %v4081, %v4184
    %v4338 = vmul.f32 %v4082, %v4186
    %v4339 = vmul.f32 %v4083, %v4188
    %v4340 = vmul.f32 %v4084, %v4190
    %v4341 = vmul.f32 %v4085, %v4192
    %v4342 = vmul.f32 %v4086, %v4194
    %v4343 = vmul.f32 %v4087, %v4196
    %v4344 = vmul.f32 %v4088, %v4198
    %v4345 = vmul.f32 %v4089, %v4200
    %v4346 = vmul.f32 %v4090, %v4202
    %v4347 = vmul.f32 %v4091, %v4204
    %v4348 = vmul.f32 %v4092, %v4206
    %v4349 = vmul.f32 %v4093, %v4208
    %v4350 = vmul.f32 %v4094, %v4210
    %v4351 = vmul.f32 %v4095, %v4212
    %v4352 = vmul.f32 %v4096, %v4214
    %v4353 = vmul.f32 %v4097, %v4216
    %v4354 = vmul.f32 %v4098, %v4218
    %v4355 = vmul.f32 %v4099, %v4220
    %v4356 = vmul.f32 %v4100, %v4222
    %v4357 = vmul.f32 %v4101, %v4224
    %v4358 = vmul.f32 %v4102, %v4226
    %v4359 = vmul.f32 %v4103, %v4228
    %v4360 = vmul.f32 %v4104, %v4230
    %v4361 = vmul.f32 %v4105, %v4232
    %v4362 = vmul.f32 %v4106, %v4234
    %v4363 = vld [vmem:[%s1 + $0x5] sm:$0x1]
    %4365 = vset.pattern.permute.xlu0 0
    %4366 = vperm.xlu0 %4365, %v4299
    %v4367 = vpop.permute.xlu0 %4366
    %4370 = vset.pattern.permute.xlu0 0
    %4371 = vperm.xlu0 %4370, %v4300
    %v4372 = vpop.permute.xlu0 %4371
    %4375 = vset.pattern.permute.xlu0 0
    %4376 = vperm.xlu0 %4375, %v4301
    %v4377 = vpop.permute.xlu0 %4376
    %4380 = vset.pattern.permute.xlu0 0
    %4381 = vperm.xlu0 %4380, %v4302
    %v4382 = vpop.permute.xlu0 %4381
    %4385 = vset.pattern.permute.xlu0 0
    %4386 = vperm.xlu0 %4385, %v4303
    %v4387 = vpop.permute.xlu0 %4386
    %4390 = vset.pattern.permute.xlu0 0
    %4391 = vperm.xlu0 %4390, %v4304
    %v4392 = vpop.permute.xlu0 %4391
    %4395 = vset.pattern.permute.xlu0 0
    %4396 = vperm.xlu0 %4395, %v4305
    %v4397 = vpop.permute.xlu0 %4396
    %4400 = vset.pattern.permute.xlu0 0
    %4401 = vperm.xlu0 %4400, %v4306
    %v4402 = vpop.permute.xlu0 %4401
    %4405 = vset.pattern.permute.xlu0 0
    %4406 = vperm.xlu0 %4405, %v4307
    %v4407 = vpop.permute.xlu0 %4406
    %4410 = vset.pattern.permute.xlu0 0
    %4411 = vperm.xlu0 %4410, %v4308
    %v4412 = vpop.permute.xlu0 %4411
    %4415 = vset.pattern.permute.xlu0 0
    %4416 = vperm.xlu0 %4415, %v4309
    %v4417 = vpop.permute.xlu0 %4416
    %4420 = vset.pattern.permute.xlu0 0
    %4421 = vperm.xlu0 %4420, %v4310
    %v4422 = vpop.permute.xlu0 %4421
    %4425 = vset.pattern.permute.xlu0 0
    %4426 = vperm.xlu0 %4425, %v4311
    %v4427 = vpop.permute.xlu0 %4426
    %4430 = vset.pattern.permute.xlu0 0
    %4431 = vperm.xlu0 %4430, %v4312
    %v4432 = vpop.permute.xlu0 %4431
    %4435 = vset.pattern.permute.xlu0 0
    %4436 = vperm.xlu0 %4435, %v4313
    %v4437 = vpop.permute.xlu0 %4436
    %4440 = vset.pattern.permute.xlu0 0
    %4441 = vperm.xlu0 %4440, %v4314
    %v4442 = vpop.permute.xlu0 %4441
    %4445 = vset.pattern.permute.xlu0 0
    %4446 = vperm.xlu0 %4445, %v4315
    %v4447 = vpop.permute.xlu0 %4446
    %4450 = vset.pattern.permute.xlu0 0
    %4451 = vperm.xlu0 %4450, %v4316
    %v4452 = vpop.permute.xlu0 %4451
    %4455 = vset.pattern.permute.xlu0 0
    %4456 = vperm.xlu0 %4455, %v4317
    %v4457 = vpop.permute.xlu0 %4456
    %4460 = vset.pattern.permute.xlu0 0
    %4461 = vperm.xlu0 %4460, %v4318
    %v4462 = vpop.permute.xlu0 %4461
    %4465 = vset.pattern.permute.xlu0 0
    %4466 = vperm.xlu0 %4465, %v4319
    %v4467 = vpop.permute.xlu0 %4466
    %4470 = vset.pattern.permute.xlu0 0
    %4471 = vperm.xlu0 %4470, %v4320
    %v4472 = vpop.permute.xlu0 %4471
    %4475 = vset.pattern.permute.xlu0 0
    %4476 = vperm.xlu0 %4475, %v4321
    %v4477 = vpop.permute.xlu0 %4476
    %4480 = vset.pattern.permute.xlu0 0
    %4481 = vperm.xlu0 %4480, %v4322
    %v4482 = vpop.permute.xlu0 %4481
    %4485 = vset.pattern.permute.xlu0 0
    %4486 = vperm.xlu0 %4485, %v4323
    %v4487 = vpop.permute.xlu0 %4486
    %4490 = vset.pattern.permute.xlu0 0
    %4491 = vperm.xlu0 %4490, %v4324
    %v4492 = vpop.permute.xlu0 %4491
    %4495 = vset.pattern.permute.xlu0 0
    %4496 = vperm.xlu0 %4495, %v4325
    %v4497 = vpop.permute.xlu0 %4496
    %4500 = vset.pattern.permute.xlu0 0
    %4501 = vperm.xlu0 %4500, %v4326
    %v4502 = vpop.permute.xlu0 %4501
    %4505 = vset.pattern.permute.xlu0 0
    %4506 = vperm.xlu0 %4505, %v4327
    %v4507 = vpop.permute.xlu0 %4506
    %4510 = vset.pattern.permute.xlu0 0
    %4511 = vperm.xlu0 %4510, %v4328
    %v4512 = vpop.permute.xlu0 %4511
    %4515 = vset.pattern.permute.xlu0 0
    %4516 = vperm.xlu0 %4515, %v4329
    %v4517 = vpop.permute.xlu0 %4516
    %4520 = vset.pattern.permute.xlu0 0
    %4521 = vperm.xlu0 %4520, %v4330
    %v4522 = vpop.permute.xlu0 %4521
    %4525 = vset.pattern.permute.xlu0 0
    %4526 = vperm.xlu0 %4525, %v4331
    %v4527 = vpop.permute.xlu0 %4526
    %4530 = vset.pattern.permute.xlu0 0
    %4531 = vperm.xlu0 %4530, %v4332
    %v4532 = vpop.permute.xlu0 %4531
    %4535 = vset.pattern.permute.xlu0 0
    %4536 = vperm.xlu0 %4535, %v4333
    %v4537 = vpop.permute.xlu0 %4536
    %4540 = vset.pattern.permute.xlu0 0
    %4541 = vperm.xlu0 %4540, %v4334
    %v4542 = vpop.permute.xlu0 %4541
    %4545 = vset.pattern.permute.xlu0 0
    %4546 = vperm.xlu0 %4545, %v4335
    %v4547 = vpop.permute.xlu0 %4546
    %4550 = vset.pattern.permute.xlu0 0
    %4551 = vperm.xlu0 %4550, %v4336
    %v4552 = vpop.permute.xlu0 %4551
    %4555 = vset.pattern.permute.xlu0 0
    %4556 = vperm.xlu0 %4555, %v4337
    %v4557 = vpop.permute.xlu0 %4556
    %4560 = vset.pattern.permute.xlu0 0
    %4561 = vperm.xlu0 %4560, %v4338
    %v4562 = vpop.permute.xlu0 %4561
    %4565 = vset.pattern.permute.xlu0 0
    %4566 = vperm.xlu0 %4565, %v4339
    %v4567 = vpop.permute.xlu0 %4566
    %4570 = vset.pattern.permute.xlu0 0
    %4571 = vperm.xlu0 %4570, %v4340
    %v4572 = vpop.permute.xlu0 %4571
    %4575 = vset.pattern.permute.xlu0 0
    %4576 = vperm.xlu0 %4575, %v4341
    %v4577 = vpop.permute.xlu0 %4576
    %4580 = vset.pattern.permute.xlu0 0
    %4581 = vperm.xlu0 %4580, %v4342
    %v4582 = vpop.permute.xlu0 %4581
    %4585 = vset.pattern.permute.xlu0 0
    %4586 = vperm.xlu0 %4585, %v4343
    %v4587 = vpop.permute.xlu0 %4586
    %4590 = vset.pattern.permute.xlu0 0
    %4591 = vperm.xlu0 %4590, %v4344
    %v4592 = vpop.permute.xlu0 %4591
    %4595 = vset.pattern.permute.xlu0 0
    %4596 = vperm.xlu0 %4595, %v4345
    %v4597 = vpop.permute.xlu0 %4596
    %4600 = vset.pattern.permute.xlu0 0
    %4601 = vperm.xlu0 %4600, %v4346
    %v4602 = vpop.permute.xlu0 %4601
    %4605 = vset.pattern.permute.xlu0 0
    %4606 = vperm.xlu0 %4605, %v4347
    %v4607 = vpop.permute.xlu0 %4606
    %4610 = vset.pattern.permute.xlu0 0
    %4611 = vperm.xlu0 %4610, %v4348
    %v4612 = vpop.permute.xlu0 %4611
    %4615 = vset.pattern.permute.xlu0 0
    %4616 = vperm.xlu0 %4615, %v4349
    %v4617 = vpop.permute.xlu0 %4616
    %4620 = vset.pattern.permute.xlu0 0
    %4621 = vperm.xlu0 %4620, %v4350
    %v4622 = vpop.permute.xlu0 %4621
    %4625 = vset.pattern.permute.xlu0 0
    %4626 = vperm.xlu0 %4625, %v4351
    %v4627 = vpop.permute.xlu0 %4626
    %4630 = vset.pattern.permute.xlu0 0
    %4631 = vperm.xlu0 %4630, %v4352
    %v4632 = vpop.permute.xlu0 %4631
    %4635 = vset.pattern.permute.xlu0 0
    %4636 = vperm.xlu0 %4635, %v4353
    %v4637 = vpop.permute.xlu0 %4636
    %4640 = vset.pattern.permute.xlu0 0
    %4641 = vperm.xlu0 %4640, %v4354
    %v4642 = vpop.permute.xlu0 %4641
    %4645 = vset.pattern.permute.xlu0 0
    %4646 = vperm.xlu0 %4645, %v4355
    %v4647 = vpop.permute.xlu0 %4646
    %4650 = vset.pattern.permute.xlu0 0
    %4651 = vperm.xlu0 %4650, %v4356
    %v4652 = vpop.permute.xlu0 %4651
    %4655 = vset.pattern.permute.xlu0 0
    %4656 = vperm.xlu0 %4655, %v4357
    %v4657 = vpop.permute.xlu0 %4656
    %4660 = vset.pattern.permute.xlu0 0
    %4661 = vperm.xlu0 %4660, %v4358
    %v4662 = vpop.permute.xlu0 %4661
    %4665 = vset.pattern.permute.xlu0 0
    %4666 = vperm.xlu0 %4665, %v4359
    %v4667 = vpop.permute.xlu0 %4666
    %4670 = vset.pattern.permute.xlu0 0
    %4671 = vperm.xlu0 %4670, %v4360
    %v4672 = vpop.permute.xlu0 %4671
    %4675 = vset.pattern.permute.xlu0 0
    %4676 = vperm.xlu0 %4675, %v4361
    %v4677 = vpop.permute.xlu0 %4676
    %4680 = vset.pattern.permute.xlu0 0
    %4681 = vperm.xlu0 %4680, %v4362
    %v4682 = vpop.permute.xlu0 %4681
    %v4684 = vperm.slane %v4363, 0
    %v4685 = vmul.f32 %v4367, %v4684
    %v4686 = vmul.f32 %v4372, %v4684
    %v4687 = vmul.f32 %v4377, %v4684
    %v4688 = vmul.f32 %v4382, %v4684
    %v4689 = vmul.f32 %v4387, %v4684
    %v4690 = vmul.f32 %v4392, %v4684
    %v4691 = vmul.f32 %v4397, %v4684
    %v4692 = vmul.f32 %v4402, %v4684
    %v4693 = vmul.f32 %v4407, %v4684
    %v4694 = vmul.f32 %v4412, %v4684
    %v4695 = vmul.f32 %v4417, %v4684
    %v4696 = vmul.f32 %v4422, %v4684
    %v4697 = vmul.f32 %v4427, %v4684
    %v4698 = vmul.f32 %v4432, %v4684
    %v4699 = vmul.f32 %v4437, %v4684
    %v4700 = vmul.f32 %v4442, %v4684
    %v4701 = vmul.f32 %v4447, %v4684
    %v4702 = vmul.f32 %v4452, %v4684
    %v4703 = vmul.f32 %v4457, %v4684
    %v4704 = vmul.f32 %v4462, %v4684
    %v4705 = vmul.f32 %v4467, %v4684
    %v4706 = vmul.f32 %v4472, %v4684
    %v4707 = vmul.f32 %v4477, %v4684
    %v4708 = vmul.f32 %v4482, %v4684
    %v4709 = vmul.f32 %v4487, %v4684
    %v4710 = vmul.f32 %v4492, %v4684
    %v4711 = vmul.f32 %v4497, %v4684
    %v4712 = vmul.f32 %v4502, %v4684
    %v4713 = vmul.f32 %v4507, %v4684
    %v4714 = vmul.f32 %v4512, %v4684
    %v4715 = vmul.f32 %v4517, %v4684
    %v4716 = vmul.f32 %v4522, %v4684
    %v4717 = vmul.f32 %v4527, %v4684
    %v4718 = vmul.f32 %v4532, %v4684
    %v4719 = vmul.f32 %v4537, %v4684
    %v4720 = vmul.f32 %v4542, %v4684
    %v4721 = vmul.f32 %v4547, %v4684
    %v4722 = vmul.f32 %v4552, %v4684
    %v4723 = vmul.f32 %v4557, %v4684
    %v4724 = vmul.f32 %v4562, %v4684
    %v4725 = vmul.f32 %v4567, %v4684
    %v4726 = vmul.f32 %v4572, %v4684
    %v4727 = vmul.f32 %v4577, %v4684
    %v4728 = vmul.f32 %v4582, %v4684
    %v4729 = vmul.f32 %v4587, %v4684
    %v4730 = vmul.f32 %v4592, %v4684
    %v4731 = vmul.f32 %v4597, %v4684
    %v4732 = vmul.f32 %v4602, %v4684
    %v4733 = vmul.f32 %v4607, %v4684
    %v4734 = vmul.f32 %v4612, %v4684
    %v4735 = vmul.f32 %v4617, %v4684
    %v4736 = vmul.f32 %v4622, %v4684
    %v4737 = vmul.f32 %v4627, %v4684
    %v4738 = vmul.f32 %v4632, %v4684
    %v4739 = vmul.f32 %v4637, %v4684
    %v4740 = vmul.f32 %v4642, %v4684
    %v4741 = vmul.f32 %v4647, %v4684
    %v4742 = vmul.f32 %v4652, %v4684
    %v4743 = vmul.f32 %v4657, %v4684
    %v4744 = vmul.f32 %v4662, %v4684
    %v4745 = vmul.f32 %v4667, %v4684
    %v4746 = vmul.f32 %v4672, %v4684
    %v4747 = vmul.f32 %v4677, %v4684
    %v4748 = vmul.f32 %v4682, %v4684
    %v4749 = vadd.f32 %v3979, %v4685
    %v4750 = vadd.f32 %v3980, %v4686
    %v4751 = vadd.f32 %v3981, %v4687
    %v4752 = vadd.f32 %v3982, %v4688
    %v4753 = vadd.f32 %v3983, %v4689
    %v4754 = vadd.f32 %v3984, %v4690
    %v4755 = vadd.f32 %v3985, %v4691
    %v4756 = vadd.f32 %v3986, %v4692
    %v4757 = vadd.f32 %v3987, %v4693
    %v4758 = vadd.f32 %v3988, %v4694
    %v4759 = vadd.f32 %v3989, %v4695
    %v4760 = vadd.f32 %v3990, %v4696
    %v4761 = vadd.f32 %v3991, %v4697
    %v4762 = vadd.f32 %v3992, %v4698
    %v4763 = vadd.f32 %v3993, %v4699
    %v4764 = vadd.f32 %v3994, %v4700
    %v4765 = vadd.f32 %v3995, %v4701
    %v4766 = vadd.f32 %v3996, %v4702
    %v4767 = vadd.f32 %v3997, %v4703
    %v4768 = vadd.f32 %v3998, %v4704
    %v4769 = vadd.f32 %v3999, %v4705
    %v4770 = vadd.f32 %v4000, %v4706
    %v4771 = vadd.f32 %v4001, %v4707
    %v4772 = vadd.f32 %v4002, %v4708
    %v4773 = vadd.f32 %v4003, %v4709
    %v4774 = vadd.f32 %v4004, %v4710
    %v4775 = vadd.f32 %v4005, %v4711
    %v4776 = vadd.f32 %v4006, %v4712
    %v4777 = vadd.f32 %v4007, %v4713
    %v4778 = vadd.f32 %v4008, %v4714
    %v4779 = vadd.f32 %v4009, %v4715
    %v4780 = vadd.f32 %v4010, %v4716
    %v4781 = vadd.f32 %v4011, %v4717
    %v4782 = vadd.f32 %v4012, %v4718
    %v4783 = vadd.f32 %v4013, %v4719
    %v4784 = vadd.f32 %v4014, %v4720
    %v4785 = vadd.f32 %v4015, %v4721
    %v4786 = vadd.f32 %v4016, %v4722
    %v4787 = vadd.f32 %v4017, %v4723
    %v4788 = vadd.f32 %v4018, %v4724
    %v4789 = vadd.f32 %v4019, %v4725
    %v4790 = vadd.f32 %v4020, %v4726
    %v4791 = vadd.f32 %v4021, %v4727
    %v4792 = vadd.f32 %v4022, %v4728
    %v4793 = vadd.f32 %v4023, %v4729
    %v4794 = vadd.f32 %v4024, %v4730
    %v4795 = vadd.f32 %v4025, %v4731
    %v4796 = vadd.f32 %v4026, %v4732
    %v4797 = vadd.f32 %v4027, %v4733
    %v4798 = vadd.f32 %v4028, %v4734
    %v4799 = vadd.f32 %v4029, %v4735
    %v4800 = vadd.f32 %v4030, %v4736
    %v4801 = vadd.f32 %v4031, %v4737
    %v4802 = vadd.f32 %v4032, %v4738
    %v4803 = vadd.f32 %v4033, %v4739
    %v4804 = vadd.f32 %v4034, %v4740
    %v4805 = vadd.f32 %v4035, %v4741
    %v4806 = vadd.f32 %v4036, %v4742
    %v4807 = vadd.f32 %v4037, %v4743
    %v4808 = vadd.f32 %v4038, %v4744
    %v4809 = vadd.f32 %v4039, %v4745
    %v4810 = vadd.f32 %v4040, %v4746
    %v4811 = vadd.f32 %v4041, %v4747
    %v4812 = vadd.f32 %v4042, %v4748
    %v4813 = vld [vmem:[#allocation2 + $0x27] sm:$0xff]
    %v4814 = vld [vmem:[#allocation2 + $0x2f] sm:$0xff]
    %v4815 = vld [vmem:[#allocation2 + $0x37] sm:$0xff]
    %v4816 = vld [vmem:[#allocation2 + $0x3f] sm:$0xff]
    %v4817 = vld [vmem:[#allocation2 + $0x47] sm:$0xff]
    %v4818 = vld [vmem:[#allocation2 + $0x4f] sm:$0xff]
    %v4819 = vld [vmem:[#allocation2 + $0x57] sm:$0xff]
    %v4820 = vld [vmem:[#allocation2 + $0x5f] sm:$0xff]
    %v4821 = vld [vmem:[#allocation2 + $0x67] sm:$0xff]
    %v4822 = vld [vmem:[#allocation2 + $0x6f] sm:$0xff]
    %v4823 = vld [vmem:[#allocation2 + $0x77] sm:$0xff]
    %v4824 = vld [vmem:[#allocation2 + $0x7f] sm:$0xff]
    %v4825 = vld [vmem:[#allocation2 + $0x87] sm:$0xff]
    %v4826 = vld [vmem:[#allocation2 + $0x8f] sm:$0xff]
    %v4827 = vld [vmem:[#allocation2 + $0x97] sm:$0xff]
    %v4828 = vld [vmem:[#allocation2 + $0x9f] sm:$0xff]
    %v4829 = vld [vmem:[#allocation2 + $0xa7] sm:$0xff]
    %v4830 = vld [vmem:[#allocation2 + $0xaf] sm:$0xff]
    %v4831 = vld [vmem:[#allocation2 + $0xb7] sm:$0xff]
    %v4832 = vld [vmem:[#allocation2 + $0xbf] sm:$0xff]
    %v4833 = vld [vmem:[#allocation2 + $0xc7] sm:$0xff]
    %v4834 = vld [vmem:[#allocation2 + $0xcf] sm:$0xff]
    %v4835 = vld [vmem:[#allocation2 + $0xd7] sm:$0xff]
    %v4836 = vld [vmem:[#allocation2 + $0xdf] sm:$0xff]
    %v4837 = vld [vmem:[#allocation2 + $0xe7] sm:$0xff]
    %v4838 = vld [vmem:[#allocation2 + $0xef] sm:$0xff]
    %v4839 = vld [vmem:[#allocation2 + $0xf7] sm:$0xff]
    %v4840 = vld [vmem:[#allocation2 + $0xff] sm:$0xff]
    %v4841 = vld [vmem:[#allocation2 + $0x107] sm:$0xff]
    %v4842 = vld [vmem:[#allocation2 + $0x10f] sm:$0xff]
    %v4843 = vld [vmem:[#allocation2 + $0x117] sm:$0xff]
    %v4844 = vld [vmem:[#allocation2 + $0x11f] sm:$0xff]
    %v4845 = vld [vmem:[#allocation2 + $0x127] sm:$0xff]
    %v4846 = vld [vmem:[#allocation2 + $0x12f] sm:$0xff]
    %v4847 = vld [vmem:[#allocation2 + $0x137] sm:$0xff]
    %v4848 = vld [vmem:[#allocation2 + $0x13f] sm:$0xff]
    %v4849 = vld [vmem:[#allocation2 + $0x147] sm:$0xff]
    %v4850 = vld [vmem:[#allocation2 + $0x14f] sm:$0xff]
    %v4851 = vld [vmem:[#allocation2 + $0x157] sm:$0xff]
    %v4852 = vld [vmem:[#allocation2 + $0x15f] sm:$0xff]
    %v4853 = vld [vmem:[#allocation2 + $0x167] sm:$0xff]
    %v4854 = vld [vmem:[#allocation2 + $0x16f] sm:$0xff]
    %v4855 = vld [vmem:[#allocation2 + $0x177] sm:$0xff]
    %v4856 = vld [vmem:[#allocation2 + $0x17f] sm:$0xff]
    %v4857 = vld [vmem:[#allocation2 + $0x187] sm:$0xff]
    %v4858 = vld [vmem:[#allocation2 + $0x18f] sm:$0xff]
    %v4859 = vld [vmem:[#allocation2 + $0x197] sm:$0xff]
    %v4860 = vld [vmem:[#allocation2 + $0x19f] sm:$0xff]
    %v4861 = vld [vmem:[#allocation2 + $0x1a7] sm:$0xff]
    %v4862 = vld [vmem:[#allocation2 + $0x1af] sm:$0xff]
    %v4863 = vld [vmem:[#allocation2 + $0x1b7] sm:$0xff]
    %v4864 = vld [vmem:[#allocation2 + $0x1bf] sm:$0xff]
    %v4865 = vld [vmem:[#allocation2 + $0x1c7] sm:$0xff]
    %v4866 = vld [vmem:[#allocation2 + $0x1cf] sm:$0xff]
    %v4867 = vld [vmem:[#allocation2 + $0x1d7] sm:$0xff]
    %v4868 = vld [vmem:[#allocation2 + $0x1df] sm:$0xff]
    %v4869 = vld [vmem:[#allocation2 + $0x1e7] sm:$0xff]
    %v4870 = vld [vmem:[#allocation2 + $0x1ef] sm:$0xff]
    %v4871 = vld [vmem:[#allocation2 + $0x1f7] sm:$0xff]
    %v4872 = vld [vmem:[#allocation2 + $0x1ff] sm:$0xff]
    %v4873 = vld [vmem:[#allocation2 + $0x207] sm:$0xff]
    %v4874 = vld [vmem:[#allocation2 + $0x20f] sm:$0xff]
    %v4875 = vld [vmem:[#allocation2 + $0x217] sm:$0xff]
    %v4876 = vld [vmem:[#allocation2 + $0x21f] sm:$0xff]
    %4877 = vrot.lane.b32.xlu0 %v321, 122
    %v4878 = vpop.permute.xlu0 %4877
    %4879 = vrot.lane.b32.xlu0 %v322, 122
    %v4880 = vpop.permute.xlu0 %4879
    %4881 = vrot.lane.b32.xlu0 %v323, 122
    %v4882 = vpop.permute.xlu0 %4881
    %4883 = vrot.lane.b32.xlu0 %v324, 122
    %v4884 = vpop.permute.xlu0 %4883
    %4885 = vrot.lane.b32.xlu0 %v325, 122
    %v4886 = vpop.permute.xlu0 %4885
    %4887 = vrot.lane.b32.xlu0 %v326, 122
    %v4888 = vpop.permute.xlu0 %4887
    %4889 = vrot.lane.b32.xlu0 %v327, 122
    %v4890 = vpop.permute.xlu0 %4889
    %4891 = vrot.lane.b32.xlu0 %v328, 122
    %v4892 = vpop.permute.xlu0 %4891
    %4893 = vrot.lane.b32.xlu0 %v329, 122
    %v4894 = vpop.permute.xlu0 %4893
    %4895 = vrot.lane.b32.xlu0 %v330, 122
    %v4896 = vpop.permute.xlu0 %4895
    %4897 = vrot.lane.b32.xlu0 %v331, 122
    %v4898 = vpop.permute.xlu0 %4897
    %4899 = vrot.lane.b32.xlu0 %v332, 122
    %v4900 = vpop.permute.xlu0 %4899
    %4901 = vrot.lane.b32.xlu0 %v333, 122
    %v4902 = vpop.permute.xlu0 %4901
    %4903 = vrot.lane.b32.xlu0 %v334, 122
    %v4904 = vpop.permute.xlu0 %4903
    %4905 = vrot.lane.b32.xlu0 %v335, 122
    %v4906 = vpop.permute.xlu0 %4905
    %4907 = vrot.lane.b32.xlu0 %v336, 122
    %v4908 = vpop.permute.xlu0 %4907
    %4909 = vrot.lane.b32.xlu0 %v337, 122
    %v4910 = vpop.permute.xlu0 %4909
    %4911 = vrot.lane.b32.xlu0 %v338, 122
    %v4912 = vpop.permute.xlu0 %4911
    %4913 = vrot.lane.b32.xlu0 %v339, 122
    %v4914 = vpop.permute.xlu0 %4913
    %4915 = vrot.lane.b32.xlu0 %v340, 122
    %v4916 = vpop.permute.xlu0 %4915
    %4917 = vrot.lane.b32.xlu0 %v341, 122
    %v4918 = vpop.permute.xlu0 %4917
    %4919 = vrot.lane.b32.xlu0 %v342, 122
    %v4920 = vpop.permute.xlu0 %4919
    %4921 = vrot.lane.b32.xlu0 %v343, 122
    %v4922 = vpop.permute.xlu0 %4921
    %4923 = vrot.lane.b32.xlu0 %v344, 122
    %v4924 = vpop.permute.xlu0 %4923
    %4925 = vrot.lane.b32.xlu0 %v345, 122
    %v4926 = vpop.permute.xlu0 %4925
    %4927 = vrot.lane.b32.xlu0 %v346, 122
    %v4928 = vpop.permute.xlu0 %4927
    %4929 = vrot.lane.b32.xlu0 %v347, 122
    %v4930 = vpop.permute.xlu0 %4929
    %4931 = vrot.lane.b32.xlu0 %v348, 122
    %v4932 = vpop.permute.xlu0 %4931
    %4933 = vrot.lane.b32.xlu0 %v349, 122
    %v4934 = vpop.permute.xlu0 %4933
    %4935 = vrot.lane.b32.xlu0 %v350, 122
    %v4936 = vpop.permute.xlu0 %4935
    %4937 = vrot.lane.b32.xlu0 %v351, 122
    %v4938 = vpop.permute.xlu0 %4937
    %4939 = vrot.lane.b32.xlu0 %v352, 122
    %v4940 = vpop.permute.xlu0 %4939
    %4941 = vrot.lane.b32.xlu0 %v353, 122
    %v4942 = vpop.permute.xlu0 %4941
    %4943 = vrot.lane.b32.xlu0 %v354, 122
    %v4944 = vpop.permute.xlu0 %4943
    %4945 = vrot.lane.b32.xlu0 %v355, 122
    %v4946 = vpop.permute.xlu0 %4945
    %4947 = vrot.lane.b32.xlu0 %v356, 122
    %v4948 = vpop.permute.xlu0 %4947
    %4949 = vrot.lane.b32.xlu0 %v357, 122
    %v4950 = vpop.permute.xlu0 %4949
    %4951 = vrot.lane.b32.xlu0 %v358, 122
    %v4952 = vpop.permute.xlu0 %4951
    %4953 = vrot.lane.b32.xlu0 %v359, 122
    %v4954 = vpop.permute.xlu0 %4953
    %4955 = vrot.lane.b32.xlu0 %v360, 122
    %v4956 = vpop.permute.xlu0 %4955
    %4957 = vrot.lane.b32.xlu0 %v361, 122
    %v4958 = vpop.permute.xlu0 %4957
    %4959 = vrot.lane.b32.xlu0 %v362, 122
    %v4960 = vpop.permute.xlu0 %4959
    %4961 = vrot.lane.b32.xlu0 %v363, 122
    %v4962 = vpop.permute.xlu0 %4961
    %4963 = vrot.lane.b32.xlu0 %v364, 122
    %v4964 = vpop.permute.xlu0 %4963
    %4965 = vrot.lane.b32.xlu0 %v365, 122
    %v4966 = vpop.permute.xlu0 %4965
    %4967 = vrot.lane.b32.xlu0 %v366, 122
    %v4968 = vpop.permute.xlu0 %4967
    %4969 = vrot.lane.b32.xlu0 %v367, 122
    %v4970 = vpop.permute.xlu0 %4969
    %4971 = vrot.lane.b32.xlu0 %v368, 122
    %v4972 = vpop.permute.xlu0 %4971
    %4973 = vrot.lane.b32.xlu0 %v369, 122
    %v4974 = vpop.permute.xlu0 %4973
    %4975 = vrot.lane.b32.xlu0 %v370, 122
    %v4976 = vpop.permute.xlu0 %4975
    %4977 = vrot.lane.b32.xlu0 %v371, 122
    %v4978 = vpop.permute.xlu0 %4977
    %4979 = vrot.lane.b32.xlu0 %v372, 122
    %v4980 = vpop.permute.xlu0 %4979
    %4981 = vrot.lane.b32.xlu0 %v373, 122
    %v4982 = vpop.permute.xlu0 %4981
    %4983 = vrot.lane.b32.xlu0 %v374, 122
    %v4984 = vpop.permute.xlu0 %4983
    %4985 = vrot.lane.b32.xlu0 %v375, 122
    %v4986 = vpop.permute.xlu0 %4985
    %4987 = vrot.lane.b32.xlu0 %v376, 122
    %v4988 = vpop.permute.xlu0 %4987
    %4989 = vrot.lane.b32.xlu0 %v377, 122
    %v4990 = vpop.permute.xlu0 %4989
    %4991 = vrot.lane.b32.xlu0 %v378, 122
    %v4992 = vpop.permute.xlu0 %4991
    %4993 = vrot.lane.b32.xlu0 %v379, 122
    %v4994 = vpop.permute.xlu0 %4993
    %4995 = vrot.lane.b32.xlu0 %v380, 122
    %v4996 = vpop.permute.xlu0 %4995
    %4997 = vrot.lane.b32.xlu0 %v381, 122
    %v4998 = vpop.permute.xlu0 %4997
    %4999 = vrot.lane.b32.xlu0 %v382, 122
    %v5000 = vpop.permute.xlu0 %4999
    %5001 = vrot.lane.b32.xlu0 %v383, 122
    %v5002 = vpop.permute.xlu0 %5001
    %5003 = vrot.lane.b32.xlu0 %v384, 122
    %v5004 = vpop.permute.xlu0 %5003
    %v5069 = vmul.f32 %v4813, %v4878
    %v5070 = vmul.f32 %v4814, %v4880
    %v5071 = vmul.f32 %v4815, %v4882
    %v5072 = vmul.f32 %v4816, %v4884
    %v5073 = vmul.f32 %v4817, %v4886
    %v5074 = vmul.f32 %v4818, %v4888
    %v5075 = vmul.f32 %v4819, %v4890
    %v5076 = vmul.f32 %v4820, %v4892
    %v5077 = vmul.f32 %v4821, %v4894
    %v5078 = vmul.f32 %v4822, %v4896
    %v5079 = vmul.f32 %v4823, %v4898
    %v5080 = vmul.f32 %v4824, %v4900
    %v5081 = vmul.f32 %v4825, %v4902
    %v5082 = vmul.f32 %v4826, %v4904
    %v5083 = vmul.f32 %v4827, %v4906
    %v5084 = vmul.f32 %v4828, %v4908
    %v5085 = vmul.f32 %v4829, %v4910
    %v5086 = vmul.f32 %v4830, %v4912
    %v5087 = vmul.f32 %v4831, %v4914
    %v5088 = vmul.f32 %v4832, %v4916
    %v5089 = vmul.f32 %v4833, %v4918
    %v5090 = vmul.f32 %v4834, %v4920
    %v5091 = vmul.f32 %v4835, %v4922
    %v5092 = vmul.f32 %v4836, %v4924
    %v5093 = vmul.f32 %v4837, %v4926
    %v5094 = vmul.f32 %v4838, %v4928
    %v5095 = vmul.f32 %v4839, %v4930
    %v5096 = vmul.f32 %v4840, %v4932
    %v5097 = vmul.f32 %v4841, %v4934
    %v5098 = vmul.f32 %v4842, %v4936
    %v5099 = vmul.f32 %v4843, %v4938
    %v5100 = vmul.f32 %v4844, %v4940
    %v5101 = vmul.f32 %v4845, %v4942
    %v5102 = vmul.f32 %v4846, %v4944
    %v5103 = vmul.f32 %v4847, %v4946
    %v5104 = vmul.f32 %v4848, %v4948
    %v5105 = vmul.f32 %v4849, %v4950
    %v5106 = vmul.f32 %v4850, %v4952
    %v5107 = vmul.f32 %v4851, %v4954
    %v5108 = vmul.f32 %v4852, %v4956
    %v5109 = vmul.f32 %v4853, %v4958
    %v5110 = vmul.f32 %v4854, %v4960
    %v5111 = vmul.f32 %v4855, %v4962
    %v5112 = vmul.f32 %v4856, %v4964
    %v5113 = vmul.f32 %v4857, %v4966
    %v5114 = vmul.f32 %v4858, %v4968
    %v5115 = vmul.f32 %v4859, %v4970
    %v5116 = vmul.f32 %v4860, %v4972
    %v5117 = vmul.f32 %v4861, %v4974
    %v5118 = vmul.f32 %v4862, %v4976
    %v5119 = vmul.f32 %v4863, %v4978
    %v5120 = vmul.f32 %v4864, %v4980
    %v5121 = vmul.f32 %v4865, %v4982
    %v5122 = vmul.f32 %v4866, %v4984
    %v5123 = vmul.f32 %v4867, %v4986
    %v5124 = vmul.f32 %v4868, %v4988
    %v5125 = vmul.f32 %v4869, %v4990
    %v5126 = vmul.f32 %v4870, %v4992
    %v5127 = vmul.f32 %v4871, %v4994
    %v5128 = vmul.f32 %v4872, %v4996
    %v5129 = vmul.f32 %v4873, %v4998
    %v5130 = vmul.f32 %v4874, %v5000
    %v5131 = vmul.f32 %v4875, %v5002
    %v5132 = vmul.f32 %v4876, %v5004
    %v5133 = vld [vmem:[%s1 + $0x6] sm:$0x1]
    %5135 = vset.pattern.permute.xlu0 0
    %5136 = vperm.xlu0 %5135, %v5069
    %v5137 = vpop.permute.xlu0 %5136
    %5140 = vset.pattern.permute.xlu0 0
    %5141 = vperm.xlu0 %5140, %v5070
    %v5142 = vpop.permute.xlu0 %5141
    %5145 = vset.pattern.permute.xlu0 0
    %5146 = vperm.xlu0 %5145, %v5071
    %v5147 = vpop.permute.xlu0 %5146
    %5150 = vset.pattern.permute.xlu0 0
    %5151 = vperm.xlu0 %5150, %v5072
    %v5152 = vpop.permute.xlu0 %5151
    %5155 = vset.pattern.permute.xlu0 0
    %5156 = vperm.xlu0 %5155, %v5073
    %v5157 = vpop.permute.xlu0 %5156
    %5160 = vset.pattern.permute.xlu0 0
    %5161 = vperm.xlu0 %5160, %v5074
    %v5162 = vpop.permute.xlu0 %5161
    %5165 = vset.pattern.permute.xlu0 0
    %5166 = vperm.xlu0 %5165, %v5075
    %v5167 = vpop.permute.xlu0 %5166
    %5170 = vset.pattern.permute.xlu0 0
    %5171 = vperm.xlu0 %5170, %v5076
    %v5172 = vpop.permute.xlu0 %5171
    %5175 = vset.pattern.permute.xlu0 0
    %5176 = vperm.xlu0 %5175, %v5077
    %v5177 = vpop.permute.xlu0 %5176
    %5180 = vset.pattern.permute.xlu0 0
    %5181 = vperm.xlu0 %5180, %v5078
    %v5182 = vpop.permute.xlu0 %5181
    %5185 = vset.pattern.permute.xlu0 0
    %5186 = vperm.xlu0 %5185, %v5079
    %v5187 = vpop.permute.xlu0 %5186
    %5190 = vset.pattern.permute.xlu0 0
    %5191 = vperm.xlu0 %5190, %v5080
    %v5192 = vpop.permute.xlu0 %5191
    %5195 = vset.pattern.permute.xlu0 0
    %5196 = vperm.xlu0 %5195, %v5081
    %v5197 = vpop.permute.xlu0 %5196
    %5200 = vset.pattern.permute.xlu0 0
    %5201 = vperm.xlu0 %5200, %v5082
    %v5202 = vpop.permute.xlu0 %5201
    %5205 = vset.pattern.permute.xlu0 0
    %5206 = vperm.xlu0 %5205, %v5083
    %v5207 = vpop.permute.xlu0 %5206
    %5210 = vset.pattern.permute.xlu0 0
    %5211 = vperm.xlu0 %5210, %v5084
    %v5212 = vpop.permute.xlu0 %5211
    %5215 = vset.pattern.permute.xlu0 0
    %5216 = vperm.xlu0 %5215, %v5085
    %v5217 = vpop.permute.xlu0 %5216
    %5220 = vset.pattern.permute.xlu0 0
    %5221 = vperm.xlu0 %5220, %v5086
    %v5222 = vpop.permute.xlu0 %5221
    %5225 = vset.pattern.permute.xlu0 0
    %5226 = vperm.xlu0 %5225, %v5087
    %v5227 = vpop.permute.xlu0 %5226
    %5230 = vset.pattern.permute.xlu0 0
    %5231 = vperm.xlu0 %5230, %v5088
    %v5232 = vpop.permute.xlu0 %5231
    %5235 = vset.pattern.permute.xlu0 0
    %5236 = vperm.xlu0 %5235, %v5089
    %v5237 = vpop.permute.xlu0 %5236
    %5240 = vset.pattern.permute.xlu0 0
    %5241 = vperm.xlu0 %5240, %v5090
    %v5242 = vpop.permute.xlu0 %5241
    %5245 = vset.pattern.permute.xlu0 0
    %5246 = vperm.xlu0 %5245, %v5091
    %v5247 = vpop.permute.xlu0 %5246
    %5250 = vset.pattern.permute.xlu0 0
    %5251 = vperm.xlu0 %5250, %v5092
    %v5252 = vpop.permute.xlu0 %5251
    %5255 = vset.pattern.permute.xlu0 0
    %5256 = vperm.xlu0 %5255, %v5093
    %v5257 = vpop.permute.xlu0 %5256
    %5260 = vset.pattern.permute.xlu0 0
    %5261 = vperm.xlu0 %5260, %v5094
    %v5262 = vpop.permute.xlu0 %5261
    %5265 = vset.pattern.permute.xlu0 0
    %5266 = vperm.xlu0 %5265, %v5095
    %v5267 = vpop.permute.xlu0 %5266
    %5270 = vset.pattern.permute.xlu0 0
    %5271 = vperm.xlu0 %5270, %v5096
    %v5272 = vpop.permute.xlu0 %5271
    %5275 = vset.pattern.permute.xlu0 0
    %5276 = vperm.xlu0 %5275, %v5097
    %v5277 = vpop.permute.xlu0 %5276
    %5280 = vset.pattern.permute.xlu0 0
    %5281 = vperm.xlu0 %5280, %v5098
    %v5282 = vpop.permute.xlu0 %5281
    %5285 = vset.pattern.permute.xlu0 0
    %5286 = vperm.xlu0 %5285, %v5099
    %v5287 = vpop.permute.xlu0 %5286
    %5290 = vset.pattern.permute.xlu0 0
    %5291 = vperm.xlu0 %5290, %v5100
    %v5292 = vpop.permute.xlu0 %5291
    %5295 = vset.pattern.permute.xlu0 0
    %5296 = vperm.xlu0 %5295, %v5101
    %v5297 = vpop.permute.xlu0 %5296
    %5300 = vset.pattern.permute.xlu0 0
    %5301 = vperm.xlu0 %5300, %v5102
    %v5302 = vpop.permute.xlu0 %5301
    %5305 = vset.pattern.permute.xlu0 0
    %5306 = vperm.xlu0 %5305, %v5103
    %v5307 = vpop.permute.xlu0 %5306
    %5310 = vset.pattern.permute.xlu0 0
    %5311 = vperm.xlu0 %5310, %v5104
    %v5312 = vpop.permute.xlu0 %5311
    %5315 = vset.pattern.permute.xlu0 0
    %5316 = vperm.xlu0 %5315, %v5105
    %v5317 = vpop.permute.xlu0 %5316
    %5320 = vset.pattern.permute.xlu0 0
    %5321 = vperm.xlu0 %5320, %v5106
    %v5322 = vpop.permute.xlu0 %5321
    %5325 = vset.pattern.permute.xlu0 0
    %5326 = vperm.xlu0 %5325, %v5107
    %v5327 = vpop.permute.xlu0 %5326
    %5330 = vset.pattern.permute.xlu0 0
    %5331 = vperm.xlu0 %5330, %v5108
    %v5332 = vpop.permute.xlu0 %5331
    %5335 = vset.pattern.permute.xlu0 0
    %5336 = vperm.xlu0 %5335, %v5109
    %v5337 = vpop.permute.xlu0 %5336
    %5340 = vset.pattern.permute.xlu0 0
    %5341 = vperm.xlu0 %5340, %v5110
    %v5342 = vpop.permute.xlu0 %5341
    %5345 = vset.pattern.permute.xlu0 0
    %5346 = vperm.xlu0 %5345, %v5111
    %v5347 = vpop.permute.xlu0 %5346
    %5350 = vset.pattern.permute.xlu0 0
    %5351 = vperm.xlu0 %5350, %v5112
    %v5352 = vpop.permute.xlu0 %5351
    %5355 = vset.pattern.permute.xlu0 0
    %5356 = vperm.xlu0 %5355, %v5113
    %v5357 = vpop.permute.xlu0 %5356
    %5360 = vset.pattern.permute.xlu0 0
    %5361 = vperm.xlu0 %5360, %v5114
    %v5362 = vpop.permute.xlu0 %5361
    %5365 = vset.pattern.permute.xlu0 0
    %5366 = vperm.xlu0 %5365, %v5115
    %v5367 = vpop.permute.xlu0 %5366
    %5370 = vset.pattern.permute.xlu0 0
    %5371 = vperm.xlu0 %5370, %v5116
    %v5372 = vpop.permute.xlu0 %5371
    %5375 = vset.pattern.permute.xlu0 0
    %5376 = vperm.xlu0 %5375, %v5117
    %v5377 = vpop.permute.xlu0 %5376
    %5380 = vset.pattern.permute.xlu0 0
    %5381 = vperm.xlu0 %5380, %v5118
    %v5382 = vpop.permute.xlu0 %5381
    %5385 = vset.pattern.permute.xlu0 0
    %5386 = vperm.xlu0 %5385, %v5119
    %v5387 = vpop.permute.xlu0 %5386
    %5390 = vset.pattern.permute.xlu0 0
    %5391 = vperm.xlu0 %5390, %v5120
    %v5392 = vpop.permute.xlu0 %5391
    %5395 = vset.pattern.permute.xlu0 0
    %5396 = vperm.xlu0 %5395, %v5121
    %v5397 = vpop.permute.xlu0 %5396
    %5400 = vset.pattern.permute.xlu0 0
    %5401 = vperm.xlu0 %5400, %v5122
    %v5402 = vpop.permute.xlu0 %5401
    %5405 = vset.pattern.permute.xlu0 0
    %5406 = vperm.xlu0 %5405, %v5123
    %v5407 = vpop.permute.xlu0 %5406
    %5410 = vset.pattern.permute.xlu0 0
    %5411 = vperm.xlu0 %5410, %v5124
    %v5412 = vpop.permute.xlu0 %5411
    %5415 = vset.pattern.permute.xlu0 0
    %5416 = vperm.xlu0 %5415, %v5125
    %v5417 = vpop.permute.xlu0 %5416
    %5420 = vset.pattern.permute.xlu0 0
    %5421 = vperm.xlu0 %5420, %v5126
    %v5422 = vpop.permute.xlu0 %5421
    %5425 = vset.pattern.permute.xlu0 0
    %5426 = vperm.xlu0 %5425, %v5127
    %v5427 = vpop.permute.xlu0 %5426
    %5430 = vset.pattern.permute.xlu0 0
    %5431 = vperm.xlu0 %5430, %v5128
    %v5432 = vpop.permute.xlu0 %5431
    %5435 = vset.pattern.permute.xlu0 0
    %5436 = vperm.xlu0 %5435, %v5129
    %v5437 = vpop.permute.xlu0 %5436
    %5440 = vset.pattern.permute.xlu0 0
    %5441 = vperm.xlu0 %5440, %v5130
    %v5442 = vpop.permute.xlu0 %5441
    %5445 = vset.pattern.permute.xlu0 0
    %5446 = vperm.xlu0 %5445, %v5131
    %v5447 = vpop.permute.xlu0 %5446
    %5450 = vset.pattern.permute.xlu0 0
    %5451 = vperm.xlu0 %5450, %v5132
    %v5452 = vpop.permute.xlu0 %5451
    %v5454 = vperm.slane %v5133, 0
    %v5455 = vmul.f32 %v5137, %v5454
    %v5456 = vmul.f32 %v5142, %v5454
    %v5457 = vmul.f32 %v5147, %v5454
    %v5458 = vmul.f32 %v5152, %v5454
    %v5459 = vmul.f32 %v5157, %v5454
    %v5460 = vmul.f32 %v5162, %v5454
    %v5461 = vmul.f32 %v5167, %v5454
    %v5462 = vmul.f32 %v5172, %v5454
    %v5463 = vmul.f32 %v5177, %v5454
    %v5464 = vmul.f32 %v5182, %v5454
    %v5465 = vmul.f32 %v5187, %v5454
    %v5466 = vmul.f32 %v5192, %v5454
    %v5467 = vmul.f32 %v5197, %v5454
    %v5468 = vmul.f32 %v5202, %v5454
    %v5469 = vmul.f32 %v5207, %v5454
    %v5470 = vmul.f32 %v5212, %v5454
    %v5471 = vmul.f32 %v5217, %v5454
    %v5472 = vmul.f32 %v5222, %v5454
    %v5473 = vmul.f32 %v5227, %v5454
    %v5474 = vmul.f32 %v5232, %v5454
    %v5475 = vmul.f32 %v5237, %v5454
    %v5476 = vmul.f32 %v5242, %v5454
    %v5477 = vmul.f32 %v5247, %v5454
    %v5478 = vmul.f32 %v5252, %v5454
    %v5479 = vmul.f32 %v5257, %v5454
    %v5480 = vmul.f32 %v5262, %v5454
    %v5481 = vmul.f32 %v5267, %v5454
    %v5482 = vmul.f32 %v5272, %v5454
    %v5483 = vmul.f32 %v5277, %v5454
    %v5484 = vmul.f32 %v5282, %v5454
    %v5485 = vmul.f32 %v5287, %v5454
    %v5486 = vmul.f32 %v5292, %v5454
    %v5487 = vmul.f32 %v5297, %v5454
    %v5488 = vmul.f32 %v5302, %v5454
    %v5489 = vmul.f32 %v5307, %v5454
    %v5490 = vmul.f32 %v5312, %v5454
    %v5491 = vmul.f32 %v5317, %v5454
    %v5492 = vmul.f32 %v5322, %v5454
    %v5493 = vmul.f32 %v5327, %v5454
    %v5494 = vmul.f32 %v5332, %v5454
    %v5495 = vmul.f32 %v5337, %v5454
    %v5496 = vmul.f32 %v5342, %v5454
    %v5497 = vmul.f32 %v5347, %v5454
    %v5498 = vmul.f32 %v5352, %v5454
    %v5499 = vmul.f32 %v5357, %v5454
    %v5500 = vmul.f32 %v5362, %v5454
    %v5501 = vmul.f32 %v5367, %v5454
    %v5502 = vmul.f32 %v5372, %v5454
    %v5503 = vmul.f32 %v5377, %v5454
    %v5504 = vmul.f32 %v5382, %v5454
    %v5505 = vmul.f32 %v5387, %v5454
    %v5506 = vmul.f32 %v5392, %v5454
    %v5507 = vmul.f32 %v5397, %v5454
    %v5508 = vmul.f32 %v5402, %v5454
    %v5509 = vmul.f32 %v5407, %v5454
    %v5510 = vmul.f32 %v5412, %v5454
    %v5511 = vmul.f32 %v5417, %v5454
    %v5512 = vmul.f32 %v5422, %v5454
    %v5513 = vmul.f32 %v5427, %v5454
    %v5514 = vmul.f32 %v5432, %v5454
    %v5515 = vmul.f32 %v5437, %v5454
    %v5516 = vmul.f32 %v5442, %v5454
    %v5517 = vmul.f32 %v5447, %v5454
    %v5518 = vmul.f32 %v5452, %v5454
    %v5519 = vadd.f32 %v4749, %v5455
    %v5520 = vadd.f32 %v4750, %v5456
    %v5521 = vadd.f32 %v4751, %v5457
    %v5522 = vadd.f32 %v4752, %v5458
    %v5523 = vadd.f32 %v4753, %v5459
    %v5524 = vadd.f32 %v4754, %v5460
    %v5525 = vadd.f32 %v4755, %v5461
    %v5526 = vadd.f32 %v4756, %v5462
    %v5527 = vadd.f32 %v4757, %v5463
    %v5528 = vadd.f32 %v4758, %v5464
    %v5529 = vadd.f32 %v4759, %v5465
    %v5530 = vadd.f32 %v4760, %v5466
    %v5531 = vadd.f32 %v4761, %v5467
    %v5532 = vadd.f32 %v4762, %v5468
    %v5533 = vadd.f32 %v4763, %v5469
    %v5534 = vadd.f32 %v4764, %v5470
    %v5535 = vadd.f32 %v4765, %v5471
    %v5536 = vadd.f32 %v4766, %v5472
    %v5537 = vadd.f32 %v4767, %v5473
    %v5538 = vadd.f32 %v4768, %v5474
    %v5539 = vadd.f32 %v4769, %v5475
    %v5540 = vadd.f32 %v4770, %v5476
    %v5541 = vadd.f32 %v4771, %v5477
    %v5542 = vadd.f32 %v4772, %v5478
    %v5543 = vadd.f32 %v4773, %v5479
    %v5544 = vadd.f32 %v4774, %v5480
    %v5545 = vadd.f32 %v4775, %v5481
    %v5546 = vadd.f32 %v4776, %v5482
    %v5547 = vadd.f32 %v4777, %v5483
    %v5548 = vadd.f32 %v4778, %v5484
    %v5549 = vadd.f32 %v4779, %v5485
    %v5550 = vadd.f32 %v4780, %v5486
    %v5551 = vadd.f32 %v4781, %v5487
    %v5552 = vadd.f32 %v4782, %v5488
    %v5553 = vadd.f32 %v4783, %v5489
    %v5554 = vadd.f32 %v4784, %v5490
    %v5555 = vadd.f32 %v4785, %v5491
    %v5556 = vadd.f32 %v4786, %v5492
    %v5557 = vadd.f32 %v4787, %v5493
    %v5558 = vadd.f32 %v4788, %v5494
    %v5559 = vadd.f32 %v4789, %v5495
    %v5560 = vadd.f32 %v4790, %v5496
    %v5561 = vadd.f32 %v4791, %v5497
    %v5562 = vadd.f32 %v4792, %v5498
    %v5563 = vadd.f32 %v4793, %v5499
    %v5564 = vadd.f32 %v4794, %v5500
    %v5565 = vadd.f32 %v4795, %v5501
    %v5566 = vadd.f32 %v4796, %v5502
    %v5567 = vadd.f32 %v4797, %v5503
    %v5568 = vadd.f32 %v4798, %v5504
    %v5569 = vadd.f32 %v4799, %v5505
    %v5570 = vadd.f32 %v4800, %v5506
    %v5571 = vadd.f32 %v4801, %v5507
    %v5572 = vadd.f32 %v4802, %v5508
    %v5573 = vadd.f32 %v4803, %v5509
    %v5574 = vadd.f32 %v4804, %v5510
    %v5575 = vadd.f32 %v4805, %v5511
    %v5576 = vadd.f32 %v4806, %v5512
    %v5577 = vadd.f32 %v4807, %v5513
    %v5578 = vadd.f32 %v4808, %v5514
    %v5579 = vadd.f32 %v4809, %v5515
    %v5580 = vadd.f32 %v4810, %v5516
    %v5581 = vadd.f32 %v4811, %v5517
    %v5582 = vadd.f32 %v4812, %v5518
    %v5583 = vld [vmem:[#allocation2 + $0x28] sm:$0xff]
    %v5584 = vld [vmem:[#allocation2 + $0x30] sm:$0xff]
    %v5585 = vld [vmem:[#allocation2 + $0x38] sm:$0xff]
    %v5586 = vld [vmem:[#allocation2 + $0x40] sm:$0xff]
    %v5587 = vld [vmem:[#allocation2 + $0x48] sm:$0xff]
    %v5588 = vld [vmem:[#allocation2 + $0x50] sm:$0xff]
    %v5589 = vld [vmem:[#allocation2 + $0x58] sm:$0xff]
    %v5590 = vld [vmem:[#allocation2 + $0x60] sm:$0xff]
    %v5591 = vld [vmem:[#allocation2 + $0x68] sm:$0xff]
    %v5592 = vld [vmem:[#allocation2 + $0x70] sm:$0xff]
    %v5593 = vld [vmem:[#allocation2 + $0x78] sm:$0xff]
    %v5594 = vld [vmem:[#allocation2 + $0x80] sm:$0xff]
    %v5595 = vld [vmem:[#allocation2 + $0x88] sm:$0xff]
    %v5596 = vld [vmem:[#allocation2 + $0x90] sm:$0xff]
    %v5597 = vld [vmem:[#allocation2 + $0x98] sm:$0xff]
    %v5598 = vld [vmem:[#allocation2 + $0xa0] sm:$0xff]
    %v5599 = vld [vmem:[#allocation2 + $0xa8] sm:$0xff]
    %v5600 = vld [vmem:[#allocation2 + $0xb0] sm:$0xff]
    %v5601 = vld [vmem:[#allocation2 + $0xb8] sm:$0xff]
    %v5602 = vld [vmem:[#allocation2 + $0xc0] sm:$0xff]
    %v5603 = vld [vmem:[#allocation2 + $0xc8] sm:$0xff]
    %v5604 = vld [vmem:[#allocation2 + $0xd0] sm:$0xff]
    %v5605 = vld [vmem:[#allocation2 + $0xd8] sm:$0xff]
    %v5606 = vld [vmem:[#allocation2 + $0xe0] sm:$0xff]
    %v5607 = vld [vmem:[#allocation2 + $0xe8] sm:$0xff]
    %v5608 = vld [vmem:[#allocation2 + $0xf0] sm:$0xff]
    %v5609 = vld [vmem:[#allocation2 + $0xf8] sm:$0xff]
    %v5610 = vld [vmem:[#allocation2 + $0x100] sm:$0xff]
    %v5611 = vld [vmem:[#allocation2 + $0x108] sm:$0xff]
    %v5612 = vld [vmem:[#allocation2 + $0x110] sm:$0xff]
    %v5613 = vld [vmem:[#allocation2 + $0x118] sm:$0xff]
    %v5614 = vld [vmem:[#allocation2 + $0x120] sm:$0xff]
    %v5615 = vld [vmem:[#allocation2 + $0x128] sm:$0xff]
    %v5616 = vld [vmem:[#allocation2 + $0x130] sm:$0xff]
    %v5617 = vld [vmem:[#allocation2 + $0x138] sm:$0xff]
    %v5618 = vld [vmem:[#allocation2 + $0x140] sm:$0xff]
    %v5619 = vld [vmem:[#allocation2 + $0x148] sm:$0xff]
    %v5620 = vld [vmem:[#allocation2 + $0x150] sm:$0xff]
    %v5621 = vld [vmem:[#allocation2 + $0x158] sm:$0xff]
    %v5622 = vld [vmem:[#allocation2 + $0x160] sm:$0xff]
    %v5623 = vld [vmem:[#allocation2 + $0x168] sm:$0xff]
    %v5624 = vld [vmem:[#allocation2 + $0x170] sm:$0xff]
    %v5625 = vld [vmem:[#allocation2 + $0x178] sm:$0xff]
    %v5626 = vld [vmem:[#allocation2 + $0x180] sm:$0xff]
    %v5627 = vld [vmem:[#allocation2 + $0x188] sm:$0xff]
    %v5628 = vld [vmem:[#allocation2 + $0x190] sm:$0xff]
    %v5629 = vld [vmem:[#allocation2 + $0x198] sm:$0xff]
    %v5630 = vld [vmem:[#allocation2 + $0x1a0] sm:$0xff]
    %v5631 = vld [vmem:[#allocation2 + $0x1a8] sm:$0xff]
    %v5632 = vld [vmem:[#allocation2 + $0x1b0] sm:$0xff]
    %v5633 = vld [vmem:[#allocation2 + $0x1b8] sm:$0xff]
    %v5634 = vld [vmem:[#allocation2 + $0x1c0] sm:$0xff]
    %v5635 = vld [vmem:[#allocation2 + $0x1c8] sm:$0xff]
    %v5636 = vld [vmem:[#allocation2 + $0x1d0] sm:$0xff]
    %v5637 = vld [vmem:[#allocation2 + $0x1d8] sm:$0xff]
    %v5638 = vld [vmem:[#allocation2 + $0x1e0] sm:$0xff]
    %v5639 = vld [vmem:[#allocation2 + $0x1e8] sm:$0xff]
    %v5640 = vld [vmem:[#allocation2 + $0x1f0] sm:$0xff]
    %v5641 = vld [vmem:[#allocation2 + $0x1f8] sm:$0xff]
    %v5642 = vld [vmem:[#allocation2 + $0x200] sm:$0xff]
    %v5643 = vld [vmem:[#allocation2 + $0x208] sm:$0xff]
    %v5644 = vld [vmem:[#allocation2 + $0x210] sm:$0xff]
    %v5645 = vld [vmem:[#allocation2 + $0x218] sm:$0xff]
    %v5646 = vld [vmem:[#allocation2 + $0x220] sm:$0xff]
    %5647 = vrot.lane.b32.xlu0 %v321, 121
    %v5648 = vpop.permute.xlu0 %5647
    %5649 = vrot.lane.b32.xlu0 %v322, 121
    %v5650 = vpop.permute.xlu0 %5649
    %5651 = vrot.lane.b32.xlu0 %v323, 121
    %v5652 = vpop.permute.xlu0 %5651
    %5653 = vrot.lane.b32.xlu0 %v324, 121
    %v5654 = vpop.permute.xlu0 %5653
    %5655 = vrot.lane.b32.xlu0 %v325, 121
    %v5656 = vpop.permute.xlu0 %5655
    %5657 = vrot.lane.b32.xlu0 %v326, 121
    %v5658 = vpop.permute.xlu0 %5657
    %5659 = vrot.lane.b32.xlu0 %v327, 121
    %v5660 = vpop.permute.xlu0 %5659
    %5661 = vrot.lane.b32.xlu0 %v328, 121
    %v5662 = vpop.permute.xlu0 %5661
    %5663 = vrot.lane.b32.xlu0 %v329, 121
    %v5664 = vpop.permute.xlu0 %5663
    %5665 = vrot.lane.b32.xlu0 %v330, 121
    %v5666 = vpop.permute.xlu0 %5665
    %5667 = vrot.lane.b32.xlu0 %v331, 121
    %v5668 = vpop.permute.xlu0 %5667
    %5669 = vrot.lane.b32.xlu0 %v332, 121
    %v5670 = vpop.permute.xlu0 %5669
    %5671 = vrot.lane.b32.xlu0 %v333, 121
    %v5672 = vpop.permute.xlu0 %5671
    %5673 = vrot.lane.b32.xlu0 %v334, 121
    %v5674 = vpop.permute.xlu0 %5673
    %5675 = vrot.lane.b32.xlu0 %v335, 121
    %v5676 = vpop.permute.xlu0 %5675
    %5677 = vrot.lane.b32.xlu0 %v336, 121
    %v5678 = vpop.permute.xlu0 %5677
    %5679 = vrot.lane.b32.xlu0 %v337, 121
    %v5680 = vpop.permute.xlu0 %5679
    %5681 = vrot.lane.b32.xlu0 %v338, 121
    %v5682 = vpop.permute.xlu0 %5681
    %5683 = vrot.lane.b32.xlu0 %v339, 121
    %v5684 = vpop.permute.xlu0 %5683
    %5685 = vrot.lane.b32.xlu0 %v340, 121
    %v5686 = vpop.permute.xlu0 %5685
    %5687 = vrot.lane.b32.xlu0 %v341, 121
    %v5688 = vpop.permute.xlu0 %5687
    %5689 = vrot.lane.b32.xlu0 %v342, 121
    %v5690 = vpop.permute.xlu0 %5689
    %5691 = vrot.lane.b32.xlu0 %v343, 121
    %v5692 = vpop.permute.xlu0 %5691
    %5693 = vrot.lane.b32.xlu0 %v344, 121
    %v5694 = vpop.permute.xlu0 %5693
    %5695 = vrot.lane.b32.xlu0 %v345, 121
    %v5696 = vpop.permute.xlu0 %5695
    %5697 = vrot.lane.b32.xlu0 %v346, 121
    %v5698 = vpop.permute.xlu0 %5697
    %5699 = vrot.lane.b32.xlu0 %v347, 121
    %v5700 = vpop.permute.xlu0 %5699
    %5701 = vrot.lane.b32.xlu0 %v348, 121
    %v5702 = vpop.permute.xlu0 %5701
    %5703 = vrot.lane.b32.xlu0 %v349, 121
    %v5704 = vpop.permute.xlu0 %5703
    %5705 = vrot.lane.b32.xlu0 %v350, 121
    %v5706 = vpop.permute.xlu0 %5705
    %5707 = vrot.lane.b32.xlu0 %v351, 121
    %v5708 = vpop.permute.xlu0 %5707
    %5709 = vrot.lane.b32.xlu0 %v352, 121
    %v5710 = vpop.permute.xlu0 %5709
    %5711 = vrot.lane.b32.xlu0 %v353, 121
    %v5712 = vpop.permute.xlu0 %5711
    %5713 = vrot.lane.b32.xlu0 %v354, 121
    %v5714 = vpop.permute.xlu0 %5713
    %5715 = vrot.lane.b32.xlu0 %v355, 121
    %v5716 = vpop.permute.xlu0 %5715
    %5717 = vrot.lane.b32.xlu0 %v356, 121
    %v5718 = vpop.permute.xlu0 %5717
    %5719 = vrot.lane.b32.xlu0 %v357, 121
    %v5720 = vpop.permute.xlu0 %5719
    %5721 = vrot.lane.b32.xlu0 %v358, 121
    %v5722 = vpop.permute.xlu0 %5721
    %5723 = vrot.lane.b32.xlu0 %v359, 121
    %v5724 = vpop.permute.xlu0 %5723
    %5725 = vrot.lane.b32.xlu0 %v360, 121
    %v5726 = vpop.permute.xlu0 %5725
    %5727 = vrot.lane.b32.xlu0 %v361, 121
    %v5728 = vpop.permute.xlu0 %5727
    %5729 = vrot.lane.b32.xlu0 %v362, 121
    %v5730 = vpop.permute.xlu0 %5729
    %5731 = vrot.lane.b32.xlu0 %v363, 121
    %v5732 = vpop.permute.xlu0 %5731
    %5733 = vrot.lane.b32.xlu0 %v364, 121
    %v5734 = vpop.permute.xlu0 %5733
    %5735 = vrot.lane.b32.xlu0 %v365, 121
    %v5736 = vpop.permute.xlu0 %5735
    %5737 = vrot.lane.b32.xlu0 %v366, 121
    %v5738 = vpop.permute.xlu0 %5737
    %5739 = vrot.lane.b32.xlu0 %v367, 121
    %v5740 = vpop.permute.xlu0 %5739
    %5741 = vrot.lane.b32.xlu0 %v368, 121
    %v5742 = vpop.permute.xlu0 %5741
    %5743 = vrot.lane.b32.xlu0 %v369, 121
    %v5744 = vpop.permute.xlu0 %5743
    %5745 = vrot.lane.b32.xlu0 %v370, 121
    %v5746 = vpop.permute.xlu0 %5745
    %5747 = vrot.lane.b32.xlu0 %v371, 121
    %v5748 = vpop.permute.xlu0 %5747
    %5749 = vrot.lane.b32.xlu0 %v372, 121
    %v5750 = vpop.permute.xlu0 %5749
    %5751 = vrot.lane.b32.xlu0 %v373, 121
    %v5752 = vpop.permute.xlu0 %5751
    %5753 = vrot.lane.b32.xlu0 %v374, 121
    %v5754 = vpop.permute.xlu0 %5753
    %5755 = vrot.lane.b32.xlu0 %v375, 121
    %v5756 = vpop.permute.xlu0 %5755
    %5757 = vrot.lane.b32.xlu0 %v376, 121
    %v5758 = vpop.permute.xlu0 %5757
    %5759 = vrot.lane.b32.xlu0 %v377, 121
    %v5760 = vpop.permute.xlu0 %5759
    %5761 = vrot.lane.b32.xlu0 %v378, 121
    %v5762 = vpop.permute.xlu0 %5761
    %5763 = vrot.lane.b32.xlu0 %v379, 121
    %v5764 = vpop.permute.xlu0 %5763
    %5765 = vrot.lane.b32.xlu0 %v380, 121
    %v5766 = vpop.permute.xlu0 %5765
    %5767 = vrot.lane.b32.xlu0 %v381, 121
    %v5768 = vpop.permute.xlu0 %5767
    %5769 = vrot.lane.b32.xlu0 %v382, 121
    %v5770 = vpop.permute.xlu0 %5769
    %5771 = vrot.lane.b32.xlu0 %v383, 121
    %v5772 = vpop.permute.xlu0 %5771
    %5773 = vrot.lane.b32.xlu0 %v384, 121
    %v5774 = vpop.permute.xlu0 %5773
    %v5839 = vmul.f32 %v5583, %v5648
    %v5840 = vmul.f32 %v5584, %v5650
    %v5841 = vmul.f32 %v5585, %v5652
    %v5842 = vmul.f32 %v5586, %v5654
    %v5843 = vmul.f32 %v5587, %v5656
    %v5844 = vmul.f32 %v5588, %v5658
    %v5845 = vmul.f32 %v5589, %v5660
    %v5846 = vmul.f32 %v5590, %v5662
    %v5847 = vmul.f32 %v5591, %v5664
    %v5848 = vmul.f32 %v5592, %v5666
    %v5849 = vmul.f32 %v5593, %v5668
    %v5850 = vmul.f32 %v5594, %v5670
    %v5851 = vmul.f32 %v5595, %v5672
    %v5852 = vmul.f32 %v5596, %v5674
    %v5853 = vmul.f32 %v5597, %v5676
    %v5854 = vmul.f32 %v5598, %v5678
    %v5855 = vmul.f32 %v5599, %v5680
    %v5856 = vmul.f32 %v5600, %v5682
    %v5857 = vmul.f32 %v5601, %v5684
    %v5858 = vmul.f32 %v5602, %v5686
    %v5859 = vmul.f32 %v5603, %v5688
    %v5860 = vmul.f32 %v5604, %v5690
    %v5861 = vmul.f32 %v5605, %v5692
    %v5862 = vmul.f32 %v5606, %v5694
    %v5863 = vmul.f32 %v5607, %v5696
    %v5864 = vmul.f32 %v5608, %v5698
    %v5865 = vmul.f32 %v5609, %v5700
    %v5866 = vmul.f32 %v5610, %v5702
    %v5867 = vmul.f32 %v5611, %v5704
    %v5868 = vmul.f32 %v5612, %v5706
    %v5869 = vmul.f32 %v5613, %v5708
    %v5870 = vmul.f32 %v5614, %v5710
    %v5871 = vmul.f32 %v5615, %v5712
    %v5872 = vmul.f32 %v5616, %v5714
    %v5873 = vmul.f32 %v5617, %v5716
    %v5874 = vmul.f32 %v5618, %v5718
    %v5875 = vmul.f32 %v5619, %v5720
    %v5876 = vmul.f32 %v5620, %v5722
    %v5877 = vmul.f32 %v5621, %v5724
    %v5878 = vmul.f32 %v5622, %v5726
    %v5879 = vmul.f32 %v5623, %v5728
    %v5880 = vmul.f32 %v5624, %v5730
    %v5881 = vmul.f32 %v5625, %v5732
    %v5882 = vmul.f32 %v5626, %v5734
    %v5883 = vmul.f32 %v5627, %v5736
    %v5884 = vmul.f32 %v5628, %v5738
    %v5885 = vmul.f32 %v5629, %v5740
    %v5886 = vmul.f32 %v5630, %v5742
    %v5887 = vmul.f32 %v5631, %v5744
    %v5888 = vmul.f32 %v5632, %v5746
    %v5889 = vmul.f32 %v5633, %v5748
    %v5890 = vmul.f32 %v5634, %v5750
    %v5891 = vmul.f32 %v5635, %v5752
    %v5892 = vmul.f32 %v5636, %v5754
    %v5893 = vmul.f32 %v5637, %v5756
    %v5894 = vmul.f32 %v5638, %v5758
    %v5895 = vmul.f32 %v5639, %v5760
    %v5896 = vmul.f32 %v5640, %v5762
    %v5897 = vmul.f32 %v5641, %v5764
    %v5898 = vmul.f32 %v5642, %v5766
    %v5899 = vmul.f32 %v5643, %v5768
    %v5900 = vmul.f32 %v5644, %v5770
    %v5901 = vmul.f32 %v5645, %v5772
    %v5902 = vmul.f32 %v5646, %v5774
    %v5903 = vld [vmem:[%s1 + $0x7] sm:$0x1]
    %5905 = vset.pattern.permute.xlu0 0
    %5906 = vperm.xlu0 %5905, %v5839
    %v5907 = vpop.permute.xlu0 %5906
    %5910 = vset.pattern.permute.xlu0 0
    %5911 = vperm.xlu0 %5910, %v5840
    %v5912 = vpop.permute.xlu0 %5911
    %5915 = vset.pattern.permute.xlu0 0
    %5916 = vperm.xlu0 %5915, %v5841
    %v5917 = vpop.permute.xlu0 %5916
    %5920 = vset.pattern.permute.xlu0 0
    %5921 = vperm.xlu0 %5920, %v5842
    %v5922 = vpop.permute.xlu0 %5921
    %5925 = vset.pattern.permute.xlu0 0
    %5926 = vperm.xlu0 %5925, %v5843
    %v5927 = vpop.permute.xlu0 %5926
    %5930 = vset.pattern.permute.xlu0 0
    %5931 = vperm.xlu0 %5930, %v5844
    %v5932 = vpop.permute.xlu0 %5931
    %5935 = vset.pattern.permute.xlu0 0
    %5936 = vperm.xlu0 %5935, %v5845
    %v5937 = vpop.permute.xlu0 %5936
    %5940 = vset.pattern.permute.xlu0 0
    %5941 = vperm.xlu0 %5940, %v5846
    %v5942 = vpop.permute.xlu0 %5941
    %5945 = vset.pattern.permute.xlu0 0
    %5946 = vperm.xlu0 %5945, %v5847
    %v5947 = vpop.permute.xlu0 %5946
    %5950 = vset.pattern.permute.xlu0 0
    %5951 = vperm.xlu0 %5950, %v5848
    %v5952 = vpop.permute.xlu0 %5951
    %5955 = vset.pattern.permute.xlu0 0
    %5956 = vperm.xlu0 %5955, %v5849
    %v5957 = vpop.permute.xlu0 %5956
    %5960 = vset.pattern.permute.xlu0 0
    %5961 = vperm.xlu0 %5960, %v5850
    %v5962 = vpop.permute.xlu0 %5961
    %5965 = vset.pattern.permute.xlu0 0
    %5966 = vperm.xlu0 %5965, %v5851
    %v5967 = vpop.permute.xlu0 %5966
    %5970 = vset.pattern.permute.xlu0 0
    %5971 = vperm.xlu0 %5970, %v5852
    %v5972 = vpop.permute.xlu0 %5971
    %5975 = vset.pattern.permute.xlu0 0
    %5976 = vperm.xlu0 %5975, %v5853
    %v5977 = vpop.permute.xlu0 %5976
    %5980 = vset.pattern.permute.xlu0 0
    %5981 = vperm.xlu0 %5980, %v5854
    %v5982 = vpop.permute.xlu0 %5981
    %5985 = vset.pattern.permute.xlu0 0
    %5986 = vperm.xlu0 %5985, %v5855
    %v5987 = vpop.permute.xlu0 %5986
    %5990 = vset.pattern.permute.xlu0 0
    %5991 = vperm.xlu0 %5990, %v5856
    %v5992 = vpop.permute.xlu0 %5991
    %5995 = vset.pattern.permute.xlu0 0
    %5996 = vperm.xlu0 %5995, %v5857
    %v5997 = vpop.permute.xlu0 %5996
    %6000 = vset.pattern.permute.xlu0 0
    %6001 = vperm.xlu0 %6000, %v5858
    %v6002 = vpop.permute.xlu0 %6001
    %6005 = vset.pattern.permute.xlu0 0
    %6006 = vperm.xlu0 %6005, %v5859
    %v6007 = vpop.permute.xlu0 %6006
    %6010 = vset.pattern.permute.xlu0 0
    %6011 = vperm.xlu0 %6010, %v5860
    %v6012 = vpop.permute.xlu0 %6011
    %6015 = vset.pattern.permute.xlu0 0
    %6016 = vperm.xlu0 %6015, %v5861
    %v6017 = vpop.permute.xlu0 %6016
    %6020 = vset.pattern.permute.xlu0 0
    %6021 = vperm.xlu0 %6020, %v5862
    %v6022 = vpop.permute.xlu0 %6021
    %6025 = vset.pattern.permute.xlu0 0
    %6026 = vperm.xlu0 %6025, %v5863
    %v6027 = vpop.permute.xlu0 %6026
    %6030 = vset.pattern.permute.xlu0 0
    %6031 = vperm.xlu0 %6030, %v5864
    %v6032 = vpop.permute.xlu0 %6031
    %6035 = vset.pattern.permute.xlu0 0
    %6036 = vperm.xlu0 %6035, %v5865
    %v6037 = vpop.permute.xlu0 %6036
    %6040 = vset.pattern.permute.xlu0 0
    %6041 = vperm.xlu0 %6040, %v5866
    %v6042 = vpop.permute.xlu0 %6041
    %6045 = vset.pattern.permute.xlu0 0
    %6046 = vperm.xlu0 %6045, %v5867
    %v6047 = vpop.permute.xlu0 %6046
    %6050 = vset.pattern.permute.xlu0 0
    %6051 = vperm.xlu0 %6050, %v5868
    %v6052 = vpop.permute.xlu0 %6051
    %6055 = vset.pattern.permute.xlu0 0
    %6056 = vperm.xlu0 %6055, %v5869
    %v6057 = vpop.permute.xlu0 %6056
    %6060 = vset.pattern.permute.xlu0 0
    %6061 = vperm.xlu0 %6060, %v5870
    %v6062 = vpop.permute.xlu0 %6061
    %6065 = vset.pattern.permute.xlu0 0
    %6066 = vperm.xlu0 %6065, %v5871
    %v6067 = vpop.permute.xlu0 %6066
    %6070 = vset.pattern.permute.xlu0 0
    %6071 = vperm.xlu0 %6070, %v5872
    %v6072 = vpop.permute.xlu0 %6071
    %6075 = vset.pattern.permute.xlu0 0
    %6076 = vperm.xlu0 %6075, %v5873
    %v6077 = vpop.permute.xlu0 %6076
    %6080 = vset.pattern.permute.xlu0 0
    %6081 = vperm.xlu0 %6080, %v5874
    %v6082 = vpop.permute.xlu0 %6081
    %6085 = vset.pattern.permute.xlu0 0
    %6086 = vperm.xlu0 %6085, %v5875
    %v6087 = vpop.permute.xlu0 %6086
    %6090 = vset.pattern.permute.xlu0 0
    %6091 = vperm.xlu0 %6090, %v5876
    %v6092 = vpop.permute.xlu0 %6091
    %6095 = vset.pattern.permute.xlu0 0
    %6096 = vperm.xlu0 %6095, %v5877
    %v6097 = vpop.permute.xlu0 %6096
    %6100 = vset.pattern.permute.xlu0 0
    %6101 = vperm.xlu0 %6100, %v5878
    %v6102 = vpop.permute.xlu0 %6101
    %6105 = vset.pattern.permute.xlu0 0
    %6106 = vperm.xlu0 %6105, %v5879
    %v6107 = vpop.permute.xlu0 %6106
    %6110 = vset.pattern.permute.xlu0 0
    %6111 = vperm.xlu0 %6110, %v5880
    %v6112 = vpop.permute.xlu0 %6111
    %6115 = vset.pattern.permute.xlu0 0
    %6116 = vperm.xlu0 %6115, %v5881
    %v6117 = vpop.permute.xlu0 %6116
    %6120 = vset.pattern.permute.xlu0 0
    %6121 = vperm.xlu0 %6120, %v5882
    %v6122 = vpop.permute.xlu0 %6121
    %6125 = vset.pattern.permute.xlu0 0
    %6126 = vperm.xlu0 %6125, %v5883
    %v6127 = vpop.permute.xlu0 %6126
    %6130 = vset.pattern.permute.xlu0 0
    %6131 = vperm.xlu0 %6130, %v5884
    %v6132 = vpop.permute.xlu0 %6131
    %6135 = vset.pattern.permute.xlu0 0
    %6136 = vperm.xlu0 %6135, %v5885
    %v6137 = vpop.permute.xlu0 %6136
    %6140 = vset.pattern.permute.xlu0 0
    %6141 = vperm.xlu0 %6140, %v5886
    %v6142 = vpop.permute.xlu0 %6141
    %6145 = vset.pattern.permute.xlu0 0
    %6146 = vperm.xlu0 %6145, %v5887
    %v6147 = vpop.permute.xlu0 %6146
    %6150 = vset.pattern.permute.xlu0 0
    %6151 = vperm.xlu0 %6150, %v5888
    %v6152 = vpop.permute.xlu0 %6151
    %6155 = vset.pattern.permute.xlu0 0
    %6156 = vperm.xlu0 %6155, %v5889
    %v6157 = vpop.permute.xlu0 %6156
    %6160 = vset.pattern.permute.xlu0 0
    %6161 = vperm.xlu0 %6160, %v5890
    %v6162 = vpop.permute.xlu0 %6161
    %6165 = vset.pattern.permute.xlu0 0
    %6166 = vperm.xlu0 %6165, %v5891
    %v6167 = vpop.permute.xlu0 %6166
    %6170 = vset.pattern.permute.xlu0 0
    %6171 = vperm.xlu0 %6170, %v5892
    %v6172 = vpop.permute.xlu0 %6171
    %6175 = vset.pattern.permute.xlu0 0
    %6176 = vperm.xlu0 %6175, %v5893
    %v6177 = vpop.permute.xlu0 %6176
    %6180 = vset.pattern.permute.xlu0 0
    %6181 = vperm.xlu0 %6180, %v5894
    %v6182 = vpop.permute.xlu0 %6181
    %6185 = vset.pattern.permute.xlu0 0
    %6186 = vperm.xlu0 %6185, %v5895
    %v6187 = vpop.permute.xlu0 %6186
    %6190 = vset.pattern.permute.xlu0 0
    %6191 = vperm.xlu0 %6190, %v5896
    %v6192 = vpop.permute.xlu0 %6191
    %6195 = vset.pattern.permute.xlu0 0
    %6196 = vperm.xlu0 %6195, %v5897
    %v6197 = vpop.permute.xlu0 %6196
    %6200 = vset.pattern.permute.xlu0 0
    %6201 = vperm.xlu0 %6200, %v5898
    %v6202 = vpop.permute.xlu0 %6201
    %6205 = vset.pattern.permute.xlu0 0
    %6206 = vperm.xlu0 %6205, %v5899
    %v6207 = vpop.permute.xlu0 %6206
    %6210 = vset.pattern.permute.xlu0 0
    %6211 = vperm.xlu0 %6210, %v5900
    %v6212 = vpop.permute.xlu0 %6211
    %6215 = vset.pattern.permute.xlu0 0
    %6216 = vperm.xlu0 %6215, %v5901
    %v6217 = vpop.permute.xlu0 %6216
    %6220 = vset.pattern.permute.xlu0 0
    %6221 = vperm.xlu0 %6220, %v5902
    %v6222 = vpop.permute.xlu0 %6221
    %v6224 = vperm.slane %v5903, 0
    %v6225 = vmul.f32 %v5907, %v6224
    %v6226 = vmul.f32 %v5912, %v6224
    %v6227 = vmul.f32 %v5917, %v6224
    %v6228 = vmul.f32 %v5922, %v6224
    %v6229 = vmul.f32 %v5927, %v6224
    %v6230 = vmul.f32 %v5932, %v6224
    %v6231 = vmul.f32 %v5937, %v6224
    %v6232 = vmul.f32 %v5942, %v6224
    %v6233 = vmul.f32 %v5947, %v6224
    %v6234 = vmul.f32 %v5952, %v6224
    %v6235 = vmul.f32 %v5957, %v6224
    %v6236 = vmul.f32 %v5962, %v6224
    %v6237 = vmul.f32 %v5967, %v6224
    %v6238 = vmul.f32 %v5972, %v6224
    %v6239 = vmul.f32 %v5977, %v6224
    %v6240 = vmul.f32 %v5982, %v6224
    %v6241 = vmul.f32 %v5987, %v6224
    %v6242 = vmul.f32 %v5992, %v6224
    %v6243 = vmul.f32 %v5997, %v6224
    %v6244 = vmul.f32 %v6002, %v6224
    %v6245 = vmul.f32 %v6007, %v6224
    %v6246 = vmul.f32 %v6012, %v6224
    %v6247 = vmul.f32 %v6017, %v6224
    %v6248 = vmul.f32 %v6022, %v6224
    %v6249 = vmul.f32 %v6027, %v6224
    %v6250 = vmul.f32 %v6032, %v6224
    %v6251 = vmul.f32 %v6037, %v6224
    %v6252 = vmul.f32 %v6042, %v6224
    %v6253 = vmul.f32 %v6047, %v6224
    %v6254 = vmul.f32 %v6052, %v6224
    %v6255 = vmul.f32 %v6057, %v6224
    %v6256 = vmul.f32 %v6062, %v6224
    %v6257 = vmul.f32 %v6067, %v6224
    %v6258 = vmul.f32 %v6072, %v6224
    %v6259 = vmul.f32 %v6077, %v6224
    %v6260 = vmul.f32 %v6082, %v6224
    %v6261 = vmul.f32 %v6087, %v6224
    %v6262 = vmul.f32 %v6092, %v6224
    %v6263 = vmul.f32 %v6097, %v6224
    %v6264 = vmul.f32 %v6102, %v6224
    %v6265 = vmul.f32 %v6107, %v6224
    %v6266 = vmul.f32 %v6112, %v6224
    %v6267 = vmul.f32 %v6117, %v6224
    %v6268 = vmul.f32 %v6122, %v6224
    %v6269 = vmul.f32 %v6127, %v6224
    %v6270 = vmul.f32 %v6132, %v6224
    %v6271 = vmul.f32 %v6137, %v6224
    %v6272 = vmul.f32 %v6142, %v6224
    %v6273 = vmul.f32 %v6147, %v6224
    %v6274 = vmul.f32 %v6152, %v6224
    %v6275 = vmul.f32 %v6157, %v6224
    %v6276 = vmul.f32 %v6162, %v6224
    %v6277 = vmul.f32 %v6167, %v6224
    %v6278 = vmul.f32 %v6172, %v6224
    %v6279 = vmul.f32 %v6177, %v6224
    %v6280 = vmul.f32 %v6182, %v6224
    %v6281 = vmul.f32 %v6187, %v6224
    %v6282 = vmul.f32 %v6192, %v6224
    %v6283 = vmul.f32 %v6197, %v6224
    %v6284 = vmul.f32 %v6202, %v6224
    %v6285 = vmul.f32 %v6207, %v6224
    %v6286 = vmul.f32 %v6212, %v6224
    %v6287 = vmul.f32 %v6217, %v6224
    %v6288 = vmul.f32 %v6222, %v6224
    %v6289 = vadd.f32 %v5519, %v6225
    %v6290 = vadd.f32 %v5520, %v6226
    %v6291 = vadd.f32 %v5521, %v6227
    %v6292 = vadd.f32 %v5522, %v6228
    %v6293 = vadd.f32 %v5523, %v6229
    %v6294 = vadd.f32 %v5524, %v6230
    %v6295 = vadd.f32 %v5525, %v6231
    %v6296 = vadd.f32 %v5526, %v6232
    %v6297 = vadd.f32 %v5527, %v6233
    %v6298 = vadd.f32 %v5528, %v6234
    %v6299 = vadd.f32 %v5529, %v6235
    %v6300 = vadd.f32 %v5530, %v6236
    %v6301 = vadd.f32 %v5531, %v6237
    %v6302 = vadd.f32 %v5532, %v6238
    %v6303 = vadd.f32 %v5533, %v6239
    %v6304 = vadd.f32 %v5534, %v6240
    %v6305 = vadd.f32 %v5535, %v6241
    %v6306 = vadd.f32 %v5536, %v6242
    %v6307 = vadd.f32 %v5537, %v6243
    %v6308 = vadd.f32 %v5538, %v6244
    %v6309 = vadd.f32 %v5539, %v6245
    %v6310 = vadd.f32 %v5540, %v6246
    %v6311 = vadd.f32 %v5541, %v6247
    %v6312 = vadd.f32 %v5542, %v6248
    %v6313 = vadd.f32 %v5543, %v6249
    %v6314 = vadd.f32 %v5544, %v6250
    %v6315 = vadd.f32 %v5545, %v6251
    %v6316 = vadd.f32 %v5546, %v6252
    %v6317 = vadd.f32 %v5547, %v6253
    %v6318 = vadd.f32 %v5548, %v6254
    %v6319 = vadd.f32 %v5549, %v6255
    %v6320 = vadd.f32 %v5550, %v6256
    %v6321 = vadd.f32 %v5551, %v6257
    %v6322 = vadd.f32 %v5552, %v6258
    %v6323 = vadd.f32 %v5553, %v6259
    %v6324 = vadd.f32 %v5554, %v6260
    %v6325 = vadd.f32 %v5555, %v6261
    %v6326 = vadd.f32 %v5556, %v6262
    %v6327 = vadd.f32 %v5557, %v6263
    %v6328 = vadd.f32 %v5558, %v6264
    %v6329 = vadd.f32 %v5559, %v6265
    %v6330 = vadd.f32 %v5560, %v6266
    %v6331 = vadd.f32 %v5561, %v6267
    %v6332 = vadd.f32 %v5562, %v6268
    %v6333 = vadd.f32 %v5563, %v6269
    %v6334 = vadd.f32 %v5564, %v6270
    %v6335 = vadd.f32 %v5565, %v6271
    %v6336 = vadd.f32 %v5566, %v6272
    %v6337 = vadd.f32 %v5567, %v6273
    %v6338 = vadd.f32 %v5568, %v6274
    %v6339 = vadd.f32 %v5569, %v6275
    %v6340 = vadd.f32 %v5570, %v6276
    %v6341 = vadd.f32 %v5571, %v6277
    %v6342 = vadd.f32 %v5572, %v6278
    %v6343 = vadd.f32 %v5573, %v6279
    %v6344 = vadd.f32 %v5574, %v6280
    %v6345 = vadd.f32 %v5575, %v6281
    %v6346 = vadd.f32 %v5576, %v6282
    %v6347 = vadd.f32 %v5577, %v6283
    %v6348 = vadd.f32 %v5578, %v6284
    %v6349 = vadd.f32 %v5579, %v6285
    %v6350 = vadd.f32 %v5580, %v6286
    %v6351 = vadd.f32 %v5581, %v6287
    %v6352 = vadd.f32 %v5582, %v6288
    %v6353 = vld [vmem:[#allocation2 + $0x29] sm:$0xff]
    %v6354 = vld [vmem:[#allocation2 + $0x31] sm:$0xff]
    %v6355 = vld [vmem:[#allocation2 + $0x39] sm:$0xff]
    %v6356 = vld [vmem:[#allocation2 + $0x41] sm:$0xff]
    %v6357 = vld [vmem:[#allocation2 + $0x49] sm:$0xff]
    %v6358 = vld [vmem:[#allocation2 + $0x51] sm:$0xff]
    %v6359 = vld [vmem:[#allocation2 + $0x59] sm:$0xff]
    %v6360 = vld [vmem:[#allocation2 + $0x61] sm:$0xff]
    %v6361 = vld [vmem:[#allocation2 + $0x69] sm:$0xff]
    %v6362 = vld [vmem:[#allocation2 + $0x71] sm:$0xff]
    %v6363 = vld [vmem:[#allocation2 + $0x79] sm:$0xff]
    %v6364 = vld [vmem:[#allocation2 + $0x81] sm:$0xff]
    %v6365 = vld [vmem:[#allocation2 + $0x89] sm:$0xff]
    %v6366 = vld [vmem:[#allocation2 + $0x91] sm:$0xff]
    %v6367 = vld [vmem:[#allocation2 + $0x99] sm:$0xff]
    %v6368 = vld [vmem:[#allocation2 + $0xa1] sm:$0xff]
    %v6369 = vld [vmem:[#allocation2 + $0xa9] sm:$0xff]
    %v6370 = vld [vmem:[#allocation2 + $0xb1] sm:$0xff]
    %v6371 = vld [vmem:[#allocation2 + $0xb9] sm:$0xff]
    %v6372 = vld [vmem:[#allocation2 + $0xc1] sm:$0xff]
    %v6373 = vld [vmem:[#allocation2 + $0xc9] sm:$0xff]
    %v6374 = vld [vmem:[#allocation2 + $0xd1] sm:$0xff]
    %v6375 = vld [vmem:[#allocation2 + $0xd9] sm:$0xff]
    %v6376 = vld [vmem:[#allocation2 + $0xe1] sm:$0xff]
    %v6377 = vld [vmem:[#allocation2 + $0xe9] sm:$0xff]
    %v6378 = vld [vmem:[#allocation2 + $0xf1] sm:$0xff]
    %v6379 = vld [vmem:[#allocation2 + $0xf9] sm:$0xff]
    %v6380 = vld [vmem:[#allocation2 + $0x101] sm:$0xff]
    %v6381 = vld [vmem:[#allocation2 + $0x109] sm:$0xff]
    %v6382 = vld [vmem:[#allocation2 + $0x111] sm:$0xff]
    %v6383 = vld [vmem:[#allocation2 + $0x119] sm:$0xff]
    %v6384 = vld [vmem:[#allocation2 + $0x121] sm:$0xff]
    %v6385 = vld [vmem:[#allocation2 + $0x129] sm:$0xff]
    %v6386 = vld [vmem:[#allocation2 + $0x131] sm:$0xff]
    %v6387 = vld [vmem:[#allocation2 + $0x139] sm:$0xff]
    %v6388 = vld [vmem:[#allocation2 + $0x141] sm:$0xff]
    %v6389 = vld [vmem:[#allocation2 + $0x149] sm:$0xff]
    %v6390 = vld [vmem:[#allocation2 + $0x151] sm:$0xff]
    %v6391 = vld [vmem:[#allocation2 + $0x159] sm:$0xff]
    %v6392 = vld [vmem:[#allocation2 + $0x161] sm:$0xff]
    %v6393 = vld [vmem:[#allocation2 + $0x169] sm:$0xff]
    %v6394 = vld [vmem:[#allocation2 + $0x171] sm:$0xff]
    %v6395 = vld [vmem:[#allocation2 + $0x179] sm:$0xff]
    %v6396 = vld [vmem:[#allocation2 + $0x181] sm:$0xff]
    %v6397 = vld [vmem:[#allocation2 + $0x189] sm:$0xff]
    %v6398 = vld [vmem:[#allocation2 + $0x191] sm:$0xff]
    %v6399 = vld [vmem:[#allocation2 + $0x199] sm:$0xff]
    %v6400 = vld [vmem:[#allocation2 + $0x1a1] sm:$0xff]
    %v6401 = vld [vmem:[#allocation2 + $0x1a9] sm:$0xff]
    %v6402 = vld [vmem:[#allocation2 + $0x1b1] sm:$0xff]
    %v6403 = vld [vmem:[#allocation2 + $0x1b9] sm:$0xff]
    %v6404 = vld [vmem:[#allocation2 + $0x1c1] sm:$0xff]
    %v6405 = vld [vmem:[#allocation2 + $0x1c9] sm:$0xff]
    %v6406 = vld [vmem:[#allocation2 + $0x1d1] sm:$0xff]
    %v6407 = vld [vmem:[#allocation2 + $0x1d9] sm:$0xff]
    %v6408 = vld [vmem:[#allocation2 + $0x1e1] sm:$0xff]
    %v6409 = vld [vmem:[#allocation2 + $0x1e9] sm:$0xff]
    %v6410 = vld [vmem:[#allocation2 + $0x1f1] sm:$0xff]
    %v6411 = vld [vmem:[#allocation2 + $0x1f9] sm:$0xff]
    %v6412 = vld [vmem:[#allocation2 + $0x201] sm:$0xff]
    %v6413 = vld [vmem:[#allocation2 + $0x209] sm:$0xff]
    %v6414 = vld [vmem:[#allocation2 + $0x211] sm:$0xff]
    %v6415 = vld [vmem:[#allocation2 + $0x219] sm:$0xff]
    %v6416 = vld [vmem:[#allocation2 + $0x221] sm:$0xff]
    %6417 = vrot.lane.b32.xlu0 %v321, 120
    %v6418 = vpop.permute.xlu0 %6417
    %6419 = vrot.lane.b32.xlu0 %v322, 120
    %v6420 = vpop.permute.xlu0 %6419
    %6421 = vrot.lane.b32.xlu0 %v323, 120
    %v6422 = vpop.permute.xlu0 %6421
    %6423 = vrot.lane.b32.xlu0 %v324, 120
    %v6424 = vpop.permute.xlu0 %6423
    %6425 = vrot.lane.b32.xlu0 %v325, 120
    %v6426 = vpop.permute.xlu0 %6425
    %6427 = vrot.lane.b32.xlu0 %v326, 120
    %v6428 = vpop.permute.xlu0 %6427
    %6429 = vrot.lane.b32.xlu0 %v327, 120
    %v6430 = vpop.permute.xlu0 %6429
    %6431 = vrot.lane.b32.xlu0 %v328, 120
    %v6432 = vpop.permute.xlu0 %6431
    %6433 = vrot.lane.b32.xlu0 %v329, 120
    %v6434 = vpop.permute.xlu0 %6433
    %6435 = vrot.lane.b32.xlu0 %v330, 120
    %v6436 = vpop.permute.xlu0 %6435
    %6437 = vrot.lane.b32.xlu0 %v331, 120
    %v6438 = vpop.permute.xlu0 %6437
    %6439 = vrot.lane.b32.xlu0 %v332, 120
    %v6440 = vpop.permute.xlu0 %6439
    %6441 = vrot.lane.b32.xlu0 %v333, 120
    %v6442 = vpop.permute.xlu0 %6441
    %6443 = vrot.lane.b32.xlu0 %v334, 120
    %v6444 = vpop.permute.xlu0 %6443
    %6445 = vrot.lane.b32.xlu0 %v335, 120
    %v6446 = vpop.permute.xlu0 %6445
    %6447 = vrot.lane.b32.xlu0 %v336, 120
    %v6448 = vpop.permute.xlu0 %6447
    %6449 = vrot.lane.b32.xlu0 %v337, 120
    %v6450 = vpop.permute.xlu0 %6449
    %6451 = vrot.lane.b32.xlu0 %v338, 120
    %v6452 = vpop.permute.xlu0 %6451
    %6453 = vrot.lane.b32.xlu0 %v339, 120
    %v6454 = vpop.permute.xlu0 %6453
    %6455 = vrot.lane.b32.xlu0 %v340, 120
    %v6456 = vpop.permute.xlu0 %6455
    %6457 = vrot.lane.b32.xlu0 %v341, 120
    %v6458 = vpop.permute.xlu0 %6457
    %6459 = vrot.lane.b32.xlu0 %v342, 120
    %v6460 = vpop.permute.xlu0 %6459
    %6461 = vrot.lane.b32.xlu0 %v343, 120
    %v6462 = vpop.permute.xlu0 %6461
    %6463 = vrot.lane.b32.xlu0 %v344, 120
    %v6464 = vpop.permute.xlu0 %6463
    %6465 = vrot.lane.b32.xlu0 %v345, 120
    %v6466 = vpop.permute.xlu0 %6465
    %6467 = vrot.lane.b32.xlu0 %v346, 120
    %v6468 = vpop.permute.xlu0 %6467
    %6469 = vrot.lane.b32.xlu0 %v347, 120
    %v6470 = vpop.permute.xlu0 %6469
    %6471 = vrot.lane.b32.xlu0 %v348, 120
    %v6472 = vpop.permute.xlu0 %6471
    %6473 = vrot.lane.b32.xlu0 %v349, 120
    %v6474 = vpop.permute.xlu0 %6473
    %6475 = vrot.lane.b32.xlu0 %v350, 120
    %v6476 = vpop.permute.xlu0 %6475
    %6477 = vrot.lane.b32.xlu0 %v351, 120
    %v6478 = vpop.permute.xlu0 %6477
    %6479 = vrot.lane.b32.xlu0 %v352, 120
    %v6480 = vpop.permute.xlu0 %6479
    %6481 = vrot.lane.b32.xlu0 %v353, 120
    %v6482 = vpop.permute.xlu0 %6481
    %6483 = vrot.lane.b32.xlu0 %v354, 120
    %v6484 = vpop.permute.xlu0 %6483
    %6485 = vrot.lane.b32.xlu0 %v355, 120
    %v6486 = vpop.permute.xlu0 %6485
    %6487 = vrot.lane.b32.xlu0 %v356, 120
    %v6488 = vpop.permute.xlu0 %6487
    %6489 = vrot.lane.b32.xlu0 %v357, 120
    %v6490 = vpop.permute.xlu0 %6489
    %6491 = vrot.lane.b32.xlu0 %v358, 120
    %v6492 = vpop.permute.xlu0 %6491
    %6493 = vrot.lane.b32.xlu0 %v359, 120
    %v6494 = vpop.permute.xlu0 %6493
    %6495 = vrot.lane.b32.xlu0 %v360, 120
    %v6496 = vpop.permute.xlu0 %6495
    %6497 = vrot.lane.b32.xlu0 %v361, 120
    %v6498 = vpop.permute.xlu0 %6497
    %6499 = vrot.lane.b32.xlu0 %v362, 120
    %v6500 = vpop.permute.xlu0 %6499
    %6501 = vrot.lane.b32.xlu0 %v363, 120
    %v6502 = vpop.permute.xlu0 %6501
    %6503 = vrot.lane.b32.xlu0 %v364, 120
    %v6504 = vpop.permute.xlu0 %6503
    %6505 = vrot.lane.b32.xlu0 %v365, 120
    %v6506 = vpop.permute.xlu0 %6505
    %6507 = vrot.lane.b32.xlu0 %v366, 120
    %v6508 = vpop.permute.xlu0 %6507
    %6509 = vrot.lane.b32.xlu0 %v367, 120
    %v6510 = vpop.permute.xlu0 %6509
    %6511 = vrot.lane.b32.xlu0 %v368, 120
    %v6512 = vpop.permute.xlu0 %6511
    %6513 = vrot.lane.b32.xlu0 %v369, 120
    %v6514 = vpop.permute.xlu0 %6513
    %6515 = vrot.lane.b32.xlu0 %v370, 120
    %v6516 = vpop.permute.xlu0 %6515
    %6517 = vrot.lane.b32.xlu0 %v371, 120
    %v6518 = vpop.permute.xlu0 %6517
    %6519 = vrot.lane.b32.xlu0 %v372, 120
    %v6520 = vpop.permute.xlu0 %6519
    %6521 = vrot.lane.b32.xlu0 %v373, 120
    %v6522 = vpop.permute.xlu0 %6521
    %6523 = vrot.lane.b32.xlu0 %v374, 120
    %v6524 = vpop.permute.xlu0 %6523
    %6525 = vrot.lane.b32.xlu0 %v375, 120
    %v6526 = vpop.permute.xlu0 %6525
    %6527 = vrot.lane.b32.xlu0 %v376, 120
    %v6528 = vpop.permute.xlu0 %6527
    %6529 = vrot.lane.b32.xlu0 %v377, 120
    %v6530 = vpop.permute.xlu0 %6529
    %6531 = vrot.lane.b32.xlu0 %v378, 120
    %v6532 = vpop.permute.xlu0 %6531
    %6533 = vrot.lane.b32.xlu0 %v379, 120
    %v6534 = vpop.permute.xlu0 %6533
    %6535 = vrot.lane.b32.xlu0 %v380, 120
    %v6536 = vpop.permute.xlu0 %6535
    %6537 = vrot.lane.b32.xlu0 %v381, 120
    %v6538 = vpop.permute.xlu0 %6537
    %6539 = vrot.lane.b32.xlu0 %v382, 120
    %v6540 = vpop.permute.xlu0 %6539
    %6541 = vrot.lane.b32.xlu0 %v383, 120
    %v6542 = vpop.permute.xlu0 %6541
    %6543 = vrot.lane.b32.xlu0 %v384, 120
    %v6544 = vpop.permute.xlu0 %6543
    %v6609 = vmul.f32 %v6353, %v6418
    %v6610 = vmul.f32 %v6354, %v6420
    %v6611 = vmul.f32 %v6355, %v6422
    %v6612 = vmul.f32 %v6356, %v6424
    %v6613 = vmul.f32 %v6357, %v6426
    %v6614 = vmul.f32 %v6358, %v6428
    %v6615 = vmul.f32 %v6359, %v6430
    %v6616 = vmul.f32 %v6360, %v6432
    %v6617 = vmul.f32 %v6361, %v6434
    %v6618 = vmul.f32 %v6362, %v6436
    %v6619 = vmul.f32 %v6363, %v6438
    %v6620 = vmul.f32 %v6364, %v6440
    %v6621 = vmul.f32 %v6365, %v6442
    %v6622 = vmul.f32 %v6366, %v6444
    %v6623 = vmul.f32 %v6367, %v6446
    %v6624 = vmul.f32 %v6368, %v6448
    %v6625 = vmul.f32 %v6369, %v6450
    %v6626 = vmul.f32 %v6370, %v6452
    %v6627 = vmul.f32 %v6371, %v6454
    %v6628 = vmul.f32 %v6372, %v6456
    %v6629 = vmul.f32 %v6373, %v6458
    %v6630 = vmul.f32 %v6374, %v6460
    %v6631 = vmul.f32 %v6375, %v6462
    %v6632 = vmul.f32 %v6376, %v6464
    %v6633 = vmul.f32 %v6377, %v6466
    %v6634 = vmul.f32 %v6378, %v6468
    %v6635 = vmul.f32 %v6379, %v6470
    %v6636 = vmul.f32 %v6380, %v6472
    %v6637 = vmul.f32 %v6381, %v6474
    %v6638 = vmul.f32 %v6382, %v6476
    %v6639 = vmul.f32 %v6383, %v6478
    %v6640 = vmul.f32 %v6384, %v6480
    %v6641 = vmul.f32 %v6385, %v6482
    %v6642 = vmul.f32 %v6386, %v6484
    %v6643 = vmul.f32 %v6387, %v6486
    %v6644 = vmul.f32 %v6388, %v6488
    %v6645 = vmul.f32 %v6389, %v6490
    %v6646 = vmul.f32 %v6390, %v6492
    %v6647 = vmul.f32 %v6391, %v6494
    %v6648 = vmul.f32 %v6392, %v6496
    %v6649 = vmul.f32 %v6393, %v6498
    %v6650 = vmul.f32 %v6394, %v6500
    %v6651 = vmul.f32 %v6395, %v6502
    %v6652 = vmul.f32 %v6396, %v6504
    %v6653 = vmul.f32 %v6397, %v6506
    %v6654 = vmul.f32 %v6398, %v6508
    %v6655 = vmul.f32 %v6399, %v6510
    %v6656 = vmul.f32 %v6400, %v6512
    %v6657 = vmul.f32 %v6401, %v6514
    %v6658 = vmul.f32 %v6402, %v6516
    %v6659 = vmul.f32 %v6403, %v6518
    %v6660 = vmul.f32 %v6404, %v6520
    %v6661 = vmul.f32 %v6405, %v6522
    %v6662 = vmul.f32 %v6406, %v6524
    %v6663 = vmul.f32 %v6407, %v6526
    %v6664 = vmul.f32 %v6408, %v6528
    %v6665 = vmul.f32 %v6409, %v6530
    %v6666 = vmul.f32 %v6410, %v6532
    %v6667 = vmul.f32 %v6411, %v6534
    %v6668 = vmul.f32 %v6412, %v6536
    %v6669 = vmul.f32 %v6413, %v6538
    %v6670 = vmul.f32 %v6414, %v6540
    %v6671 = vmul.f32 %v6415, %v6542
    %v6672 = vmul.f32 %v6416, %v6544
    %v6673 = vld [vmem:[%s1 + $0x8] sm:$0x1]
    %6675 = vset.pattern.permute.xlu0 0
    %6676 = vperm.xlu0 %6675, %v6609
    %v6677 = vpop.permute.xlu0 %6676
    %6680 = vset.pattern.permute.xlu0 0
    %6681 = vperm.xlu0 %6680, %v6610
    %v6682 = vpop.permute.xlu0 %6681
    %6685 = vset.pattern.permute.xlu0 0
    %6686 = vperm.xlu0 %6685, %v6611
    %v6687 = vpop.permute.xlu0 %6686
    %6690 = vset.pattern.permute.xlu0 0
    %6691 = vperm.xlu0 %6690, %v6612
    %v6692 = vpop.permute.xlu0 %6691
    %6695 = vset.pattern.permute.xlu0 0
    %6696 = vperm.xlu0 %6695, %v6613
    %v6697 = vpop.permute.xlu0 %6696
    %6700 = vset.pattern.permute.xlu0 0
    %6701 = vperm.xlu0 %6700, %v6614
    %v6702 = vpop.permute.xlu0 %6701
    %6705 = vset.pattern.permute.xlu0 0
    %6706 = vperm.xlu0 %6705, %v6615
    %v6707 = vpop.permute.xlu0 %6706
    %6710 = vset.pattern.permute.xlu0 0
    %6711 = vperm.xlu0 %6710, %v6616
    %v6712 = vpop.permute.xlu0 %6711
    %6715 = vset.pattern.permute.xlu0 0
    %6716 = vperm.xlu0 %6715, %v6617
    %v6717 = vpop.permute.xlu0 %6716
    %6720 = vset.pattern.permute.xlu0 0
    %6721 = vperm.xlu0 %6720, %v6618
    %v6722 = vpop.permute.xlu0 %6721
    %6725 = vset.pattern.permute.xlu0 0
    %6726 = vperm.xlu0 %6725, %v6619
    %v6727 = vpop.permute.xlu0 %6726
    %6730 = vset.pattern.permute.xlu0 0
    %6731 = vperm.xlu0 %6730, %v6620
    %v6732 = vpop.permute.xlu0 %6731
    %6735 = vset.pattern.permute.xlu0 0
    %6736 = vperm.xlu0 %6735, %v6621
    %v6737 = vpop.permute.xlu0 %6736
    %6740 = vset.pattern.permute.xlu0 0
    %6741 = vperm.xlu0 %6740, %v6622
    %v6742 = vpop.permute.xlu0 %6741
    %6745 = vset.pattern.permute.xlu0 0
    %6746 = vperm.xlu0 %6745, %v6623
    %v6747 = vpop.permute.xlu0 %6746
    %6750 = vset.pattern.permute.xlu0 0
    %6751 = vperm.xlu0 %6750, %v6624
    %v6752 = vpop.permute.xlu0 %6751
    %6755 = vset.pattern.permute.xlu0 0
    %6756 = vperm.xlu0 %6755, %v6625
    %v6757 = vpop.permute.xlu0 %6756
    %6760 = vset.pattern.permute.xlu0 0
    %6761 = vperm.xlu0 %6760, %v6626
    %v6762 = vpop.permute.xlu0 %6761
    %6765 = vset.pattern.permute.xlu0 0
    %6766 = vperm.xlu0 %6765, %v6627
    %v6767 = vpop.permute.xlu0 %6766
    %6770 = vset.pattern.permute.xlu0 0
    %6771 = vperm.xlu0 %6770, %v6628
    %v6772 = vpop.permute.xlu0 %6771
    %6775 = vset.pattern.permute.xlu0 0
    %6776 = vperm.xlu0 %6775, %v6629
    %v6777 = vpop.permute.xlu0 %6776
    %6780 = vset.pattern.permute.xlu0 0
    %6781 = vperm.xlu0 %6780, %v6630
    %v6782 = vpop.permute.xlu0 %6781
    %6785 = vset.pattern.permute.xlu0 0
    %6786 = vperm.xlu0 %6785, %v6631
    %v6787 = vpop.permute.xlu0 %6786
    %6790 = vset.pattern.permute.xlu0 0
    %6791 = vperm.xlu0 %6790, %v6632
    %v6792 = vpop.permute.xlu0 %6791
    %6795 = vset.pattern.permute.xlu0 0
    %6796 = vperm.xlu0 %6795, %v6633
    %v6797 = vpop.permute.xlu0 %6796
    %6800 = vset.pattern.permute.xlu0 0
    %6801 = vperm.xlu0 %6800, %v6634
    %v6802 = vpop.permute.xlu0 %6801
    %6805 = vset.pattern.permute.xlu0 0
    %6806 = vperm.xlu0 %6805, %v6635
    %v6807 = vpop.permute.xlu0 %6806
    %6810 = vset.pattern.permute.xlu0 0
    %6811 = vperm.xlu0 %6810, %v6636
    %v6812 = vpop.permute.xlu0 %6811
    %6815 = vset.pattern.permute.xlu0 0
    %6816 = vperm.xlu0 %6815, %v6637
    %v6817 = vpop.permute.xlu0 %6816
    %6820 = vset.pattern.permute.xlu0 0
    %6821 = vperm.xlu0 %6820, %v6638
    %v6822 = vpop.permute.xlu0 %6821
    %6825 = vset.pattern.permute.xlu0 0
    %6826 = vperm.xlu0 %6825, %v6639
    %v6827 = vpop.permute.xlu0 %6826
    %6830 = vset.pattern.permute.xlu0 0
    %6831 = vperm.xlu0 %6830, %v6640
    %v6832 = vpop.permute.xlu0 %6831
    %6835 = vset.pattern.permute.xlu0 0
    %6836 = vperm.xlu0 %6835, %v6641
    %v6837 = vpop.permute.xlu0 %6836
    %6840 = vset.pattern.permute.xlu0 0
    %6841 = vperm.xlu0 %6840, %v6642
    %v6842 = vpop.permute.xlu0 %6841
    %6845 = vset.pattern.permute.xlu0 0
    %6846 = vperm.xlu0 %6845, %v6643
    %v6847 = vpop.permute.xlu0 %6846
    %6850 = vset.pattern.permute.xlu0 0
    %6851 = vperm.xlu0 %6850, %v6644
    %v6852 = vpop.permute.xlu0 %6851
    %6855 = vset.pattern.permute.xlu0 0
    %6856 = vperm.xlu0 %6855, %v6645
    %v6857 = vpop.permute.xlu0 %6856
    %6860 = vset.pattern.permute.xlu0 0
    %6861 = vperm.xlu0 %6860, %v6646
    %v6862 = vpop.permute.xlu0 %6861
    %6865 = vset.pattern.permute.xlu0 0
    %6866 = vperm.xlu0 %6865, %v6647
    %v6867 = vpop.permute.xlu0 %6866
    %6870 = vset.pattern.permute.xlu0 0
    %6871 = vperm.xlu0 %6870, %v6648
    %v6872 = vpop.permute.xlu0 %6871
    %6875 = vset.pattern.permute.xlu0 0
    %6876 = vperm.xlu0 %6875, %v6649
    %v6877 = vpop.permute.xlu0 %6876
    %6880 = vset.pattern.permute.xlu0 0
    %6881 = vperm.xlu0 %6880, %v6650
    %v6882 = vpop.permute.xlu0 %6881
    %6885 = vset.pattern.permute.xlu0 0
    %6886 = vperm.xlu0 %6885, %v6651
    %v6887 = vpop.permute.xlu0 %6886
    %6890 = vset.pattern.permute.xlu0 0
    %6891 = vperm.xlu0 %6890, %v6652
    %v6892 = vpop.permute.xlu0 %6891
    %6895 = vset.pattern.permute.xlu0 0
    %6896 = vperm.xlu0 %6895, %v6653
    %v6897 = vpop.permute.xlu0 %6896
    %6900 = vset.pattern.permute.xlu0 0
    %6901 = vperm.xlu0 %6900, %v6654
    %v6902 = vpop.permute.xlu0 %6901
    %6905 = vset.pattern.permute.xlu0 0
    %6906 = vperm.xlu0 %6905, %v6655
    %v6907 = vpop.permute.xlu0 %6906
    %6910 = vset.pattern.permute.xlu0 0
    %6911 = vperm.xlu0 %6910, %v6656
    %v6912 = vpop.permute.xlu0 %6911
    %6915 = vset.pattern.permute.xlu0 0
    %6916 = vperm.xlu0 %6915, %v6657
    %v6917 = vpop.permute.xlu0 %6916
    %6920 = vset.pattern.permute.xlu0 0
    %6921 = vperm.xlu0 %6920, %v6658
    %v6922 = vpop.permute.xlu0 %6921
    %6925 = vset.pattern.permute.xlu0 0
    %6926 = vperm.xlu0 %6925, %v6659
    %v6927 = vpop.permute.xlu0 %6926
    %6930 = vset.pattern.permute.xlu0 0
    %6931 = vperm.xlu0 %6930, %v6660
    %v6932 = vpop.permute.xlu0 %6931
    %6935 = vset.pattern.permute.xlu0 0
    %6936 = vperm.xlu0 %6935, %v6661
    %v6937 = vpop.permute.xlu0 %6936
    %6940 = vset.pattern.permute.xlu0 0
    %6941 = vperm.xlu0 %6940, %v6662
    %v6942 = vpop.permute.xlu0 %6941
    %6945 = vset.pattern.permute.xlu0 0
    %6946 = vperm.xlu0 %6945, %v6663
    %v6947 = vpop.permute.xlu0 %6946
    %6950 = vset.pattern.permute.xlu0 0
    %6951 = vperm.xlu0 %6950, %v6664
    %v6952 = vpop.permute.xlu0 %6951
    %6955 = vset.pattern.permute.xlu0 0
    %6956 = vperm.xlu0 %6955, %v6665
    %v6957 = vpop.permute.xlu0 %6956
    %6960 = vset.pattern.permute.xlu0 0
    %6961 = vperm.xlu0 %6960, %v6666
    %v6962 = vpop.permute.xlu0 %6961
    %6965 = vset.pattern.permute.xlu0 0
    %6966 = vperm.xlu0 %6965, %v6667
    %v6967 = vpop.permute.xlu0 %6966
    %6970 = vset.pattern.permute.xlu0 0
    %6971 = vperm.xlu0 %6970, %v6668
    %v6972 = vpop.permute.xlu0 %6971
    %6975 = vset.pattern.permute.xlu0 0
    %6976 = vperm.xlu0 %6975, %v6669
    %v6977 = vpop.permute.xlu0 %6976
    %6980 = vset.pattern.permute.xlu0 0
    %6981 = vperm.xlu0 %6980, %v6670
    %v6982 = vpop.permute.xlu0 %6981
    %6985 = vset.pattern.permute.xlu0 0
    %6986 = vperm.xlu0 %6985, %v6671
    %v6987 = vpop.permute.xlu0 %6986
    %6990 = vset.pattern.permute.xlu0 0
    %6991 = vperm.xlu0 %6990, %v6672
    %v6992 = vpop.permute.xlu0 %6991
    %v6994 = vperm.slane %v6673, 0
    %v6995 = vmul.f32 %v6677, %v6994
    %v6996 = vmul.f32 %v6682, %v6994
    %v6997 = vmul.f32 %v6687, %v6994
    %v6998 = vmul.f32 %v6692, %v6994
    %v6999 = vmul.f32 %v6697, %v6994
    %v7000 = vmul.f32 %v6702, %v6994
    %v7001 = vmul.f32 %v6707, %v6994
    %v7002 = vmul.f32 %v6712, %v6994
    %v7003 = vmul.f32 %v6717, %v6994
    %v7004 = vmul.f32 %v6722, %v6994
    %v7005 = vmul.f32 %v6727, %v6994
    %v7006 = vmul.f32 %v6732, %v6994
    %v7007 = vmul.f32 %v6737, %v6994
    %v7008 = vmul.f32 %v6742, %v6994
    %v7009 = vmul.f32 %v6747, %v6994
    %v7010 = vmul.f32 %v6752, %v6994
    %v7011 = vmul.f32 %v6757, %v6994
    %v7012 = vmul.f32 %v6762, %v6994
    %v7013 = vmul.f32 %v6767, %v6994
    %v7014 = vmul.f32 %v6772, %v6994
    %v7015 = vmul.f32 %v6777, %v6994
    %v7016 = vmul.f32 %v6782, %v6994
    %v7017 = vmul.f32 %v6787, %v6994
    %v7018 = vmul.f32 %v6792, %v6994
    %v7019 = vmul.f32 %v6797, %v6994
    %v7020 = vmul.f32 %v6802, %v6994
    %v7021 = vmul.f32 %v6807, %v6994
    %v7022 = vmul.f32 %v6812, %v6994
    %v7023 = vmul.f32 %v6817, %v6994
    %v7024 = vmul.f32 %v6822, %v6994
    %v7025 = vmul.f32 %v6827, %v6994
    %v7026 = vmul.f32 %v6832, %v6994
    %v7027 = vmul.f32 %v6837, %v6994
    %v7028 = vmul.f32 %v6842, %v6994
    %v7029 = vmul.f32 %v6847, %v6994
    %v7030 = vmul.f32 %v6852, %v6994
    %v7031 = vmul.f32 %v6857, %v6994
    %v7032 = vmul.f32 %v6862, %v6994
    %v7033 = vmul.f32 %v6867, %v6994
    %v7034 = vmul.f32 %v6872, %v6994
    %v7035 = vmul.f32 %v6877, %v6994
    %v7036 = vmul.f32 %v6882, %v6994
    %v7037 = vmul.f32 %v6887, %v6994
    %v7038 = vmul.f32 %v6892, %v6994
    %v7039 = vmul.f32 %v6897, %v6994
    %v7040 = vmul.f32 %v6902, %v6994
    %v7041 = vmul.f32 %v6907, %v6994
    %v7042 = vmul.f32 %v6912, %v6994
    %v7043 = vmul.f32 %v6917, %v6994
    %v7044 = vmul.f32 %v6922, %v6994
    %v7045 = vmul.f32 %v6927, %v6994
    %v7046 = vmul.f32 %v6932, %v6994
    %v7047 = vmul.f32 %v6937, %v6994
    %v7048 = vmul.f32 %v6942, %v6994
    %v7049 = vmul.f32 %v6947, %v6994
    %v7050 = vmul.f32 %v6952, %v6994
    %v7051 = vmul.f32 %v6957, %v6994
    %v7052 = vmul.f32 %v6962, %v6994
    %v7053 = vmul.f32 %v6967, %v6994
    %v7054 = vmul.f32 %v6972, %v6994
    %v7055 = vmul.f32 %v6977, %v6994
    %v7056 = vmul.f32 %v6982, %v6994
    %v7057 = vmul.f32 %v6987, %v6994
    %v7058 = vmul.f32 %v6992, %v6994
    %v7059 = vadd.f32 %v6289, %v6995
    %v7060 = vadd.f32 %v6290, %v6996
    %v7061 = vadd.f32 %v6291, %v6997
    %v7062 = vadd.f32 %v6292, %v6998
    %v7063 = vadd.f32 %v6293, %v6999
    %v7064 = vadd.f32 %v6294, %v7000
    %v7065 = vadd.f32 %v6295, %v7001
    %v7066 = vadd.f32 %v6296, %v7002
    %v7067 = vadd.f32 %v6297, %v7003
    %v7068 = vadd.f32 %v6298, %v7004
    %v7069 = vadd.f32 %v6299, %v7005
    %v7070 = vadd.f32 %v6300, %v7006
    %v7071 = vadd.f32 %v6301, %v7007
    %v7072 = vadd.f32 %v6302, %v7008
    %v7073 = vadd.f32 %v6303, %v7009
    %v7074 = vadd.f32 %v6304, %v7010
    %v7075 = vadd.f32 %v6305, %v7011
    %v7076 = vadd.f32 %v6306, %v7012
    %v7077 = vadd.f32 %v6307, %v7013
    %v7078 = vadd.f32 %v6308, %v7014
    %v7079 = vadd.f32 %v6309, %v7015
    %v7080 = vadd.f32 %v6310, %v7016
    %v7081 = vadd.f32 %v6311, %v7017
    %v7082 = vadd.f32 %v6312, %v7018
    %v7083 = vadd.f32 %v6313, %v7019
    %v7084 = vadd.f32 %v6314, %v7020
    %v7085 = vadd.f32 %v6315, %v7021
    %v7086 = vadd.f32 %v6316, %v7022
    %v7087 = vadd.f32 %v6317, %v7023
    %v7088 = vadd.f32 %v6318, %v7024
    %v7089 = vadd.f32 %v6319, %v7025
    %v7090 = vadd.f32 %v6320, %v7026
    %v7091 = vadd.f32 %v6321, %v7027
    %v7092 = vadd.f32 %v6322, %v7028
    %v7093 = vadd.f32 %v6323, %v7029
    %v7094 = vadd.f32 %v6324, %v7030
    %v7095 = vadd.f32 %v6325, %v7031
    %v7096 = vadd.f32 %v6326, %v7032
    %v7097 = vadd.f32 %v6327, %v7033
    %v7098 = vadd.f32 %v6328, %v7034
    %v7099 = vadd.f32 %v6329, %v7035
    %v7100 = vadd.f32 %v6330, %v7036
    %v7101 = vadd.f32 %v6331, %v7037
    %v7102 = vadd.f32 %v6332, %v7038
    %v7103 = vadd.f32 %v6333, %v7039
    %v7104 = vadd.f32 %v6334, %v7040
    %v7105 = vadd.f32 %v6335, %v7041
    %v7106 = vadd.f32 %v6336, %v7042
    %v7107 = vadd.f32 %v6337, %v7043
    %v7108 = vadd.f32 %v6338, %v7044
    %v7109 = vadd.f32 %v6339, %v7045
    %v7110 = vadd.f32 %v6340, %v7046
    %v7111 = vadd.f32 %v6341, %v7047
    %v7112 = vadd.f32 %v6342, %v7048
    %v7113 = vadd.f32 %v6343, %v7049
    %v7114 = vadd.f32 %v6344, %v7050
    %v7115 = vadd.f32 %v6345, %v7051
    %v7116 = vadd.f32 %v6346, %v7052
    %v7117 = vadd.f32 %v6347, %v7053
    %v7118 = vadd.f32 %v6348, %v7054
    %v7119 = vadd.f32 %v6349, %v7055
    %v7120 = vadd.f32 %v6350, %v7056
    %v7121 = vadd.f32 %v6351, %v7057
    %v7122 = vadd.f32 %v6352, %v7058
    %v7123 = vld [vmem:[%s2] sm:$0x1]
    %v7125 = vperm.slane %v7123, 0
    %v7127 = vadd.f32 %v7059, %v7125
    %v7128 = vadd.f32 %v7060, %v7125
    %v7129 = vadd.f32 %v7061, %v7125
    %v7130 = vadd.f32 %v7062, %v7125
    %v7131 = vadd.f32 %v7063, %v7125
    %v7132 = vadd.f32 %v7064, %v7125
    %v7133 = vadd.f32 %v7065, %v7125
    %v7134 = vadd.f32 %v7066, %v7125
    %v7135 = vadd.f32 %v7067, %v7125
    %v7136 = vadd.f32 %v7068, %v7125
    %v7137 = vadd.f32 %v7069, %v7125
    %v7138 = vadd.f32 %v7070, %v7125
    %v7139 = vadd.f32 %v7071, %v7125
    %v7140 = vadd.f32 %v7072, %v7125
    %v7141 = vadd.f32 %v7073, %v7125
    %v7142 = vadd.f32 %v7074, %v7125
    %v7143 = vadd.f32 %v7075, %v7125
    %v7144 = vadd.f32 %v7076, %v7125
    %v7145 = vadd.f32 %v7077, %v7125
    %v7146 = vadd.f32 %v7078, %v7125
    %v7147 = vadd.f32 %v7079, %v7125
    %v7148 = vadd.f32 %v7080, %v7125
    %v7149 = vadd.f32 %v7081, %v7125
    %v7150 = vadd.f32 %v7082, %v7125
    %v7151 = vadd.f32 %v7083, %v7125
    %v7152 = vadd.f32 %v7084, %v7125
    %v7153 = vadd.f32 %v7085, %v7125
    %v7154 = vadd.f32 %v7086, %v7125
    %v7155 = vadd.f32 %v7087, %v7125
    %v7156 = vadd.f32 %v7088, %v7125
    %v7157 = vadd.f32 %v7089, %v7125
    %v7158 = vadd.f32 %v7090, %v7125
    %v7159 = vadd.f32 %v7091, %v7125
    %v7160 = vadd.f32 %v7092, %v7125
    %v7161 = vadd.f32 %v7093, %v7125
    %v7162 = vadd.f32 %v7094, %v7125
    %v7163 = vadd.f32 %v7095, %v7125
    %v7164 = vadd.f32 %v7096, %v7125
    %v7165 = vadd.f32 %v7097, %v7125
    %v7166 = vadd.f32 %v7098, %v7125
    %v7167 = vadd.f32 %v7099, %v7125
    %v7168 = vadd.f32 %v7100, %v7125
    %v7169 = vadd.f32 %v7101, %v7125
    %v7170 = vadd.f32 %v7102, %v7125
    %v7171 = vadd.f32 %v7103, %v7125
    %v7172 = vadd.f32 %v7104, %v7125
    %v7173 = vadd.f32 %v7105, %v7125
    %v7174 = vadd.f32 %v7106, %v7125
    %v7175 = vadd.f32 %v7107, %v7125
    %v7176 = vadd.f32 %v7108, %v7125
    %v7177 = vadd.f32 %v7109, %v7125
    %v7178 = vadd.f32 %v7110, %v7125
    %v7179 = vadd.f32 %v7111, %v7125
    %v7180 = vadd.f32 %v7112, %v7125
    %v7181 = vadd.f32 %v7113, %v7125
    %v7182 = vadd.f32 %v7114, %v7125
    %v7183 = vadd.f32 %v7115, %v7125
    %v7184 = vadd.f32 %v7116, %v7125
    %v7185 = vadd.f32 %v7117, %v7125
    %v7186 = vadd.f32 %v7118, %v7125
    %v7187 = vadd.f32 %v7119, %v7125
    %v7188 = vadd.f32 %v7120, %v7125
    %v7189 = vadd.f32 %v7121, %v7125
    %v7190 = vadd.f32 %v7122, %v7125
    %v7191 = vmax.f32 %v7127, 0.0
    %v7192 = vmax.f32 %v7128, 0.0
    %v7193 = vmax.f32 %v7129, 0.0
    %v7194 = vmax.f32 %v7130, 0.0
    %v7195 = vmax.f32 %v7131, 0.0
    %v7196 = vmax.f32 %v7132, 0.0
    %v7197 = vmax.f32 %v7133, 0.0
    %v7198 = vmax.f32 %v7134, 0.0
    %v7199 = vmax.f32 %v7135, 0.0
    %v7200 = vmax.f32 %v7136, 0.0
    %v7201 = vmax.f32 %v7137, 0.0
    %v7202 = vmax.f32 %v7138, 0.0
    %v7203 = vmax.f32 %v7139, 0.0
    %v7204 = vmax.f32 %v7140, 0.0
    %v7205 = vmax.f32 %v7141, 0.0
    %v7206 = vmax.f32 %v7142, 0.0
    %v7207 = vmax.f32 %v7143, 0.0
    %v7208 = vmax.f32 %v7144, 0.0
    %v7209 = vmax.f32 %v7145, 0.0
    %v7210 = vmax.f32 %v7146, 0.0
    %v7211 = vmax.f32 %v7147, 0.0
    %v7212 = vmax.f32 %v7148, 0.0
    %v7213 = vmax.f32 %v7149, 0.0
    %v7214 = vmax.f32 %v7150, 0.0
    %v7215 = vmax.f32 %v7151, 0.0
    %v7216 = vmax.f32 %v7152, 0.0
    %v7217 = vmax.f32 %v7153, 0.0
    %v7218 = vmax.f32 %v7154, 0.0
    %v7219 = vmax.f32 %v7155, 0.0
    %v7220 = vmax.f32 %v7156, 0.0
    %v7221 = vmax.f32 %v7157, 0.0
    %v7222 = vmax.f32 %v7158, 0.0
    %v7223 = vmax.f32 %v7159, 0.0
    %v7224 = vmax.f32 %v7160, 0.0
    %v7225 = vmax.f32 %v7161, 0.0
    %v7226 = vmax.f32 %v7162, 0.0
    %v7227 = vmax.f32 %v7163, 0.0
    %v7228 = vmax.f32 %v7164, 0.0
    %v7229 = vmax.f32 %v7165, 0.0
    %v7230 = vmax.f32 %v7166, 0.0
    %v7231 = vmax.f32 %v7167, 0.0
    %v7232 = vmax.f32 %v7168, 0.0
    %v7233 = vmax.f32 %v7169, 0.0
    %v7234 = vmax.f32 %v7170, 0.0
    %v7235 = vmax.f32 %v7171, 0.0
    %v7236 = vmax.f32 %v7172, 0.0
    %v7237 = vmax.f32 %v7173, 0.0
    %v7238 = vmax.f32 %v7174, 0.0
    %v7239 = vmax.f32 %v7175, 0.0
    %v7240 = vmax.f32 %v7176, 0.0
    %v7241 = vmax.f32 %v7177, 0.0
    %v7242 = vmax.f32 %v7178, 0.0
    %v7243 = vmax.f32 %v7179, 0.0
    %v7244 = vmax.f32 %v7180, 0.0
    %v7245 = vmax.f32 %v7181, 0.0
    %v7246 = vmax.f32 %v7182, 0.0
    %v7247 = vmax.f32 %v7183, 0.0
    %v7248 = vmax.f32 %v7184, 0.0
    %v7249 = vmax.f32 %v7185, 0.0
    %v7250 = vmax.f32 %v7186, 0.0
    %v7251 = vmax.f32 %v7187, 0.0
    %v7252 = vmax.f32 %v7188, 0.0
    %v7253 = vmax.f32 %v7189, 0.0
    %v7254 = vmax.f32 %v7190, 0.0
    %vm7255 = vcmask 261120
    %7256 = vst.msk [vmem:[#allocation3] sm:$0xff] %vm7255, 0.0
    %7257 = vst.msk [vmem:[#allocation3 + $0x8] sm:$0xff] %vm7255, 0.0
    %7258 = vst.msk [vmem:[#allocation3 + $0x10] sm:$0xff] %vm7255, 0.0
    %7259 = vst.msk [vmem:[#allocation3 + $0x18] sm:$0xff] %vm7255, 0.0
    %7260 = vst.msk [vmem:[#allocation3 + $0x20] sm:$0xff] %vm7255, 0.0
    %7261 = vst.msk [vmem:[#allocation3 + $0x28] sm:$0xff] %vm7255, 0.0
    %7262 = vst.msk [vmem:[#allocation3 + $0x30] sm:$0xff] %vm7255, 0.0
    %7263 = vst.msk [vmem:[#allocation3 + $0x38] sm:$0xff] %vm7255, 0.0
    %7264 = vst.msk [vmem:[#allocation3 + $0x40] sm:$0xff] %vm7255, 0.0
    %7265 = vst.msk [vmem:[#allocation3 + $0x48] sm:$0xff] %vm7255, 0.0
    %7266 = vst.msk [vmem:[#allocation3 + $0x50] sm:$0xff] %vm7255, 0.0
    %7267 = vst.msk [vmem:[#allocation3 + $0x58] sm:$0xff] %vm7255, 0.0
    %7268 = vst.msk [vmem:[#allocation3 + $0x60] sm:$0xff] %vm7255, 0.0
    %7269 = vst.msk [vmem:[#allocation3 + $0x68] sm:$0xff] %vm7255, 0.0
    %7270 = vst.msk [vmem:[#allocation3 + $0x70] sm:$0xff] %vm7255, 0.0
    %7271 = vst.msk [vmem:[#allocation3 + $0x78] sm:$0xff] %vm7255, 0.0
    %7272 = vst.msk [vmem:[#allocation3 + $0x80] sm:$0xff] %vm7255, 0.0
    %7273 = vst.msk [vmem:[#allocation3 + $0x88] sm:$0xff] %vm7255, 0.0
    %7274 = vst.msk [vmem:[#allocation3 + $0x90] sm:$0xff] %vm7255, 0.0
    %7275 = vst.msk [vmem:[#allocation3 + $0x98] sm:$0xff] %vm7255, 0.0
    %7276 = vst.msk [vmem:[#allocation3 + $0xa0] sm:$0xff] %vm7255, 0.0
    %7277 = vst.msk [vmem:[#allocation3 + $0xa8] sm:$0xff] %vm7255, 0.0
    %7278 = vst.msk [vmem:[#allocation3 + $0xb0] sm:$0xff] %vm7255, 0.0
    %7279 = vst.msk [vmem:[#allocation3 + $0xb8] sm:$0xff] %vm7255, 0.0
    %7280 = vst.msk [vmem:[#allocation3 + $0xc0] sm:$0xff] %vm7255, 0.0
    %7281 = vst.msk [vmem:[#allocation3 + $0xc8] sm:$0xff] %vm7255, 0.0
    %7282 = vst.msk [vmem:[#allocation3 + $0xd0] sm:$0xff] %vm7255, 0.0
    %7283 = vst.msk [vmem:[#allocation3 + $0xd8] sm:$0xff] %vm7255, 0.0
    %7284 = vst.msk [vmem:[#allocation3 + $0xe0] sm:$0xff] %vm7255, 0.0
    %7285 = vst.msk [vmem:[#allocation3 + $0xe8] sm:$0xff] %vm7255, 0.0
    %7286 = vst.msk [vmem:[#allocation3 + $0xf0] sm:$0xff] %vm7255, 0.0
    %7287 = vst.msk [vmem:[#allocation3 + $0xf8] sm:$0xff] %vm7255, 0.0
    %7288 = vst.msk [vmem:[#allocation3 + $0x100] sm:$0xff] %vm7255, 0.0
    %7289 = vst.msk [vmem:[#allocation3 + $0x108] sm:$0xff] %vm7255, 0.0
    %7290 = vst.msk [vmem:[#allocation3 + $0x110] sm:$0xff] %vm7255, 0.0
    %7291 = vst.msk [vmem:[#allocation3 + $0x118] sm:$0xff] %vm7255, 0.0
    %7292 = vst.msk [vmem:[#allocation3 + $0x120] sm:$0xff] %vm7255, 0.0
    %7293 = vst.msk [vmem:[#allocation3 + $0x128] sm:$0xff] %vm7255, 0.0
    %7294 = vst.msk [vmem:[#allocation3 + $0x130] sm:$0xff] %vm7255, 0.0
    %7295 = vst.msk [vmem:[#allocation3 + $0x138] sm:$0xff] %vm7255, 0.0
    %7296 = vst.msk [vmem:[#allocation3 + $0x140] sm:$0xff] %vm7255, 0.0
    %7297 = vst.msk [vmem:[#allocation3 + $0x148] sm:$0xff] %vm7255, 0.0
    %7298 = vst.msk [vmem:[#allocation3 + $0x150] sm:$0xff] %vm7255, 0.0
    %7299 = vst.msk [vmem:[#allocation3 + $0x158] sm:$0xff] %vm7255, 0.0
    %7300 = vst.msk [vmem:[#allocation3 + $0x160] sm:$0xff] %vm7255, 0.0
    %7301 = vst.msk [vmem:[#allocation3 + $0x168] sm:$0xff] %vm7255, 0.0
    %7302 = vst.msk [vmem:[#allocation3 + $0x170] sm:$0xff] %vm7255, 0.0
    %7303 = vst.msk [vmem:[#allocation3 + $0x178] sm:$0xff] %vm7255, 0.0
    %7304 = vst.msk [vmem:[#allocation3 + $0x180] sm:$0xff] %vm7255, 0.0
    %7305 = vst.msk [vmem:[#allocation3 + $0x188] sm:$0xff] %vm7255, 0.0
    %7306 = vst.msk [vmem:[#allocation3 + $0x190] sm:$0xff] %vm7255, 0.0
    %7307 = vst.msk [vmem:[#allocation3 + $0x198] sm:$0xff] %vm7255, 0.0
    %7308 = vst.msk [vmem:[#allocation3 + $0x1a0] sm:$0xff] %vm7255, 0.0
    %7309 = vst.msk [vmem:[#allocation3 + $0x1a8] sm:$0xff] %vm7255, 0.0
    %7310 = vst.msk [vmem:[#allocation3 + $0x1b0] sm:$0xff] %vm7255, 0.0
    %7311 = vst.msk [vmem:[#allocation3 + $0x1b8] sm:$0xff] %vm7255, 0.0
    %7312 = vst.msk [vmem:[#allocation3 + $0x1c0] sm:$0xff] %vm7255, 0.0
    %7313 = vst.msk [vmem:[#allocation3 + $0x1c8] sm:$0xff] %vm7255, 0.0
    %7314 = vst.msk [vmem:[#allocation3 + $0x1d0] sm:$0xff] %vm7255, 0.0
    %7315 = vst.msk [vmem:[#allocation3 + $0x1d8] sm:$0xff] %vm7255, 0.0
    %7316 = vst.msk [vmem:[#allocation3 + $0x1e0] sm:$0xff] %vm7255, 0.0
    %7317 = vst.msk [vmem:[#allocation3 + $0x1e8] sm:$0xff] %vm7255, 0.0
    %7318 = vst.msk [vmem:[#allocation3 + $0x1f0] sm:$0xff] %vm7255, 0.0
    %7319 = vst.msk [vmem:[#allocation3 + $0x1f8] sm:$0xff] %vm7255, 0.0
    %7320 = vst.msk [vmem:[#allocation3 + $0x200] sm:$0xff] %vm7255, 0.0
    %7321 = vst.msk [vmem:[#allocation3 + $0x208] sm:$0xff] %vm7255, 0.0
    %7322 = vst.msk [vmem:[#allocation3 + $0x210] sm:$0xff] %vm7255, 0.0
    %7323 = vst.msk [vmem:[#allocation3] sm:$0xff] %vm7255, %v7191
    %7324 = vst.msk [vmem:[#allocation3 + $0x8] sm:$0xff] %vm7255, %v7192
    %7325 = vst.msk [vmem:[#allocation3 + $0x10] sm:$0xff] %vm7255, %v7193
    %7326 = vst.msk [vmem:[#allocation3 + $0x18] sm:$0xff] %vm7255, %v7194
    %7327 = vst.msk [vmem:[#allocation3 + $0x20] sm:$0xff] %vm7255, %v7195
    %7328 = vst.msk [vmem:[#allocation3 + $0x28] sm:$0xff] %vm7255, %v7196
    %7329 = vst.msk [vmem:[#allocation3 + $0x30] sm:$0xff] %vm7255, %v7197
    %7330 = vst.msk [vmem:[#allocation3 + $0x38] sm:$0xff] %vm7255, %v7198
    %7331 = vst.msk [vmem:[#allocation3 + $0x40] sm:$0xff] %vm7255, %v7199
    %7332 = vst.msk [vmem:[#allocation3 + $0x48] sm:$0xff] %vm7255, %v7200
    %7333 = vst.msk [vmem:[#allocation3 + $0x50] sm:$0xff] %vm7255, %v7201
    %7334 = vst.msk [vmem:[#allocation3 + $0x58] sm:$0xff] %vm7255, %v7202
    %7335 = vst.msk [vmem:[#allocation3 + $0x60] sm:$0xff] %vm7255, %v7203
    %7336 = vst.msk [vmem:[#allocation3 + $0x68] sm:$0xff] %vm7255, %v7204
    %7337 = vst.msk [vmem:[#allocation3 + $0x70] sm:$0xff] %vm7255, %v7205
    %7338 = vst.msk [vmem:[#allocation3 + $0x78] sm:$0xff] %vm7255, %v7206
    %7339 = vst.msk [vmem:[#allocation3 + $0x80] sm:$0xff] %vm7255, %v7207
    %7340 = vst.msk [vmem:[#allocation3 + $0x88] sm:$0xff] %vm7255, %v7208
    %7341 = vst.msk [vmem:[#allocation3 + $0x90] sm:$0xff] %vm7255, %v7209
    %7342 = vst.msk [vmem:[#allocation3 + $0x98] sm:$0xff] %vm7255, %v7210
    %7343 = vst.msk [vmem:[#allocation3 + $0xa0] sm:$0xff] %vm7255, %v7211
    %7344 = vst.msk [vmem:[#allocation3 + $0xa8] sm:$0xff] %vm7255, %v7212
    %7345 = vst.msk [vmem:[#allocation3 + $0xb0] sm:$0xff] %vm7255, %v7213
    %7346 = vst.msk [vmem:[#allocation3 + $0xb8] sm:$0xff] %vm7255, %v7214
    %7347 = vst.msk [vmem:[#allocation3 + $0xc0] sm:$0xff] %vm7255, %v7215
    %7348 = vst.msk [vmem:[#allocation3 + $0xc8] sm:$0xff] %vm7255, %v7216
    %7349 = vst.msk [vmem:[#allocation3 + $0xd0] sm:$0xff] %vm7255, %v7217
    %7350 = vst.msk [vmem:[#allocation3 + $0xd8] sm:$0xff] %vm7255, %v7218
    %7351 = vst.msk [vmem:[#allocation3 + $0xe0] sm:$0xff] %vm7255, %v7219
    %7352 = vst.msk [vmem:[#allocation3 + $0xe8] sm:$0xff] %vm7255, %v7220
    %7353 = vst.msk [vmem:[#allocation3 + $0xf0] sm:$0xff] %vm7255, %v7221
    %7354 = vst.msk [vmem:[#allocation3 + $0xf8] sm:$0xff] %vm7255, %v7222
    %7355 = vst.msk [vmem:[#allocation3 + $0x100] sm:$0xff] %vm7255, %v7223
    %7356 = vst.msk [vmem:[#allocation3 + $0x108] sm:$0xff] %vm7255, %v7224
    %7357 = vst.msk [vmem:[#allocation3 + $0x110] sm:$0xff] %vm7255, %v7225
    %7358 = vst.msk [vmem:[#allocation3 + $0x118] sm:$0xff] %vm7255, %v7226
    %7359 = vst.msk [vmem:[#allocation3 + $0x120] sm:$0xff] %vm7255, %v7227
    %7360 = vst.msk [vmem:[#allocation3 + $0x128] sm:$0xff] %vm7255, %v7228
    %7361 = vst.msk [vmem:[#allocation3 + $0x130] sm:$0xff] %vm7255, %v7229
    %7362 = vst.msk [vmem:[#allocation3 + $0x138] sm:$0xff] %vm7255, %v7230
    %7363 = vst.msk [vmem:[#allocation3 + $0x140] sm:$0xff] %vm7255, %v7231
    %7364 = vst.msk [vmem:[#allocation3 + $0x148] sm:$0xff] %vm7255, %v7232
    %7365 = vst.msk [vmem:[#allocation3 + $0x150] sm:$0xff] %vm7255, %v7233
    %7366 = vst.msk [vmem:[#allocation3 + $0x158] sm:$0xff] %vm7255, %v7234
    %7367 = vst.msk [vmem:[#allocation3 + $0x160] sm:$0xff] %vm7255, %v7235
    %7368 = vst.msk [vmem:[#allocation3 + $0x168] sm:$0xff] %vm7255, %v7236
    %7369 = vst.msk [vmem:[#allocation3 + $0x170] sm:$0xff] %vm7255, %v7237
    %7370 = vst.msk [vmem:[#allocation3 + $0x178] sm:$0xff] %vm7255, %v7238
    %7371 = vst.msk [vmem:[#allocation3 + $0x180] sm:$0xff] %vm7255, %v7239
    %7372 = vst.msk [vmem:[#allocation3 + $0x188] sm:$0xff] %vm7255, %v7240
    %7373 = vst.msk [vmem:[#allocation3 + $0x190] sm:$0xff] %vm7255, %v7241
    %7374 = vst.msk [vmem:[#allocation3 + $0x198] sm:$0xff] %vm7255, %v7242
    %7375 = vst.msk [vmem:[#allocation3 + $0x1a0] sm:$0xff] %vm7255, %v7243
    %7376 = vst.msk [vmem:[#allocation3 + $0x1a8] sm:$0xff] %vm7255, %v7244
    %7377 = vst.msk [vmem:[#allocation3 + $0x1b0] sm:$0xff] %vm7255, %v7245
    %7378 = vst.msk [vmem:[#allocation3 + $0x1b8] sm:$0xff] %vm7255, %v7246
    %7379 = vst.msk [vmem:[#allocation3 + $0x1c0] sm:$0xff] %vm7255, %v7247
    %7380 = vst.msk [vmem:[#allocation3 + $0x1c8] sm:$0xff] %vm7255, %v7248
    %7381 = vst.msk [vmem:[#allocation3 + $0x1d0] sm:$0xff] %vm7255, %v7249
    %7382 = vst.msk [vmem:[#allocation3 + $0x1d8] sm:$0xff] %vm7255, %v7250
    %7383 = vst.msk [vmem:[#allocation3 + $0x1e0] sm:$0xff] %vm7255, %v7251
    %7384 = vst.msk [vmem:[#allocation3 + $0x1e8] sm:$0xff] %vm7255, %v7252
    %7385 = vst.msk [vmem:[#allocation3 + $0x1f0] sm:$0xff] %vm7255, %v7253
    %7386 = vst.msk [vmem:[#allocation3 + $0x1f8] sm:$0xff] %vm7255, %v7254
    %v7387 = vld [vmem:[#allocation3] sm:$0xff]
    %v7388 = vld [vmem:[#allocation3 + $0x8] sm:$0xff]
    %v7389 = vld [vmem:[#allocation3 + $0x10] sm:$0xff]
    %v7390 = vld [vmem:[#allocation3 + $0x18] sm:$0xff]
    %v7391 = vld [vmem:[#allocation3 + $0x20] sm:$0xff]
    %v7392 = vld [vmem:[#allocation3 + $0x28] sm:$0xff]
    %v7393 = vld [vmem:[#allocation3 + $0x30] sm:$0xff]
    %v7394 = vld [vmem:[#allocation3 + $0x38] sm:$0xff]
    %v7395 = vld [vmem:[#allocation3 + $0x40] sm:$0xff]
    %v7396 = vld [vmem:[#allocation3 + $0x48] sm:$0xff]
    %v7397 = vld [vmem:[#allocation3 + $0x50] sm:$0xff]
    %v7398 = vld [vmem:[#allocation3 + $0x58] sm:$0xff]
    %v7399 = vld [vmem:[#allocation3 + $0x60] sm:$0xff]
    %v7400 = vld [vmem:[#allocation3 + $0x68] sm:$0xff]
    %v7401 = vld [vmem:[#allocation3 + $0x70] sm:$0xff]
    %v7402 = vld [vmem:[#allocation3 + $0x78] sm:$0xff]
    %v7403 = vld [vmem:[#allocation3 + $0x80] sm:$0xff]
    %v7404 = vld [vmem:[#allocation3 + $0x88] sm:$0xff]
    %v7405 = vld [vmem:[#allocation3 + $0x90] sm:$0xff]
    %v7406 = vld [vmem:[#allocation3 + $0x98] sm:$0xff]
    %v7407 = vld [vmem:[#allocation3 + $0xa0] sm:$0xff]
    %v7408 = vld [vmem:[#allocation3 + $0xa8] sm:$0xff]
    %v7409 = vld [vmem:[#allocation3 + $0xb0] sm:$0xff]
    %v7410 = vld [vmem:[#allocation3 + $0xb8] sm:$0xff]
    %v7411 = vld [vmem:[#allocation3 + $0xc0] sm:$0xff]
    %v7412 = vld [vmem:[#allocation3 + $0xc8] sm:$0xff]
    %v7413 = vld [vmem:[#allocation3 + $0xd0] sm:$0xff]
    %v7414 = vld [vmem:[#allocation3 + $0xd8] sm:$0xff]
    %v7415 = vld [vmem:[#allocation3 + $0xe0] sm:$0xff]
    %v7416 = vld [vmem:[#allocation3 + $0xe8] sm:$0xff]
    %v7417 = vld [vmem:[#allocation3 + $0xf0] sm:$0xff]
    %v7418 = vld [vmem:[#allocation3 + $0xf8] sm:$0xff]
    %v7419 = vld [vmem:[#allocation3 + $0x100] sm:$0xff]
    %v7420 = vld [vmem:[#allocation3 + $0x108] sm:$0xff]
    %v7421 = vld [vmem:[#allocation3 + $0x110] sm:$0xff]
    %v7422 = vld [vmem:[#allocation3 + $0x118] sm:$0xff]
    %v7423 = vld [vmem:[#allocation3 + $0x120] sm:$0xff]
    %v7424 = vld [vmem:[#allocation3 + $0x128] sm:$0xff]
    %v7425 = vld [vmem:[#allocation3 + $0x130] sm:$0xff]
    %v7426 = vld [vmem:[#allocation3 + $0x138] sm:$0xff]
    %v7427 = vld [vmem:[#allocation3 + $0x140] sm:$0xff]
    %v7428 = vld [vmem:[#allocation3 + $0x148] sm:$0xff]
    %v7429 = vld [vmem:[#allocation3 + $0x150] sm:$0xff]
    %v7430 = vld [vmem:[#allocation3 + $0x158] sm:$0xff]
    %v7431 = vld [vmem:[#allocation3 + $0x160] sm:$0xff]
    %v7432 = vld [vmem:[#allocation3 + $0x168] sm:$0xff]
    %v7433 = vld [vmem:[#allocation3 + $0x170] sm:$0xff]
    %v7434 = vld [vmem:[#allocation3 + $0x178] sm:$0xff]
    %v7435 = vld [vmem:[#allocation3 + $0x180] sm:$0xff]
    %v7436 = vld [vmem:[#allocation3 + $0x188] sm:$0xff]
    %v7437 = vld [vmem:[#allocation3 + $0x190] sm:$0xff]
    %v7438 = vld [vmem:[#allocation3 + $0x198] sm:$0xff]
    %v7439 = vld [vmem:[#allocation3 + $0x1a0] sm:$0xff]
    %v7440 = vld [vmem:[#allocation3 + $0x1a8] sm:$0xff]
    %v7441 = vld [vmem:[#allocation3 + $0x1b0] sm:$0xff]
    %v7442 = vld [vmem:[#allocation3 + $0x1b8] sm:$0xff]
    %v7443 = vld [vmem:[#allocation3 + $0x1c0] sm:$0xff]
    %v7444 = vld [vmem:[#allocation3 + $0x1c8] sm:$0xff]
    %v7445 = vld [vmem:[#allocation3 + $0x1d0] sm:$0xff]
    %v7446 = vld [vmem:[#allocation3 + $0x1d8] sm:$0xff]
    %v7447 = vld [vmem:[#allocation3 + $0x1e0] sm:$0xff]
    %v7448 = vld [vmem:[#allocation3 + $0x1e8] sm:$0xff]
    %v7449 = vld [vmem:[#allocation3 + $0x1f0] sm:$0xff]
    %v7450 = vld [vmem:[#allocation3 + $0x1f8] sm:$0xff]
    %v7451 = vld [vmem:[#allocation3 + $0x1] sm:$0xff]
    %v7452 = vld [vmem:[#allocation3 + $0x9] sm:$0xff]
    %v7453 = vld [vmem:[#allocation3 + $0x11] sm:$0xff]
    %v7454 = vld [vmem:[#allocation3 + $0x19] sm:$0xff]
    %v7455 = vld [vmem:[#allocation3 + $0x21] sm:$0xff]
    %v7456 = vld [vmem:[#allocation3 + $0x29] sm:$0xff]
    %v7457 = vld [vmem:[#allocation3 + $0x31] sm:$0xff]
    %v7458 = vld [vmem:[#allocation3 + $0x39] sm:$0xff]
    %v7459 = vld [vmem:[#allocation3 + $0x41] sm:$0xff]
    %v7460 = vld [vmem:[#allocation3 + $0x49] sm:$0xff]
    %v7461 = vld [vmem:[#allocation3 + $0x51] sm:$0xff]
    %v7462 = vld [vmem:[#allocation3 + $0x59] sm:$0xff]
    %v7463 = vld [vmem:[#allocation3 + $0x61] sm:$0xff]
    %v7464 = vld [vmem:[#allocation3 + $0x69] sm:$0xff]
    %v7465 = vld [vmem:[#allocation3 + $0x71] sm:$0xff]
    %v7466 = vld [vmem:[#allocation3 + $0x79] sm:$0xff]
    %v7467 = vld [vmem:[#allocation3 + $0x81] sm:$0xff]
    %v7468 = vld [vmem:[#allocation3 + $0x89] sm:$0xff]
    %v7469 = vld [vmem:[#allocation3 + $0x91] sm:$0xff]
    %v7470 = vld [vmem:[#allocation3 + $0x99] sm:$0xff]
    %v7471 = vld [vmem:[#allocation3 + $0xa1] sm:$0xff]
    %v7472 = vld [vmem:[#allocation3 + $0xa9] sm:$0xff]
    %v7473 = vld [vmem:[#allocation3 + $0xb1] sm:$0xff]
    %v7474 = vld [vmem:[#allocation3 + $0xb9] sm:$0xff]
    %v7475 = vld [vmem:[#allocation3 + $0xc1] sm:$0xff]
    %v7476 = vld [vmem:[#allocation3 + $0xc9] sm:$0xff]
    %v7477 = vld [vmem:[#allocation3 + $0xd1] sm:$0xff]
    %v7478 = vld [vmem:[#allocation3 + $0xd9] sm:$0xff]
    %v7479 = vld [vmem:[#allocation3 + $0xe1] sm:$0xff]
    %v7480 = vld [vmem:[#allocation3 + $0xe9] sm:$0xff]
    %v7481 = vld [vmem:[#allocation3 + $0xf1] sm:$0xff]
    %v7482 = vld [vmem:[#allocation3 + $0xf9] sm:$0xff]
    %v7483 = vld [vmem:[#allocation3 + $0x101] sm:$0xff]
    %v7484 = vld [vmem:[#allocation3 + $0x109] sm:$0xff]
    %v7485 = vld [vmem:[#allocation3 + $0x111] sm:$0xff]
    %v7486 = vld [vmem:[#allocation3 + $0x119] sm:$0xff]
    %v7487 = vld [vmem:[#allocation3 + $0x121] sm:$0xff]
    %v7488 = vld [vmem:[#allocation3 + $0x129] sm:$0xff]
    %v7489 = vld [vmem:[#allocation3 + $0x131] sm:$0xff]
    %v7490 = vld [vmem:[#allocation3 + $0x139] sm:$0xff]
    %v7491 = vld [vmem:[#allocation3 + $0x141] sm:$0xff]
    %v7492 = vld [vmem:[#allocation3 + $0x149] sm:$0xff]
    %v7493 = vld [vmem:[#allocation3 + $0x151] sm:$0xff]
    %v7494 = vld [vmem:[#allocation3 + $0x159] sm:$0xff]
    %v7495 = vld [vmem:[#allocation3 + $0x161] sm:$0xff]
    %v7496 = vld [vmem:[#allocation3 + $0x169] sm:$0xff]
    %v7497 = vld [vmem:[#allocation3 + $0x171] sm:$0xff]
    %v7498 = vld [vmem:[#allocation3 + $0x179] sm:$0xff]
    %v7499 = vld [vmem:[#allocation3 + $0x181] sm:$0xff]
    %v7500 = vld [vmem:[#allocation3 + $0x189] sm:$0xff]
    %v7501 = vld [vmem:[#allocation3 + $0x191] sm:$0xff]
    %v7502 = vld [vmem:[#allocation3 + $0x199] sm:$0xff]
    %v7503 = vld [vmem:[#allocation3 + $0x1a1] sm:$0xff]
    %v7504 = vld [vmem:[#allocation3 + $0x1a9] sm:$0xff]
    %v7505 = vld [vmem:[#allocation3 + $0x1b1] sm:$0xff]
    %v7506 = vld [vmem:[#allocation3 + $0x1b9] sm:$0xff]
    %v7507 = vld [vmem:[#allocation3 + $0x1c1] sm:$0xff]
    %v7508 = vld [vmem:[#allocation3 + $0x1c9] sm:$0xff]
    %v7509 = vld [vmem:[#allocation3 + $0x1d1] sm:$0xff]
    %v7510 = vld [vmem:[#allocation3 + $0x1d9] sm:$0xff]
    %v7511 = vld [vmem:[#allocation3 + $0x1e1] sm:$0xff]
    %v7512 = vld [vmem:[#allocation3 + $0x1e9] sm:$0xff]
    %v7513 = vld [vmem:[#allocation3 + $0x1f1] sm:$0xff]
    %v7514 = vld [vmem:[#allocation3 + $0x1f9] sm:$0xff]
    %v7515 = vmax.f32 %v7387, %v7451
    %v7516 = vmax.f32 %v7388, %v7452
    %v7517 = vmax.f32 %v7389, %v7453
    %v7518 = vmax.f32 %v7390, %v7454
    %v7519 = vmax.f32 %v7391, %v7455
    %v7520 = vmax.f32 %v7392, %v7456
    %v7521 = vmax.f32 %v7393, %v7457
    %v7522 = vmax.f32 %v7394, %v7458
    %v7523 = vmax.f32 %v7395, %v7459
    %v7524 = vmax.f32 %v7396, %v7460
    %v7525 = vmax.f32 %v7397, %v7461
    %v7526 = vmax.f32 %v7398, %v7462
    %v7527 = vmax.f32 %v7399, %v7463
    %v7528 = vmax.f32 %v7400, %v7464
    %v7529 = vmax.f32 %v7401, %v7465
    %v7530 = vmax.f32 %v7402, %v7466
    %v7531 = vmax.f32 %v7403, %v7467
    %v7532 = vmax.f32 %v7404, %v7468
    %v7533 = vmax.f32 %v7405, %v7469
    %v7534 = vmax.f32 %v7406, %v7470
    %v7535 = vmax.f32 %v7407, %v7471
    %v7536 = vmax.f32 %v7408, %v7472
    %v7537 = vmax.f32 %v7409, %v7473
    %v7538 = vmax.f32 %v7410, %v7474
    %v7539 = vmax.f32 %v7411, %v7475
    %v7540 = vmax.f32 %v7412, %v7476
    %v7541 = vmax.f32 %v7413, %v7477
    %v7542 = vmax.f32 %v7414, %v7478
    %v7543 = vmax.f32 %v7415, %v7479
    %v7544 = vmax.f32 %v7416, %v7480
    %v7545 = vmax.f32 %v7417, %v7481
    %v7546 = vmax.f32 %v7418, %v7482
    %v7547 = vmax.f32 %v7419, %v7483
    %v7548 = vmax.f32 %v7420, %v7484
    %v7549 = vmax.f32 %v7421, %v7485
    %v7550 = vmax.f32 %v7422, %v7486
    %v7551 = vmax.f32 %v7423, %v7487
    %v7552 = vmax.f32 %v7424, %v7488
    %v7553 = vmax.f32 %v7425, %v7489
    %v7554 = vmax.f32 %v7426, %v7490
    %v7555 = vmax.f32 %v7427, %v7491
    %v7556 = vmax.f32 %v7428, %v7492
    %v7557 = vmax.f32 %v7429, %v7493
    %v7558 = vmax.f32 %v7430, %v7494
    %v7559 = vmax.f32 %v7431, %v7495
    %v7560 = vmax.f32 %v7432, %v7496
    %v7561 = vmax.f32 %v7433, %v7497
    %v7562 = vmax.f32 %v7434, %v7498
    %v7563 = vmax.f32 %v7435, %v7499
    %v7564 = vmax.f32 %v7436, %v7500
    %v7565 = vmax.f32 %v7437, %v7501
    %v7566 = vmax.f32 %v7438, %v7502
    %v7567 = vmax.f32 %v7439, %v7503
    %v7568 = vmax.f32 %v7440, %v7504
    %v7569 = vmax.f32 %v7441, %v7505
    %v7570 = vmax.f32 %v7442, %v7506
    %v7571 = vmax.f32 %v7443, %v7507
    %v7572 = vmax.f32 %v7444, %v7508
    %v7573 = vmax.f32 %v7445, %v7509
    %v7574 = vmax.f32 %v7446, %v7510
    %v7575 = vmax.f32 %v7447, %v7511
    %v7576 = vmax.f32 %v7448, %v7512
    %v7577 = vmax.f32 %v7449, %v7513
    %v7578 = vmax.f32 %v7450, %v7514
    %v7579 = vld [vmem:[#allocation3 + $0x200] sm:$0xff]
    %v7580 = vld [vmem:[#allocation3 + $0x208] sm:$0xff]
    %v7581 = vld [vmem:[#allocation3 + $0x201] sm:$0xff]
    %v7582 = vld [vmem:[#allocation3 + $0x209] sm:$0xff]
    %v7583 = vmax.f32 %v7579, %v7581
    %v7584 = vmax.f32 %v7580, %v7582
    %v7585 = vmax.f32 %v7515, %v7517
    %v7586 = vmax.f32 %v7516, %v7518
    %v7587 = vmax.f32 %v7517, %v7519
    %v7588 = vmax.f32 %v7518, %v7520
    %v7589 = vmax.f32 %v7519, %v7521
    %v7590 = vmax.f32 %v7520, %v7522
    %v7591 = vmax.f32 %v7521, %v7523
    %v7592 = vmax.f32 %v7522, %v7524
    %v7593 = vmax.f32 %v7523, %v7525
    %v7594 = vmax.f32 %v7524, %v7526
    %v7595 = vmax.f32 %v7525, %v7527
    %v7596 = vmax.f32 %v7526, %v7528
    %v7597 = vmax.f32 %v7527, %v7529
    %v7598 = vmax.f32 %v7528, %v7530
    %v7599 = vmax.f32 %v7529, %v7531
    %v7600 = vmax.f32 %v7530, %v7532
    %v7601 = vmax.f32 %v7531, %v7533
    %v7602 = vmax.f32 %v7532, %v7534
    %v7603 = vmax.f32 %v7533, %v7535
    %v7604 = vmax.f32 %v7534, %v7536
    %v7605 = vmax.f32 %v7535, %v7537
    %v7606 = vmax.f32 %v7536, %v7538
    %v7607 = vmax.f32 %v7537, %v7539
    %v7608 = vmax.f32 %v7538, %v7540
    %v7609 = vmax.f32 %v7539, %v7541
    %v7610 = vmax.f32 %v7540, %v7542
    %v7611 = vmax.f32 %v7541, %v7543
    %v7612 = vmax.f32 %v7542, %v7544
    %v7613 = vmax.f32 %v7543, %v7545
    %v7614 = vmax.f32 %v7544, %v7546
    %v7615 = vmax.f32 %v7545, %v7547
    %v7616 = vmax.f32 %v7546, %v7548
    %v7617 = vmax.f32 %v7547, %v7549
    %v7618 = vmax.f32 %v7548, %v7550
    %v7619 = vmax.f32 %v7549, %v7551
    %v7620 = vmax.f32 %v7550, %v7552
    %v7621 = vmax.f32 %v7551, %v7553
    %v7622 = vmax.f32 %v7552, %v7554
    %v7623 = vmax.f32 %v7553, %v7555
    %v7624 = vmax.f32 %v7554, %v7556
    %v7625 = vmax.f32 %v7555, %v7557
    %v7626 = vmax.f32 %v7556, %v7558
    %v7627 = vmax.f32 %v7557, %v7559
    %v7628 = vmax.f32 %v7558, %v7560
    %v7629 = vmax.f32 %v7559, %v7561
    %v7630 = vmax.f32 %v7560, %v7562
    %v7631 = vmax.f32 %v7561, %v7563
    %v7632 = vmax.f32 %v7562, %v7564
    %v7633 = vmax.f32 %v7563, %v7565
    %v7634 = vmax.f32 %v7564, %v7566
    %v7635 = vmax.f32 %v7565, %v7567
    %v7636 = vmax.f32 %v7566, %v7568
    %v7637 = vmax.f32 %v7567, %v7569
    %v7638 = vmax.f32 %v7568, %v7570
    %v7639 = vmax.f32 %v7569, %v7571
    %v7640 = vmax.f32 %v7570, %v7572
    %v7641 = vmax.f32 %v7571, %v7573
    %v7642 = vmax.f32 %v7572, %v7574
    %v7643 = vmax.f32 %v7573, %v7575
    %v7644 = vmax.f32 %v7574, %v7576
    %v7645 = vmax.f32 %v7575, %v7577
    %v7646 = vmax.f32 %v7576, %v7578
    %v7647 = vmax.f32 %v7577, %v7583
    %v7648 = vmax.f32 %v7578, %v7584
    %v7649 = vld [vmem:[%s4] sm:$0xff]
    %v7650 = vld [vmem:[%s4 + $0x8] sm:$0xff]
    %v7651 = vld [vmem:[%s4 + $0x10] sm:$0xff]
    %v7652 = vld [vmem:[%s4 + $0x18] sm:$0xff]
    %v7653 = vld [vmem:[%s4 + $0x20] sm:$0xff]
    %v7654 = vld [vmem:[%s4 + $0x28] sm:$0xff]
    %v7655 = vld [vmem:[%s4 + $0x30] sm:$0xff]
    %v7656 = vld [vmem:[%s4 + $0x38] sm:$0xff]
    %v7657 = vld [vmem:[%s4 + $0x40] sm:$0xff]
    %v7658 = vld [vmem:[%s4 + $0x48] sm:$0xff]
    %v7659 = vld [vmem:[%s4 + $0x50] sm:$0xff]
    %v7660 = vld [vmem:[%s4 + $0x58] sm:$0xff]
    %v7661 = vld [vmem:[%s4 + $0x60] sm:$0xff]
    %v7662 = vld [vmem:[%s4 + $0x68] sm:$0xff]
    %v7663 = vld [vmem:[%s4 + $0x70] sm:$0xff]
    %v7664 = vld [vmem:[%s4 + $0x78] sm:$0xff]
    %v7665 = vld [vmem:[%s4 + $0x80] sm:$0xff]
    %v7666 = vld [vmem:[%s4 + $0x88] sm:$0xff]
    %v7667 = vld [vmem:[%s4 + $0x90] sm:$0xff]
    %v7668 = vld [vmem:[%s4 + $0x98] sm:$0xff]
    %v7669 = vld [vmem:[%s4 + $0xa0] sm:$0xff]
    %v7670 = vld [vmem:[%s4 + $0xa8] sm:$0xff]
    %v7671 = vld [vmem:[%s4 + $0xb0] sm:$0xff]
    %v7672 = vld [vmem:[%s4 + $0xb8] sm:$0xff]
    %v7673 = vld [vmem:[%s4 + $0xc0] sm:$0xff]
    %v7674 = vld [vmem:[%s4 + $0xc8] sm:$0xff]
    %v7675 = vld [vmem:[%s4 + $0xd0] sm:$0xff]
    %v7676 = vld [vmem:[%s4 + $0xd8] sm:$0xff]
    %v7677 = vld [vmem:[%s4 + $0xe0] sm:$0xff]
    %v7678 = vld [vmem:[%s4 + $0xe8] sm:$0xff]
    %v7679 = vld [vmem:[%s4 + $0xf0] sm:$0xff]
    %v7680 = vld [vmem:[%s4 + $0xf8] sm:$0xff]
    %v7681 = vld [vmem:[%s4 + $0x100] sm:$0xff]
    %v7682 = vld [vmem:[%s4 + $0x108] sm:$0xff]
    %v7683 = vld [vmem:[%s4 + $0x110] sm:$0xff]
    %v7684 = vld [vmem:[%s4 + $0x118] sm:$0xff]
    %v7685 = vld [vmem:[%s4 + $0x120] sm:$0xff]
    %v7686 = vld [vmem:[%s4 + $0x128] sm:$0xff]
    %v7687 = vld [vmem:[%s4 + $0x130] sm:$0xff]
    %v7688 = vld [vmem:[%s4 + $0x138] sm:$0xff]
    %v7689 = vld [vmem:[%s4 + $0x140] sm:$0xff]
    %v7690 = vld [vmem:[%s4 + $0x148] sm:$0xff]
    %v7691 = vld [vmem:[%s4 + $0x150] sm:$0xff]
    %v7692 = vld [vmem:[%s4 + $0x158] sm:$0xff]
    %v7693 = vld [vmem:[%s4 + $0x160] sm:$0xff]
    %v7694 = vld [vmem:[%s4 + $0x168] sm:$0xff]
    %v7695 = vld [vmem:[%s4 + $0x170] sm:$0xff]
    %v7696 = vld [vmem:[%s4 + $0x178] sm:$0xff]
    %v7697 = vld [vmem:[%s4 + $0x180] sm:$0xff]
    %v7698 = vld [vmem:[%s4 + $0x188] sm:$0xff]
    %v7699 = vld [vmem:[%s4 + $0x190] sm:$0xff]
    %v7700 = vld [vmem:[%s4 + $0x198] sm:$0xff]
    %v7701 = vld [vmem:[%s4 + $0x1a0] sm:$0xff]
    %v7702 = vld [vmem:[%s4 + $0x1a8] sm:$0xff]
    %v7703 = vld [vmem:[%s4 + $0x1b0] sm:$0xff]
    %v7704 = vld [vmem:[%s4 + $0x1b8] sm:$0xff]
    %v7705 = vld [vmem:[%s4 + $0x1c0] sm:$0xff]
    %v7706 = vld [vmem:[%s4 + $0x1c8] sm:$0xff]
    %v7707 = vld [vmem:[%s4 + $0x1d0] sm:$0xff]
    %v7708 = vld [vmem:[%s4 + $0x1d8] sm:$0xff]
    %v7709 = vld [vmem:[%s4 + $0x1e0] sm:$0xff]
    %v7710 = vld [vmem:[%s4 + $0x1e8] sm:$0xff]
    %v7711 = vld [vmem:[%s4 + $0x1f0] sm:$0xff]
    %v7712 = vld [vmem:[%s4 + $0x1f8] sm:$0xff]
    %7713 = vmatpush.msra.mxu0 %v7600
    %7714 = vmatpush.msra.mxu0 %v7599
    %7715 = vmatpush.msra.mxu0 %v7598
    %7716 = vmatpush.msra.mxu0 %v7597
    %7717 = vmatpush.msra.mxu0 %v7596
    %7718 = vmatpush.msra.mxu0 %v7595
    %7719 = vmatpush.msra.mxu0 %v7594
    %7720 = vmatpush.msra.mxu0 %v7593
    %7721 = vmatpush.msra.mxu0 %v7592
    %7722 = vmatpush.msra.mxu0 %v7591
    %7723 = vmatpush.msra.mxu0 %v7590
    %7724 = vmatpush.msra.mxu0 %v7589
    %7725 = vmatpush.msra.mxu0 %v7588
    %7726 = vmatpush.msra.mxu0 %v7587
    %7727 = vmatpush.msra.mxu0 %v7586
    %7728 = vmatpush.msra.mxu0 %v7585
    %7729 = vmatmul.f32.gmra.mxu0 %v7649
    %v7730 = vpop.f32.mrf.mxu0
    %v7731 = vadd.f32 0.0, %v7730
    %7732 = vmatmul.f32.gmra.mxu0 %v7653
    %v7733 = vpop.f32.mrf.mxu0
    %v7734 = vadd.f32 0.0, %v7733
    %7735 = vmatmul.f32.gmra.mxu0 %v7657
    %v7736 = vpop.f32.mrf.mxu0
    %v7737 = vadd.f32 0.0, %v7736
    %7738 = vmatmul.f32.gmra.mxu0 %v7661
    %v7739 = vpop.f32.mrf.mxu0
    %v7740 = vadd.f32 0.0, %v7739
    %7741 = vmatmul.f32.gmra.mxu0 %v7665
    %v7742 = vpop.f32.mrf.mxu0
    %v7743 = vadd.f32 0.0, %v7742
    %7744 = vmatmul.f32.gmra.mxu0 %v7669
    %v7745 = vpop.f32.mrf.mxu0
    %v7746 = vadd.f32 0.0, %v7745
    %7747 = vmatmul.f32.gmra.mxu0 %v7673
    %v7748 = vpop.f32.mrf.mxu0
    %v7749 = vadd.f32 0.0, %v7748
    %7750 = vmatmul.f32.gmra.mxu0 %v7677
    %v7751 = vpop.f32.mrf.mxu0
    %v7752 = vadd.f32 0.0, %v7751
    %7753 = vmatmul.f32.gmra.mxu0 %v7681
    %v7754 = vpop.f32.mrf.mxu0
    %v7755 = vadd.f32 0.0, %v7754
    %7756 = vmatmul.f32.gmra.mxu0 %v7685
    %v7757 = vpop.f32.mrf.mxu0
    %v7758 = vadd.f32 0.0, %v7757
    %7759 = vmatmul.f32.gmra.mxu0 %v7689
    %v7760 = vpop.f32.mrf.mxu0
    %v7761 = vadd.f32 0.0, %v7760
    %7762 = vmatmul.f32.gmra.mxu0 %v7693
    %v7763 = vpop.f32.mrf.mxu0
    %v7764 = vadd.f32 0.0, %v7763
    %7765 = vmatmul.f32.gmra.mxu0 %v7697
    %v7766 = vpop.f32.mrf.mxu0
    %v7767 = vadd.f32 0.0, %v7766
    %7768 = vmatmul.f32.gmra.mxu0 %v7701
    %v7769 = vpop.f32.mrf.mxu0
    %v7770 = vadd.f32 0.0, %v7769
    %7771 = vmatmul.f32.gmra.mxu0 %v7705
    %v7772 = vpop.f32.mrf.mxu0
    %v7773 = vadd.f32 0.0, %v7772
    %7774 = vmatmul.f32.gmra.mxu0 %v7709
    %v7775 = vpop.f32.mrf.mxu0
    %v7776 = vadd.f32 0.0, %v7775
    %7777 = vdwg.mxu0
    %7778 = vmatpush.msra.mxu0 %v7616
    %7779 = vmatpush.msra.mxu0 %v7615
    %7780 = vmatpush.msra.mxu0 %v7614
    %7781 = vmatpush.msra.mxu0 %v7613
    %7782 = vmatpush.msra.mxu0 %v7612
    %7783 = vmatpush.msra.mxu0 %v7611
    %7784 = vmatpush.msra.mxu0 %v7610
    %7785 = vmatpush.msra.mxu0 %v7609
    %7786 = vmatpush.msra.mxu0 %v7608
    %7787 = vmatpush.msra.mxu0 %v7607
    %7788 = vmatpush.msra.mxu0 %v7606
    %7789 = vmatpush.msra.mxu0 %v7605
    %7790 = vmatpush.msra.mxu0 %v7604
    %7791 = vmatpush.msra.mxu0 %v7603
    %7792 = vmatpush.msra.mxu0 %v7602
    %7793 = vmatpush.msra.mxu0 %v7601
    %7794 = vmatmul.f32.gmra.mxu0 %v7650
    %v7795 = vpop.f32.mrf.mxu0
    %v7796 = vadd.f32 %v7731, %v7795
    %7797 = vmatmul.f32.gmra.mxu0 %v7654
    %v7798 = vpop.f32.mrf.mxu0
    %v7799 = vadd.f32 %v7734, %v7798
    %7800 = vmatmul.f32.gmra.mxu0 %v7658
    %v7801 = vpop.f32.mrf.mxu0
    %v7802 = vadd.f32 %v7737, %v7801
    %7803 = vmatmul.f32.gmra.mxu0 %v7662
    %v7804 = vpop.f32.mrf.mxu0
    %v7805 = vadd.f32 %v7740, %v7804
    %7806 = vmatmul.f32.gmra.mxu0 %v7666
    %v7807 = vpop.f32.mrf.mxu0
    %v7808 = vadd.f32 %v7743, %v7807
    %7809 = vmatmul.f32.gmra.mxu0 %v7670
    %v7810 = vpop.f32.mrf.mxu0
    %v7811 = vadd.f32 %v7746, %v7810
    %7812 = vmatmul.f32.gmra.mxu0 %v7674
    %v7813 = vpop.f32.mrf.mxu0
    %v7814 = vadd.f32 %v7749, %v7813
    %7815 = vmatmul.f32.gmra.mxu0 %v7678
    %v7816 = vpop.f32.mrf.mxu0
    %v7817 = vadd.f32 %v7752, %v7816
    %7818 = vmatmul.f32.gmra.mxu0 %v7682
    %v7819 = vpop.f32.mrf.mxu0
    %v7820 = vadd.f32 %v7755, %v7819
    %7821 = vmatmul.f32.gmra.mxu0 %v7686
    %v7822 = vpop.f32.mrf.mxu0
    %v7823 = vadd.f32 %v7758, %v7822
    %7824 = vmatmul.f32.gmra.mxu0 %v7690
    %v7825 = vpop.f32.mrf.mxu0
    %v7826 = vadd.f32 %v7761, %v7825
    %7827 = vmatmul.f32.gmra.mxu0 %v7694
    %v7828 = vpop.f32.mrf.mxu0
    %v7829 = vadd.f32 %v7764, %v7828
    %7830 = vmatmul.f32.gmra.mxu0 %v7698
    %v7831 = vpop.f32.mrf.mxu0
    %v7832 = vadd.f32 %v7767, %v7831
    %7833 = vmatmul.f32.gmra.mxu0 %v7702
    %v7834 = vpop.f32.mrf.mxu0
    %v7835 = vadd.f32 %v7770, %v7834
    %7836 = vmatmul.f32.gmra.mxu0 %v7706
    %v7837 = vpop.f32.mrf.mxu0
    %v7838 = vadd.f32 %v7773, %v7837
    %7839 = vmatmul.f32.gmra.mxu0 %v7710
    %v7840 = vpop.f32.mrf.mxu0
    %v7841 = vadd.f32 %v7776, %v7840
    %7842 = vdwg.mxu0
    %7843 = vmatpush.msra.mxu0 %v7632
    %7844 = vmatpush.msra.mxu0 %v7631
    %7845 = vmatpush.msra.mxu0 %v7630
    %7846 = vmatpush.msra.mxu0 %v7629
    %7847 = vmatpush.msra.mxu0 %v7628
    %7848 = vmatpush.msra.mxu0 %v7627
    %7849 = vmatpush.msra.mxu0 %v7626
    %7850 = vmatpush.msra.mxu0 %v7625
    %7851 = vmatpush.msra.mxu0 %v7624
    %7852 = vmatpush.msra.mxu0 %v7623
    %7853 = vmatpush.msra.mxu0 %v7622
    %7854 = vmatpush.msra.mxu0 %v7621
    %7855 = vmatpush.msra.mxu0 %v7620
    %7856 = vmatpush.msra.mxu0 %v7619
    %7857 = vmatpush.msra.mxu0 %v7618
    %7858 = vmatpush.msra.mxu0 %v7617
    %7859 = vmatmul.f32.gmra.mxu0 %v7651
    %v7860 = vpop.f32.mrf.mxu0
    %v7861 = vadd.f32 %v7796, %v7860
    %7862 = vmatmul.f32.gmra.mxu0 %v7655
    %v7863 = vpop.f32.mrf.mxu0
    %v7864 = vadd.f32 %v7799, %v7863
    %7865 = vmatmul.f32.gmra.mxu0 %v7659
    %v7866 = vpop.f32.mrf.mxu0
    %v7867 = vadd.f32 %v7802, %v7866
    %7868 = vmatmul.f32.gmra.mxu0 %v7663
    %v7869 = vpop.f32.mrf.mxu0
    %v7870 = vadd.f32 %v7805, %v7869
    %7871 = vmatmul.f32.gmra.mxu0 %v7667
    %v7872 = vpop.f32.mrf.mxu0
    %v7873 = vadd.f32 %v7808, %v7872
    %7874 = vmatmul.f32.gmra.mxu0 %v7671
    %v7875 = vpop.f32.mrf.mxu0
    %v7876 = vadd.f32 %v7811, %v7875
    %7877 = vmatmul.f32.gmra.mxu0 %v7675
    %v7878 = vpop.f32.mrf.mxu0
    %v7879 = vadd.f32 %v7814, %v7878
    %7880 = vmatmul.f32.gmra.mxu0 %v7679
    %v7881 = vpop.f32.mrf.mxu0
    %v7882 = vadd.f32 %v7817, %v7881
    %7883 = vmatmul.f32.gmra.mxu0 %v7683
    %v7884 = vpop.f32.mrf.mxu0
    %v7885 = vadd.f32 %v7820, %v7884
    %7886 = vmatmul.f32.gmra.mxu0 %v7687
    %v7887 = vpop.f32.mrf.mxu0
    %v7888 = vadd.f32 %v7823, %v7887
    %7889 = vmatmul.f32.gmra.mxu0 %v7691
    %v7890 = vpop.f32.mrf.mxu0
    %v7891 = vadd.f32 %v7826, %v7890
    %7892 = vmatmul.f32.gmra.mxu0 %v7695
    %v7893 = vpop.f32.mrf.mxu0
    %v7894 = vadd.f32 %v7829, %v7893
    %7895 = vmatmul.f32.gmra.mxu0 %v7699
    %v7896 = vpop.f32.mrf.mxu0
    %v7897 = vadd.f32 %v7832, %v7896
    %7898 = vmatmul.f32.gmra.mxu0 %v7703
    %v7899 = vpop.f32.mrf.mxu0
    %v7900 = vadd.f32 %v7835, %v7899
    %7901 = vmatmul.f32.gmra.mxu0 %v7707
    %v7902 = vpop.f32.mrf.mxu0
    %v7903 = vadd.f32 %v7838, %v7902
    %7904 = vmatmul.f32.gmra.mxu0 %v7711
    %v7905 = vpop.f32.mrf.mxu0
    %v7906 = vadd.f32 %v7841, %v7905
    %7907 = vdwg.mxu0
    %7908 = vmatpush.msra.mxu0 %v7648
    %7909 = vmatpush.msra.mxu0 %v7647
    %7910 = vmatpush.msra.mxu0 %v7646
    %7911 = vmatpush.msra.mxu0 %v7645
    %7912 = vmatpush.msra.mxu0 %v7644
    %7913 = vmatpush.msra.mxu0 %v7643
    %7914 = vmatpush.msra.mxu0 %v7642
    %7915 = vmatpush.msra.mxu0 %v7641
    %7916 = vmatpush.msra.mxu0 %v7640
    %7917 = vmatpush.msra.mxu0 %v7639
    %7918 = vmatpush.msra.mxu0 %v7638
    %7919 = vmatpush.msra.mxu0 %v7637
    %7920 = vmatpush.msra.mxu0 %v7636
    %7921 = vmatpush.msra.mxu0 %v7635
    %7922 = vmatpush.msra.mxu0 %v7634
    %7923 = vmatpush.msra.mxu0 %v7633
    %7924 = vmatmul.f32.gmra.mxu0 %v7652
    %v7925 = vpop.f32.mrf.mxu0
    %v7926 = vadd.f32 %v7861, %v7925
    %7927 = vmatmul.f32.gmra.mxu0 %v7656
    %v7928 = vpop.f32.mrf.mxu0
    %v7929 = vadd.f32 %v7864, %v7928
    %7930 = vmatmul.f32.gmra.mxu0 %v7660
    %v7931 = vpop.f32.mrf.mxu0
    %v7932 = vadd.f32 %v7867, %v7931
    %7933 = vmatmul.f32.gmra.mxu0 %v7664
    %v7934 = vpop.f32.mrf.mxu0
    %v7935 = vadd.f32 %v7870, %v7934
    %7936 = vmatmul.f32.gmra.mxu0 %v7668
    %v7937 = vpop.f32.mrf.mxu0
    %v7938 = vadd.f32 %v7873, %v7937
    %7939 = vmatmul.f32.gmra.mxu0 %v7672
    %v7940 = vpop.f32.mrf.mxu0
    %v7941 = vadd.f32 %v7876, %v7940
    %7942 = vmatmul.f32.gmra.mxu0 %v7676
    %v7943 = vpop.f32.mrf.mxu0
    %v7944 = vadd.f32 %v7879, %v7943
    %7945 = vmatmul.f32.gmra.mxu0 %v7680
    %v7946 = vpop.f32.mrf.mxu0
    %v7947 = vadd.f32 %v7882, %v7946
    %7948 = vmatmul.f32.gmra.mxu0 %v7684
    %v7949 = vpop.f32.mrf.mxu0
    %v7950 = vadd.f32 %v7885, %v7949
    %7951 = vmatmul.f32.gmra.mxu0 %v7688
    %v7952 = vpop.f32.mrf.mxu0
    %v7953 = vadd.f32 %v7888, %v7952
    %7954 = vmatmul.f32.gmra.mxu0 %v7692
    %v7955 = vpop.f32.mrf.mxu0
    %v7956 = vadd.f32 %v7891, %v7955
    %7957 = vmatmul.f32.gmra.mxu0 %v7696
    %v7958 = vpop.f32.mrf.mxu0
    %v7959 = vadd.f32 %v7894, %v7958
    %7960 = vmatmul.f32.gmra.mxu0 %v7700
    %v7961 = vpop.f32.mrf.mxu0
    %v7962 = vadd.f32 %v7897, %v7961
    %7963 = vmatmul.f32.gmra.mxu0 %v7704
    %v7964 = vpop.f32.mrf.mxu0
    %v7965 = vadd.f32 %v7900, %v7964
    %7966 = vmatmul.f32.gmra.mxu0 %v7708
    %v7967 = vpop.f32.mrf.mxu0
    %v7968 = vadd.f32 %v7903, %v7967
    %7969 = vmatmul.f32.gmra.mxu0 %v7712
    %v7970 = vpop.f32.mrf.mxu0
    %v7971 = vadd.f32 %v7906, %v7970
    %7972 = vdwg.mxu0
    %7973 = vst.msk [vmem:[#allocation4] sm:$0xff] %vm7255, 0.0
    %7974 = vst.msk [vmem:[#allocation4 + $0x8] sm:$0xff] %vm7255, 0.0
    %7975 = vst.msk [vmem:[#allocation4 + $0x10] sm:$0xff] %vm7255, 0.0
    %7976 = vst.msk [vmem:[#allocation4 + $0x18] sm:$0xff] %vm7255, 0.0
    %7977 = vst.msk [vmem:[#allocation4 + $0x20] sm:$0xff] %vm7255, 0.0
    %7978 = vst.msk [vmem:[#allocation4 + $0x28] sm:$0xff] %vm7255, 0.0
    %7979 = vst.msk [vmem:[#allocation4 + $0x30] sm:$0xff] %vm7255, 0.0
    %7980 = vst.msk [vmem:[#allocation4 + $0x38] sm:$0xff] %vm7255, 0.0
    %7981 = vst.msk [vmem:[#allocation4 + $0x40] sm:$0xff] %vm7255, 0.0
    %7982 = vst.msk [vmem:[#allocation4 + $0x48] sm:$0xff] %vm7255, 0.0
    %7983 = vst.msk [vmem:[#allocation4 + $0x50] sm:$0xff] %vm7255, 0.0
    %7984 = vst.msk [vmem:[#allocation4 + $0x58] sm:$0xff] %vm7255, 0.0
    %7985 = vst.msk [vmem:[#allocation4 + $0x60] sm:$0xff] %vm7255, 0.0
    %7986 = vst.msk [vmem:[#allocation4 + $0x68] sm:$0xff] %vm7255, 0.0
    %7987 = vst.msk [vmem:[#allocation4 + $0x70] sm:$0xff] %vm7255, 0.0
    %7988 = vst.msk [vmem:[#allocation4 + $0x78] sm:$0xff] %vm7255, 0.0
    %7989 = vst.msk [vmem:[#allocation4 + $0x80] sm:$0xff] %vm7255, 0.0
    %7990 = vst.msk [vmem:[#allocation4 + $0x88] sm:$0xff] %vm7255, 0.0
    %7991 = vst.msk [vmem:[#allocation4 + $0x90] sm:$0xff] %vm7255, 0.0
    %7992 = vst.msk [vmem:[#allocation4 + $0x98] sm:$0xff] %vm7255, 0.0
    %7993 = vst.msk [vmem:[#allocation4 + $0x10] sm:$0xff] %vm7255, %v7926
    %7994 = vst.msk [vmem:[#allocation4 + $0x18] sm:$0xff] %vm7255, %v7929
    %7995 = vst.msk [vmem:[#allocation4 + $0x20] sm:$0xff] %vm7255, %v7932
    %7996 = vst.msk [vmem:[#allocation4 + $0x28] sm:$0xff] %vm7255, %v7935
    %7997 = vst.msk [vmem:[#allocation4 + $0x30] sm:$0xff] %vm7255, %v7938
    %7998 = vst.msk [vmem:[#allocation4 + $0x38] sm:$0xff] %vm7255, %v7941
    %7999 = vst.msk [vmem:[#allocation4 + $0x40] sm:$0xff] %vm7255, %v7944
    %8000 = vst.msk [vmem:[#allocation4 + $0x48] sm:$0xff] %vm7255, %v7947
    %8001 = vst.msk [vmem:[#allocation4 + $0x50] sm:$0xff] %vm7255, %v7950
    %8002 = vst.msk [vmem:[#allocation4 + $0x58] sm:$0xff] %vm7255, %v7953
    %8003 = vst.msk [vmem:[#allocation4 + $0x60] sm:$0xff] %vm7255, %v7956
    %8004 = vst.msk [vmem:[#allocation4 + $0x68] sm:$0xff] %vm7255, %v7959
    %8005 = vst.msk [vmem:[#allocation4 + $0x70] sm:$0xff] %vm7255, %v7962
    %8006 = vst.msk [vmem:[#allocation4 + $0x78] sm:$0xff] %vm7255, %v7965
    %8007 = vst.msk [vmem:[#allocation4 + $0x80] sm:$0xff] %vm7255, %v7968
    %8008 = vst.msk [vmem:[#allocation4 + $0x88] sm:$0xff] %vm7255, %v7971
    %v8009 = vld [vmem:[#allocation4 + $0x7] sm:$0xff]
    %v8010 = vld [vmem:[#allocation4 + $0xf] sm:$0xff]
    %v8011 = vld [vmem:[#allocation4 + $0x17] sm:$0xff]
    %v8012 = vld [vmem:[#allocation4 + $0x1f] sm:$0xff]
    %v8013 = vld [vmem:[#allocation4 + $0x27] sm:$0xff]
    %v8014 = vld [vmem:[#allocation4 + $0x2f] sm:$0xff]
    %v8015 = vld [vmem:[#allocation4 + $0x37] sm:$0xff]
    %v8016 = vld [vmem:[#allocation4 + $0x3f] sm:$0xff]
    %v8017 = vld [vmem:[#allocation4 + $0x47] sm:$0xff]
    %v8018 = vld [vmem:[#allocation4 + $0x4f] sm:$0xff]
    %v8019 = vld [vmem:[#allocation4 + $0x57] sm:$0xff]
    %v8020 = vld [vmem:[#allocation4 + $0x5f] sm:$0xff]
    %v8021 = vld [vmem:[#allocation4 + $0x67] sm:$0xff]
    %v8022 = vld [vmem:[#allocation4 + $0x6f] sm:$0xff]
    %v8023 = vld [vmem:[#allocation4 + $0x77] sm:$0xff]
    %v8024 = vld [vmem:[#allocation4 + $0x7f] sm:$0xff]
    %v8025 = vld [vmem:[%s7] sm:$0xff]
    %v8026 = vld [vmem:[%s7 + $0x8] sm:$0xff]
    %v8027 = vld [vmem:[%s7 + $0x10] sm:$0xff]
    %v8028 = vld [vmem:[%s7 + $0x18] sm:$0xff]
    %v8029 = vld [vmem:[%s7 + $0x20] sm:$0xff]
    %v8030 = vld [vmem:[%s7 + $0x28] sm:$0xff]
    %v8031 = vld [vmem:[%s7 + $0x30] sm:$0xff]
    %v8032 = vld [vmem:[%s7 + $0x38] sm:$0xff]
    %v8033 = vld [vmem:[%s7 + $0x40] sm:$0xff]
    %v8034 = vld [vmem:[%s7 + $0x48] sm:$0xff]
    %v8035 = vld [vmem:[%s7 + $0x50] sm:$0xff]
    %v8036 = vld [vmem:[%s7 + $0x58] sm:$0xff]
    %v8037 = vld [vmem:[%s7 + $0x60] sm:$0xff]
    %v8038 = vld [vmem:[%s7 + $0x68] sm:$0xff]
    %v8039 = vld [vmem:[%s7 + $0x70] sm:$0xff]
    %v8040 = vld [vmem:[%s7 + $0x78] sm:$0xff]
    %8042 = vset.pattern.permute.xlu0 0
    %8043 = vperm.xlu0 %8042, %v8025
    %v8044 = vpop.permute.xlu0 %8043
    %8047 = vset.pattern.permute.xlu0 0
    %8048 = vperm.xlu0 %8047, %v8026
    %v8049 = vpop.permute.xlu0 %8048
    %8052 = vset.pattern.permute.xlu0 0
    %8053 = vperm.xlu0 %8052, %v8027
    %v8054 = vpop.permute.xlu0 %8053
    %8057 = vset.pattern.permute.xlu0 0
    %8058 = vperm.xlu0 %8057, %v8028
    %v8059 = vpop.permute.xlu0 %8058
    %8062 = vset.pattern.permute.xlu0 0
    %8063 = vperm.xlu0 %8062, %v8029
    %v8064 = vpop.permute.xlu0 %8063
    %8067 = vset.pattern.permute.xlu0 0
    %8068 = vperm.xlu0 %8067, %v8030
    %v8069 = vpop.permute.xlu0 %8068
    %8072 = vset.pattern.permute.xlu0 0
    %8073 = vperm.xlu0 %8072, %v8031
    %v8074 = vpop.permute.xlu0 %8073
    %8077 = vset.pattern.permute.xlu0 0
    %8078 = vperm.xlu0 %8077, %v8032
    %v8079 = vpop.permute.xlu0 %8078
    %8082 = vset.pattern.permute.xlu0 0
    %8083 = vperm.xlu0 %8082, %v8033
    %v8084 = vpop.permute.xlu0 %8083
    %8087 = vset.pattern.permute.xlu0 0
    %8088 = vperm.xlu0 %8087, %v8034
    %v8089 = vpop.permute.xlu0 %8088
    %8092 = vset.pattern.permute.xlu0 0
    %8093 = vperm.xlu0 %8092, %v8035
    %v8094 = vpop.permute.xlu0 %8093
    %8097 = vset.pattern.permute.xlu0 0
    %8098 = vperm.xlu0 %8097, %v8036
    %v8099 = vpop.permute.xlu0 %8098
    %8102 = vset.pattern.permute.xlu0 0
    %8103 = vperm.xlu0 %8102, %v8037
    %v8104 = vpop.permute.xlu0 %8103
    %8107 = vset.pattern.permute.xlu0 0
    %8108 = vperm.xlu0 %8107, %v8038
    %v8109 = vpop.permute.xlu0 %8108
    %8112 = vset.pattern.permute.xlu0 0
    %8113 = vperm.xlu0 %8112, %v8039
    %v8114 = vpop.permute.xlu0 %8113
    %8117 = vset.pattern.permute.xlu0 0
    %8118 = vperm.xlu0 %8117, %v8040
    %v8119 = vpop.permute.xlu0 %8118
    %v8121 = vmul.f32 %v8009, %v8044
    %v8122 = vmul.f32 %v8010, %v8049
    %v8123 = vmul.f32 %v8011, %v8054
    %v8124 = vmul.f32 %v8012, %v8059
    %v8125 = vmul.f32 %v8013, %v8064
    %v8126 = vmul.f32 %v8014, %v8069
    %v8127 = vmul.f32 %v8015, %v8074
    %v8128 = vmul.f32 %v8016, %v8079
    %v8129 = vmul.f32 %v8017, %v8084
    %v8130 = vmul.f32 %v8018, %v8089
    %v8131 = vmul.f32 %v8019, %v8094
    %v8132 = vmul.f32 %v8020, %v8099
    %v8133 = vmul.f32 %v8021, %v8104
    %v8134 = vmul.f32 %v8022, %v8109
    %v8135 = vmul.f32 %v8023, %v8114
    %v8136 = vmul.f32 %v8024, %v8119
    %v8137 = vld [vmem:[%s5] sm:$0xf]
    %v8138 = vld [vmem:[%s5 + $0x4] sm:$0xf]
    %v8139 = vld [vmem:[%s5 + $0x8] sm:$0xf]
    %v8140 = vld [vmem:[%s5 + $0xc] sm:$0xf]
    %v8141 = vpack.c.bf16 %v8122, %v8121
    %v8142 = vpack.c.bf16 %v8124, %v8123
    %v8143 = vpack.c.bf16 %v8126, %v8125
    %v8144 = vpack.c.bf16 %v8128, %v8127
    %v8145 = vpack.c.bf16 %v8130, %v8129
    %v8146 = vpack.c.bf16 %v8132, %v8131
    %v8147 = vpack.c.bf16 %v8134, %v8133
    %v8148 = vpack.c.bf16 %v8136, %v8135
    %v8149 = vld [vmem:[#allocation4 + $0x8] sm:$0xff]
    %v8150 = vld [vmem:[#allocation4 + $0x10] sm:$0xff]
    %v8151 = vld [vmem:[#allocation4 + $0x18] sm:$0xff]
    %v8152 = vld [vmem:[#allocation4 + $0x20] sm:$0xff]
    %v8153 = vld [vmem:[#allocation4 + $0x28] sm:$0xff]
    %v8154 = vld [vmem:[#allocation4 + $0x30] sm:$0xff]
    %v8155 = vld [vmem:[#allocation4 + $0x38] sm:$0xff]
    %v8156 = vld [vmem:[#allocation4 + $0x40] sm:$0xff]
    %v8157 = vld [vmem:[#allocation4 + $0x48] sm:$0xff]
    %v8158 = vld [vmem:[#allocation4 + $0x50] sm:$0xff]
    %v8159 = vld [vmem:[#allocation4 + $0x58] sm:$0xff]
    %v8160 = vld [vmem:[#allocation4 + $0x60] sm:$0xff]
    %v8161 = vld [vmem:[#allocation4 + $0x68] sm:$0xff]
    %v8162 = vld [vmem:[#allocation4 + $0x70] sm:$0xff]
    %v8163 = vld [vmem:[#allocation4 + $0x78] sm:$0xff]
    %v8164 = vld [vmem:[#allocation4 + $0x80] sm:$0xff]
    %8165 = vset.pattern.permute.xlu0 1
    %8166 = vperm.xlu0 %8165, %v8025
    %v8167 = vpop.permute.xlu0 %8166
    %8169 = vset.pattern.permute.xlu0 1
    %8170 = vperm.xlu0 %8169, %v8026
    %v8171 = vpop.permute.xlu0 %8170
    %8173 = vset.pattern.permute.xlu0 1
    %8174 = vperm.xlu0 %8173, %v8027
    %v8175 = vpop.permute.xlu0 %8174
    %8177 = vset.pattern.permute.xlu0 1
    %8178 = vperm.xlu0 %8177, %v8028
    %v8179 = vpop.permute.xlu0 %8178
    %8181 = vset.pattern.permute.xlu0 1
    %8182 = vperm.xlu0 %8181, %v8029
    %v8183 = vpop.permute.xlu0 %8182
    %8185 = vset.pattern.permute.xlu0 1
    %8186 = vperm.xlu0 %8185, %v8030
    %v8187 = vpop.permute.xlu0 %8186
    %8189 = vset.pattern.permute.xlu0 1
    %8190 = vperm.xlu0 %8189, %v8031
    %v8191 = vpop.permute.xlu0 %8190
    %8193 = vset.pattern.permute.xlu0 1
    %8194 = vperm.xlu0 %8193, %v8032
    %v8195 = vpop.permute.xlu0 %8194
    %8197 = vset.pattern.permute.xlu0 1
    %8198 = vperm.xlu0 %8197, %v8033
    %v8199 = vpop.permute.xlu0 %8198
    %8201 = vset.pattern.permute.xlu0 1
    %8202 = vperm.xlu0 %8201, %v8034
    %v8203 = vpop.permute.xlu0 %8202
    %8205 = vset.pattern.permute.xlu0 1
    %8206 = vperm.xlu0 %8205, %v8035
    %v8207 = vpop.permute.xlu0 %8206
    %8209 = vset.pattern.permute.xlu0 1
    %8210 = vperm.xlu0 %8209, %v8036
    %v8211 = vpop.permute.xlu0 %8210
    %8213 = vset.pattern.permute.xlu0 1
    %8214 = vperm.xlu0 %8213, %v8037
    %v8215 = vpop.permute.xlu0 %8214
    %8217 = vset.pattern.permute.xlu0 1
    %8218 = vperm.xlu0 %8217, %v8038
    %v8219 = vpop.permute.xlu0 %8218
    %8221 = vset.pattern.permute.xlu0 1
    %8222 = vperm.xlu0 %8221, %v8039
    %v8223 = vpop.permute.xlu0 %8222
    %8225 = vset.pattern.permute.xlu0 1
    %8226 = vperm.xlu0 %8225, %v8040
    %v8227 = vpop.permute.xlu0 %8226
    %v8229 = vmul.f32 %v8149, %v8167
    %v8230 = vmul.f32 %v8150, %v8171
    %v8231 = vmul.f32 %v8151, %v8175
    %v8232 = vmul.f32 %v8152, %v8179
    %v8233 = vmul.f32 %v8153, %v8183
    %v8234 = vmul.f32 %v8154, %v8187
    %v8235 = vmul.f32 %v8155, %v8191
    %v8236 = vmul.f32 %v8156, %v8195
    %v8237 = vmul.f32 %v8157, %v8199
    %v8238 = vmul.f32 %v8158, %v8203
    %v8239 = vmul.f32 %v8159, %v8207
    %v8240 = vmul.f32 %v8160, %v8211
    %v8241 = vmul.f32 %v8161, %v8215
    %v8242 = vmul.f32 %v8162, %v8219
    %v8243 = vmul.f32 %v8163, %v8223
    %v8244 = vmul.f32 %v8164, %v8227
    %v8245 = vld [vmem:[%s5 + $0x10] sm:$0xf]
    %v8246 = vld [vmem:[%s5 + $0x14] sm:$0xf]
    %v8247 = vld [vmem:[%s5 + $0x18] sm:$0xf]
    %v8248 = vld [vmem:[%s5 + $0x1c] sm:$0xf]
    %v8249 = vpack.c.bf16 %v8230, %v8229
    %v8250 = vpack.c.bf16 %v8232, %v8231
    %v8251 = vpack.c.bf16 %v8234, %v8233
    %v8252 = vpack.c.bf16 %v8236, %v8235
    %v8253 = vpack.c.bf16 %v8238, %v8237
    %v8254 = vpack.c.bf16 %v8240, %v8239
    %v8255 = vpack.c.bf16 %v8242, %v8241
    %v8256 = vpack.c.bf16 %v8244, %v8243
    %v8261 = vunpack.c.l.b16 %v8245
    %v8262 = vunpack.c.l.b16 %v8246
    %v8263 = vunpack.c.l.b16 %v8247
    %v8264 = vunpack.c.l.b16 %v8248
    %v8265 = vpack.c.b16 %v8262, %v8261
    %v8266 = vpack.c.b16 %v8264, %v8263
    %v8270 = vsel %vm7255, %v8249, 0
    %v8273 = vsel %vm7255, %v8250, 0
    %v8276 = vsel %vm7255, %v8251, 0
    %v8279 = vsel %vm7255, %v8252, 0
    %v8282 = vsel %vm7255, %v8253, 0
    %v8285 = vsel %vm7255, %v8254, 0
    %v8288 = vsel %vm7255, %v8255, 0
    %v8291 = vsel %vm7255, %v8256, 0
    %8293 = vmatpush.bf16.msra.mxu0 0
    %8294 = vmatpush.bf16.msra.mxu0 0
    %8295 = vmatpush.bf16.msra.mxu0 0
    %8296 = vmatpush.bf16.msra.mxu0 0
    %8297 = vmatpush.bf16.msra.mxu0 0
    %8298 = vmatpush.bf16.msra.mxu0 0
    %8299 = vmatpush.bf16.msra.mxu0 %v8266
    %8300 = vmatpush.bf16.msra.mxu0 %v8265
    %8301 = vmatmul.bf16.gmra.mxu0 %v8270
    %v8302 = vpop.f32.mrf.mxu0
    %v8303 = vadd.f32 0.0, %v8302
    %v8304 = vpop.f32.mrf.mxu0
    %v8305 = vadd.f32 0.0, %v8304
    %8306 = vmatmul.bf16.gmra.mxu0 %v8273
    %v8307 = vpop.f32.mrf.mxu0
    %v8308 = vadd.f32 0.0, %v8307
    %v8309 = vpop.f32.mrf.mxu0
    %v8310 = vadd.f32 0.0, %v8309
    %8311 = vmatmul.bf16.gmra.mxu0 %v8276
    %v8312 = vpop.f32.mrf.mxu0
    %v8313 = vadd.f32 0.0, %v8312
    %v8314 = vpop.f32.mrf.mxu0
    %v8315 = vadd.f32 0.0, %v8314
    %8316 = vmatmul.bf16.gmra.mxu0 %v8279
    %v8317 = vpop.f32.mrf.mxu0
    %v8318 = vadd.f32 0.0, %v8317
    %v8319 = vpop.f32.mrf.mxu0
    %v8320 = vadd.f32 0.0, %v8319
    %8321 = vmatmul.bf16.gmra.mxu0 %v8282
    %v8322 = vpop.f32.mrf.mxu0
    %v8323 = vadd.f32 0.0, %v8322
    %v8324 = vpop.f32.mrf.mxu0
    %v8325 = vadd.f32 0.0, %v8324
    %8326 = vmatmul.bf16.gmra.mxu0 %v8285
    %v8327 = vpop.f32.mrf.mxu0
    %v8328 = vadd.f32 0.0, %v8327
    %v8329 = vpop.f32.mrf.mxu0
    %v8330 = vadd.f32 0.0, %v8329
    %8331 = vmatmul.bf16.gmra.mxu0 %v8288
    %v8332 = vpop.f32.mrf.mxu0
    %v8333 = vadd.f32 0.0, %v8332
    %v8334 = vpop.f32.mrf.mxu0
    %v8335 = vadd.f32 0.0, %v8334
    %8336 = vmatmul.bf16.gmra.mxu0 %v8291
    %v8337 = vpop.f32.mrf.mxu0
    %v8338 = vadd.f32 0.0, %v8337
    %v8339 = vpop.f32.mrf.mxu0
    %v8340 = vadd.f32 0.0, %v8339
    %8341 = vdwg.mxu0
    %v8346 = vunpack.c.l.b16 %v8137
    %v8347 = vunpack.c.l.b16 %v8138
    %v8348 = vunpack.c.l.b16 %v8139
    %v8349 = vunpack.c.l.b16 %v8140
    %v8350 = vpack.c.b16 %v8347, %v8346
    %v8351 = vpack.c.b16 %v8349, %v8348
    %v8355 = vsel %vm7255, %v8141, 0
    %v8358 = vsel %vm7255, %v8142, 0
    %v8361 = vsel %vm7255, %v8143, 0
    %v8364 = vsel %vm7255, %v8144, 0
    %v8367 = vsel %vm7255, %v8145, 0
    %v8370 = vsel %vm7255, %v8146, 0
    %v8373 = vsel %vm7255, %v8147, 0
    %v8376 = vsel %vm7255, %v8148, 0
    %8378 = vmatpush.bf16.msra.mxu0 0
    %8379 = vmatpush.bf16.msra.mxu0 0
    %8380 = vmatpush.bf16.msra.mxu0 0
    %8381 = vmatpush.bf16.msra.mxu0 0
    %8382 = vmatpush.bf16.msra.mxu0 0
    %8383 = vmatpush.bf16.msra.mxu0 0
    %8384 = vmatpush.bf16.msra.mxu0 %v8351
    %8385 = vmatpush.bf16.msra.mxu0 %v8350
    %8386 = vmatmul.bf16.gmra.mxu0 %v8355
    %v8387 = vpop.f32.mrf.mxu0
    %v8388 = vadd.f32 %v8303, %v8387
    %v8389 = vpop.f32.mrf.mxu0
    %v8390 = vadd.f32 %v8305, %v8389
    %8391 = vmatmul.bf16.gmra.mxu0 %v8358
    %v8392 = vpop.f32.mrf.mxu0
    %v8393 = vadd.f32 %v8308, %v8392
    %v8394 = vpop.f32.mrf.mxu0
    %v8395 = vadd.f32 %v8310, %v8394
    %8396 = vmatmul.bf16.gmra.mxu0 %v8361
    %v8397 = vpop.f32.mrf.mxu0
    %v8398 = vadd.f32 %v8313, %v8397
    %v8399 = vpop.f32.mrf.mxu0
    %v8400 = vadd.f32 %v8315, %v8399
    %8401 = vmatmul.bf16.gmra.mxu0 %v8364
    %v8402 = vpop.f32.mrf.mxu0
    %v8403 = vadd.f32 %v8318, %v8402
    %v8404 = vpop.f32.mrf.mxu0
    %v8405 = vadd.f32 %v8320, %v8404
    %8406 = vmatmul.bf16.gmra.mxu0 %v8367
    %v8407 = vpop.f32.mrf.mxu0
    %v8408 = vadd.f32 %v8323, %v8407
    %v8409 = vpop.f32.mrf.mxu0
    %v8410 = vadd.f32 %v8325, %v8409
    %8411 = vmatmul.bf16.gmra.mxu0 %v8370
    %v8412 = vpop.f32.mrf.mxu0
    %v8413 = vadd.f32 %v8328, %v8412
    %v8414 = vpop.f32.mrf.mxu0
    %v8415 = vadd.f32 %v8330, %v8414
    %8416 = vmatmul.bf16.gmra.mxu0 %v8373
    %v8417 = vpop.f32.mrf.mxu0
    %v8418 = vadd.f32 %v8333, %v8417
    %v8419 = vpop.f32.mrf.mxu0
    %v8420 = vadd.f32 %v8335, %v8419
    %8421 = vmatmul.bf16.gmra.mxu0 %v8376
    %v8422 = vpop.f32.mrf.mxu0
    %v8423 = vadd.f32 %v8338, %v8422
    %v8424 = vpop.f32.mrf.mxu0
    %v8425 = vadd.f32 %v8340, %v8424
    %8426 = vdwg.mxu0
    %v8427 = vld [vmem:[#allocation4 + $0x9] sm:$0xff]
    %v8428 = vld [vmem:[#allocation4 + $0x11] sm:$0xff]
    %v8429 = vld [vmem:[#allocation4 + $0x19] sm:$0xff]
    %v8430 = vld [vmem:[#allocation4 + $0x21] sm:$0xff]
    %v8431 = vld [vmem:[#allocation4 + $0x29] sm:$0xff]
    %v8432 = vld [vmem:[#allocation4 + $0x31] sm:$0xff]
    %v8433 = vld [vmem:[#allocation4 + $0x39] sm:$0xff]
    %v8434 = vld [vmem:[#allocation4 + $0x41] sm:$0xff]
    %v8435 = vld [vmem:[#allocation4 + $0x49] sm:$0xff]
    %v8436 = vld [vmem:[#allocation4 + $0x51] sm:$0xff]
    %v8437 = vld [vmem:[#allocation4 + $0x59] sm:$0xff]
    %v8438 = vld [vmem:[#allocation4 + $0x61] sm:$0xff]
    %v8439 = vld [vmem:[#allocation4 + $0x69] sm:$0xff]
    %v8440 = vld [vmem:[#allocation4 + $0x71] sm:$0xff]
    %v8441 = vld [vmem:[#allocation4 + $0x79] sm:$0xff]
    %v8442 = vld [vmem:[#allocation4 + $0x81] sm:$0xff]
    %8443 = vset.pattern.permute.xlu0 2
    %8444 = vperm.xlu0 %8443, %v8025
    %v8445 = vpop.permute.xlu0 %8444
    %8447 = vset.pattern.permute.xlu0 2
    %8448 = vperm.xlu0 %8447, %v8026
    %v8449 = vpop.permute.xlu0 %8448
    %8451 = vset.pattern.permute.xlu0 2
    %8452 = vperm.xlu0 %8451, %v8027
    %v8453 = vpop.permute.xlu0 %8452
    %8455 = vset.pattern.permute.xlu0 2
    %8456 = vperm.xlu0 %8455, %v8028
    %v8457 = vpop.permute.xlu0 %8456
    %8459 = vset.pattern.permute.xlu0 2
    %8460 = vperm.xlu0 %8459, %v8029
    %v8461 = vpop.permute.xlu0 %8460
    %8463 = vset.pattern.permute.xlu0 2
    %8464 = vperm.xlu0 %8463, %v8030
    %v8465 = vpop.permute.xlu0 %8464
    %8467 = vset.pattern.permute.xlu0 2
    %8468 = vperm.xlu0 %8467, %v8031
    %v8469 = vpop.permute.xlu0 %8468
    %8471 = vset.pattern.permute.xlu0 2
    %8472 = vperm.xlu0 %8471, %v8032
    %v8473 = vpop.permute.xlu0 %8472
    %8475 = vset.pattern.permute.xlu0 2
    %8476 = vperm.xlu0 %8475, %v8033
    %v8477 = vpop.permute.xlu0 %8476
    %8479 = vset.pattern.permute.xlu0 2
    %8480 = vperm.xlu0 %8479, %v8034
    %v8481 = vpop.permute.xlu0 %8480
    %8483 = vset.pattern.permute.xlu0 2
    %8484 = vperm.xlu0 %8483, %v8035
    %v8485 = vpop.permute.xlu0 %8484
    %8487 = vset.pattern.permute.xlu0 2
    %8488 = vperm.xlu0 %8487, %v8036
    %v8489 = vpop.permute.xlu0 %8488
    %8491 = vset.pattern.permute.xlu0 2
    %8492 = vperm.xlu0 %8491, %v8037
    %v8493 = vpop.permute.xlu0 %8492
    %8495 = vset.pattern.permute.xlu0 2
    %8496 = vperm.xlu0 %8495, %v8038
    %v8497 = vpop.permute.xlu0 %8496
    %8499 = vset.pattern.permute.xlu0 2
    %8500 = vperm.xlu0 %8499, %v8039
    %v8501 = vpop.permute.xlu0 %8500
    %8503 = vset.pattern.permute.xlu0 2
    %8504 = vperm.xlu0 %8503, %v8040
    %v8505 = vpop.permute.xlu0 %8504
    %v8507 = vmul.f32 %v8427, %v8445
    %v8508 = vmul.f32 %v8428, %v8449
    %v8509 = vmul.f32 %v8429, %v8453
    %v8510 = vmul.f32 %v8430, %v8457
    %v8511 = vmul.f32 %v8431, %v8461
    %v8512 = vmul.f32 %v8432, %v8465
    %v8513 = vmul.f32 %v8433, %v8469
    %v8514 = vmul.f32 %v8434, %v8473
    %v8515 = vmul.f32 %v8435, %v8477
    %v8516 = vmul.f32 %v8436, %v8481
    %v8517 = vmul.f32 %v8437, %v8485
    %v8518 = vmul.f32 %v8438, %v8489
    %v8519 = vmul.f32 %v8439, %v8493
    %v8520 = vmul.f32 %v8440, %v8497
    %v8521 = vmul.f32 %v8441, %v8501
    %v8522 = vmul.f32 %v8442, %v8505
    %v8523 = vld [vmem:[%s5 + $0x20] sm:$0xf]
    %v8524 = vld [vmem:[%s5 + $0x24] sm:$0xf]
    %v8525 = vld [vmem:[%s5 + $0x28] sm:$0xf]
    %v8526 = vld [vmem:[%s5 + $0x2c] sm:$0xf]
    %v8527 = vpack.c.bf16 %v8508, %v8507
    %v8528 = vpack.c.bf16 %v8510, %v8509
    %v8529 = vpack.c.bf16 %v8512, %v8511
    %v8530 = vpack.c.bf16 %v8514, %v8513
    %v8531 = vpack.c.bf16 %v8516, %v8515
    %v8532 = vpack.c.bf16 %v8518, %v8517
    %v8533 = vpack.c.bf16 %v8520, %v8519
    %v8534 = vpack.c.bf16 %v8522, %v8521
    %v8539 = vunpack.c.l.b16 %v8523
    %v8540 = vunpack.c.l.b16 %v8524
    %v8541 = vunpack.c.l.b16 %v8525
    %v8542 = vunpack.c.l.b16 %v8526
    %v8543 = vpack.c.b16 %v8540, %v8539
    %v8544 = vpack.c.b16 %v8542, %v8541
    %v8548 = vsel %vm7255, %v8527, 0
    %v8551 = vsel %vm7255, %v8528, 0
    %v8554 = vsel %vm7255, %v8529, 0
    %v8557 = vsel %vm7255, %v8530, 0
    %v8560 = vsel %vm7255, %v8531, 0
    %v8563 = vsel %vm7255, %v8532, 0
    %v8566 = vsel %vm7255, %v8533, 0
    %v8569 = vsel %vm7255, %v8534, 0
    %8571 = vmatpush.bf16.msra.mxu0 0
    %8572 = vmatpush.bf16.msra.mxu0 0
    %8573 = vmatpush.bf16.msra.mxu0 0
    %8574 = vmatpush.bf16.msra.mxu0 0
    %8575 = vmatpush.bf16.msra.mxu0 0
    %8576 = vmatpush.bf16.msra.mxu0 0
    %8577 = vmatpush.bf16.msra.mxu0 %v8544
    %8578 = vmatpush.bf16.msra.mxu0 %v8543
    %8579 = vmatmul.bf16.gmra.mxu0 %v8548
    %v8580 = vpop.f32.mrf.mxu0
    %v8581 = vadd.f32 0.0, %v8580
    %v8582 = vpop.f32.mrf.mxu0
    %v8583 = vadd.f32 0.0, %v8582
    %8584 = vmatmul.bf16.gmra.mxu0 %v8551
    %v8585 = vpop.f32.mrf.mxu0
    %v8586 = vadd.f32 0.0, %v8585
    %v8587 = vpop.f32.mrf.mxu0
    %v8588 = vadd.f32 0.0, %v8587
    %8589 = vmatmul.bf16.gmra.mxu0 %v8554
    %v8590 = vpop.f32.mrf.mxu0
    %v8591 = vadd.f32 0.0, %v8590
    %v8592 = vpop.f32.mrf.mxu0
    %v8593 = vadd.f32 0.0, %v8592
    %8594 = vmatmul.bf16.gmra.mxu0 %v8557
    %v8595 = vpop.f32.mrf.mxu0
    %v8596 = vadd.f32 0.0, %v8595
    %v8597 = vpop.f32.mrf.mxu0
    %v8598 = vadd.f32 0.0, %v8597
    %8599 = vmatmul.bf16.gmra.mxu0 %v8560
    %v8600 = vpop.f32.mrf.mxu0
    %v8601 = vadd.f32 0.0, %v8600
    %v8602 = vpop.f32.mrf.mxu0
    %v8603 = vadd.f32 0.0, %v8602
    %8604 = vmatmul.bf16.gmra.mxu0 %v8563
    %v8605 = vpop.f32.mrf.mxu0
    %v8606 = vadd.f32 0.0, %v8605
    %v8607 = vpop.f32.mrf.mxu0
    %v8608 = vadd.f32 0.0, %v8607
    %8609 = vmatmul.bf16.gmra.mxu0 %v8566
    %v8610 = vpop.f32.mrf.mxu0
    %v8611 = vadd.f32 0.0, %v8610
    %v8612 = vpop.f32.mrf.mxu0
    %v8613 = vadd.f32 0.0, %v8612
    %8614 = vmatmul.bf16.gmra.mxu0 %v8569
    %v8615 = vpop.f32.mrf.mxu0
    %v8616 = vadd.f32 0.0, %v8615
    %v8617 = vpop.f32.mrf.mxu0
    %v8618 = vadd.f32 0.0, %v8617
    %8619 = vdwg.mxu0
    %v8620 = vadd.f32 %v8388, %v8581
    %v8621 = vadd.f32 %v8390, %v8583
    %v8622 = vadd.f32 %v8393, %v8586
    %v8623 = vadd.f32 %v8395, %v8588
    %v8624 = vadd.f32 %v8398, %v8591
    %v8625 = vadd.f32 %v8400, %v8593
    %v8626 = vadd.f32 %v8403, %v8596
    %v8627 = vadd.f32 %v8405, %v8598
    %v8628 = vadd.f32 %v8408, %v8601
    %v8629 = vadd.f32 %v8410, %v8603
    %v8630 = vadd.f32 %v8413, %v8606
    %v8631 = vadd.f32 %v8415, %v8608
    %v8632 = vadd.f32 %v8418, %v8611
    %v8633 = vadd.f32 %v8420, %v8613
    %v8634 = vadd.f32 %v8423, %v8616
    %v8635 = vadd.f32 %v8425, %v8618
    %v8636 = vld [vmem:[#allocation4 + $0xf] sm:$0xff]
    %v8637 = vld [vmem:[#allocation4 + $0x17] sm:$0xff]
    %v8638 = vld [vmem:[#allocation4 + $0x1f] sm:$0xff]
    %v8639 = vld [vmem:[#allocation4 + $0x27] sm:$0xff]
    %v8640 = vld [vmem:[#allocation4 + $0x2f] sm:$0xff]
    %v8641 = vld [vmem:[#allocation4 + $0x37] sm:$0xff]
    %v8642 = vld [vmem:[#allocation4 + $0x3f] sm:$0xff]
    %v8643 = vld [vmem:[#allocation4 + $0x47] sm:$0xff]
    %v8644 = vld [vmem:[#allocation4 + $0x4f] sm:$0xff]
    %v8645 = vld [vmem:[#allocation4 + $0x57] sm:$0xff]
    %v8646 = vld [vmem:[#allocation4 + $0x5f] sm:$0xff]
    %v8647 = vld [vmem:[#allocation4 + $0x67] sm:$0xff]
    %v8648 = vld [vmem:[#allocation4 + $0x6f] sm:$0xff]
    %v8649 = vld [vmem:[#allocation4 + $0x77] sm:$0xff]
    %v8650 = vld [vmem:[#allocation4 + $0x7f] sm:$0xff]
    %v8651 = vld [vmem:[#allocation4 + $0x87] sm:$0xff]
    %8652 = vset.pattern.permute.xlu0 3
    %8653 = vperm.xlu0 %8652, %v8025
    %v8654 = vpop.permute.xlu0 %8653
    %8656 = vset.pattern.permute.xlu0 3
    %8657 = vperm.xlu0 %8656, %v8026
    %v8658 = vpop.permute.xlu0 %8657
    %8660 = vset.pattern.permute.xlu0 3
    %8661 = vperm.xlu0 %8660, %v8027
    %v8662 = vpop.permute.xlu0 %8661
    %8664 = vset.pattern.permute.xlu0 3
    %8665 = vperm.xlu0 %8664, %v8028
    %v8666 = vpop.permute.xlu0 %8665
    %8668 = vset.pattern.permute.xlu0 3
    %8669 = vperm.xlu0 %8668, %v8029
    %v8670 = vpop.permute.xlu0 %8669
    %8672 = vset.pattern.permute.xlu0 3
    %8673 = vperm.xlu0 %8672, %v8030
    %v8674 = vpop.permute.xlu0 %8673
    %8676 = vset.pattern.permute.xlu0 3
    %8677 = vperm.xlu0 %8676, %v8031
    %v8678 = vpop.permute.xlu0 %8677
    %8680 = vset.pattern.permute.xlu0 3
    %8681 = vperm.xlu0 %8680, %v8032
    %v8682 = vpop.permute.xlu0 %8681
    %8684 = vset.pattern.permute.xlu0 3
    %8685 = vperm.xlu0 %8684, %v8033
    %v8686 = vpop.permute.xlu0 %8685
    %8688 = vset.pattern.permute.xlu0 3
    %8689 = vperm.xlu0 %8688, %v8034
    %v8690 = vpop.permute.xlu0 %8689
    %8692 = vset.pattern.permute.xlu0 3
    %8693 = vperm.xlu0 %8692, %v8035
    %v8694 = vpop.permute.xlu0 %8693
    %8696 = vset.pattern.permute.xlu0 3
    %8697 = vperm.xlu0 %8696, %v8036
    %v8698 = vpop.permute.xlu0 %8697
    %8700 = vset.pattern.permute.xlu0 3
    %8701 = vperm.xlu0 %8700, %v8037
    %v8702 = vpop.permute.xlu0 %8701
    %8704 = vset.pattern.permute.xlu0 3
    %8705 = vperm.xlu0 %8704, %v8038
    %v8706 = vpop.permute.xlu0 %8705
    %8708 = vset.pattern.permute.xlu0 3
    %8709 = vperm.xlu0 %8708, %v8039
    %v8710 = vpop.permute.xlu0 %8709
    %8712 = vset.pattern.permute.xlu0 3
    %8713 = vperm.xlu0 %8712, %v8040
    %v8714 = vpop.permute.xlu0 %8713
    %v8716 = vmul.f32 %v8636, %v8654
    %v8717 = vmul.f32 %v8637, %v8658
    %v8718 = vmul.f32 %v8638, %v8662
    %v8719 = vmul.f32 %v8639, %v8666
    %v8720 = vmul.f32 %v8640, %v8670
    %v8721 = vmul.f32 %v8641, %v8674
    %v8722 = vmul.f32 %v8642, %v8678
    %v8723 = vmul.f32 %v8643, %v8682
    %v8724 = vmul.f32 %v8644, %v8686
    %v8725 = vmul.f32 %v8645, %v8690
    %v8726 = vmul.f32 %v8646, %v8694
    %v8727 = vmul.f32 %v8647, %v8698
    %v8728 = vmul.f32 %v8648, %v8702
    %v8729 = vmul.f32 %v8649, %v8706
    %v8730 = vmul.f32 %v8650, %v8710
    %v8731 = vmul.f32 %v8651, %v8714
    %v8732 = vld [vmem:[%s5 + $0x30] sm:$0xf]
    %v8733 = vld [vmem:[%s5 + $0x34] sm:$0xf]
    %v8734 = vld [vmem:[%s5 + $0x38] sm:$0xf]
    %v8735 = vld [vmem:[%s5 + $0x3c] sm:$0xf]
    %v8736 = vpack.c.bf16 %v8717, %v8716
    %v8737 = vpack.c.bf16 %v8719, %v8718
    %v8738 = vpack.c.bf16 %v8721, %v8720
    %v8739 = vpack.c.bf16 %v8723, %v8722
    %v8740 = vpack.c.bf16 %v8725, %v8724
    %v8741 = vpack.c.bf16 %v8727, %v8726
    %v8742 = vpack.c.bf16 %v8729, %v8728
    %v8743 = vpack.c.bf16 %v8731, %v8730
    %v8748 = vunpack.c.l.b16 %v8732
    %v8749 = vunpack.c.l.b16 %v8733
    %v8750 = vunpack.c.l.b16 %v8734
    %v8751 = vunpack.c.l.b16 %v8735
    %v8752 = vpack.c.b16 %v8749, %v8748
    %v8753 = vpack.c.b16 %v8751, %v8750
    %v8757 = vsel %vm7255, %v8736, 0
    %v8760 = vsel %vm7255, %v8737, 0
    %v8763 = vsel %vm7255, %v8738, 0
    %v8766 = vsel %vm7255, %v8739, 0
    %v8769 = vsel %vm7255, %v8740, 0
    %v8772 = vsel %vm7255, %v8741, 0
    %v8775 = vsel %vm7255, %v8742, 0
    %v8778 = vsel %vm7255, %v8743, 0
    %8780 = vmatpush.bf16.msra.mxu0 0
    %8781 = vmatpush.bf16.msra.mxu0 0
    %8782 = vmatpush.bf16.msra.mxu0 0
    %8783 = vmatpush.bf16.msra.mxu0 0
    %8784 = vmatpush.bf16.msra.mxu0 0
    %8785 = vmatpush.bf16.msra.mxu0 0
    %8786 = vmatpush.bf16.msra.mxu0 %v8753
    %8787 = vmatpush.bf16.msra.mxu0 %v8752
    %8788 = vmatmul.bf16.gmra.mxu0 %v8757
    %v8789 = vpop.f32.mrf.mxu0
    %v8790 = vadd.f32 0.0, %v8789
    %v8791 = vpop.f32.mrf.mxu0
    %v8792 = vadd.f32 0.0, %v8791
    %8793 = vmatmul.bf16.gmra.mxu0 %v8760
    %v8794 = vpop.f32.mrf.mxu0
    %v8795 = vadd.f32 0.0, %v8794
    %v8796 = vpop.f32.mrf.mxu0
    %v8797 = vadd.f32 0.0, %v8796
    %8798 = vmatmul.bf16.gmra.mxu0 %v8763
    %v8799 = vpop.f32.mrf.mxu0
    %v8800 = vadd.f32 0.0, %v8799
    %v8801 = vpop.f32.mrf.mxu0
    %v8802 = vadd.f32 0.0, %v8801
    %8803 = vmatmul.bf16.gmra.mxu0 %v8766
    %v8804 = vpop.f32.mrf.mxu0
    %v8805 = vadd.f32 0.0, %v8804
    %v8806 = vpop.f32.mrf.mxu0
    %v8807 = vadd.f32 0.0, %v8806
    %8808 = vmatmul.bf16.gmra.mxu0 %v8769
    %v8809 = vpop.f32.mrf.mxu0
    %v8810 = vadd.f32 0.0, %v8809
    %v8811 = vpop.f32.mrf.mxu0
    %v8812 = vadd.f32 0.0, %v8811
    %8813 = vmatmul.bf16.gmra.mxu0 %v8772
    %v8814 = vpop.f32.mrf.mxu0
    %v8815 = vadd.f32 0.0, %v8814
    %v8816 = vpop.f32.mrf.mxu0
    %v8817 = vadd.f32 0.0, %v8816
    %8818 = vmatmul.bf16.gmra.mxu0 %v8775
    %v8819 = vpop.f32.mrf.mxu0
    %v8820 = vadd.f32 0.0, %v8819
    %v8821 = vpop.f32.mrf.mxu0
    %v8822 = vadd.f32 0.0, %v8821
    %8823 = vmatmul.bf16.gmra.mxu0 %v8778
    %v8824 = vpop.f32.mrf.mxu0
    %v8825 = vadd.f32 0.0, %v8824
    %v8826 = vpop.f32.mrf.mxu0
    %v8827 = vadd.f32 0.0, %v8826
    %8828 = vdwg.mxu0
    %v8829 = vadd.f32 %v8620, %v8790
    %v8830 = vadd.f32 %v8621, %v8792
    %v8831 = vadd.f32 %v8622, %v8795
    %v8832 = vadd.f32 %v8623, %v8797
    %v8833 = vadd.f32 %v8624, %v8800
    %v8834 = vadd.f32 %v8625, %v8802
    %v8835 = vadd.f32 %v8626, %v8805
    %v8836 = vadd.f32 %v8627, %v8807
    %v8837 = vadd.f32 %v8628, %v8810
    %v8838 = vadd.f32 %v8629, %v8812
    %v8839 = vadd.f32 %v8630, %v8815
    %v8840 = vadd.f32 %v8631, %v8817
    %v8841 = vadd.f32 %v8632, %v8820
    %v8842 = vadd.f32 %v8633, %v8822
    %v8843 = vadd.f32 %v8634, %v8825
    %v8844 = vadd.f32 %v8635, %v8827
    %v8845 = vld [vmem:[#allocation4 + $0x10] sm:$0xff]
    %v8846 = vld [vmem:[#allocation4 + $0x18] sm:$0xff]
    %v8847 = vld [vmem:[#allocation4 + $0x20] sm:$0xff]
    %v8848 = vld [vmem:[#allocation4 + $0x28] sm:$0xff]
    %v8849 = vld [vmem:[#allocation4 + $0x30] sm:$0xff]
    %v8850 = vld [vmem:[#allocation4 + $0x38] sm:$0xff]
    %v8851 = vld [vmem:[#allocation4 + $0x40] sm:$0xff]
    %v8852 = vld [vmem:[#allocation4 + $0x48] sm:$0xff]
    %v8853 = vld [vmem:[#allocation4 + $0x50] sm:$0xff]
    %v8854 = vld [vmem:[#allocation4 + $0x58] sm:$0xff]
    %v8855 = vld [vmem:[#allocation4 + $0x60] sm:$0xff]
    %v8856 = vld [vmem:[#allocation4 + $0x68] sm:$0xff]
    %v8857 = vld [vmem:[#allocation4 + $0x70] sm:$0xff]
    %v8858 = vld [vmem:[#allocation4 + $0x78] sm:$0xff]
    %v8859 = vld [vmem:[#allocation4 + $0x80] sm:$0xff]
    %v8860 = vld [vmem:[#allocation4 + $0x88] sm:$0xff]
    %8861 = vset.pattern.permute.xlu0 4
    %8862 = vperm.xlu0 %8861, %v8025
    %v8863 = vpop.permute.xlu0 %8862
    %8865 = vset.pattern.permute.xlu0 4
    %8866 = vperm.xlu0 %8865, %v8026
    %v8867 = vpop.permute.xlu0 %8866
    %8869 = vset.pattern.permute.xlu0 4
    %8870 = vperm.xlu0 %8869, %v8027
    %v8871 = vpop.permute.xlu0 %8870
    %8873 = vset.pattern.permute.xlu0 4
    %8874 = vperm.xlu0 %8873, %v8028
    %v8875 = vpop.permute.xlu0 %8874
    %8877 = vset.pattern.permute.xlu0 4
    %8878 = vperm.xlu0 %8877, %v8029
    %v8879 = vpop.permute.xlu0 %8878
    %8881 = vset.pattern.permute.xlu0 4
    %8882 = vperm.xlu0 %8881, %v8030
    %v8883 = vpop.permute.xlu0 %8882
    %8885 = vset.pattern.permute.xlu0 4
    %8886 = vperm.xlu0 %8885, %v8031
    %v8887 = vpop.permute.xlu0 %8886
    %8889 = vset.pattern.permute.xlu0 4
    %8890 = vperm.xlu0 %8889, %v8032
    %v8891 = vpop.permute.xlu0 %8890
    %8893 = vset.pattern.permute.xlu0 4
    %8894 = vperm.xlu0 %8893, %v8033
    %v8895 = vpop.permute.xlu0 %8894
    %8897 = vset.pattern.permute.xlu0 4
    %8898 = vperm.xlu0 %8897, %v8034
    %v8899 = vpop.permute.xlu0 %8898
    %8901 = vset.pattern.permute.xlu0 4
    %8902 = vperm.xlu0 %8901, %v8035
    %v8903 = vpop.permute.xlu0 %8902
    %8905 = vset.pattern.permute.xlu0 4
    %8906 = vperm.xlu0 %8905, %v8036
    %v8907 = vpop.permute.xlu0 %8906
    %8909 = vset.pattern.permute.xlu0 4
    %8910 = vperm.xlu0 %8909, %v8037
    %v8911 = vpop.permute.xlu0 %8910
    %8913 = vset.pattern.permute.xlu0 4
    %8914 = vperm.xlu0 %8913, %v8038
    %v8915 = vpop.permute.xlu0 %8914
    %8917 = vset.pattern.permute.xlu0 4
    %8918 = vperm.xlu0 %8917, %v8039
    %v8919 = vpop.permute.xlu0 %8918
    %8921 = vset.pattern.permute.xlu0 4
    %8922 = vperm.xlu0 %8921, %v8040
    %v8923 = vpop.permute.xlu0 %8922
    %v8925 = vmul.f32 %v8845, %v8863
    %v8926 = vmul.f32 %v8846, %v8867
    %v8927 = vmul.f32 %v8847, %v8871
    %v8928 = vmul.f32 %v8848, %v8875
    %v8929 = vmul.f32 %v8849, %v8879
    %v8930 = vmul.f32 %v8850, %v8883
    %v8931 = vmul.f32 %v8851, %v8887
    %v8932 = vmul.f32 %v8852, %v8891
    %v8933 = vmul.f32 %v8853, %v8895
    %v8934 = vmul.f32 %v8854, %v8899
    %v8935 = vmul.f32 %v8855, %v8903
    %v8936 = vmul.f32 %v8856, %v8907
    %v8937 = vmul.f32 %v8857, %v8911
    %v8938 = vmul.f32 %v8858, %v8915
    %v8939 = vmul.f32 %v8859, %v8919
    %v8940 = vmul.f32 %v8860, %v8923
    %v8941 = vld [vmem:[%s5 + $0x40] sm:$0xf]
    %v8942 = vld [vmem:[%s5 + $0x44] sm:$0xf]
    %v8943 = vld [vmem:[%s5 + $0x48] sm:$0xf]
    %v8944 = vld [vmem:[%s5 + $0x4c] sm:$0xf]
    %v8945 = vpack.c.bf16 %v8926, %v8925
    %v8946 = vpack.c.bf16 %v8928, %v8927
    %v8947 = vpack.c.bf16 %v8930, %v8929
    %v8948 = vpack.c.bf16 %v8932, %v8931
    %v8949 = vpack.c.bf16 %v8934, %v8933
    %v8950 = vpack.c.bf16 %v8936, %v8935
    %v8951 = vpack.c.bf16 %v8938, %v8937
    %v8952 = vpack.c.bf16 %v8940, %v8939
    %v8957 = vunpack.c.l.b16 %v8941
    %v8958 = vunpack.c.l.b16 %v8942
    %v8959 = vunpack.c.l.b16 %v8943
    %v8960 = vunpack.c.l.b16 %v8944
    %v8961 = vpack.c.b16 %v8958, %v8957
    %v8962 = vpack.c.b16 %v8960, %v8959
    %v8966 = vsel %vm7255, %v8945, 0
    %v8969 = vsel %vm7255, %v8946, 0
    %v8972 = vsel %vm7255, %v8947, 0
    %v8975 = vsel %vm7255, %v8948, 0
    %v8978 = vsel %vm7255, %v8949, 0
    %v8981 = vsel %vm7255, %v8950, 0
    %v8984 = vsel %vm7255, %v8951, 0
    %v8987 = vsel %vm7255, %v8952, 0
    %8989 = vmatpush.bf16.msra.mxu0 0
    %8990 = vmatpush.bf16.msra.mxu0 0
    %8991 = vmatpush.bf16.msra.mxu0 0
    %8992 = vmatpush.bf16.msra.mxu0 0
    %8993 = vmatpush.bf16.msra.mxu0 0
    %8994 = vmatpush.bf16.msra.mxu0 0
    %8995 = vmatpush.bf16.msra.mxu0 %v8962
    %8996 = vmatpush.bf16.msra.mxu0 %v8961
    %8997 = vmatmul.bf16.gmra.mxu0 %v8966
    %v8998 = vpop.f32.mrf.mxu0
    %v8999 = vadd.f32 0.0, %v8998
    %v9000 = vpop.f32.mrf.mxu0
    %v9001 = vadd.f32 0.0, %v9000
    %9002 = vmatmul.bf16.gmra.mxu0 %v8969
    %v9003 = vpop.f32.mrf.mxu0
    %v9004 = vadd.f32 0.0, %v9003
    %v9005 = vpop.f32.mrf.mxu0
    %v9006 = vadd.f32 0.0, %v9005
    %9007 = vmatmul.bf16.gmra.mxu0 %v8972
    %v9008 = vpop.f32.mrf.mxu0
    %v9009 = vadd.f32 0.0, %v9008
    %v9010 = vpop.f32.mrf.mxu0
    %v9011 = vadd.f32 0.0, %v9010
    %9012 = vmatmul.bf16.gmra.mxu0 %v8975
    %v9013 = vpop.f32.mrf.mxu0
    %v9014 = vadd.f32 0.0, %v9013
    %v9015 = vpop.f32.mrf.mxu0
    %v9016 = vadd.f32 0.0, %v9015
    %9017 = vmatmul.bf16.gmra.mxu0 %v8978
    %v9018 = vpop.f32.mrf.mxu0
    %v9019 = vadd.f32 0.0, %v9018
    %v9020 = vpop.f32.mrf.mxu0
    %v9021 = vadd.f32 0.0, %v9020
    %9022 = vmatmul.bf16.gmra.mxu0 %v8981
    %v9023 = vpop.f32.mrf.mxu0
    %v9024 = vadd.f32 0.0, %v9023
    %v9025 = vpop.f32.mrf.mxu0
    %v9026 = vadd.f32 0.0, %v9025
    %9027 = vmatmul.bf16.gmra.mxu0 %v8984
    %v9028 = vpop.f32.mrf.mxu0
    %v9029 = vadd.f32 0.0, %v9028
    %v9030 = vpop.f32.mrf.mxu0
    %v9031 = vadd.f32 0.0, %v9030
    %9032 = vmatmul.bf16.gmra.mxu0 %v8987
    %v9033 = vpop.f32.mrf.mxu0
    %v9034 = vadd.f32 0.0, %v9033
    %v9035 = vpop.f32.mrf.mxu0
    %v9036 = vadd.f32 0.0, %v9035
    %9037 = vdwg.mxu0
    %v9038 = vadd.f32 %v8829, %v8999
    %v9039 = vadd.f32 %v8830, %v9001
    %v9040 = vadd.f32 %v8831, %v9004
    %v9041 = vadd.f32 %v8832, %v9006
    %v9042 = vadd.f32 %v8833, %v9009
    %v9043 = vadd.f32 %v8834, %v9011
    %v9044 = vadd.f32 %v8835, %v9014
    %v9045 = vadd.f32 %v8836, %v9016
    %v9046 = vadd.f32 %v8837, %v9019
    %v9047 = vadd.f32 %v8838, %v9021
    %v9048 = vadd.f32 %v8839, %v9024
    %v9049 = vadd.f32 %v8840, %v9026
    %v9050 = vadd.f32 %v8841, %v9029
    %v9051 = vadd.f32 %v8842, %v9031
    %v9052 = vadd.f32 %v8843, %v9034
    %v9053 = vadd.f32 %v8844, %v9036
    %v9054 = vld [vmem:[#allocation4 + $0x11] sm:$0xff]
    %v9055 = vld [vmem:[#allocation4 + $0x19] sm:$0xff]
    %v9056 = vld [vmem:[#allocation4 + $0x21] sm:$0xff]
    %v9057 = vld [vmem:[#allocation4 + $0x29] sm:$0xff]
    %v9058 = vld [vmem:[#allocation4 + $0x31] sm:$0xff]
    %v9059 = vld [vmem:[#allocation4 + $0x39] sm:$0xff]
    %v9060 = vld [vmem:[#allocation4 + $0x41] sm:$0xff]
    %v9061 = vld [vmem:[#allocation4 + $0x49] sm:$0xff]
    %v9062 = vld [vmem:[#allocation4 + $0x51] sm:$0xff]
    %v9063 = vld [vmem:[#allocation4 + $0x59] sm:$0xff]
    %v9064 = vld [vmem:[#allocation4 + $0x61] sm:$0xff]
    %v9065 = vld [vmem:[#allocation4 + $0x69] sm:$0xff]
    %v9066 = vld [vmem:[#allocation4 + $0x71] sm:$0xff]
    %v9067 = vld [vmem:[#allocation4 + $0x79] sm:$0xff]
    %v9068 = vld [vmem:[#allocation4 + $0x81] sm:$0xff]
    %v9069 = vld [vmem:[#allocation4 + $0x89] sm:$0xff]
    %9070 = vset.pattern.permute.xlu0 5
    %9071 = vperm.xlu0 %9070, %v8025
    %v9072 = vpop.permute.xlu0 %9071
    %9074 = vset.pattern.permute.xlu0 5
    %9075 = vperm.xlu0 %9074, %v8026
    %v9076 = vpop.permute.xlu0 %9075
    %9078 = vset.pattern.permute.xlu0 5
    %9079 = vperm.xlu0 %9078, %v8027
    %v9080 = vpop.permute.xlu0 %9079
    %9082 = vset.pattern.permute.xlu0 5
    %9083 = vperm.xlu0 %9082, %v8028
    %v9084 = vpop.permute.xlu0 %9083
    %9086 = vset.pattern.permute.xlu0 5
    %9087 = vperm.xlu0 %9086, %v8029
    %v9088 = vpop.permute.xlu0 %9087
    %9090 = vset.pattern.permute.xlu0 5
    %9091 = vperm.xlu0 %9090, %v8030
    %v9092 = vpop.permute.xlu0 %9091
    %9094 = vset.pattern.permute.xlu0 5
    %9095 = vperm.xlu0 %9094, %v8031
    %v9096 = vpop.permute.xlu0 %9095
    %9098 = vset.pattern.permute.xlu0 5
    %9099 = vperm.xlu0 %9098, %v8032
    %v9100 = vpop.permute.xlu0 %9099
    %9102 = vset.pattern.permute.xlu0 5
    %9103 = vperm.xlu0 %9102, %v8033
    %v9104 = vpop.permute.xlu0 %9103
    %9106 = vset.pattern.permute.xlu0 5
    %9107 = vperm.xlu0 %9106, %v8034
    %v9108 = vpop.permute.xlu0 %9107
    %9110 = vset.pattern.permute.xlu0 5
    %9111 = vperm.xlu0 %9110, %v8035
    %v9112 = vpop.permute.xlu0 %9111
    %9114 = vset.pattern.permute.xlu0 5
    %9115 = vperm.xlu0 %9114, %v8036
    %v9116 = vpop.permute.xlu0 %9115
    %9118 = vset.pattern.permute.xlu0 5
    %9119 = vperm.xlu0 %9118, %v8037
    %v9120 = vpop.permute.xlu0 %9119
    %9122 = vset.pattern.permute.xlu0 5
    %9123 = vperm.xlu0 %9122, %v8038
    %v9124 = vpop.permute.xlu0 %9123
    %9126 = vset.pattern.permute.xlu0 5
    %9127 = vperm.xlu0 %9126, %v8039
    %v9128 = vpop.permute.xlu0 %9127
    %9130 = vset.pattern.permute.xlu0 5
    %9131 = vperm.xlu0 %9130, %v8040
    %v9132 = vpop.permute.xlu0 %9131
    %v9134 = vmul.f32 %v9054, %v9072
    %v9135 = vmul.f32 %v9055, %v9076
    %v9136 = vmul.f32 %v9056, %v9080
    %v9137 = vmul.f32 %v9057, %v9084
    %v9138 = vmul.f32 %v9058, %v9088
    %v9139 = vmul.f32 %v9059, %v9092
    %v9140 = vmul.f32 %v9060, %v9096
    %v9141 = vmul.f32 %v9061, %v9100
    %v9142 = vmul.f32 %v9062, %v9104
    %v9143 = vmul.f32 %v9063, %v9108
    %v9144 = vmul.f32 %v9064, %v9112
    %v9145 = vmul.f32 %v9065, %v9116
    %v9146 = vmul.f32 %v9066, %v9120
    %v9147 = vmul.f32 %v9067, %v9124
    %v9148 = vmul.f32 %v9068, %v9128
    %v9149 = vmul.f32 %v9069, %v9132
    %v9150 = vld [vmem:[%s5 + $0x50] sm:$0xf]
    %v9151 = vld [vmem:[%s5 + $0x54] sm:$0xf]
    %v9152 = vld [vmem:[%s5 + $0x58] sm:$0xf]
    %v9153 = vld [vmem:[%s5 + $0x5c] sm:$0xf]
    %v9154 = vpack.c.bf16 %v9135, %v9134
    %v9155 = vpack.c.bf16 %v9137, %v9136
    %v9156 = vpack.c.bf16 %v9139, %v9138
    %v9157 = vpack.c.bf16 %v9141, %v9140
    %v9158 = vpack.c.bf16 %v9143, %v9142
    %v9159 = vpack.c.bf16 %v9145, %v9144
    %v9160 = vpack.c.bf16 %v9147, %v9146
    %v9161 = vpack.c.bf16 %v9149, %v9148
    %v9166 = vunpack.c.l.b16 %v9150
    %v9167 = vunpack.c.l.b16 %v9151
    %v9168 = vunpack.c.l.b16 %v9152
    %v9169 = vunpack.c.l.b16 %v9153
    %v9170 = vpack.c.b16 %v9167, %v9166
    %v9171 = vpack.c.b16 %v9169, %v9168
    %v9175 = vsel %vm7255, %v9154, 0
    %v9178 = vsel %vm7255, %v9155, 0
    %v9181 = vsel %vm7255, %v9156, 0
    %v9184 = vsel %vm7255, %v9157, 0
    %v9187 = vsel %vm7255, %v9158, 0
    %v9190 = vsel %vm7255, %v9159, 0
    %v9193 = vsel %vm7255, %v9160, 0
    %v9196 = vsel %vm7255, %v9161, 0
    %9198 = vmatpush.bf16.msra.mxu0 0
    %9199 = vmatpush.bf16.msra.mxu0 0
    %9200 = vmatpush.bf16.msra.mxu0 0
    %9201 = vmatpush.bf16.msra.mxu0 0
    %9202 = vmatpush.bf16.msra.mxu0 0
    %9203 = vmatpush.bf16.msra.mxu0 0
    %9204 = vmatpush.bf16.msra.mxu0 %v9171
    %9205 = vmatpush.bf16.msra.mxu0 %v9170
    %9206 = vmatmul.bf16.gmra.mxu0 %v9175
    %v9207 = vpop.f32.mrf.mxu0
    %v9208 = vadd.f32 0.0, %v9207
    %v9209 = vpop.f32.mrf.mxu0
    %v9210 = vadd.f32 0.0, %v9209
    %9211 = vmatmul.bf16.gmra.mxu0 %v9178
    %v9212 = vpop.f32.mrf.mxu0
    %v9213 = vadd.f32 0.0, %v9212
    %v9214 = vpop.f32.mrf.mxu0
    %v9215 = vadd.f32 0.0, %v9214
    %9216 = vmatmul.bf16.gmra.mxu0 %v9181
    %v9217 = vpop.f32.mrf.mxu0
    %v9218 = vadd.f32 0.0, %v9217
    %v9219 = vpop.f32.mrf.mxu0
    %v9220 = vadd.f32 0.0, %v9219
    %9221 = vmatmul.bf16.gmra.mxu0 %v9184
    %v9222 = vpop.f32.mrf.mxu0
    %v9223 = vadd.f32 0.0, %v9222
    %v9224 = vpop.f32.mrf.mxu0
    %v9225 = vadd.f32 0.0, %v9224
    %9226 = vmatmul.bf16.gmra.mxu0 %v9187
    %v9227 = vpop.f32.mrf.mxu0
    %v9228 = vadd.f32 0.0, %v9227
    %v9229 = vpop.f32.mrf.mxu0
    %v9230 = vadd.f32 0.0, %v9229
    %9231 = vmatmul.bf16.gmra.mxu0 %v9190
    %v9232 = vpop.f32.mrf.mxu0
    %v9233 = vadd.f32 0.0, %v9232
    %v9234 = vpop.f32.mrf.mxu0
    %v9235 = vadd.f32 0.0, %v9234
    %9236 = vmatmul.bf16.gmra.mxu0 %v9193
    %v9237 = vpop.f32.mrf.mxu0
    %v9238 = vadd.f32 0.0, %v9237
    %v9239 = vpop.f32.mrf.mxu0
    %v9240 = vadd.f32 0.0, %v9239
    %9241 = vmatmul.bf16.gmra.mxu0 %v9196
    %v9242 = vpop.f32.mrf.mxu0
    %v9243 = vadd.f32 0.0, %v9242
    %v9244 = vpop.f32.mrf.mxu0
    %v9245 = vadd.f32 0.0, %v9244
    %9246 = vdwg.mxu0
    %v9247 = vadd.f32 %v9038, %v9208
    %v9248 = vadd.f32 %v9039, %v9210
    %v9249 = vadd.f32 %v9040, %v9213
    %v9250 = vadd.f32 %v9041, %v9215
    %v9251 = vadd.f32 %v9042, %v9218
    %v9252 = vadd.f32 %v9043, %v9220
    %v9253 = vadd.f32 %v9044, %v9223
    %v9254 = vadd.f32 %v9045, %v9225
    %v9255 = vadd.f32 %v9046, %v9228
    %v9256 = vadd.f32 %v9047, %v9230
    %v9257 = vadd.f32 %v9048, %v9233
    %v9258 = vadd.f32 %v9049, %v9235
    %v9259 = vadd.f32 %v9050, %v9238
    %v9260 = vadd.f32 %v9051, %v9240
    %v9261 = vadd.f32 %v9052, %v9243
    %v9262 = vadd.f32 %v9053, %v9245
    %v9263 = vld [vmem:[#allocation4 + $0x17] sm:$0xff]
    %v9264 = vld [vmem:[#allocation4 + $0x1f] sm:$0xff]
    %v9265 = vld [vmem:[#allocation4 + $0x27] sm:$0xff]
    %v9266 = vld [vmem:[#allocation4 + $0x2f] sm:$0xff]
    %v9267 = vld [vmem:[#allocation4 + $0x37] sm:$0xff]
    %v9268 = vld [vmem:[#allocation4 + $0x3f] sm:$0xff]
    %v9269 = vld [vmem:[#allocation4 + $0x47] sm:$0xff]
    %v9270 = vld [vmem:[#allocation4 + $0x4f] sm:$0xff]
    %v9271 = vld [vmem:[#allocation4 + $0x57] sm:$0xff]
    %v9272 = vld [vmem:[#allocation4 + $0x5f] sm:$0xff]
    %v9273 = vld [vmem:[#allocation4 + $0x67] sm:$0xff]
    %v9274 = vld [vmem:[#allocation4 + $0x6f] sm:$0xff]
    %v9275 = vld [vmem:[#allocation4 + $0x77] sm:$0xff]
    %v9276 = vld [vmem:[#allocation4 + $0x7f] sm:$0xff]
    %v9277 = vld [vmem:[#allocation4 + $0x87] sm:$0xff]
    %v9278 = vld [vmem:[#allocation4 + $0x8f] sm:$0xff]
    %9279 = vset.pattern.permute.xlu0 6
    %9280 = vperm.xlu0 %9279, %v8025
    %v9281 = vpop.permute.xlu0 %9280
    %9283 = vset.pattern.permute.xlu0 6
    %9284 = vperm.xlu0 %9283, %v8026
    %v9285 = vpop.permute.xlu0 %9284
    %9287 = vset.pattern.permute.xlu0 6
    %9288 = vperm.xlu0 %9287, %v8027
    %v9289 = vpop.permute.xlu0 %9288
    %9291 = vset.pattern.permute.xlu0 6
    %9292 = vperm.xlu0 %9291, %v8028
    %v9293 = vpop.permute.xlu0 %9292
    %9295 = vset.pattern.permute.xlu0 6
    %9296 = vperm.xlu0 %9295, %v8029
    %v9297 = vpop.permute.xlu0 %9296
    %9299 = vset.pattern.permute.xlu0 6
    %9300 = vperm.xlu0 %9299, %v8030
    %v9301 = vpop.permute.xlu0 %9300
    %9303 = vset.pattern.permute.xlu0 6
    %9304 = vperm.xlu0 %9303, %v8031
    %v9305 = vpop.permute.xlu0 %9304
    %9307 = vset.pattern.permute.xlu0 6
    %9308 = vperm.xlu0 %9307, %v8032
    %v9309 = vpop.permute.xlu0 %9308
    %9311 = vset.pattern.permute.xlu0 6
    %9312 = vperm.xlu0 %9311, %v8033
    %v9313 = vpop.permute.xlu0 %9312
    %9315 = vset.pattern.permute.xlu0 6
    %9316 = vperm.xlu0 %9315, %v8034
    %v9317 = vpop.permute.xlu0 %9316
    %9319 = vset.pattern.permute.xlu0 6
    %9320 = vperm.xlu0 %9319, %v8035
    %v9321 = vpop.permute.xlu0 %9320
    %9323 = vset.pattern.permute.xlu0 6
    %9324 = vperm.xlu0 %9323, %v8036
    %v9325 = vpop.permute.xlu0 %9324
    %9327 = vset.pattern.permute.xlu0 6
    %9328 = vperm.xlu0 %9327, %v8037
    %v9329 = vpop.permute.xlu0 %9328
    %9331 = vset.pattern.permute.xlu0 6
    %9332 = vperm.xlu0 %9331, %v8038
    %v9333 = vpop.permute.xlu0 %9332
    %9335 = vset.pattern.permute.xlu0 6
    %9336 = vperm.xlu0 %9335, %v8039
    %v9337 = vpop.permute.xlu0 %9336
    %9339 = vset.pattern.permute.xlu0 6
    %9340 = vperm.xlu0 %9339, %v8040
    %v9341 = vpop.permute.xlu0 %9340
    %v9343 = vmul.f32 %v9263, %v9281
    %v9344 = vmul.f32 %v9264, %v9285
    %v9345 = vmul.f32 %v9265, %v9289
    %v9346 = vmul.f32 %v9266, %v9293
    %v9347 = vmul.f32 %v9267, %v9297
    %v9348 = vmul.f32 %v9268, %v9301
    %v9349 = vmul.f32 %v9269, %v9305
    %v9350 = vmul.f32 %v9270, %v9309
    %v9351 = vmul.f32 %v9271, %v9313
    %v9352 = vmul.f32 %v9272, %v9317
    %v9353 = vmul.f32 %v9273, %v9321
    %v9354 = vmul.f32 %v9274, %v9325
    %v9355 = vmul.f32 %v9275, %v9329
    %v9356 = vmul.f32 %v9276, %v9333
    %v9357 = vmul.f32 %v9277, %v9337
    %v9358 = vmul.f32 %v9278, %v9341
    %v9359 = vld [vmem:[%s5 + $0x60] sm:$0xf]
    %v9360 = vld [vmem:[%s5 + $0x64] sm:$0xf]
    %v9361 = vld [vmem:[%s5 + $0x68] sm:$0xf]
    %v9362 = vld [vmem:[%s5 + $0x6c] sm:$0xf]
    %v9363 = vpack.c.bf16 %v9344, %v9343
    %v9364 = vpack.c.bf16 %v9346, %v9345
    %v9365 = vpack.c.bf16 %v9348, %v9347
    %v9366 = vpack.c.bf16 %v9350, %v9349
    %v9367 = vpack.c.bf16 %v9352, %v9351
    %v9368 = vpack.c.bf16 %v9354, %v9353
    %v9369 = vpack.c.bf16 %v9356, %v9355
    %v9370 = vpack.c.bf16 %v9358, %v9357
    %v9375 = vunpack.c.l.b16 %v9359
    %v9376 = vunpack.c.l.b16 %v9360
    %v9377 = vunpack.c.l.b16 %v9361
    %v9378 = vunpack.c.l.b16 %v9362
    %v9379 = vpack.c.b16 %v9376, %v9375
    %v9380 = vpack.c.b16 %v9378, %v9377
    %v9384 = vsel %vm7255, %v9363, 0
    %v9387 = vsel %vm7255, %v9364, 0
    %v9390 = vsel %vm7255, %v9365, 0
    %v9393 = vsel %vm7255, %v9366, 0
    %v9396 = vsel %vm7255, %v9367, 0
    %v9399 = vsel %vm7255, %v9368, 0
    %v9402 = vsel %vm7255, %v9369, 0
    %v9405 = vsel %vm7255, %v9370, 0
    %9407 = vmatpush.bf16.msra.mxu0 0
    %9408 = vmatpush.bf16.msra.mxu0 0
    %9409 = vmatpush.bf16.msra.mxu0 0
    %9410 = vmatpush.bf16.msra.mxu0 0
    %9411 = vmatpush.bf16.msra.mxu0 0
    %9412 = vmatpush.bf16.msra.mxu0 0
    %9413 = vmatpush.bf16.msra.mxu0 %v9380
    %9414 = vmatpush.bf16.msra.mxu0 %v9379
    %9415 = vmatmul.bf16.gmra.mxu0 %v9384
    %v9416 = vpop.f32.mrf.mxu0
    %v9417 = vadd.f32 0.0, %v9416
    %v9418 = vpop.f32.mrf.mxu0
    %v9419 = vadd.f32 0.0, %v9418
    %9420 = vmatmul.bf16.gmra.mxu0 %v9387
    %v9421 = vpop.f32.mrf.mxu0
    %v9422 = vadd.f32 0.0, %v9421
    %v9423 = vpop.f32.mrf.mxu0
    %v9424 = vadd.f32 0.0, %v9423
    %9425 = vmatmul.bf16.gmra.mxu0 %v9390
    %v9426 = vpop.f32.mrf.mxu0
    %v9427 = vadd.f32 0.0, %v9426
    %v9428 = vpop.f32.mrf.mxu0
    %v9429 = vadd.f32 0.0, %v9428
    %9430 = vmatmul.bf16.gmra.mxu0 %v9393
    %v9431 = vpop.f32.mrf.mxu0
    %v9432 = vadd.f32 0.0, %v9431
    %v9433 = vpop.f32.mrf.mxu0
    %v9434 = vadd.f32 0.0, %v9433
    %9435 = vmatmul.bf16.gmra.mxu0 %v9396
    %v9436 = vpop.f32.mrf.mxu0
    %v9437 = vadd.f32 0.0, %v9436
    %v9438 = vpop.f32.mrf.mxu0
    %v9439 = vadd.f32 0.0, %v9438
    %9440 = vmatmul.bf16.gmra.mxu0 %v9399
    %v9441 = vpop.f32.mrf.mxu0
    %v9442 = vadd.f32 0.0, %v9441
    %v9443 = vpop.f32.mrf.mxu0
    %v9444 = vadd.f32 0.0, %v9443
    %9445 = vmatmul.bf16.gmra.mxu0 %v9402
    %v9446 = vpop.f32.mrf.mxu0
    %v9447 = vadd.f32 0.0, %v9446
    %v9448 = vpop.f32.mrf.mxu0
    %v9449 = vadd.f32 0.0, %v9448
    %9450 = vmatmul.bf16.gmra.mxu0 %v9405
    %v9451 = vpop.f32.mrf.mxu0
    %v9452 = vadd.f32 0.0, %v9451
    %v9453 = vpop.f32.mrf.mxu0
    %v9454 = vadd.f32 0.0, %v9453
    %9455 = vdwg.mxu0
    %v9456 = vadd.f32 %v9247, %v9417
    %v9457 = vadd.f32 %v9248, %v9419
    %v9458 = vadd.f32 %v9249, %v9422
    %v9459 = vadd.f32 %v9250, %v9424
    %v9460 = vadd.f32 %v9251, %v9427
    %v9461 = vadd.f32 %v9252, %v9429
    %v9462 = vadd.f32 %v9253, %v9432
    %v9463 = vadd.f32 %v9254, %v9434
    %v9464 = vadd.f32 %v9255, %v9437
    %v9465 = vadd.f32 %v9256, %v9439
    %v9466 = vadd.f32 %v9257, %v9442
    %v9467 = vadd.f32 %v9258, %v9444
    %v9468 = vadd.f32 %v9259, %v9447
    %v9469 = vadd.f32 %v9260, %v9449
    %v9470 = vadd.f32 %v9261, %v9452
    %v9471 = vadd.f32 %v9262, %v9454
    %v9472 = vld [vmem:[#allocation4 + $0x18] sm:$0xff]
    %v9473 = vld [vmem:[#allocation4 + $0x20] sm:$0xff]
    %v9474 = vld [vmem:[#allocation4 + $0x28] sm:$0xff]
    %v9475 = vld [vmem:[#allocation4 + $0x30] sm:$0xff]
    %v9476 = vld [vmem:[#allocation4 + $0x38] sm:$0xff]
    %v9477 = vld [vmem:[#allocation4 + $0x40] sm:$0xff]
    %v9478 = vld [vmem:[#allocation4 + $0x48] sm:$0xff]
    %v9479 = vld [vmem:[#allocation4 + $0x50] sm:$0xff]
    %v9480 = vld [vmem:[#allocation4 + $0x58] sm:$0xff]
    %v9481 = vld [vmem:[#allocation4 + $0x60] sm:$0xff]
    %v9482 = vld [vmem:[#allocation4 + $0x68] sm:$0xff]
    %v9483 = vld [vmem:[#allocation4 + $0x70] sm:$0xff]
    %v9484 = vld [vmem:[#allocation4 + $0x78] sm:$0xff]
    %v9485 = vld [vmem:[#allocation4 + $0x80] sm:$0xff]
    %v9486 = vld [vmem:[#allocation4 + $0x88] sm:$0xff]
    %v9487 = vld [vmem:[#allocation4 + $0x90] sm:$0xff]
    %9488 = vset.pattern.permute.xlu0 7
    %9489 = vperm.xlu0 %9488, %v8025
    %v9490 = vpop.permute.xlu0 %9489
    %9492 = vset.pattern.permute.xlu0 7
    %9493 = vperm.xlu0 %9492, %v8026
    %v9494 = vpop.permute.xlu0 %9493
    %9496 = vset.pattern.permute.xlu0 7
    %9497 = vperm.xlu0 %9496, %v8027
    %v9498 = vpop.permute.xlu0 %9497
    %9500 = vset.pattern.permute.xlu0 7
    %9501 = vperm.xlu0 %9500, %v8028
    %v9502 = vpop.permute.xlu0 %9501
    %9504 = vset.pattern.permute.xlu0 7
    %9505 = vperm.xlu0 %9504, %v8029
    %v9506 = vpop.permute.xlu0 %9505
    %9508 = vset.pattern.permute.xlu0 7
    %9509 = vperm.xlu0 %9508, %v8030
    %v9510 = vpop.permute.xlu0 %9509
    %9512 = vset.pattern.permute.xlu0 7
    %9513 = vperm.xlu0 %9512, %v8031
    %v9514 = vpop.permute.xlu0 %9513
    %9516 = vset.pattern.permute.xlu0 7
    %9517 = vperm.xlu0 %9516, %v8032
    %v9518 = vpop.permute.xlu0 %9517
    %9520 = vset.pattern.permute.xlu0 7
    %9521 = vperm.xlu0 %9520, %v8033
    %v9522 = vpop.permute.xlu0 %9521
    %9524 = vset.pattern.permute.xlu0 7
    %9525 = vperm.xlu0 %9524, %v8034
    %v9526 = vpop.permute.xlu0 %9525
    %9528 = vset.pattern.permute.xlu0 7
    %9529 = vperm.xlu0 %9528, %v8035
    %v9530 = vpop.permute.xlu0 %9529
    %9532 = vset.pattern.permute.xlu0 7
    %9533 = vperm.xlu0 %9532, %v8036
    %v9534 = vpop.permute.xlu0 %9533
    %9536 = vset.pattern.permute.xlu0 7
    %9537 = vperm.xlu0 %9536, %v8037
    %v9538 = vpop.permute.xlu0 %9537
    %9540 = vset.pattern.permute.xlu0 7
    %9541 = vperm.xlu0 %9540, %v8038
    %v9542 = vpop.permute.xlu0 %9541
    %9544 = vset.pattern.permute.xlu0 7
    %9545 = vperm.xlu0 %9544, %v8039
    %v9546 = vpop.permute.xlu0 %9545
    %9548 = vset.pattern.permute.xlu0 7
    %9549 = vperm.xlu0 %9548, %v8040
    %v9550 = vpop.permute.xlu0 %9549
    %v9552 = vmul.f32 %v9472, %v9490
    %v9553 = vmul.f32 %v9473, %v9494
    %v9554 = vmul.f32 %v9474, %v9498
    %v9555 = vmul.f32 %v9475, %v9502
    %v9556 = vmul.f32 %v9476, %v9506
    %v9557 = vmul.f32 %v9477, %v9510
    %v9558 = vmul.f32 %v9478, %v9514
    %v9559 = vmul.f32 %v9479, %v9518
    %v9560 = vmul.f32 %v9480, %v9522
    %v9561 = vmul.f32 %v9481, %v9526
    %v9562 = vmul.f32 %v9482, %v9530
    %v9563 = vmul.f32 %v9483, %v9534
    %v9564 = vmul.f32 %v9484, %v9538
    %v9565 = vmul.f32 %v9485, %v9542
    %v9566 = vmul.f32 %v9486, %v9546
    %v9567 = vmul.f32 %v9487, %v9550
    %v9568 = vld [vmem:[%s5 + $0x70] sm:$0xf]
    %v9569 = vld [vmem:[%s5 + $0x74] sm:$0xf]
    %v9570 = vld [vmem:[%s5 + $0x78] sm:$0xf]
    %v9571 = vld [vmem:[%s5 + $0x7c] sm:$0xf]
    %v9572 = vpack.c.bf16 %v9553, %v9552
    %v9573 = vpack.c.bf16 %v9555, %v9554
    %v9574 = vpack.c.bf16 %v9557, %v9556
    %v9575 = vpack.c.bf16 %v9559, %v9558
    %v9576 = vpack.c.bf16 %v9561, %v9560
    %v9577 = vpack.c.bf16 %v9563, %v9562
    %v9578 = vpack.c.bf16 %v9565, %v9564
    %v9579 = vpack.c.bf16 %v9567, %v9566
    %v9584 = vunpack.c.l.b16 %v9568
    %v9585 = vunpack.c.l.b16 %v9569
    %v9586 = vunpack.c.l.b16 %v9570
    %v9587 = vunpack.c.l.b16 %v9571
    %v9588 = vpack.c.b16 %v9585, %v9584
    %v9589 = vpack.c.b16 %v9587, %v9586
    %v9593 = vsel %vm7255, %v9572, 0
    %v9596 = vsel %vm7255, %v9573, 0
    %v9599 = vsel %vm7255, %v9574, 0
    %v9602 = vsel %vm7255, %v9575, 0
    %v9605 = vsel %vm7255, %v9576, 0
    %v9608 = vsel %vm7255, %v9577, 0
    %v9611 = vsel %vm7255, %v9578, 0
    %v9614 = vsel %vm7255, %v9579, 0
    %9616 = vmatpush.bf16.msra.mxu0 0
    %9617 = vmatpush.bf16.msra.mxu0 0
    %9618 = vmatpush.bf16.msra.mxu0 0
    %9619 = vmatpush.bf16.msra.mxu0 0
    %9620 = vmatpush.bf16.msra.mxu0 0
    %9621 = vmatpush.bf16.msra.mxu0 0
    %9622 = vmatpush.bf16.msra.mxu0 %v9589
    %9623 = vmatpush.bf16.msra.mxu0 %v9588
    %9624 = vmatmul.bf16.gmra.mxu0 %v9593
    %v9625 = vpop.f32.mrf.mxu0
    %v9626 = vadd.f32 0.0, %v9625
    %v9627 = vpop.f32.mrf.mxu0
    %v9628 = vadd.f32 0.0, %v9627
    %9629 = vmatmul.bf16.gmra.mxu0 %v9596
    %v9630 = vpop.f32.mrf.mxu0
    %v9631 = vadd.f32 0.0, %v9630
    %v9632 = vpop.f32.mrf.mxu0
    %v9633 = vadd.f32 0.0, %v9632
    %9634 = vmatmul.bf16.gmra.mxu0 %v9599
    %v9635 = vpop.f32.mrf.mxu0
    %v9636 = vadd.f32 0.0, %v9635
    %v9637 = vpop.f32.mrf.mxu0
    %v9638 = vadd.f32 0.0, %v9637
    %9639 = vmatmul.bf16.gmra.mxu0 %v9602
    %v9640 = vpop.f32.mrf.mxu0
    %v9641 = vadd.f32 0.0, %v9640
    %v9642 = vpop.f32.mrf.mxu0
    %v9643 = vadd.f32 0.0, %v9642
    %9644 = vmatmul.bf16.gmra.mxu0 %v9605
    %v9645 = vpop.f32.mrf.mxu0
    %v9646 = vadd.f32 0.0, %v9645
    %v9647 = vpop.f32.mrf.mxu0
    %v9648 = vadd.f32 0.0, %v9647
    %9649 = vmatmul.bf16.gmra.mxu0 %v9608
    %v9650 = vpop.f32.mrf.mxu0
    %v9651 = vadd.f32 0.0, %v9650
    %v9652 = vpop.f32.mrf.mxu0
    %v9653 = vadd.f32 0.0, %v9652
    %9654 = vmatmul.bf16.gmra.mxu0 %v9611
    %v9655 = vpop.f32.mrf.mxu0
    %v9656 = vadd.f32 0.0, %v9655
    %v9657 = vpop.f32.mrf.mxu0
    %v9658 = vadd.f32 0.0, %v9657
    %9659 = vmatmul.bf16.gmra.mxu0 %v9614
    %v9660 = vpop.f32.mrf.mxu0
    %v9661 = vadd.f32 0.0, %v9660
    %v9662 = vpop.f32.mrf.mxu0
    %v9663 = vadd.f32 0.0, %v9662
    %9664 = vdwg.mxu0
    %v9665 = vadd.f32 %v9456, %v9626
    %v9666 = vadd.f32 %v9457, %v9628
    %v9667 = vadd.f32 %v9458, %v9631
    %v9668 = vadd.f32 %v9459, %v9633
    %v9669 = vadd.f32 %v9460, %v9636
    %v9670 = vadd.f32 %v9461, %v9638
    %v9671 = vadd.f32 %v9462, %v9641
    %v9672 = vadd.f32 %v9463, %v9643
    %v9673 = vadd.f32 %v9464, %v9646
    %v9674 = vadd.f32 %v9465, %v9648
    %v9675 = vadd.f32 %v9466, %v9651
    %v9676 = vadd.f32 %v9467, %v9653
    %v9677 = vadd.f32 %v9468, %v9656
    %v9678 = vadd.f32 %v9469, %v9658
    %v9679 = vadd.f32 %v9470, %v9661
    %v9680 = vadd.f32 %v9471, %v9663
    %v9681 = vld [vmem:[#allocation4 + $0x19] sm:$0xff]
    %v9682 = vld [vmem:[#allocation4 + $0x21] sm:$0xff]
    %v9683 = vld [vmem:[#allocation4 + $0x29] sm:$0xff]
    %v9684 = vld [vmem:[#allocation4 + $0x31] sm:$0xff]
    %v9685 = vld [vmem:[#allocation4 + $0x39] sm:$0xff]
    %v9686 = vld [vmem:[#allocation4 + $0x41] sm:$0xff]
    %v9687 = vld [vmem:[#allocation4 + $0x49] sm:$0xff]
    %v9688 = vld [vmem:[#allocation4 + $0x51] sm:$0xff]
    %v9689 = vld [vmem:[#allocation4 + $0x59] sm:$0xff]
    %v9690 = vld [vmem:[#allocation4 + $0x61] sm:$0xff]
    %v9691 = vld [vmem:[#allocation4 + $0x69] sm:$0xff]
    %v9692 = vld [vmem:[#allocation4 + $0x71] sm:$0xff]
    %v9693 = vld [vmem:[#allocation4 + $0x79] sm:$0xff]
    %v9694 = vld [vmem:[#allocation4 + $0x81] sm:$0xff]
    %v9695 = vld [vmem:[#allocation4 + $0x89] sm:$0xff]
    %v9696 = vld [vmem:[#allocation4 + $0x91] sm:$0xff]
    %9697 = vset.pattern.permute.xlu0 8
    %9698 = vperm.xlu0 %9697, %v8025
    %v9699 = vpop.permute.xlu0 %9698
    %9701 = vset.pattern.permute.xlu0 8
    %9702 = vperm.xlu0 %9701, %v8026
    %v9703 = vpop.permute.xlu0 %9702
    %9705 = vset.pattern.permute.xlu0 8
    %9706 = vperm.xlu0 %9705, %v8027
    %v9707 = vpop.permute.xlu0 %9706
    %9709 = vset.pattern.permute.xlu0 8
    %9710 = vperm.xlu0 %9709, %v8028
    %v9711 = vpop.permute.xlu0 %9710
    %9713 = vset.pattern.permute.xlu0 8
    %9714 = vperm.xlu0 %9713, %v8029
    %v9715 = vpop.permute.xlu0 %9714
    %9717 = vset.pattern.permute.xlu0 8
    %9718 = vperm.xlu0 %9717, %v8030
    %v9719 = vpop.permute.xlu0 %9718
    %9721 = vset.pattern.permute.xlu0 8
    %9722 = vperm.xlu0 %9721, %v8031
    %v9723 = vpop.permute.xlu0 %9722
    %9725 = vset.pattern.permute.xlu0 8
    %9726 = vperm.xlu0 %9725, %v8032
    %v9727 = vpop.permute.xlu0 %9726
    %9729 = vset.pattern.permute.xlu0 8
    %9730 = vperm.xlu0 %9729, %v8033
    %v9731 = vpop.permute.xlu0 %9730
    %9733 = vset.pattern.permute.xlu0 8
    %9734 = vperm.xlu0 %9733, %v8034
    %v9735 = vpop.permute.xlu0 %9734
    %9737 = vset.pattern.permute.xlu0 8
    %9738 = vperm.xlu0 %9737, %v8035
    %v9739 = vpop.permute.xlu0 %9738
    %9741 = vset.pattern.permute.xlu0 8
    %9742 = vperm.xlu0 %9741, %v8036
    %v9743 = vpop.permute.xlu0 %9742
    %9745 = vset.pattern.permute.xlu0 8
    %9746 = vperm.xlu0 %9745, %v8037
    %v9747 = vpop.permute.xlu0 %9746
    %9749 = vset.pattern.permute.xlu0 8
    %9750 = vperm.xlu0 %9749, %v8038
    %v9751 = vpop.permute.xlu0 %9750
    %9753 = vset.pattern.permute.xlu0 8
    %9754 = vperm.xlu0 %9753, %v8039
    %v9755 = vpop.permute.xlu0 %9754
    %9757 = vset.pattern.permute.xlu0 8
    %9758 = vperm.xlu0 %9757, %v8040
    %v9759 = vpop.permute.xlu0 %9758
    %v9761 = vmul.f32 %v9681, %v9699
    %v9762 = vmul.f32 %v9682, %v9703
    %v9763 = vmul.f32 %v9683, %v9707
    %v9764 = vmul.f32 %v9684, %v9711
    %v9765 = vmul.f32 %v9685, %v9715
    %v9766 = vmul.f32 %v9686, %v9719
    %v9767 = vmul.f32 %v9687, %v9723
    %v9768 = vmul.f32 %v9688, %v9727
    %v9769 = vmul.f32 %v9689, %v9731
    %v9770 = vmul.f32 %v9690, %v9735
    %v9771 = vmul.f32 %v9691, %v9739
    %v9772 = vmul.f32 %v9692, %v9743
    %v9773 = vmul.f32 %v9693, %v9747
    %v9774 = vmul.f32 %v9694, %v9751
    %v9775 = vmul.f32 %v9695, %v9755
    %v9776 = vmul.f32 %v9696, %v9759
    %v9777 = vld [vmem:[%s5 + $0x80] sm:$0xf]
    %v9778 = vld [vmem:[%s5 + $0x84] sm:$0xf]
    %v9779 = vld [vmem:[%s5 + $0x88] sm:$0xf]
    %v9780 = vld [vmem:[%s5 + $0x8c] sm:$0xf]
    %v9781 = vpack.c.bf16 %v9762, %v9761
    %v9782 = vpack.c.bf16 %v9764, %v9763
    %v9783 = vpack.c.bf16 %v9766, %v9765
    %v9784 = vpack.c.bf16 %v9768, %v9767
    %v9785 = vpack.c.bf16 %v9770, %v9769
    %v9786 = vpack.c.bf16 %v9772, %v9771
    %v9787 = vpack.c.bf16 %v9774, %v9773
    %v9788 = vpack.c.bf16 %v9776, %v9775
    %v9793 = vunpack.c.l.b16 %v9777
    %v9794 = vunpack.c.l.b16 %v9778
    %v9795 = vunpack.c.l.b16 %v9779
    %v9796 = vunpack.c.l.b16 %v9780
    %v9797 = vpack.c.b16 %v9794, %v9793
    %v9798 = vpack.c.b16 %v9796, %v9795
    %v9802 = vsel %vm7255, %v9781, 0
    %v9805 = vsel %vm7255, %v9782, 0
    %v9808 = vsel %vm7255, %v9783, 0
    %v9811 = vsel %vm7255, %v9784, 0
    %v9814 = vsel %vm7255, %v9785, 0
    %v9817 = vsel %vm7255, %v9786, 0
    %v9820 = vsel %vm7255, %v9787, 0
    %v9823 = vsel %vm7255, %v9788, 0
    %9825 = vmatpush.bf16.msra.mxu0 0
    %9826 = vmatpush.bf16.msra.mxu0 0
    %9827 = vmatpush.bf16.msra.mxu0 0
    %9828 = vmatpush.bf16.msra.mxu0 0
    %9829 = vmatpush.bf16.msra.mxu0 0
    %9830 = vmatpush.bf16.msra.mxu0 0
    %9831 = vmatpush.bf16.msra.mxu0 %v9798
    %9832 = vmatpush.bf16.msra.mxu0 %v9797
    %9833 = vmatmul.bf16.gmra.mxu0 %v9802
    %v9834 = vpop.f32.mrf.mxu0
    %v9835 = vadd.f32 0.0, %v9834
    %v9836 = vpop.f32.mrf.mxu0
    %v9837 = vadd.f32 0.0, %v9836
    %9838 = vmatmul.bf16.gmra.mxu0 %v9805
    %v9839 = vpop.f32.mrf.mxu0
    %v9840 = vadd.f32 0.0, %v9839
    %v9841 = vpop.f32.mrf.mxu0
    %v9842 = vadd.f32 0.0, %v9841
    %9843 = vmatmul.bf16.gmra.mxu0 %v9808
    %v9844 = vpop.f32.mrf.mxu0
    %v9845 = vadd.f32 0.0, %v9844
    %v9846 = vpop.f32.mrf.mxu0
    %v9847 = vadd.f32 0.0, %v9846
    %9848 = vmatmul.bf16.gmra.mxu0 %v9811
    %v9849 = vpop.f32.mrf.mxu0
    %v9850 = vadd.f32 0.0, %v9849
    %v9851 = vpop.f32.mrf.mxu0
    %v9852 = vadd.f32 0.0, %v9851
    %9853 = vmatmul.bf16.gmra.mxu0 %v9814
    %v9854 = vpop.f32.mrf.mxu0
    %v9855 = vadd.f32 0.0, %v9854
    %v9856 = vpop.f32.mrf.mxu0
    %v9857 = vadd.f32 0.0, %v9856
    %9858 = vmatmul.bf16.gmra.mxu0 %v9817
    %v9859 = vpop.f32.mrf.mxu0
    %v9860 = vadd.f32 0.0, %v9859
    %v9861 = vpop.f32.mrf.mxu0
    %v9862 = vadd.f32 0.0, %v9861
    %9863 = vmatmul.bf16.gmra.mxu0 %v9820
    %v9864 = vpop.f32.mrf.mxu0
    %v9865 = vadd.f32 0.0, %v9864
    %v9866 = vpop.f32.mrf.mxu0
    %v9867 = vadd.f32 0.0, %v9866
    %9868 = vmatmul.bf16.gmra.mxu0 %v9823
    %v9869 = vpop.f32.mrf.mxu0
    %v9870 = vadd.f32 0.0, %v9869
    %v9871 = vpop.f32.mrf.mxu0
    %v9872 = vadd.f32 0.0, %v9871
    %9873 = vdwg.mxu0
    %v9874 = vadd.f32 %v9665, %v9835
    %v9875 = vadd.f32 %v9666, %v9837
    %v9876 = vadd.f32 %v9667, %v9840
    %v9877 = vadd.f32 %v9668, %v9842
    %v9878 = vadd.f32 %v9669, %v9845
    %v9879 = vadd.f32 %v9670, %v9847
    %v9880 = vadd.f32 %v9671, %v9850
    %v9881 = vadd.f32 %v9672, %v9852
    %v9882 = vadd.f32 %v9673, %v9855
    %v9883 = vadd.f32 %v9674, %v9857
    %v9884 = vadd.f32 %v9675, %v9860
    %v9885 = vadd.f32 %v9676, %v9862
    %v9886 = vadd.f32 %v9677, %v9865
    %v9887 = vadd.f32 %v9678, %v9867
    %v9888 = vadd.f32 %v9679, %v9870
    %v9889 = vadd.f32 %v9680, %v9872
    %v9890 = vld [vmem:[%s6] sm:$0x1]
    %v9892 = vperm.slane %v9890, 0
    %v9894 = vadd.f32 %v9874, %v9892
    %v9895 = vadd.f32 %v9875, %v9892
    %v9896 = vadd.f32 %v9876, %v9892
    %v9897 = vadd.f32 %v9877, %v9892
    %v9898 = vadd.f32 %v9878, %v9892
    %v9899 = vadd.f32 %v9879, %v9892
    %v9900 = vadd.f32 %v9880, %v9892
    %v9901 = vadd.f32 %v9881, %v9892
    %v9902 = vadd.f32 %v9882, %v9892
    %v9903 = vadd.f32 %v9883, %v9892
    %v9904 = vadd.f32 %v9884, %v9892
    %v9905 = vadd.f32 %v9885, %v9892
    %v9906 = vadd.f32 %v9886, %v9892
    %v9907 = vadd.f32 %v9887, %v9892
    %v9908 = vadd.f32 %v9888, %v9892
    %v9909 = vadd.f32 %v9889, %v9892
    %v9910 = vmax.f32 %v9894, 0.0
    %v9911 = vmax.f32 %v9895, 0.0
    %v9912 = vmax.f32 %v9896, 0.0
    %v9913 = vmax.f32 %v9897, 0.0
    %v9914 = vmax.f32 %v9898, 0.0
    %v9915 = vmax.f32 %v9899, 0.0
    %v9916 = vmax.f32 %v9900, 0.0
    %v9917 = vmax.f32 %v9901, 0.0
    %v9918 = vmax.f32 %v9902, 0.0
    %v9919 = vmax.f32 %v9903, 0.0
    %v9920 = vmax.f32 %v9904, 0.0
    %v9921 = vmax.f32 %v9905, 0.0
    %v9922 = vmax.f32 %v9906, 0.0
    %v9923 = vmax.f32 %v9907, 0.0
    %v9924 = vmax.f32 %v9908, 0.0
    %v9925 = vmax.f32 %v9909, 0.0
    %vm9926 = vcmask 523264
    %9927 = vst.msk [vmem:[#allocation5] sm:$0xff] %vm9926, 0.0
    %9928 = vst.msk [vmem:[#allocation5 + $0x8] sm:$0xff] %vm9926, 0.0
    %9929 = vst.msk [vmem:[#allocation5 + $0x10] sm:$0xff] %vm9926, 0.0
    %9930 = vst.msk [vmem:[#allocation5 + $0x18] sm:$0xff] %vm9926, 0.0
    %9931 = vst.msk [vmem:[#allocation5 + $0x20] sm:$0xff] %vm9926, 0.0
    %9932 = vst.msk [vmem:[#allocation5 + $0x28] sm:$0xff] %vm9926, 0.0
    %9933 = vst.msk [vmem:[#allocation5 + $0x30] sm:$0xff] %vm9926, 0.0
    %9934 = vst.msk [vmem:[#allocation5 + $0x38] sm:$0xff] %vm9926, 0.0
    %9935 = vst.msk [vmem:[#allocation5 + $0x40] sm:$0xff] %vm9926, 0.0
    %9936 = vst.msk [vmem:[#allocation5 + $0x48] sm:$0xff] %vm9926, 0.0
    %9937 = vst.msk [vmem:[#allocation5 + $0x50] sm:$0xff] %vm9926, 0.0
    %9938 = vst.msk [vmem:[#allocation5 + $0x58] sm:$0xff] %vm9926, 0.0
    %9939 = vst.msk [vmem:[#allocation5 + $0x60] sm:$0xff] %vm9926, 0.0
    %9940 = vst.msk [vmem:[#allocation5 + $0x68] sm:$0xff] %vm9926, 0.0
    %9941 = vst.msk [vmem:[#allocation5 + $0x70] sm:$0xff] %vm9926, 0.0
    %9942 = vst.msk [vmem:[#allocation5 + $0x78] sm:$0xff] %vm9926, 0.0
    %9943 = vst.msk [vmem:[#allocation5 + $0x80] sm:$0xff] %vm9926, 0.0
    %9944 = vst.msk [vmem:[#allocation5 + $0x88] sm:$0xff] %vm9926, 0.0
    %9945 = vst.msk [vmem:[#allocation5] sm:$0xff] %vm9926, %v9910
    %9946 = vst.msk [vmem:[#allocation5 + $0x8] sm:$0xff] %vm9926, %v9911
    %9947 = vst.msk [vmem:[#allocation5 + $0x10] sm:$0xff] %vm9926, %v9912
    %9948 = vst.msk [vmem:[#allocation5 + $0x18] sm:$0xff] %vm9926, %v9913
    %9949 = vst.msk [vmem:[#allocation5 + $0x20] sm:$0xff] %vm9926, %v9914
    %9950 = vst.msk [vmem:[#allocation5 + $0x28] sm:$0xff] %vm9926, %v9915
    %9951 = vst.msk [vmem:[#allocation5 + $0x30] sm:$0xff] %vm9926, %v9916
    %9952 = vst.msk [vmem:[#allocation5 + $0x38] sm:$0xff] %vm9926, %v9917
    %9953 = vst.msk [vmem:[#allocation5 + $0x40] sm:$0xff] %vm9926, %v9918
    %9954 = vst.msk [vmem:[#allocation5 + $0x48] sm:$0xff] %vm9926, %v9919
    %9955 = vst.msk [vmem:[#allocation5 + $0x50] sm:$0xff] %vm9926, %v9920
    %9956 = vst.msk [vmem:[#allocation5 + $0x58] sm:$0xff] %vm9926, %v9921
    %9957 = vst.msk [vmem:[#allocation5 + $0x60] sm:$0xff] %vm9926, %v9922
    %9958 = vst.msk [vmem:[#allocation5 + $0x68] sm:$0xff] %vm9926, %v9923
    %9959 = vst.msk [vmem:[#allocation5 + $0x70] sm:$0xff] %vm9926, %v9924
    %9960 = vst.msk [vmem:[#allocation5 + $0x78] sm:$0xff] %vm9926, %v9925
    %v9961 = vld [vmem:[#allocation5] sm:$0xff]
    %v9962 = vld [vmem:[#allocation5 + $0x8] sm:$0xff]
    %v9963 = vld [vmem:[#allocation5 + $0x10] sm:$0xff]
    %v9964 = vld [vmem:[#allocation5 + $0x18] sm:$0xff]
    %v9965 = vld [vmem:[#allocation5 + $0x20] sm:$0xff]
    %v9966 = vld [vmem:[#allocation5 + $0x28] sm:$0xff]
    %v9967 = vld [vmem:[#allocation5 + $0x30] sm:$0xff]
    %v9968 = vld [vmem:[#allocation5 + $0x38] sm:$0xff]
    %v9969 = vld [vmem:[#allocation5 + $0x40] sm:$0xff]
    %v9970 = vld [vmem:[#allocation5 + $0x48] sm:$0xff]
    %v9971 = vld [vmem:[#allocation5 + $0x50] sm:$0xff]
    %v9972 = vld [vmem:[#allocation5 + $0x58] sm:$0xff]
    %v9973 = vld [vmem:[#allocation5 + $0x60] sm:$0xff]
    %v9974 = vld [vmem:[#allocation5 + $0x68] sm:$0xff]
    %v9975 = vld [vmem:[#allocation5 + $0x70] sm:$0xff]
    %v9976 = vld [vmem:[#allocation5 + $0x78] sm:$0xff]
    %v9977 = vld [vmem:[#allocation5 + $0x1] sm:$0xff]
    %v9978 = vld [vmem:[#allocation5 + $0x9] sm:$0xff]
    %v9979 = vld [vmem:[#allocation5 + $0x11] sm:$0xff]
    %v9980 = vld [vmem:[#allocation5 + $0x19] sm:$0xff]
    %v9981 = vld [vmem:[#allocation5 + $0x21] sm:$0xff]
    %v9982 = vld [vmem:[#allocation5 + $0x29] sm:$0xff]
    %v9983 = vld [vmem:[#allocation5 + $0x31] sm:$0xff]
    %v9984 = vld [vmem:[#allocation5 + $0x39] sm:$0xff]
    %v9985 = vld [vmem:[#allocation5 + $0x41] sm:$0xff]
    %v9986 = vld [vmem:[#allocation5 + $0x49] sm:$0xff]
    %v9987 = vld [vmem:[#allocation5 + $0x51] sm:$0xff]
    %v9988 = vld [vmem:[#allocation5 + $0x59] sm:$0xff]
    %v9989 = vld [vmem:[#allocation5 + $0x61] sm:$0xff]
    %v9990 = vld [vmem:[#allocation5 + $0x69] sm:$0xff]
    %v9991 = vld [vmem:[#allocation5 + $0x71] sm:$0xff]
    %v9992 = vld [vmem:[#allocation5 + $0x79] sm:$0xff]
    %v9993 = vmax.f32 %v9961, %v9977
    %v9994 = vmax.f32 %v9962, %v9978
    %v9995 = vmax.f32 %v9963, %v9979
    %v9996 = vmax.f32 %v9964, %v9980
    %v9997 = vmax.f32 %v9965, %v9981
    %v9998 = vmax.f32 %v9966, %v9982
    %v9999 = vmax.f32 %v9967, %v9983
    %v10000 = vmax.f32 %v9968, %v9984
    %v10001 = vmax.f32 %v9969, %v9985
    %v10002 = vmax.f32 %v9970, %v9986
    %v10003 = vmax.f32 %v9971, %v9987
    %v10004 = vmax.f32 %v9972, %v9988
    %v10005 = vmax.f32 %v9973, %v9989
    %v10006 = vmax.f32 %v9974, %v9990
    %v10007 = vmax.f32 %v9975, %v9991
    %v10008 = vmax.f32 %v9976, %v9992
    %v10009 = vld [vmem:[#allocation5 + $0x80] sm:$0xff]
    %v10010 = vld [vmem:[#allocation5 + $0x81] sm:$0xff]
    %v10011 = vmax.f32 %v10009, %v10010
    %v10012 = vmax.f32 %v9993, %v9994
    %v10013 = vmax.f32 %v9994, %v9995
    %v10014 = vmax.f32 %v9995, %v9996
    %v10015 = vmax.f32 %v9996, %v9997
    %v10016 = vmax.f32 %v9997, %v9998
    %v10017 = vmax.f32 %v9998, %v9999
    %v10018 = vmax.f32 %v9999, %v10000
    %v10019 = vmax.f32 %v10000, %v10001
    %v10020 = vmax.f32 %v10001, %v10002
    %v10021 = vmax.f32 %v10002, %v10003
    %v10022 = vmax.f32 %v10003, %v10004
    %v10023 = vmax.f32 %v10004, %v10005
    %v10024 = vmax.f32 %v10005, %v10006
    %v10025 = vmax.f32 %v10006, %v10007
    %v10026 = vmax.f32 %v10007, %v10008
    %v10027 = vmax.f32 %v10008, %v10011
    %v10028 = vld [vmem:[%s8] sm:$0xff]
    %v10029 = vld [vmem:[%s8 + $0x8] sm:$0xff]
    %v10030 = vld [vmem:[%s8 + $0x10] sm:$0xff]
    %v10031 = vld [vmem:[%s8 + $0x18] sm:$0xff]
    %10032 = vmatpush.msra.mxu0 %v10027
    %10033 = vmatpush.msra.mxu0 %v10026
    %10034 = vmatpush.msra.mxu0 %v10025
    %10035 = vmatpush.msra.mxu0 %v10024
    %10036 = vmatpush.msra.mxu0 %v10023
    %10037 = vmatpush.msra.mxu0 %v10022
    %10038 = vmatpush.msra.mxu0 %v10021
    %10039 = vmatpush.msra.mxu0 %v10020
    %10040 = vmatpush.msra.mxu0 %v10019
    %10041 = vmatpush.msra.mxu0 %v10018
    %10042 = vmatpush.msra.mxu0 %v10017
    %10043 = vmatpush.msra.mxu0 %v10016
    %10044 = vmatpush.msra.mxu0 %v10015
    %10045 = vmatpush.msra.mxu0 %v10014
    %10046 = vmatpush.msra.mxu0 %v10013
    %10047 = vmatpush.msra.mxu0 %v10012
    %10048 = vmatmul.f32.gmra.mxu0 %v10028
    %v10049 = vpop.f32.mrf.mxu0
    %v10050 = vadd.f32 0.0, %v10049
    %10051 = vmatmul.f32.gmra.mxu0 %v10029
    %v10052 = vpop.f32.mrf.mxu0
    %v10053 = vadd.f32 0.0, %v10052
    %10054 = vmatmul.f32.gmra.mxu0 %v10030
    %v10055 = vpop.f32.mrf.mxu0
    %v10056 = vadd.f32 0.0, %v10055
    %10057 = vmatmul.f32.gmra.mxu0 %v10031
    %v10058 = vpop.f32.mrf.mxu0
    %v10059 = vadd.f32 0.0, %v10058
    %10060 = vdwg.mxu0
    %10061 = vst.msk [vmem:[#allocation6] sm:$0xff] %vm9926, 0.0
    %10062 = vst.msk [vmem:[#allocation6 + $0x8] sm:$0xff] %vm9926, 0.0
    %10063 = vst.msk [vmem:[#allocation6 + $0x10] sm:$0xff] %vm9926, 0.0
    %10064 = vst.msk [vmem:[#allocation6 + $0x18] sm:$0xff] %vm9926, 0.0
    %10065 = vst.msk [vmem:[#allocation6 + $0x20] sm:$0xff] %vm9926, 0.0
    %10066 = vst.msk [vmem:[#allocation6 + $0x28] sm:$0xff] %vm9926, 0.0
    %10067 = vst.msk [vmem:[#allocation6 + $0x8] sm:$0xff] %vm9926, %v10050
    %10068 = vst.msk [vmem:[#allocation6 + $0x10] sm:$0xff] %vm9926, %v10053
    %10069 = vst.msk [vmem:[#allocation6 + $0x18] sm:$0xff] %vm9926, %v10056
    %10070 = vst.msk [vmem:[#allocation6 + $0x20] sm:$0xff] %vm9926, %v10059
    %v10071 = vld [vmem:[#allocation6 + $0x3] sm:$0xff]
    %v10072 = vld [vmem:[#allocation6 + $0xb] sm:$0xff]
    %v10073 = vld [vmem:[#allocation6 + $0x13] sm:$0xff]
    %v10074 = vld [vmem:[#allocation6 + $0x1b] sm:$0xff]
    %v10075 = vld [vmem:[%s11] sm:$0xff]
    %v10076 = vld [vmem:[%s11 + $0x8] sm:$0xff]
    %v10077 = vld [vmem:[%s11 + $0x10] sm:$0xff]
    %v10078 = vld [vmem:[%s11 + $0x18] sm:$0xff]
    %10080 = vset.pattern.permute.xlu0 0
    %10081 = vperm.xlu0 %10080, %v10075
    %v10082 = vpop.permute.xlu0 %10081
    %10085 = vset.pattern.permute.xlu0 0
    %10086 = vperm.xlu0 %10085, %v10076
    %v10087 = vpop.permute.xlu0 %10086
    %10090 = vset.pattern.permute.xlu0 0
    %10091 = vperm.xlu0 %10090, %v10077
    %v10092 = vpop.permute.xlu0 %10091
    %10095 = vset.pattern.permute.xlu0 0
    %10096 = vperm.xlu0 %10095, %v10078
    %v10097 = vpop.permute.xlu0 %10096
    %v10099 = vmul.f32 %v10071, %v10082
    %v10100 = vmul.f32 %v10072, %v10087
    %v10101 = vmul.f32 %v10073, %v10092
    %v10102 = vmul.f32 %v10074, %v10097
    %v10103 = vld [vmem:[%s9] sm:$0xf]
    %v10104 = vld [vmem:[%s9 + $0x4] sm:$0xf]
    %v10105 = vld [vmem:[%s9 + $0x8] sm:$0xf]
    %v10106 = vld [vmem:[%s9 + $0xc] sm:$0xf]
    %v10107 = vld [vmem:[%s9 + $0x10] sm:$0xf]
    %v10108 = vld [vmem:[%s9 + $0x14] sm:$0xf]
    %v10109 = vld [vmem:[%s9 + $0x18] sm:$0xf]
    %v10110 = vld [vmem:[%s9 + $0x1c] sm:$0xf]
    %v10111 = vpack.c.bf16 %v10100, %v10099
    %v10112 = vpack.c.bf16 %v10102, %v10101
    %v10113 = vld [vmem:[#allocation6 + $0x4] sm:$0xff]
    %v10114 = vld [vmem:[#allocation6 + $0xc] sm:$0xff]
    %v10115 = vld [vmem:[#allocation6 + $0x14] sm:$0xff]
    %v10116 = vld [vmem:[#allocation6 + $0x1c] sm:$0xff]
    %10117 = vset.pattern.permute.xlu0 1
    %10118 = vperm.xlu0 %10117, %v10075
    %v10119 = vpop.permute.xlu0 %10118
    %10121 = vset.pattern.permute.xlu0 1
    %10122 = vperm.xlu0 %10121, %v10076
    %v10123 = vpop.permute.xlu0 %10122
    %10125 = vset.pattern.permute.xlu0 1
    %10126 = vperm.xlu0 %10125, %v10077
    %v10127 = vpop.permute.xlu0 %10126
    %10129 = vset.pattern.permute.xlu0 1
    %10130 = vperm.xlu0 %10129, %v10078
    %v10131 = vpop.permute.xlu0 %10130
    %v10133 = vmul.f32 %v10113, %v10119
    %v10134 = vmul.f32 %v10114, %v10123
    %v10135 = vmul.f32 %v10115, %v10127
    %v10136 = vmul.f32 %v10116, %v10131
    %v10137 = vld [vmem:[%s9 + $0x20] sm:$0xf]
    %v10138 = vld [vmem:[%s9 + $0x24] sm:$0xf]
    %v10139 = vld [vmem:[%s9 + $0x28] sm:$0xf]
    %v10140 = vld [vmem:[%s9 + $0x2c] sm:$0xf]
    %v10141 = vld [vmem:[%s9 + $0x30] sm:$0xf]
    %v10142 = vld [vmem:[%s9 + $0x34] sm:$0xf]
    %v10143 = vld [vmem:[%s9 + $0x38] sm:$0xf]
    %v10144 = vld [vmem:[%s9 + $0x3c] sm:$0xf]
    %v10145 = vpack.c.bf16 %v10134, %v10133
    %v10146 = vpack.c.bf16 %v10136, %v10135
    %v10155 = vunpack.c.l.b16 %v10137
    %v10156 = vunpack.c.l.b16 %v10138
    %v10157 = vunpack.c.l.b16 %v10139
    %v10158 = vunpack.c.l.b16 %v10140
    %v10159 = vunpack.c.l.b16 %v10141
    %v10160 = vunpack.c.l.b16 %v10142
    %v10161 = vunpack.c.l.b16 %v10143
    %v10162 = vunpack.c.l.b16 %v10144
    %v10163 = vpack.c.b16 %v10156, %v10155
    %v10164 = vpack.c.b16 %v10158, %v10157
    %v10165 = vpack.c.b16 %v10160, %v10159
    %v10166 = vpack.c.b16 %v10162, %v10161
    %v10172 = vsel %vm9926, %v10145, 0
    %v10175 = vsel %vm9926, %v10146, 0
    %10177 = vmatpush.bf16.msra.mxu0 0
    %10178 = vmatpush.bf16.msra.mxu0 0
    %10179 = vmatpush.bf16.msra.mxu0 0
    %10180 = vmatpush.bf16.msra.mxu0 0
    %10181 = vmatpush.bf16.msra.mxu0 %v10166
    %10182 = vmatpush.bf16.msra.mxu0 %v10165
    %10183 = vmatpush.bf16.msra.mxu0 %v10164
    %10184 = vmatpush.bf16.msra.mxu0 %v10163
    %10185 = vmatmul.bf16.gmra.mxu0 %v10172
    %v10186 = vpop.f32.mrf.mxu0
    %v10187 = vadd.f32 0.0, %v10186
    %v10188 = vpop.f32.mrf.mxu0
    %v10189 = vadd.f32 0.0, %v10188
    %10190 = vmatmul.bf16.gmra.mxu0 %v10175
    %v10191 = vpop.f32.mrf.mxu0
    %v10192 = vadd.f32 0.0, %v10191
    %v10193 = vpop.f32.mrf.mxu0
    %v10194 = vadd.f32 0.0, %v10193
    %10195 = vdwg.mxu0
    %v10204 = vunpack.c.l.b16 %v10103
    %v10205 = vunpack.c.l.b16 %v10104
    %v10206 = vunpack.c.l.b16 %v10105
    %v10207 = vunpack.c.l.b16 %v10106
    %v10208 = vunpack.c.l.b16 %v10107
    %v10209 = vunpack.c.l.b16 %v10108
    %v10210 = vunpack.c.l.b16 %v10109
    %v10211 = vunpack.c.l.b16 %v10110
    %v10212 = vpack.c.b16 %v10205, %v10204
    %v10213 = vpack.c.b16 %v10207, %v10206
    %v10214 = vpack.c.b16 %v10209, %v10208
    %v10215 = vpack.c.b16 %v10211, %v10210
    %v10221 = vsel %vm9926, %v10111, 0
    %v10224 = vsel %vm9926, %v10112, 0
    %10226 = vmatpush.bf16.msra.mxu0 0
    %10227 = vmatpush.bf16.msra.mxu0 0
    %10228 = vmatpush.bf16.msra.mxu0 0
    %10229 = vmatpush.bf16.msra.mxu0 0
    %10230 = vmatpush.bf16.msra.mxu0 %v10215
    %10231 = vmatpush.bf16.msra.mxu0 %v10214
    %10232 = vmatpush.bf16.msra.mxu0 %v10213
    %10233 = vmatpush.bf16.msra.mxu0 %v10212
    %10234 = vmatmul.bf16.gmra.mxu0 %v10221
    %v10235 = vpop.f32.mrf.mxu0
    %v10236 = vadd.f32 %v10187, %v10235
    %v10237 = vpop.f32.mrf.mxu0
    %v10238 = vadd.f32 %v10189, %v10237
    %10239 = vmatmul.bf16.gmra.mxu0 %v10224
    %v10240 = vpop.f32.mrf.mxu0
    %v10241 = vadd.f32 %v10192, %v10240
    %v10242 = vpop.f32.mrf.mxu0
    %v10243 = vadd.f32 %v10194, %v10242
    %10244 = vdwg.mxu0
    %v10245 = vld [vmem:[#allocation6 + $0x5] sm:$0xff]
    %v10246 = vld [vmem:[#allocation6 + $0xd] sm:$0xff]
    %v10247 = vld [vmem:[#allocation6 + $0x15] sm:$0xff]
    %v10248 = vld [vmem:[#allocation6 + $0x1d] sm:$0xff]
    %10249 = vset.pattern.permute.xlu0 2
    %10250 = vperm.xlu0 %10249, %v10075
    %v10251 = vpop.permute.xlu0 %10250
    %10253 = vset.pattern.permute.xlu0 2
    %10254 = vperm.xlu0 %10253, %v10076
    %v10255 = vpop.permute.xlu0 %10254
    %10257 = vset.pattern.permute.xlu0 2
    %10258 = vperm.xlu0 %10257, %v10077
    %v10259 = vpop.permute.xlu0 %10258
    %10261 = vset.pattern.permute.xlu0 2
    %10262 = vperm.xlu0 %10261, %v10078
    %v10263 = vpop.permute.xlu0 %10262
    %v10265 = vmul.f32 %v10245, %v10251
    %v10266 = vmul.f32 %v10246, %v10255
    %v10267 = vmul.f32 %v10247, %v10259
    %v10268 = vmul.f32 %v10248, %v10263
    %v10269 = vld [vmem:[%s9 + $0x40] sm:$0xf]
    %v10270 = vld [vmem:[%s9 + $0x44] sm:$0xf]
    %v10271 = vld [vmem:[%s9 + $0x48] sm:$0xf]
    %v10272 = vld [vmem:[%s9 + $0x4c] sm:$0xf]
    %v10273 = vld [vmem:[%s9 + $0x50] sm:$0xf]
    %v10274 = vld [vmem:[%s9 + $0x54] sm:$0xf]
    %v10275 = vld [vmem:[%s9 + $0x58] sm:$0xf]
    %v10276 = vld [vmem:[%s9 + $0x5c] sm:$0xf]
    %v10277 = vpack.c.bf16 %v10266, %v10265
    %v10278 = vpack.c.bf16 %v10268, %v10267
    %v10287 = vunpack.c.l.b16 %v10269
    %v10288 = vunpack.c.l.b16 %v10270
    %v10289 = vunpack.c.l.b16 %v10271
    %v10290 = vunpack.c.l.b16 %v10272
    %v10291 = vunpack.c.l.b16 %v10273
    %v10292 = vunpack.c.l.b16 %v10274
    %v10293 = vunpack.c.l.b16 %v10275
    %v10294 = vunpack.c.l.b16 %v10276
    %v10295 = vpack.c.b16 %v10288, %v10287
    %v10296 = vpack.c.b16 %v10290, %v10289
    %v10297 = vpack.c.b16 %v10292, %v10291
    %v10298 = vpack.c.b16 %v10294, %v10293
    %v10304 = vsel %vm9926, %v10277, 0
    %v10307 = vsel %vm9926, %v10278, 0
    %10309 = vmatpush.bf16.msra.mxu0 0
    %10310 = vmatpush.bf16.msra.mxu0 0
    %10311 = vmatpush.bf16.msra.mxu0 0
    %10312 = vmatpush.bf16.msra.mxu0 0
    %10313 = vmatpush.bf16.msra.mxu0 %v10298
    %10314 = vmatpush.bf16.msra.mxu0 %v10297
    %10315 = vmatpush.bf16.msra.mxu0 %v10296
    %10316 = vmatpush.bf16.msra.mxu0 %v10295
    %10317 = vmatmul.bf16.gmra.mxu0 %v10304
    %v10318 = vpop.f32.mrf.mxu0
    %v10319 = vadd.f32 0.0, %v10318
    %v10320 = vpop.f32.mrf.mxu0
    %v10321 = vadd.f32 0.0, %v10320
    %10322 = vmatmul.bf16.gmra.mxu0 %v10307
    %v10323 = vpop.f32.mrf.mxu0
    %v10324 = vadd.f32 0.0, %v10323
    %v10325 = vpop.f32.mrf.mxu0
    %v10326 = vadd.f32 0.0, %v10325
    %10327 = vdwg.mxu0
    %v10328 = vadd.f32 %v10236, %v10319
    %v10329 = vadd.f32 %v10238, %v10321
    %v10330 = vadd.f32 %v10241, %v10324
    %v10331 = vadd.f32 %v10243, %v10326
    %v10332 = vld [vmem:[#allocation6 + $0x7] sm:$0xff]
    %v10333 = vld [vmem:[#allocation6 + $0xf] sm:$0xff]
    %v10334 = vld [vmem:[#allocation6 + $0x17] sm:$0xff]
    %v10335 = vld [vmem:[#allocation6 + $0x1f] sm:$0xff]
    %10336 = vset.pattern.permute.xlu0 3
    %10337 = vperm.xlu0 %10336, %v10075
    %v10338 = vpop.permute.xlu0 %10337
    %10340 = vset.pattern.permute.xlu0 3
    %10341 = vperm.xlu0 %10340, %v10076
    %v10342 = vpop.permute.xlu0 %10341
    %10344 = vset.pattern.permute.xlu0 3
    %10345 = vperm.xlu0 %10344, %v10077
    %v10346 = vpop.permute.xlu0 %10345
    %10348 = vset.pattern.permute.xlu0 3
    %10349 = vperm.xlu0 %10348, %v10078
    %v10350 = vpop.permute.xlu0 %10349
    %v10352 = vmul.f32 %v10332, %v10338
    %v10353 = vmul.f32 %v10333, %v10342
    %v10354 = vmul.f32 %v10334, %v10346
    %v10355 = vmul.f32 %v10335, %v10350
    %v10356 = vld [vmem:[%s9 + $0x60] sm:$0xf]
    %v10357 = vld [vmem:[%s9 + $0x64] sm:$0xf]
    %v10358 = vld [vmem:[%s9 + $0x68] sm:$0xf]
    %v10359 = vld [vmem:[%s9 + $0x6c] sm:$0xf]
    %v10360 = vld [vmem:[%s9 + $0x70] sm:$0xf]
    %v10361 = vld [vmem:[%s9 + $0x74] sm:$0xf]
    %v10362 = vld [vmem:[%s9 + $0x78] sm:$0xf]
    %v10363 = vld [vmem:[%s9 + $0x7c] sm:$0xf]
    %v10364 = vpack.c.bf16 %v10353, %v10352
    %v10365 = vpack.c.bf16 %v10355, %v10354
    %v10374 = vunpack.c.l.b16 %v10356
    %v10375 = vunpack.c.l.b16 %v10357
    %v10376 = vunpack.c.l.b16 %v10358
    %v10377 = vunpack.c.l.b16 %v10359
    %v10378 = vunpack.c.l.b16 %v10360
    %v10379 = vunpack.c.l.b16 %v10361
    %v10380 = vunpack.c.l.b16 %v10362
    %v10381 = vunpack.c.l.b16 %v10363
    %v10382 = vpack.c.b16 %v10375, %v10374
    %v10383 = vpack.c.b16 %v10377, %v10376
    %v10384 = vpack.c.b16 %v10379, %v10378
    %v10385 = vpack.c.b16 %v10381, %v10380
    %v10391 = vsel %vm9926, %v10364, 0
    %v10394 = vsel %vm9926, %v10365, 0
    %10396 = vmatpush.bf16.msra.mxu0 0
    %10397 = vmatpush.bf16.msra.mxu0 0
    %10398 = vmatpush.bf16.msra.mxu0 0
    %10399 = vmatpush.bf16.msra.mxu0 0
    %10400 = vmatpush.bf16.msra.mxu0 %v10385
    %10401 = vmatpush.bf16.msra.mxu0 %v10384
    %10402 = vmatpush.bf16.msra.mxu0 %v10383
    %10403 = vmatpush.bf16.msra.mxu0 %v10382
    %10404 = vmatmul.bf16.gmra.mxu0 %v10391
    %v10405 = vpop.f32.mrf.mxu0
    %v10406 = vadd.f32 0.0, %v10405
    %v10407 = vpop.f32.mrf.mxu0
    %v10408 = vadd.f32 0.0, %v10407
    %10409 = vmatmul.bf16.gmra.mxu0 %v10394
    %v10410 = vpop.f32.mrf.mxu0
    %v10411 = vadd.f32 0.0, %v10410
    %v10412 = vpop.f32.mrf.mxu0
    %v10413 = vadd.f32 0.0, %v10412
    %10414 = vdwg.mxu0
    %v10415 = vadd.f32 %v10328, %v10406
    %v10416 = vadd.f32 %v10329, %v10408
    %v10417 = vadd.f32 %v10330, %v10411
    %v10418 = vadd.f32 %v10331, %v10413
    %v10419 = vld [vmem:[#allocation6 + $0x8] sm:$0xff]
    %v10420 = vld [vmem:[#allocation6 + $0x10] sm:$0xff]
    %v10421 = vld [vmem:[#allocation6 + $0x18] sm:$0xff]
    %v10422 = vld [vmem:[#allocation6 + $0x20] sm:$0xff]
    %10423 = vset.pattern.permute.xlu0 4
    %10424 = vperm.xlu0 %10423, %v10075
    %v10425 = vpop.permute.xlu0 %10424
    %10427 = vset.pattern.permute.xlu0 4
    %10428 = vperm.xlu0 %10427, %v10076
    %v10429 = vpop.permute.xlu0 %10428
    %10431 = vset.pattern.permute.xlu0 4
    %10432 = vperm.xlu0 %10431, %v10077
    %v10433 = vpop.permute.xlu0 %10432
    %10435 = vset.pattern.permute.xlu0 4
    %10436 = vperm.xlu0 %10435, %v10078
    %v10437 = vpop.permute.xlu0 %10436
    %v10439 = vmul.f32 %v10419, %v10425
    %v10440 = vmul.f32 %v10420, %v10429
    %v10441 = vmul.f32 %v10421, %v10433
    %v10442 = vmul.f32 %v10422, %v10437
    %v10443 = vld [vmem:[%s9 + $0x80] sm:$0xf]
    %v10444 = vld [vmem:[%s9 + $0x84] sm:$0xf]
    %v10445 = vld [vmem:[%s9 + $0x88] sm:$0xf]
    %v10446 = vld [vmem:[%s9 + $0x8c] sm:$0xf]
    %v10447 = vld [vmem:[%s9 + $0x90] sm:$0xf]
    %v10448 = vld [vmem:[%s9 + $0x94] sm:$0xf]
    %v10449 = vld [vmem:[%s9 + $0x98] sm:$0xf]
    %v10450 = vld [vmem:[%s9 + $0x9c] sm:$0xf]
    %v10451 = vpack.c.bf16 %v10440, %v10439
    %v10452 = vpack.c.bf16 %v10442, %v10441
    %v10461 = vunpack.c.l.b16 %v10443
    %v10462 = vunpack.c.l.b16 %v10444
    %v10463 = vunpack.c.l.b16 %v10445
    %v10464 = vunpack.c.l.b16 %v10446
    %v10465 = vunpack.c.l.b16 %v10447
    %v10466 = vunpack.c.l.b16 %v10448
    %v10467 = vunpack.c.l.b16 %v10449
    %v10468 = vunpack.c.l.b16 %v10450
    %v10469 = vpack.c.b16 %v10462, %v10461
    %v10470 = vpack.c.b16 %v10464, %v10463
    %v10471 = vpack.c.b16 %v10466, %v10465
    %v10472 = vpack.c.b16 %v10468, %v10467
    %v10478 = vsel %vm9926, %v10451, 0
    %v10481 = vsel %vm9926, %v10452, 0
    %10483 = vmatpush.bf16.msra.mxu0 0
    %10484 = vmatpush.bf16.msra.mxu0 0
    %10485 = vmatpush.bf16.msra.mxu0 0
    %10486 = vmatpush.bf16.msra.mxu0 0
    %10487 = vmatpush.bf16.msra.mxu0 %v10472
    %10488 = vmatpush.bf16.msra.mxu0 %v10471
    %10489 = vmatpush.bf16.msra.mxu0 %v10470
    %10490 = vmatpush.bf16.msra.mxu0 %v10469
    %10491 = vmatmul.bf16.gmra.mxu0 %v10478
    %v10492 = vpop.f32.mrf.mxu0
    %v10493 = vadd.f32 0.0, %v10492
    %v10494 = vpop.f32.mrf.mxu0
    %v10495 = vadd.f32 0.0, %v10494
    %10496 = vmatmul.bf16.gmra.mxu0 %v10481
    %v10497 = vpop.f32.mrf.mxu0
    %v10498 = vadd.f32 0.0, %v10497
    %v10499 = vpop.f32.mrf.mxu0
    %v10500 = vadd.f32 0.0, %v10499
    %10501 = vdwg.mxu0
    %v10502 = vadd.f32 %v10415, %v10493
    %v10503 = vadd.f32 %v10416, %v10495
    %v10504 = vadd.f32 %v10417, %v10498
    %v10505 = vadd.f32 %v10418, %v10500
    %v10506 = vld [vmem:[#allocation6 + $0x9] sm:$0xff]
    %v10507 = vld [vmem:[#allocation6 + $0x11] sm:$0xff]
    %v10508 = vld [vmem:[#allocation6 + $0x19] sm:$0xff]
    %v10509 = vld [vmem:[#allocation6 + $0x21] sm:$0xff]
    %10510 = vset.pattern.permute.xlu0 5
    %10511 = vperm.xlu0 %10510, %v10075
    %v10512 = vpop.permute.xlu0 %10511
    %10514 = vset.pattern.permute.xlu0 5
    %10515 = vperm.xlu0 %10514, %v10076
    %v10516 = vpop.permute.xlu0 %10515
    %10518 = vset.pattern.permute.xlu0 5
    %10519 = vperm.xlu0 %10518, %v10077
    %v10520 = vpop.permute.xlu0 %10519
    %10522 = vset.pattern.permute.xlu0 5
    %10523 = vperm.xlu0 %10522, %v10078
    %v10524 = vpop.permute.xlu0 %10523
    %v10526 = vmul.f32 %v10506, %v10512
    %v10527 = vmul.f32 %v10507, %v10516
    %v10528 = vmul.f32 %v10508, %v10520
    %v10529 = vmul.f32 %v10509, %v10524
    %v10530 = vld [vmem:[%s9 + $0xa0] sm:$0xf]
    %v10531 = vld [vmem:[%s9 + $0xa4] sm:$0xf]
    %v10532 = vld [vmem:[%s9 + $0xa8] sm:$0xf]
    %v10533 = vld [vmem:[%s9 + $0xac] sm:$0xf]
    %v10534 = vld [vmem:[%s9 + $0xb0] sm:$0xf]
    %v10535 = vld [vmem:[%s9 + $0xb4] sm:$0xf]
    %v10536 = vld [vmem:[%s9 + $0xb8] sm:$0xf]
    %v10537 = vld [vmem:[%s9 + $0xbc] sm:$0xf]
    %v10538 = vpack.c.bf16 %v10527, %v10526
    %v10539 = vpack.c.bf16 %v10529, %v10528
    %v10548 = vunpack.c.l.b16 %v10530
    %v10549 = vunpack.c.l.b16 %v10531
    %v10550 = vunpack.c.l.b16 %v10532
    %v10551 = vunpack.c.l.b16 %v10533
    %v10552 = vunpack.c.l.b16 %v10534
    %v10553 = vunpack.c.l.b16 %v10535
    %v10554 = vunpack.c.l.b16 %v10536
    %v10555 = vunpack.c.l.b16 %v10537
    %v10556 = vpack.c.b16 %v10549, %v10548
    %v10557 = vpack.c.b16 %v10551, %v10550
    %v10558 = vpack.c.b16 %v10553, %v10552
    %v10559 = vpack.c.b16 %v10555, %v10554
    %v10565 = vsel %vm9926, %v10538, 0
    %v10568 = vsel %vm9926, %v10539, 0
    %10570 = vmatpush.bf16.msra.mxu0 0
    %10571 = vmatpush.bf16.msra.mxu0 0
    %10572 = vmatpush.bf16.msra.mxu0 0
    %10573 = vmatpush.bf16.msra.mxu0 0
    %10574 = vmatpush.bf16.msra.mxu0 %v10559
    %10575 = vmatpush.bf16.msra.mxu0 %v10558
    %10576 = vmatpush.bf16.msra.mxu0 %v10557
    %10577 = vmatpush.bf16.msra.mxu0 %v10556
    %10578 = vmatmul.bf16.gmra.mxu0 %v10565
    %v10579 = vpop.f32.mrf.mxu0
    %v10580 = vadd.f32 0.0, %v10579
    %v10581 = vpop.f32.mrf.mxu0
    %v10582 = vadd.f32 0.0, %v10581
    %10583 = vmatmul.bf16.gmra.mxu0 %v10568
    %v10584 = vpop.f32.mrf.mxu0
    %v10585 = vadd.f32 0.0, %v10584
    %v10586 = vpop.f32.mrf.mxu0
    %v10587 = vadd.f32 0.0, %v10586
    %10588 = vdwg.mxu0
    %v10589 = vadd.f32 %v10502, %v10580
    %v10590 = vadd.f32 %v10503, %v10582
    %v10591 = vadd.f32 %v10504, %v10585
    %v10592 = vadd.f32 %v10505, %v10587
    %v10593 = vld [vmem:[#allocation6 + $0xb] sm:$0xff]
    %v10594 = vld [vmem:[#allocation6 + $0x13] sm:$0xff]
    %v10595 = vld [vmem:[#allocation6 + $0x1b] sm:$0xff]
    %v10596 = vld [vmem:[#allocation6 + $0x23] sm:$0xff]
    %10597 = vset.pattern.permute.xlu0 6
    %10598 = vperm.xlu0 %10597, %v10075
    %v10599 = vpop.permute.xlu0 %10598
    %10601 = vset.pattern.permute.xlu0 6
    %10602 = vperm.xlu0 %10601, %v10076
    %v10603 = vpop.permute.xlu0 %10602
    %10605 = vset.pattern.permute.xlu0 6
    %10606 = vperm.xlu0 %10605, %v10077
    %v10607 = vpop.permute.xlu0 %10606
    %10609 = vset.pattern.permute.xlu0 6
    %10610 = vperm.xlu0 %10609, %v10078
    %v10611 = vpop.permute.xlu0 %10610
    %v10613 = vmul.f32 %v10593, %v10599
    %v10614 = vmul.f32 %v10594, %v10603
    %v10615 = vmul.f32 %v10595, %v10607
    %v10616 = vmul.f32 %v10596, %v10611
    %v10617 = vld [vmem:[%s9 + $0xc0] sm:$0xf]
    %v10618 = vld [vmem:[%s9 + $0xc4] sm:$0xf]
    %v10619 = vld [vmem:[%s9 + $0xc8] sm:$0xf]
    %v10620 = vld [vmem:[%s9 + $0xcc] sm:$0xf]
    %v10621 = vld [vmem:[%s9 + $0xd0] sm:$0xf]
    %v10622 = vld [vmem:[%s9 + $0xd4] sm:$0xf]
    %v10623 = vld [vmem:[%s9 + $0xd8] sm:$0xf]
    %v10624 = vld [vmem:[%s9 + $0xdc] sm:$0xf]
    %v10625 = vpack.c.bf16 %v10614, %v10613
    %v10626 = vpack.c.bf16 %v10616, %v10615
    %v10635 = vunpack.c.l.b16 %v10617
    %v10636 = vunpack.c.l.b16 %v10618
    %v10637 = vunpack.c.l.b16 %v10619
    %v10638 = vunpack.c.l.b16 %v10620
    %v10639 = vunpack.c.l.b16 %v10621
    %v10640 = vunpack.c.l.b16 %v10622
    %v10641 = vunpack.c.l.b16 %v10623
    %v10642 = vunpack.c.l.b16 %v10624
    %v10643 = vpack.c.b16 %v10636, %v10635
    %v10644 = vpack.c.b16 %v10638, %v10637
    %v10645 = vpack.c.b16 %v10640, %v10639
    %v10646 = vpack.c.b16 %v10642, %v10641
    %v10652 = vsel %vm9926, %v10625, 0
    %v10655 = vsel %vm9926, %v10626, 0
    %10657 = vmatpush.bf16.msra.mxu0 0
    %10658 = vmatpush.bf16.msra.mxu0 0
    %10659 = vmatpush.bf16.msra.mxu0 0
    %10660 = vmatpush.bf16.msra.mxu0 0
    %10661 = vmatpush.bf16.msra.mxu0 %v10646
    %10662 = vmatpush.bf16.msra.mxu0 %v10645
    %10663 = vmatpush.bf16.msra.mxu0 %v10644
    %10664 = vmatpush.bf16.msra.mxu0 %v10643
    %10665 = vmatmul.bf16.gmra.mxu0 %v10652
    %v10666 = vpop.f32.mrf.mxu0
    %v10667 = vadd.f32 0.0, %v10666
    %v10668 = vpop.f32.mrf.mxu0
    %v10669 = vadd.f32 0.0, %v10668
    %10670 = vmatmul.bf16.gmra.mxu0 %v10655
    %v10671 = vpop.f32.mrf.mxu0
    %v10672 = vadd.f32 0.0, %v10671
    %v10673 = vpop.f32.mrf.mxu0
    %v10674 = vadd.f32 0.0, %v10673
    %10675 = vdwg.mxu0
    %v10676 = vadd.f32 %v10589, %v10667
    %v10677 = vadd.f32 %v10590, %v10669
    %v10678 = vadd.f32 %v10591, %v10672
    %v10679 = vadd.f32 %v10592, %v10674
    %v10680 = vld [vmem:[#allocation6 + $0xc] sm:$0xff]
    %v10681 = vld [vmem:[#allocation6 + $0x14] sm:$0xff]
    %v10682 = vld [vmem:[#allocation6 + $0x1c] sm:$0xff]
    %v10683 = vld [vmem:[#allocation6 + $0x24] sm:$0xff]
    %10684 = vset.pattern.permute.xlu0 7
    %10685 = vperm.xlu0 %10684, %v10075
    %v10686 = vpop.permute.xlu0 %10685
    %10688 = vset.pattern.permute.xlu0 7
    %10689 = vperm.xlu0 %10688, %v10076
    %v10690 = vpop.permute.xlu0 %10689
    %10692 = vset.pattern.permute.xlu0 7
    %10693 = vperm.xlu0 %10692, %v10077
    %v10694 = vpop.permute.xlu0 %10693
    %10696 = vset.pattern.permute.xlu0 7
    %10697 = vperm.xlu0 %10696, %v10078
    %v10698 = vpop.permute.xlu0 %10697
    %v10700 = vmul.f32 %v10680, %v10686
    %v10701 = vmul.f32 %v10681, %v10690
    %v10702 = vmul.f32 %v10682, %v10694
    %v10703 = vmul.f32 %v10683, %v10698
    %v10704 = vld [vmem:[%s9 + $0xe0] sm:$0xf]
    %v10705 = vld [vmem:[%s9 + $0xe4] sm:$0xf]
    %v10706 = vld [vmem:[%s9 + $0xe8] sm:$0xf]
    %v10707 = vld [vmem:[%s9 + $0xec] sm:$0xf]
    %v10708 = vld [vmem:[%s9 + $0xf0] sm:$0xf]
    %v10709 = vld [vmem:[%s9 + $0xf4] sm:$0xf]
    %v10710 = vld [vmem:[%s9 + $0xf8] sm:$0xf]
    %v10711 = vld [vmem:[%s9 + $0xfc] sm:$0xf]
    %v10712 = vpack.c.bf16 %v10701, %v10700
    %v10713 = vpack.c.bf16 %v10703, %v10702
    %v10722 = vunpack.c.l.b16 %v10704
    %v10723 = vunpack.c.l.b16 %v10705
    %v10724 = vunpack.c.l.b16 %v10706
    %v10725 = vunpack.c.l.b16 %v10707
    %v10726 = vunpack.c.l.b16 %v10708
    %v10727 = vunpack.c.l.b16 %v10709
    %v10728 = vunpack.c.l.b16 %v10710
    %v10729 = vunpack.c.l.b16 %v10711
    %v10730 = vpack.c.b16 %v10723, %v10722
    %v10731 = vpack.c.b16 %v10725, %v10724
    %v10732 = vpack.c.b16 %v10727, %v10726
    %v10733 = vpack.c.b16 %v10729, %v10728
    %v10739 = vsel %vm9926, %v10712, 0
    %v10742 = vsel %vm9926, %v10713, 0
    %10744 = vmatpush.bf16.msra.mxu0 0
    %10745 = vmatpush.bf16.msra.mxu0 0
    %10746 = vmatpush.bf16.msra.mxu0 0
    %10747 = vmatpush.bf16.msra.mxu0 0
    %10748 = vmatpush.bf16.msra.mxu0 %v10733
    %10749 = vmatpush.bf16.msra.mxu0 %v10732
    %10750 = vmatpush.bf16.msra.mxu0 %v10731
    %10751 = vmatpush.bf16.msra.mxu0 %v10730
    %10752 = vmatmul.bf16.gmra.mxu0 %v10739
    %v10753 = vpop.f32.mrf.mxu0
    %v10754 = vadd.f32 0.0, %v10753
    %v10755 = vpop.f32.mrf.mxu0
    %v10756 = vadd.f32 0.0, %v10755
    %10757 = vmatmul.bf16.gmra.mxu0 %v10742
    %v10758 = vpop.f32.mrf.mxu0
    %v10759 = vadd.f32 0.0, %v10758
    %v10760 = vpop.f32.mrf.mxu0
    %v10761 = vadd.f32 0.0, %v10760
    %10762 = vdwg.mxu0
    %v10763 = vadd.f32 %v10676, %v10754
    %v10764 = vadd.f32 %v10677, %v10756
    %v10765 = vadd.f32 %v10678, %v10759
    %v10766 = vadd.f32 %v10679, %v10761
    %v10767 = vld [vmem:[#allocation6 + $0xd] sm:$0xff]
    %v10768 = vld [vmem:[#allocation6 + $0x15] sm:$0xff]
    %v10769 = vld [vmem:[#allocation6 + $0x1d] sm:$0xff]
    %v10770 = vld [vmem:[#allocation6 + $0x25] sm:$0xff]
    %10771 = vset.pattern.permute.xlu0 8
    %10772 = vperm.xlu0 %10771, %v10075
    %v10773 = vpop.permute.xlu0 %10772
    %10775 = vset.pattern.permute.xlu0 8
    %10776 = vperm.xlu0 %10775, %v10076
    %v10777 = vpop.permute.xlu0 %10776
    %10779 = vset.pattern.permute.xlu0 8
    %10780 = vperm.xlu0 %10779, %v10077
    %v10781 = vpop.permute.xlu0 %10780
    %10783 = vset.pattern.permute.xlu0 8
    %10784 = vperm.xlu0 %10783, %v10078
    %v10785 = vpop.permute.xlu0 %10784
    %v10787 = vmul.f32 %v10767, %v10773
    %v10788 = vmul.f32 %v10768, %v10777
    %v10789 = vmul.f32 %v10769, %v10781
    %v10790 = vmul.f32 %v10770, %v10785
    %v10791 = vld [vmem:[%s9 + $0x100] sm:$0xf]
    %v10792 = vld [vmem:[%s9 + $0x104] sm:$0xf]
    %v10793 = vld [vmem:[%s9 + $0x108] sm:$0xf]
    %v10794 = vld [vmem:[%s9 + $0x10c] sm:$0xf]
    %v10795 = vld [vmem:[%s9 + $0x110] sm:$0xf]
    %v10796 = vld [vmem:[%s9 + $0x114] sm:$0xf]
    %v10797 = vld [vmem:[%s9 + $0x118] sm:$0xf]
    %v10798 = vld [vmem:[%s9 + $0x11c] sm:$0xf]
    %v10799 = vpack.c.bf16 %v10788, %v10787
    %v10800 = vpack.c.bf16 %v10790, %v10789
    %v10809 = vunpack.c.l.b16 %v10791
    %v10810 = vunpack.c.l.b16 %v10792
    %v10811 = vunpack.c.l.b16 %v10793
    %v10812 = vunpack.c.l.b16 %v10794
    %v10813 = vunpack.c.l.b16 %v10795
    %v10814 = vunpack.c.l.b16 %v10796
    %v10815 = vunpack.c.l.b16 %v10797
    %v10816 = vunpack.c.l.b16 %v10798
    %v10817 = vpack.c.b16 %v10810, %v10809
    %v10818 = vpack.c.b16 %v10812, %v10811
    %v10819 = vpack.c.b16 %v10814, %v10813
    %v10820 = vpack.c.b16 %v10816, %v10815
    %v10826 = vsel %vm9926, %v10799, 0
    %v10829 = vsel %vm9926, %v10800, 0
    %10831 = vmatpush.bf16.msra.mxu0 0
    %10832 = vmatpush.bf16.msra.mxu0 0
    %10833 = vmatpush.bf16.msra.mxu0 0
    %10834 = vmatpush.bf16.msra.mxu0 0
    %10835 = vmatpush.bf16.msra.mxu0 %v10820
    %10836 = vmatpush.bf16.msra.mxu0 %v10819
    %10837 = vmatpush.bf16.msra.mxu0 %v10818
    %10838 = vmatpush.bf16.msra.mxu0 %v10817
    %10839 = vmatmul.bf16.gmra.mxu0 %v10826
    %v10840 = vpop.f32.mrf.mxu0
    %v10841 = vadd.f32 0.0, %v10840
    %v10842 = vpop.f32.mrf.mxu0
    %v10843 = vadd.f32 0.0, %v10842
    %10844 = vmatmul.bf16.gmra.mxu0 %v10829
    %v10845 = vpop.f32.mrf.mxu0
    %v10846 = vadd.f32 0.0, %v10845
    %v10847 = vpop.f32.mrf.mxu0
    %v10848 = vadd.f32 0.0, %v10847
    %10849 = vdwg.mxu0
    %v10850 = vadd.f32 %v10763, %v10841
    %v10851 = vadd.f32 %v10764, %v10843
    %v10852 = vadd.f32 %v10765, %v10846
    %v10853 = vadd.f32 %v10766, %v10848
    %v10854 = vld [vmem:[%s10] sm:$0x1]
    %v10856 = vperm.slane %v10854, 0
    %v10858 = vadd.f32 %v10850, %v10856
    %v10859 = vadd.f32 %v10851, %v10856
    %v10860 = vadd.f32 %v10852, %v10856
    %v10861 = vadd.f32 %v10853, %v10856
    %v10862 = vmax.f32 %v10858, 0.0
    %v10863 = vmax.f32 %v10859, 0.0
    %v10864 = vmax.f32 %v10860, 0.0
    %v10865 = vmax.f32 %v10861, 0.0
    %10866 = vst [vmem:[#allocation7] sm:$0xff] 0.0
    %10867 = vst [vmem:[#allocation7 + $0x8] sm:$0xff] 0.0
    %10868 = vst [vmem:[#allocation7 + $0x10] sm:$0xff] 0.0
    %10869 = vst [vmem:[#allocation7 + $0x18] sm:$0xff] 0.0
    %10870 = vst [vmem:[#allocation7 + $0x20] sm:$0xff] 0.0
    %10871 = vst [vmem:[#allocation7] sm:$0xff] %v10862
    %10872 = vst [vmem:[#allocation7 + $0x8] sm:$0xff] %v10863
    %10873 = vst [vmem:[#allocation7 + $0x10] sm:$0xff] %v10864
    %10874 = vst [vmem:[#allocation7 + $0x18] sm:$0xff] %v10865
    %v10875 = vld [vmem:[#allocation7] sm:$0xff]
    %v10876 = vld [vmem:[#allocation7 + $0x8] sm:$0xff]
    %v10877 = vld [vmem:[#allocation7 + $0x10] sm:$0xff]
    %v10878 = vld [vmem:[#allocation7 + $0x18] sm:$0xff]
    %v10879 = vld [vmem:[#allocation7 + $0x1] sm:$0xff]
    %v10880 = vld [vmem:[#allocation7 + $0x9] sm:$0xff]
    %v10881 = vld [vmem:[#allocation7 + $0x11] sm:$0xff]
    %v10882 = vld [vmem:[#allocation7 + $0x19] sm:$0xff]
    %v10883 = vmax.f32 %v10875, %v10879
    %v10884 = vmax.f32 %v10876, %v10880
    %v10885 = vmax.f32 %v10877, %v10881
    %v10886 = vmax.f32 %v10878, %v10882
    %v10887 = vld [vmem:[#allocation7 + $0x4] sm:$0xff]
    %v10888 = vld [vmem:[#allocation7 + $0xc] sm:$0xff]
    %v10889 = vld [vmem:[#allocation7 + $0x14] sm:$0xff]
    %v10890 = vld [vmem:[#allocation7 + $0x1c] sm:$0xff]
    %v10891 = vld [vmem:[#allocation7 + $0x5] sm:$0xff]
    %v10892 = vld [vmem:[#allocation7 + $0xd] sm:$0xff]
    %v10893 = vld [vmem:[#allocation7 + $0x15] sm:$0xff]
    %v10894 = vld [vmem:[#allocation7 + $0x1d] sm:$0xff]
    %v10895 = vmax.f32 %v10887, %v10891
    %v10896 = vmax.f32 %v10888, %v10892
    %v10897 = vmax.f32 %v10889, %v10893
    %v10898 = vmax.f32 %v10890, %v10894
    %v10899 = vmax.f32 %v10883, %v10895
    %v10900 = vmax.f32 %v10884, %v10896
    %v10901 = vmax.f32 %v10885, %v10897
    %v10902 = vmax.f32 %v10886, %v10898
    %v10903 = vld [vmem:[%s12] sm:$0x3]
    %v10905 = vsel %vm7255, %v10903, 0
    %10907 = vmatpush.msra.mxu0 0.0
    %10908 = vmatpush.msra.mxu0 0.0
    %10909 = vmatpush.msra.mxu0 0.0
    %10910 = vmatpush.msra.mxu0 0.0
    %10911 = vmatpush.msra.mxu0 0.0
    %10912 = vmatpush.msra.mxu0 0.0
    %10913 = vmatpush.msra.mxu0 0.0
    %10914 = vmatpush.msra.mxu0 0.0
    %10915 = vmatpush.msra.mxu0 0.0
    %10916 = vmatpush.msra.mxu0 0.0
    %10917 = vmatpush.msra.mxu0 0.0
    %10918 = vmatpush.msra.mxu0 0.0
    %10919 = vmatpush.msra.mxu0 %v10902
    %10920 = vmatpush.msra.mxu0 %v10901
    %10921 = vmatpush.msra.mxu0 %v10900
    %10922 = vmatpush.msra.mxu0 %v10899
    %10923 = vmatmul.f32.gmra.mxu0 %v10905
    %v10924 = vpop.f32.mrf.mxu0
    %v10925 = vadd.f32 0.0, %v10924
    %10926 = vdwg.mxu0
    %v10927 = vpack.c.bf16 %v10925, %v10925
    %v10928 = vld [vmem:[%s13] sm:$0xff]
    %v10929 = vld [vmem:[%s13 + $0x8] sm:$0xff]
    %v10930 = vld [vmem:[%s13 + $0x10] sm:$0xff]
    %v10931 = vld [vmem:[%s13 + $0x18] sm:$0xff]
    %v10932 = vld [vmem:[%s13 + $0x20] sm:$0xff]
    %v10933 = vld [vmem:[%s13 + $0x28] sm:$0xff]
    %v10934 = vld [vmem:[%s13 + $0x30] sm:$0xff]
    %v10935 = vld [vmem:[%s13 + $0x38] sm:$0xff]
    %v10936 = vld [vmem:[%s13 + $0x40] sm:$0xff]
    %v10937 = vld [vmem:[%s13 + $0x48] sm:$0xff]
    %v10938 = vld [vmem:[%s13 + $0x50] sm:$0xff]
    %v10939 = vld [vmem:[%s13 + $0x58] sm:$0xff]
    %v10940 = vld [vmem:[%s13 + $0x60] sm:$0xff]
    %v10941 = vld [vmem:[%s13 + $0x68] sm:$0xff]
    %v10942 = vld [vmem:[%s13 + $0x70] sm:$0xff]
    %v10943 = vld [vmem:[%s13 + $0x78] sm:$0xff]
    %v10944 = vld [vmem:[%s14] sm:$0x3]
    %v10946 = vperm.slane %v10944, 0
    %v10947 = vperm.slane %v10944, 1
    %v10966 = vunpack.c.l.b16 %v10928
    %v10967 = vunpack.c.h.b16 %v10928
    %v10968 = vunpack.c.l.b16 %v10929
    %v10969 = vunpack.c.h.b16 %v10929
    %v10970 = vunpack.c.l.b16 %v10930
    %v10971 = vunpack.c.h.b16 %v10930
    %v10972 = vunpack.c.l.b16 %v10931
    %v10973 = vunpack.c.h.b16 %v10931
    %v10974 = vunpack.c.l.b16 %v10932
    %v10975 = vunpack.c.h.b16 %v10932
    %v10976 = vunpack.c.l.b16 %v10933
    %v10977 = vunpack.c.h.b16 %v10933
    %v10978 = vunpack.c.l.b16 %v10934
    %v10979 = vunpack.c.h.b16 %v10934
    %v10980 = vunpack.c.l.b16 %v10935
    %v10981 = vunpack.c.h.b16 %v10935
    %v10982 = vunpack.c.l.b16 %v10936
    %v10983 = vunpack.c.h.b16 %v10936
    %v10984 = vunpack.c.l.b16 %v10937
    %v10985 = vunpack.c.h.b16 %v10937
    %v10986 = vunpack.c.l.b16 %v10938
    %v10987 = vunpack.c.h.b16 %v10938
    %v10988 = vunpack.c.l.b16 %v10939
    %v10989 = vunpack.c.h.b16 %v10939
    %v10990 = vunpack.c.l.b16 %v10940
    %v10991 = vunpack.c.h.b16 %v10940
    %v10992 = vunpack.c.l.b16 %v10941
    %v10993 = vunpack.c.h.b16 %v10941
    %v10994 = vunpack.c.l.b16 %v10942
    %v10995 = vunpack.c.h.b16 %v10942
    %v10996 = vunpack.c.l.b16 %v10943
    %v10997 = vunpack.c.h.b16 %v10943
    %v10998 = vpack.c.b16 %v10968, %v10966
    %v10999 = vpack.c.b16 %v10969, %v10967
    %v11000 = vpack.c.b16 %v10972, %v10970
    %v11001 = vpack.c.b16 %v10973, %v10971
    %v11002 = vpack.c.b16 %v10976, %v10974
    %v11003 = vpack.c.b16 %v10977, %v10975
    %v11004 = vpack.c.b16 %v10980, %v10978
    %v11005 = vpack.c.b16 %v10981, %v10979
    %v11006 = vpack.c.b16 %v10984, %v10982
    %v11007 = vpack.c.b16 %v10985, %v10983
    %v11008 = vpack.c.b16 %v10988, %v10986
    %v11009 = vpack.c.b16 %v10989, %v10987
    %v11010 = vpack.c.b16 %v10992, %v10990
    %v11011 = vpack.c.b16 %v10993, %v10991
    %v11012 = vpack.c.b16 %v10996, %v10994
    %v11013 = vpack.c.b16 %v10997, %v10995
    %11030 = vmatpush.bf16.msra.mxu0 %v11012
    %11031 = vmatpush.bf16.msra.mxu0 %v11010
    %11032 = vmatpush.bf16.msra.mxu0 %v11008
    %11033 = vmatpush.bf16.msra.mxu0 %v11006
    %11034 = vmatpush.bf16.msra.mxu0 %v11004
    %11035 = vmatpush.bf16.msra.mxu0 %v11002
    %11036 = vmatpush.bf16.msra.mxu0 %v11000
    %11037 = vmatpush.bf16.msra.mxu0 %v10998
    %11038 = vmatmul.bf16.gmra.mxu0 %v10927
    %v11039 = vpop.f32.mrf.mxu0
    %v11040 = vadd.f32 %v10946, %v11039
    %v11041 = vpop.f32.mrf.mxu0
    %11042 = vdwg.mxu0
    %11043 = vmatpush.bf16.msra.mxu0 %v11013
    %11044 = vmatpush.bf16.msra.mxu0 %v11011
    %11045 = vmatpush.bf16.msra.mxu0 %v11009
    %11046 = vmatpush.bf16.msra.mxu0 %v11007
    %11047 = vmatpush.bf16.msra.mxu0 %v11005
    %11048 = vmatpush.bf16.msra.mxu0 %v11003
    %11049 = vmatpush.bf16.msra.mxu0 %v11001
    %11050 = vmatpush.bf16.msra.mxu0 %v10999
    %11051 = vmatmul.bf16.gmra.mxu0 %v10927
    %v11052 = vpop.f32.mrf.mxu0
    %v11053 = vadd.f32 %v10947, %v11052
    %v11054 = vpop.f32.mrf.mxu0
    %11055 = vdwg.mxu0
    %v11056 = vmax.f32 %v11040, 0.0
    %v11057 = vmax.f32 %v11053, 0.0
    %v11058 = vpack.c.bf16 %v11056, %v11056
    %v11059 = vpack.c.bf16 %v11057, %v11057
    %v11060 = vld [vmem:[%s15] sm:$0xf]
    %v11061 = vld [vmem:[%s15 + $0x4] sm:$0xf]
    %v11062 = vld [vmem:[%s15 + $0x8] sm:$0xf]
    %v11063 = vld [vmem:[%s15 + $0xc] sm:$0xf]
    %v11064 = vld [vmem:[%s15 + $0x10] sm:$0xf]
    %v11065 = vld [vmem:[%s15 + $0x14] sm:$0xf]
    %v11066 = vld [vmem:[%s15 + $0x18] sm:$0xf]
    %v11067 = vld [vmem:[%s15 + $0x1c] sm:$0xf]
    %v11068 = vld [vmem:[%s15 + $0x20] sm:$0xf]
    %v11069 = vld [vmem:[%s15 + $0x24] sm:$0xf]
    %v11070 = vld [vmem:[%s15 + $0x28] sm:$0xf]
    %v11071 = vld [vmem:[%s15 + $0x2c] sm:$0xf]
    %v11072 = vld [vmem:[%s15 + $0x30] sm:$0xf]
    %v11073 = vld [vmem:[%s15 + $0x34] sm:$0xf]
    %v11074 = vld [vmem:[%s15 + $0x38] sm:$0xf]
    %v11075 = vld [vmem:[%s15 + $0x3c] sm:$0xf]
    %v11076 = vld [vmem:[%s15 + $0x40] sm:$0xf]
    %v11077 = vld [vmem:[%s15 + $0x44] sm:$0xf]
    %v11078 = vld [vmem:[%s15 + $0x48] sm:$0xf]
    %v11079 = vld [vmem:[%s15 + $0x4c] sm:$0xf]
    %v11080 = vld [vmem:[%s15 + $0x50] sm:$0xf]
    %v11081 = vld [vmem:[%s15 + $0x54] sm:$0xf]
    %v11082 = vld [vmem:[%s15 + $0x58] sm:$0xf]
    %v11083 = vld [vmem:[%s15 + $0x5c] sm:$0xf]
    %v11084 = vld [vmem:[%s15 + $0x60] sm:$0xf]
    %v11085 = vld [vmem:[%s15 + $0x64] sm:$0xf]
    %v11086 = vld [vmem:[%s15 + $0x68] sm:$0xf]
    %v11087 = vld [vmem:[%s15 + $0x6c] sm:$0xf]
    %v11088 = vld [vmem:[%s15 + $0x70] sm:$0xf]
    %v11089 = vld [vmem:[%s15 + $0x74] sm:$0xf]
    %v11090 = vld [vmem:[%s15 + $0x78] sm:$0xf]
    %v11091 = vld [vmem:[%s15 + $0x7c] sm:$0xf]
    %v11092 = vld [vmem:[%s16] sm:$0x1]
    %v11094 = vperm.slane %v11092, 0
    %v11128 = vunpack.c.l.b16 %v11060
    %v11129 = vunpack.c.l.b16 %v11061
    %v11130 = vunpack.c.l.b16 %v11062
    %v11131 = vunpack.c.l.b16 %v11063
    %v11132 = vunpack.c.l.b16 %v11064
    %v11133 = vunpack.c.l.b16 %v11065
    %v11134 = vunpack.c.l.b16 %v11066
    %v11135 = vunpack.c.l.b16 %v11067
    %v11136 = vunpack.c.l.b16 %v11068
    %v11137 = vunpack.c.l.b16 %v11069
    %v11138 = vunpack.c.l.b16 %v11070
    %v11139 = vunpack.c.l.b16 %v11071
    %v11140 = vunpack.c.l.b16 %v11072
    %v11141 = vunpack.c.l.b16 %v11073
    %v11142 = vunpack.c.l.b16 %v11074
    %v11143 = vunpack.c.l.b16 %v11075
    %v11144 = vunpack.c.l.b16 %v11076
    %v11145 = vunpack.c.l.b16 %v11077
    %v11146 = vunpack.c.l.b16 %v11078
    %v11147 = vunpack.c.l.b16 %v11079
    %v11148 = vunpack.c.l.b16 %v11080
    %v11149 = vunpack.c.l.b16 %v11081
    %v11150 = vunpack.c.l.b16 %v11082
    %v11151 = vunpack.c.l.b16 %v11083
    %v11152 = vunpack.c.l.b16 %v11084
    %v11153 = vunpack.c.l.b16 %v11085
    %v11154 = vunpack.c.l.b16 %v11086
    %v11155 = vunpack.c.l.b16 %v11087
    %v11156 = vunpack.c.l.b16 %v11088
    %v11157 = vunpack.c.l.b16 %v11089
    %v11158 = vunpack.c.l.b16 %v11090
    %v11159 = vunpack.c.l.b16 %v11091
    %v11160 = vpack.c.b16 %v11129, %v11128
    %v11161 = vpack.c.b16 %v11131, %v11130
    %v11162 = vpack.c.b16 %v11133, %v11132
    %v11163 = vpack.c.b16 %v11135, %v11134
    %v11164 = vpack.c.b16 %v11137, %v11136
    %v11165 = vpack.c.b16 %v11139, %v11138
    %v11166 = vpack.c.b16 %v11141, %v11140
    %v11167 = vpack.c.b16 %v11143, %v11142
    %v11168 = vpack.c.b16 %v11145, %v11144
    %v11169 = vpack.c.b16 %v11147, %v11146
    %v11170 = vpack.c.b16 %v11149, %v11148
    %v11171 = vpack.c.b16 %v11151, %v11150
    %v11172 = vpack.c.b16 %v11153, %v11152
    %v11173 = vpack.c.b16 %v11155, %v11154
    %v11174 = vpack.c.b16 %v11157, %v11156
    %v11175 = vpack.c.b16 %v11159, %v11158
    %11192 = vmatpush.bf16.msra.mxu0 %v11167
    %11193 = vmatpush.bf16.msra.mxu0 %v11166
    %11194 = vmatpush.bf16.msra.mxu0 %v11165
    %11195 = vmatpush.bf16.msra.mxu0 %v11164
    %11196 = vmatpush.bf16.msra.mxu0 %v11163
    %11197 = vmatpush.bf16.msra.mxu0 %v11162
    %11198 = vmatpush.bf16.msra.mxu0 %v11161
    %11199 = vmatpush.bf16.msra.mxu0 %v11160
    %11200 = vmatmul.bf16.gmra.mxu0 %v11058
    %v11201 = vpop.f32.mrf.mxu0
    %v11202 = vadd.f32 %v11094, %v11201
    %v11203 = vpop.f32.mrf.mxu0
    %11204 = vdwg.mxu0
    %11205 = vmatpush.bf16.msra.mxu0 %v11175
    %11206 = vmatpush.bf16.msra.mxu0 %v11174
    %11207 = vmatpush.bf16.msra.mxu0 %v11173
    %11208 = vmatpush.bf16.msra.mxu0 %v11172
    %11209 = vmatpush.bf16.msra.mxu0 %v11171
    %11210 = vmatpush.bf16.msra.mxu0 %v11170
    %11211 = vmatpush.bf16.msra.mxu0 %v11169
    %11212 = vmatpush.bf16.msra.mxu0 %v11168
    %11213 = vmatmul.bf16.gmra.mxu0 %v11059
    %v11214 = vpop.f32.mrf.mxu0
    %v11215 = vadd.f32 %v11202, %v11214
    %v11216 = vpop.f32.mrf.mxu0
    %11217 = vdwg.mxu0
    %vm11218 = vcmask 41984
    %11219 = vst.msk [vmem:[#allocation8] sm:$0x3] %vm11218, %v11215
    // Predicated region
    $region70: #{audio_cnn_forward.1} parent=1 // pred_check
      _
    $region71: #{audio_cnn_forward.1} parent=1 // pred_check_branch
      %11221 = sbr.rel (0) target = $region73
    $region72: #{audio_cnn_forward.1} parent=1 // pred_region
      %11223 = vsyncadd [#allocation9], 0
      %s11225 = sshll.u32 [#allocation8], 4
      %s11226 = int_to_ptr.vmem [resolvable:$true] %s11225
      %s11227 = sshll.u32 %s17, 4
      %s11228 = int_to_ptr.hbm [resolvable:$true] %s11227
      %11230 = dma.vmem_to_hbm [thread:$0]  %s11226, 32, %s11228, [#allocation9]
    $region73: #{audio_cnn_forward.1} parent=1 // pred_fallthru
      _
    // Predicated region
    $region74: #{audio_cnn_forward.1} parent=1 // pred_check
      _
    $region75: #{audio_cnn_forward.1} parent=1 // pred_check_branch
      %11232 = sbr.rel (0) target = $region77
    $region76: #{audio_cnn_forward.1} parent=1 // pred_region
      %11234 = dma.done [#allocation9], 32
    $region77: #{audio_cnn_forward.1} parent=1 // pred_fallthru
      _
    %11235 = vsyncpa [#allocation9], 1

</llo_original>
